<compile_context>
chip_gen: v6e
topology: v6e:2x2x1
jax: 0.10.0
libtpu: 0.0.40
codegen_flags: <defaults>
</compile_context>

<pallas_src>
import functools

import jax
import jax.numpy as jnp
from jax.experimental import pallas as pl
from jax.experimental.pallas import tpu as pltpu

# ----------------------------- configuration --------------------------------
N_IN_CHANNELS = 1      # n_in_channels
NUM_CLASSES = 1        # num_classes
C_BOT = 4              # bottleneck channels
C_LOW = 16             # low-level feature channels   (scaled-down 256)
C_BB = 64              # backbone output channels     (scaled-down 2048)
C_ASPP = 32            # ASPP branch channels         (scaled-down 256)
C_LOWRED = 8           # decoder low-level reduction  (scaled-down 48)
C_DEC = 32             # decoder conv channels        (scaled-down 256)

# Matmul tile ceilings: sized so double-buffered A/B tiles + f32 accumulator
# stay well inside v7x's 32 MiB scoped VMEM budget; multiples of 256 for the
# v6e/v7x 2x256x256 MXU.
TM_MAX = 256
TN_MAX = 256
TK_MAX = 1024
VMEM_LIMIT_BYTES = 32 * 1024 * 1024


def _round_up(v, m):
    return ((v + m - 1) // m) * m


# ----------------------------- Pallas kernels -------------------------------
def _matmul_affine_act_kernel(x_ref, w_ref, s_ref, b_ref, o_ref, acc_ref, *, act):
    """Tiled o = act((x @ w) * scale + bias); f32 accumulation over the K grid."""
    @pl.when(pl.program_id(2) == 0)
    def _init():
        acc_ref[...] = jnp.zeros_like(acc_ref)

    acc_ref[...] += jnp.dot(x_ref[...].astype(jnp.bfloat16),
                            w_ref[...].astype(jnp.bfloat16),
                            preferred_element_type=jnp.float32)

    @pl.when(pl.program_id(2) == pl.num_programs(2) - 1)
    def _finalize():
        y = acc_ref[...] * s_ref[...] + b_ref[...]
        if act == "relu":
            y = jnp.maximum(y, 0.0)
        elif act == "tanh":
            y = jnp.tanh(y)
        elif act == "sigmoid":
            y = 0.5 * (jnp.tanh(0.5 * y) + 1.0)   # robust sigmoid on the EUP
        o_ref[...] = y


def _multi_matmul_affine_kernel(*refs, n_terms, act):
    """o = act((sum_i x_i @ w_i) * scale + bias).

    Fuses a channel-concat followed by a conv into per-source partial matmuls
    so the concatenated tensor never materializes in HBM.
    """
    s_ref = refs[2 * n_terms]
    b_ref = refs[2 * n_terms + 1]
    o_ref = refs[2 * n_terms + 2]
    acc = jnp.zeros(o_ref.shape, jnp.float32)
    for t in range(n_terms):
        acc = acc + jnp.dot(refs[t][...].astype(jnp.bfloat16),
                            refs[n_terms + t][...].astype(jnp.bfloat16),
                            preferred_element_type=jnp.float32)
    y = acc * s_ref[...] + b_ref[...]
    if act == "relu":
        y = jnp.maximum(y, 0.0)
    o_ref[...] = y


def _resize_kernel(x_ref, a_ref, bc_ref, o_ref):
    """Fused bilinear resize: out[n] = A @ x[n] @ Bc (channels stay on lanes)."""
    a = a_ref[...]
    bc = bc_ref[...]
    for n in range(x_ref.shape[0]):            # batch unrolled at trace time
        t = jnp.dot(a, x_ref[n], preferred_element_type=jnp.float32)
        o_ref[n] = jnp.dot(t, bc, preferred_element_type=jnp.float32)


def _resize_heads_kernel(x_ref, a_ref, bc_ref, logit_ref, tanh_ref, sig_ref):
    """Final bilinear resize with the tanh / sigmoid heads fused in-kernel."""
    a = a_ref[...]
    bc = bc_ref[...]
    for n in range(x_ref.shape[0]):
        t = jnp.dot(a, x_ref[n], preferred_element_type=jnp.float32)
        y = jnp.dot(t, bc, preferred_element_type=jnp.float32)
        logit_ref[n] = y
        tanh_ref[n] = jnp.tanh(y)
        sig_ref[n] = 0.5 * (jnp.tanh(0.5 * y) + 1.0)


# ----------------------------- kernel wrappers -------------------------------
def pallas_matmul_affine(x, w, scale, bias, act="none"):
    """x: (M, K) f32, w: (K, N) f32 (GEMM layout), scale/bias: (N,). -> (M, N)."""
    M, K = x.shape
    _, N = w.shape
    bm = _round_up(min(M, TM_MAX), 8)
    bn = N if N <= TN_MAX else TN_MAX
    bk = K if K <= TK_MAX else TK_MAX
    Mp, Np, Kp = _round_up(M, bm), _round_up(N, bn), _round_up(K, bk)
    # The pads below almost never trigger at this model's shapes (ragged K/N
    # are handled with full-extent blocks); kept for generality.
    if (Mp, Kp) != (M, K):
        x = jnp.pad(x, ((0, Mp - M), (0, Kp - K)))
    if (Kp, Np) != (K, N):
        w = jnp.pad(w, ((0, Kp - K), (0, Np - N)))
        scale = jnp.pad(scale, (0, Np - N))
        bias = jnp.pad(bias, (0, Np - N))
    gm, gn, gk = Mp // bm, Np // bn, Kp // bk

    out = pl.pallas_call(
        functools.partial(_matmul_affine_act_kernel, act=act),
        out_shape=jax.ShapeDtypeStruct((Mp, Np), jnp.float32),
        grid=(gm, gn, gk),
        in_specs=[
            pl.BlockSpec((bm, bk), lambda i, j, k: (i, k)),
            pl.BlockSpec((bk, bn), lambda i, j, k: (k, j)),
            pl.BlockSpec((1, bn), lambda i, j, k: (0, j)),
            pl.BlockSpec((1, bn), lambda i, j, k: (0, j)),
        ],
        out_specs=pl.BlockSpec((bm, bn), lambda i, j, k: (i, j)),
        scratch_shapes=[pltpu.VMEM((bm, bn), jnp.float32)],
        compiler_params=pltpu.CompilerParams(
            dimension_semantics=("parallel", "parallel", "arbitrary"),
            vmem_limit_bytes=VMEM_LIMIT_BYTES),
    )(x, w, scale.reshape(1, -1), bias.reshape(1, -1))
    if (Mp, Np) != (M, N):
        out = out[:M, :N]
    return out


def pallas_multi_matmul_affine(xs, ws, scale, bias, act="none"):
    """Fused concat+conv: act((sum_i x_i @ w_i) * scale + bias), M-tiled grid."""
    M = xs[0].shape[0]
    N = ws[0].shape[1]
    bm = _round_up(min(M, TM_MAX), 8)
    Mp = _round_up(M, bm)
    if Mp != M:
        xs = [jnp.pad(x, ((0, Mp - M), (0, 0))) for x in xs]
    gm = Mp // bm
    n_terms = len(xs)
    in_specs = (
        [pl.BlockSpec((bm, x.shape[1]), lambda i: (i, 0)) for x in xs]
        + [pl.BlockSpec(w.shape, lambda i: (0, 0)) for w in ws]
        + [pl.BlockSpec((1, N), lambda i: (0, 0))] * 2)
    out = pl.pallas_call(
        functools.partial(_multi_matmul_affine_kernel, n_terms=n_terms, act=act),
        out_shape=jax.ShapeDtypeStruct((Mp, N), jnp.float32),
        grid=(gm,),
        in_specs=in_specs,
        out_specs=pl.BlockSpec((bm, N), lambda i: (i, 0)),
        compiler_params=pltpu.CompilerParams(
            dimension_semantics=("parallel",),
            vmem_limit_bytes=VMEM_LIMIT_BYTES),
    )(*xs, *ws, scale.reshape(1, -1), bias.reshape(1, -1))
    return out[:M] if Mp != M else out


# ----------------------------- conv via NHWC im2col --------------------------
def _im2col_nhwc(x, kh, kw, stride, padding, dilation):
    """NHWC im2col: (N,H,W,C) -> (N*H_out*W_out, kh*kw*C), K order tap-major."""
    n, h, w, c = x.shape
    xp = jnp.pad(x, ((0, 0), (padding, padding), (padding, padding), (0, 0)))
    h_out = (h + 2 * padding - dilation * (kh - 1) - 1) // stride + 1
    w_out = (w + 2 * padding - dilation * (kw - 1) - 1) // stride + 1
    cols = []
    for i in range(kh):
        for j in range(kw):
            cols.append(
                xp[:, i * dilation: i * dilation + stride * (h_out - 1) + 1: stride,
                      j * dilation: j * dilation + stride * (w_out - 1) + 1: stride, :])
    col = jnp.concatenate(cols, axis=-1)          # lane-contiguous, no transposes
    return col.reshape(n * h_out * w_out, kh * kw * c), h_out, w_out


def conv_affine_act(x, p, k=1, stride=1, padding=0, dilation=1, act="relu"):
    """Conv2d (NHWC) + folded-BN affine + activation via one Pallas matmul."""
    w_mat, scale, bias = p
    n = x.shape[0]
    if k == 1 and stride == 1 and padding == 0:
        h_out, w_out = x.shape[1], x.shape[2]
        col = x.reshape(n * h_out * w_out, x.shape[3])
    else:
        # TODO(synk): 3x3 convs still materialize the im2col matrix in HBM; a
        # fully implicit-GEMM kernel (tap index as a K grid axis offsetting
        # into the padded NHWC input) would remove that traffic.
        col, h_out, w_out = _im2col_nhwc(x, k, k, stride, padding, dilation)
    y = pallas_matmul_affine(col, w_mat, scale, bias, act=act)
    return y.reshape(n, h_out, w_out, w_mat.shape[1])


# ----------------------- bilinear resize (align_corners=True) ----------------
def _interp_matrix(out_size, in_size):
    if in_size == 1:
        return jnp.ones((out_size, 1), jnp.float32)
    if out_size == 1:
        return jnp.zeros((1, in_size), jnp.float32).at[0, 0].set(1.0)
    pos = jnp.arange(out_size, dtype=jnp.float32) * (in_size - 1) / (out_size - 1)
    lo = jnp.clip(jnp.floor(pos).astype(jnp.int32), 0, in_size - 2)
    frac = pos - lo.astype(jnp.float32)
    rows = jnp.arange(out_size)
    m = jnp.zeros((out_size, in_size), jnp.float32)
    m = m.at[rows, lo].add(1.0 - frac)
    m = m.at[rows, lo + 1].add(frac)
    return m


def bilinear_resize_nhwc(x, h_out, w_out, with_heads=False):
    """Both resize passes fused in one kernel: out[n] = A @ x[n] @ kron(B,I_C)^T."""
    n, h, w, c = x.shape
    a = _interp_matrix(h_out, h)                        # (H_out, H)
    b = _interp_matrix(w_out, w)                        # (W_out, W)
    bc = jnp.kron(b, jnp.eye(c, dtype=jnp.float32)).T   # (W*C, W_out*C)
    x2 = x.reshape(n, h, w * c)
    if h < 8:                                           # keep first dot's K sublane-aligned
        a = jnp.pad(a, ((0, 0), (0, 8 - h)))
        x2 = jnp.pad(x2, ((0, 0), (0, 8 - h), (0, 0)))
    vmem = pl.BlockSpec(memory_space=pltpu.MemorySpace.VMEM)
    out_sd = jax.ShapeDtypeStruct((n, h_out, w_out * c), jnp.float32)
    if not with_heads:
        out = pl.pallas_call(
            _resize_kernel, out_shape=out_sd,
            in_specs=[vmem, vmem, vmem], out_specs=vmem,
        )(x2, a, bc)
        return out.reshape(n, h_out, w_out, c)
    logit, tanh_o, sig_o = pl.pallas_call(
        _resize_heads_kernel, out_shape=(out_sd, out_sd, out_sd),
        in_specs=[vmem, vmem, vmem], out_specs=(vmem, vmem, vmem),
    )(x2, a, bc)
    shp = (n, h_out, w_out, c)
    return logit.reshape(shp), tanh_o.reshape(shp), sig_o.reshape(shp)


# ----------------------------- parameters ------------------------------------
def _fold_bn(key, c_out):
    k1, k2, k3, k4 = jax.random.split(key, 4)
    gamma = 1.0 + 0.1 * jax.random.normal(k1, (c_out,), jnp.float32)
    beta = 0.1 * jax.random.normal(k2, (c_out,), jnp.float32)
    mean = 0.1 * jax.random.normal(k3, (c_out,), jnp.float32)
    var = 0.5 + 0.5 * jnp.abs(jax.random.normal(k4, (c_out,), jnp.float32))
    scale = gamma / jnp.sqrt(var + 1e-5)                 # eval-mode BN folded
    bias = beta - mean * scale
    return scale, bias


def _gemm_weight(key, c_in, c_out, kh, kw, fan_in=None):
    fan_in = fan_in if fan_in is not None else c_in * kh * kw
    w = jax.random.normal(key, (c_out, c_in, kh, kw), jnp.float32) / jnp.sqrt(float(fan_in))
    # pre-transform ONCE to matmul layout: K = kh*kw*c_in (tap-major), N = c_out
    return jnp.transpose(w, (2, 3, 1, 0)).reshape(kh * kw * c_in, c_out)


def _conv_bn_params(key, c_in, c_out, kh, kw):
    k_w, k_bn = jax.random.split(key)
    return (_gemm_weight(k_w, c_in, c_out, kh, kw), *_fold_bn(k_bn, c_out))


def _multi_conv_bn_params(key, c_ins, c_out, kh, kw):
    keys = jax.random.split(key, len(c_ins) + 1)
    fan_in = sum(c_ins) * kh * kw
    ws = [_gemm_weight(keys[i], ci, c_out, kh, kw, fan_in=fan_in)
          for i, ci in enumerate(c_ins)]
    return (ws, *_fold_bn(keys[-1], c_out))


def init_params(key):
    ks = jax.random.split(key, 14)
    p = {}
    # TODO(synk): reduced backbone (conv/BN/ReLU stack, output_stride=16)
    # instead of the full ResNet/DRN; dropout is identity (eval mode).
    p["stem"] = _conv_bn_params(ks[0], N_IN_CHANNELS, 16, 3, 3)
    p["layer1"] = _conv_bn_params(ks[1], 16, C_LOW, 3, 3)
    p["layer2"] = _conv_bn_params(ks[2], C_LOW, 32, 3, 3)
    p["layer3"] = _conv_bn_params(ks[3], 32, C_BB, 3, 3)
    p["aspp1"] = _conv_bn_params(ks[4], C_BB, C_ASPP, 1, 1)
    p["aspp2"] = _conv_bn_params(ks[5], C_BB, C_ASPP, 3, 3)
    p["aspp3"] = _conv_bn_params(ks[6], C_BB, C_ASPP, 3, 3)
    p["aspp4"] = _conv_bn_params(ks[7], C_BB, C_ASPP, 3, 3)
    p["aspp_pool"] = _conv_bn_params(ks[8], C_BB, C_ASPP, 1, 1)
    # 1x1 projection over the concat of the 5 ASPP branches, stored as 5 weight
    # chunks so the concat is fused into one multi-matmul kernel.
    p["aspp_proj"] = _multi_conv_bn_params(ks[9], [C_ASPP] * 5, C_ASPP, 1, 1)
    p["dec_low"] = _conv_bn_params(ks[10], C_LOW, C_LOWRED, 1, 1)
    # decoder conv1 over concat([aspp_out, bottleneck, low_level_reduced]).
    p["dec_conv1"] = _multi_conv_bn_params(ks[11], [C_ASPP, C_BOT, C_LOWRED], C_DEC, 3, 3)
    p["dec_conv2"] = _conv_bn_params(ks[12], C_DEC, C_DEC, 3, 3)
    kcw, kcb = jax.random.split(ks[13])
    p["dec_cls"] = (_gemm_weight(kcw, C_DEC, NUM_CLASSES, 1, 1),
                    jnp.ones((NUM_CLASSES,), jnp.float32),
                    0.1 * jax.random.normal(kcb, (NUM_CLASSES,), jnp.float32))
    return p


# ----------------------------- forward pass ----------------------------------
@jax.jit
def deeplab_bottleneck_forward(params, x_in, bottle_neck):
    # NCHW (PyTorch convention) -> NHWC once; channels live on lanes internally.
    x = jnp.transpose(x_in, (0, 2, 3, 1))
    bn_in = jnp.transpose(bottle_neck, (0, 2, 3, 1))

    # ---- backbone (output_stride = 16; low-level feats at stride 4) ----
    h = conv_affine_act(x, params["stem"], k=3, stride=2, padding=1)
    low = conv_affine_act(h, params["layer1"], k=3, stride=2, padding=1)
    h = conv_affine_act(low, params["layer2"], k=3, stride=2, padding=1)
    xb = conv_affine_act(h, params["layer3"], k=3, stride=2, padding=1)

    # ---- ASPP (rates 1, 6, 12, 18 for output_stride 16) ----
    a1 = conv_affine_act(xb, params["aspp1"], k=1)
    a2 = conv_affine_act(xb, params["aspp2"], k=3, padding=6, dilation=6)
    a3 = conv_affine_act(xb, params["aspp3"], k=3, padding=12, dilation=12)
    a4 = conv_affine_act(xb, params["aspp4"], k=3, padding=18, dilation=18)
    pooled = jnp.mean(xb, axis=(1, 2), keepdims=True)       # global average pool
    a5 = conv_affine_act(pooled, params["aspp_pool"], k=1)
    a5 = jnp.broadcast_to(a5, (a5.shape[0], xb.shape[1], xb.shape[2], a5.shape[3]))

    # fused concat([a1..a5]) + 1x1 projection: one kernel, 5 partial matmuls.
    nb, hh, ww, _ = a1.shape
    branches = [t.reshape(nb * hh * ww, C_ASPP) for t in (a1, a2, a3, a4, a5)]
    w_p, s_p, b_p = params["aspp_proj"]
    xa = pallas_multi_matmul_affine(branches, w_p, s_p, b_p,
                                    act="relu").reshape(nb, hh, ww, C_ASPP)

    # ---- decoder ----
    low_red = conv_affine_act(low, params["dec_low"], k=1)
    # bilinear upsample (align_corners=True) of the ASPP output (fused kernel).
    up = bilinear_resize_nhwc(xa, low_red.shape[1], low_red.shape[2])
    # The bottleneck is spatially constant, so its bilinear upsample to the
    # low-level spatial size is exactly a broadcast (matches torch semantics).
    bn_up = jnp.broadcast_to(
        bn_in, (bn_in.shape[0], low_red.shape[1], low_red.shape[2], bn_in.shape[3]))

    # fused concat([up, bottleneck, low_red]) + 3x3 conv: per-source im2col and
    # accumulation of the three partial matmuls inside one kernel.
    cols = []
    for t in (up, bn_up, low_red):
        col, ho, wo = _im2col_nhwc(t, 3, 3, 1, 1, 1)
        cols.append(col)
    w1, s1, b1 = params["dec_conv1"]
    d = pallas_multi_matmul_affine(cols, w1, s1, b1,
                                   act="relu").reshape(nb, ho, wo, C_DEC)
    d = conv_affine_act(d, params["dec_conv2"], k=3, padding=1)
    logits_s4 = conv_affine_act(d, params["dec_cls"], k=1, act="none")

    # ---- final upsample to input resolution + tanh / sigmoid heads (fused) ----
    logits, out_t, out_s = bilinear_resize_nhwc(
        logits_s4, x_in.shape[2], x_in.shape[3], with_heads=True)

    to_nchw = lambda t: jnp.transpose(t, (0, 3, 1, 2))
    return to_nchw(out_t), to_nchw(out_s), to_nchw(logits)


# ----------------------------- main -------------------------------------------
if __name__ == "__main__":
    key = jax.random.PRNGKey(0)
    k_in, k_bot, k_par = jax.random.split(key, 3)

    x_in = jax.random.normal(k_in, (2, N_IN_CHANNELS, 32, 32), jnp.float32)
    bottle_neck = jax.random.normal(k_bot, (2, C_BOT, 1, 1), jnp.float32)
    params = init_params(k_par)

    output, output_mask, logits = deeplab_bottleneck_forward(params, x_in, bottle_neck)
    jax.block_until_ready((output, output_mask, logits))

    assert output.shape == (2, NUM_CLASSES, 32, 32)
    assert output_mask.shape == (2, NUM_CLASSES, 32, 32)
    assert logits.shape == (2, NUM_CLASSES, 32, 32)
    assert bool(jnp.all(jnp.isfinite(output)))
    assert bool(jnp.all((output_mask >= 0.0) & (output_mask <= 1.0)))
    print("KERNEL_OK")
</pallas_src>

<mosaic_0001>
module attributes {stable_mosaic.version = 11 : i64} {
  func.func private @main(%arg0: i32) attributes {dimension_semantics = [#tpu.dimension_semantics<core_parallel>], iteration_bounds = array<i64: 2>, tpu.core_type = #tpu.core_type<sc_scalar_subcore>, window_params = []} {
    return
  }
}

module attributes {stable_mosaic.version = 11 : i64} {
  func.func private @main(%arg0: i32) attributes {dimension_semantics = [#tpu.dimension_semantics<core_parallel>], iteration_bounds = array<i64: 2>, tpu.core_type = #tpu.core_type<sc_scalar_subcore>, window_params = []} {
    return
  }
}

module attributes {stable_mosaic.version = 11 : i64} {
  func.func @_matmul_affine_act_kernel(%arg0: i32, %arg1: i32, %arg2: i32, %arg3: memref<256x9xf32, #tpu.memory_space<vmem>>, %arg4: memref<9x16xf32, #tpu.memory_space<vmem>>, %arg5: memref<1x16xf32, #tpu.memory_space<vmem>>, %arg6: memref<1x16xf32, #tpu.memory_space<vmem>>, %arg7: memref<256x16xf32, #tpu.memory_space<vmem>>, %arg8: memref<256x16xf32, #tpu.memory_space<vmem>>) attributes {dimension_semantics = [#tpu.dimension_semantics<parallel>, #tpu.dimension_semantics<parallel>, #tpu.dimension_semantics<arbitrary>], iteration_bounds = array<i64: 2, 1, 1>, scalar_prefetch = 0 : i64, scratch_operands = 1 : i64, tpu.core_type = #tpu.core_type<tc>, window_params = [{transform_indices = @transform_0, window_bounds = array<i64: 256, 9>}, {transform_indices = @transform_1, window_bounds = array<i64: 9, 16>}, {transform_indices = @transform_2, window_bounds = array<i64: 1, 16>}, {transform_indices = @transform_3, window_bounds = array<i64: 1, 16>}, {transform_indices = @transform_4, window_bounds = array<i64: 256, 16>}]} {
    %c0_i32 = arith.constant 0 : i32
    %0 = arith.cmpi eq, %arg2, %c0_i32 : i32
    %1 = arith.extui %0 : i1 to i32
    %c0_i32_0 = arith.constant 0 : i32
    %2 = arith.cmpi ne, %1, %c0_i32_0 : i32
    scf.if %2 {
      %cst_10 = arith.constant 0.000000e+00 : f32
      %14 = vector.broadcast %cst_10 : f32 to vector<256x16xf32>
      %c0_11 = arith.constant 0 : index
      %c0_12 = arith.constant 0 : index
      %15 = vector.load %arg8[%c0_11, %c0_12] : memref<256x16xf32, #tpu.memory_space<vmem>>, vector<256x16xf32>
      tpu.vector_store %arg8[%c0_11, %c0_12], %14 {strides = array<i32>} : memref<256x16xf32, #tpu.memory_space<vmem>>, vector<256x16xf32>,
    } else {
    }
    %c0 = arith.constant 0 : index
    %c0_1 = arith.constant 0 : index
    %3 = vector.load %arg8[%c0, %c0_1] : memref<256x16xf32, #tpu.memory_space<vmem>>, vector<256x16xf32>
    %c0_2 = arith.constant 0 : index
    %c0_3 = arith.constant 0 : index
    %4 = vector.load %arg3[%c0_2, %c0_3] : memref<256x9xf32, #tpu.memory_space<vmem>>, vector<256x9xf32>
    %5 = arith.truncf %4 : vector<256x9xf32> to vector<256x9xbf16>
    %c0_4 = arith.constant 0 : index
    %c0_5 = arith.constant 0 : index
    %6 = vector.load %arg4[%c0_4, %c0_5] : memref<9x16xf32, #tpu.memory_space<vmem>>, vector<9x16xf32>
    %7 = arith.truncf %6 : vector<9x16xf32> to vector<9x16xbf16>
    %cst = arith.constant dense<0.000000e+00> : vector<256x16xf32>
    %8 = tpu.matmul %5, %7, %cst {dimension_numbers = #tpu.dot_dimension_numbers<[1], [0], [0], [1], [0, 0, 1, 1], [], []>} : vector<256x9xbf16>, vector<9x16xbf16>, vector<256x16xf32> -> vector<256x16xf32>
    %9 = arith.addf %3, %8 : vector<256x16xf32>
    %c0_6 = arith.constant 0 : index
    %c0_7 = arith.constant 0 : index
    %10 = vector.load %arg8[%c0_6, %c0_7] : memref<256x16xf32, #tpu.memory_space<vmem>>, vector<256x16xf32>
    tpu.vector_store %arg8[%c0_6, %c0_7], %9 {strides = array<i32>} : memref<256x16xf32, #tpu.memory_space<vmem>>, vector<256x16xf32>,
    %c0_i32_8 = arith.constant 0 : i32
    %11 = arith.cmpi eq, %arg2, %c0_i32_8 : i32
    %12 = arith.extui %11 : i1 to i32
    %c0_i32_9 = arith.constant 0 : i32
    %13 = arith.cmpi ne, %12, %c0_i32_9 : i32
    scf.if %13 {
      %c0_10 = arith.constant 0 : index
      %c0_11 = arith.constant 0 : index
      %14 = vector.load %arg8[%c0_10, %c0_11] : memref<256x16xf32, #tpu.memory_space<vmem>>, vector<256x16xf32>
      %c0_12 = arith.constant 0 : index
      %c0_13 = arith.constant 0 : index
      %15 = vector.load %arg5[%c0_12, %c0_13] : memref<1x16xf32, #tpu.memory_space<vmem>>, vector<1x16xf32>
      %16 = vector.broadcast %15 : vector<1x16xf32> to vector<256x16xf32>
      %17 = arith.mulf %14, %16 : vector<256x16xf32>
      %c0_14 = arith.constant 0 : index
      %c0_15 = arith.constant 0 : index
      %18 = vector.load %arg6[%c0_14, %c0_15] : memref<1x16xf32, #tpu.memory_space<vmem>>, vector<1x16xf32>
      %19 = vector.broadcast %18 : vector<1x16xf32> to vector<256x16xf32>
      %20 = arith.addf %17, %19 : vector<256x16xf32>
      %cst_16 = arith.constant 0.000000e+00 : f32
      %21 = vector.broadcast %cst_16 : f32 to vector<256x16xf32>
      %22 = arith.maximumf %20, %21 : vector<256x16xf32>
      %c0_17 = arith.constant 0 : index
      %c0_18 = arith.constant 0 : index
      %23 = vector.load %arg7[%c0_17, %c0_18] : memref<256x16xf32, #tpu.memory_space<vmem>>, vector<256x16xf32>
      tpu.vector_store %arg7[%c0_17, %c0_18], %22 {strides = array<i32>} : memref<256x16xf32, #tpu.memory_space<vmem>>, vector<256x16xf32>,
    } else {
    }
    return
  }
  func.func @transform_0(%arg0: i32, %arg1: i32, %arg2: i32) -> (i32, i32) {
    %c0_i32 = arith.constant 0 : i32
    return %arg0, %arg2 : i32, i32
  }
  func.func @transform_1(%arg0: i32, %arg1: i32, %arg2: i32) -> (i32, i32) {
    %c0_i32 = arith.constant 0 : i32
    return %arg2, %arg1 : i32, i32
  }
  func.func @transform_2(%arg0: i32, %arg1: i32, %arg2: i32) -> (i32, i32) {
    %c0_i32 = arith.constant 0 : i32
    %c0_i32_0 = arith.constant 0 : i32
    return %c0_i32, %arg1 : i32, i32
  }
  func.func @transform_3(%arg0: i32, %arg1: i32, %arg2: i32) -> (i32, i32) {
    %c0_i32 = arith.constant 0 : i32
    %c0_i32_0 = arith.constant 0 : i32
    return %c0_i32, %arg1 : i32, i32
  }
  func.func @transform_4(%arg0: i32, %arg1: i32, %arg2: i32) -> (i32, i32) {
    %c0_i32 = arith.constant 0 : i32
    return %arg0, %arg1 : i32, i32
  }
}

module attributes {stable_mosaic.version = 11 : i64} {
  func.func @_matmul_affine_act_kernel(%arg0: i32, %arg1: i32, %arg2: i32, %arg3: memref<128x144xf32, #tpu.memory_space<vmem>>, %arg4: memref<144x16xf32, #tpu.memory_space<vmem>>, %arg5: memref<1x16xf32, #tpu.memory_space<vmem>>, %arg6: memref<1x16xf32, #tpu.memory_space<vmem>>, %arg7: memref<128x16xf32, #tpu.memory_space<vmem>>, %arg8: memref<128x16xf32, #tpu.memory_space<vmem>>) attributes {dimension_semantics = [#tpu.dimension_semantics<parallel>, #tpu.dimension_semantics<parallel>, #tpu.dimension_semantics<arbitrary>], iteration_bounds = array<i64: 1, 1, 1>, scalar_prefetch = 0 : i64, scratch_operands = 1 : i64, tpu.core_type = #tpu.core_type<tc>, window_params = [{transform_indices = @transform_0, window_bounds = array<i64: 128, 144>}, {transform_indices = @transform_1, window_bounds = array<i64: 144, 16>}, {transform_indices = @transform_2, window_bounds = array<i64: 1, 16>}, {transform_indices = @transform_3, window_bounds = array<i64: 1, 16>}, {transform_indices = @transform_4, window_bounds = array<i64: 128, 16>}]} {
    %c0_i32 = arith.constant 0 : i32
    %0 = arith.cmpi eq, %arg2, %c0_i32 : i32
    %1 = arith.extui %0 : i1 to i32
    %c0_i32_0 = arith.constant 0 : i32
    %2 = arith.cmpi ne, %1, %c0_i32_0 : i32
    scf.if %2 {
      %cst_10 = arith.constant 0.000000e+00 : f32
      %14 = vector.broadcast %cst_10 : f32 to vector<128x16xf32>
      %c0_11 = arith.constant 0 : index
      %c0_12 = arith.constant 0 : index
      %15 = vector.load %arg8[%c0_11, %c0_12] : memref<128x16xf32, #tpu.memory_space<vmem>>, vector<128x16xf32>
      tpu.vector_store %arg8[%c0_11, %c0_12], %14 {strides = array<i32>} : memref<128x16xf32, #tpu.memory_space<vmem>>, vector<128x16xf32>,
    } else {
    }
    %c0 = arith.constant 0 : index
    %c0_1 = arith.constant 0 : index
    %3 = vector.load %arg8[%c0, %c0_1] : memref<128x16xf32, #tpu.memory_space<vmem>>, vector<128x16xf32>
    %c0_2 = arith.constant 0 : index
    %c0_3 = arith.constant 0 : index
    %4 = vector.load %arg3[%c0_2, %c0_3] : memref<128x144xf32, #tpu.memory_space<vmem>>, vector<128x144xf32>
    %5 = arith.truncf %4 : vector<128x144xf32> to vector<128x144xbf16>
    %c0_4 = arith.constant 0 : index
    %c0_5 = arith.constant 0 : index
    %6 = vector.load %arg4[%c0_4, %c0_5] : memref<144x16xf32, #tpu.memory_space<vmem>>, vector<144x16xf32>
    %7 = arith.truncf %6 : vector<144x16xf32> to vector<144x16xbf16>
    %cst = arith.constant dense<0.000000e+00> : vector<128x16xf32>
    %8 = tpu.matmul %5, %7, %cst {dimension_numbers = #tpu.dot_dimension_numbers<[1], [0], [0], [1], [0, 0, 1, 1], [], []>} : vector<128x144xbf16>, vector<144x16xbf16>, vector<128x16xf32> -> vector<128x16xf32>
    %9 = arith.addf %3, %8 : vector<128x16xf32>
    %c0_6 = arith.constant 0 : index
    %c0_7 = arith.constant 0 : index
    %10 = vector.load %arg8[%c0_6, %c0_7] : memref<128x16xf32, #tpu.memory_space<vmem>>, vector<128x16xf32>
    tpu.vector_store %arg8[%c0_6, %c0_7], %9 {strides = array<i32>} : memref<128x16xf32, #tpu.memory_space<vmem>>, vector<128x16xf32>,
    %c0_i32_8 = arith.constant 0 : i32
    %11 = arith.cmpi eq, %arg2, %c0_i32_8 : i32
    %12 = arith.extui %11 : i1 to i32
    %c0_i32_9 = arith.constant 0 : i32
    %13 = arith.cmpi ne, %12, %c0_i32_9 : i32
    scf.if %13 {
      %c0_10 = arith.constant 0 : index
      %c0_11 = arith.constant 0 : index
      %14 = vector.load %arg8[%c0_10, %c0_11] : memref<128x16xf32, #tpu.memory_space<vmem>>, vector<128x16xf32>
      %c0_12 = arith.constant 0 : index
      %c0_13 = arith.constant 0 : index
      %15 = vector.load %arg5[%c0_12, %c0_13] : memref<1x16xf32, #tpu.memory_space<vmem>>, vector<1x16xf32>
      %16 = vector.broadcast %15 : vector<1x16xf32> to vector<128x16xf32>
      %17 = arith.mulf %14, %16 : vector<128x16xf32>
      %c0_14 = arith.constant 0 : index
      %c0_15 = arith.constant 0 : index
      %18 = vector.load %arg6[%c0_14, %c0_15] : memref<1x16xf32, #tpu.memory_space<vmem>>, vector<1x16xf32>
      %19 = vector.broadcast %18 : vector<1x16xf32> to vector<128x16xf32>
      %20 = arith.addf %17, %19 : vector<128x16xf32>
      %cst_16 = arith.constant 0.000000e+00 : f32
      %21 = vector.broadcast %cst_16 : f32 to vector<128x16xf32>
      %22 = arith.maximumf %20, %21 : vector<128x16xf32>
      %c0_17 = arith.constant 0 : index
      %c0_18 = arith.constant 0 : index
      %23 = vector.load %arg7[%c0_17, %c0_18] : memref<128x16xf32, #tpu.memory_space<vmem>>, vector<128x16xf32>
      tpu.vector_store %arg7[%c0_17, %c0_18], %22 {strides = array<i32>} : memref<128x16xf32, #tpu.memory_space<vmem>>, vector<128x16xf32>,
    } else {
    }
    return
  }
  func.func @transform_0(%arg0: i32, %arg1: i32, %arg2: i32) -> (i32, i32) {
    %c0_i32 = arith.constant 0 : i32
    return %arg0, %arg2 : i32, i32
  }
  func.func @transform_1(%arg0: i32, %arg1: i32, %arg2: i32) -> (i32, i32) {
    %c0_i32 = arith.constant 0 : i32
    return %arg2, %arg1 : i32, i32
  }
  func.func @transform_2(%arg0: i32, %arg1: i32, %arg2: i32) -> (i32, i32) {
    %c0_i32 = arith.constant 0 : i32
    %c0_i32_0 = arith.constant 0 : i32
    return %c0_i32, %arg1 : i32, i32
  }
  func.func @transform_3(%arg0: i32, %arg1: i32, %arg2: i32) -> (i32, i32) {
    %c0_i32 = arith.constant 0 : i32
    %c0_i32_0 = arith.constant 0 : i32
    return %c0_i32, %arg1 : i32, i32
  }
  func.func @transform_4(%arg0: i32, %arg1: i32, %arg2: i32) -> (i32, i32) {
    %c0_i32 = arith.constant 0 : i32
    return %arg0, %arg1 : i32, i32
  }
}

module attributes {stable_mosaic.version = 11 : i64} {
  func.func @_matmul_affine_act_kernel(%arg0: i32, %arg1: i32, %arg2: i32, %arg3: memref<32x144xf32, #tpu.memory_space<vmem>>, %arg4: memref<144x32xf32, #tpu.memory_space<vmem>>, %arg5: memref<1x32xf32, #tpu.memory_space<vmem>>, %arg6: memref<1x32xf32, #tpu.memory_space<vmem>>, %arg7: memref<32x32xf32, #tpu.memory_space<vmem>>, %arg8: memref<32x32xf32, #tpu.memory_space<vmem>>) attributes {dimension_semantics = [#tpu.dimension_semantics<parallel>, #tpu.dimension_semantics<parallel>, #tpu.dimension_semantics<arbitrary>], iteration_bounds = array<i64: 1, 1, 1>, scalar_prefetch = 0 : i64, scratch_operands = 1 : i64, tpu.core_type = #tpu.core_type<tc>, window_params = [{transform_indices = @transform_0, window_bounds = array<i64: 32, 144>}, {transform_indices = @transform_1, window_bounds = array<i64: 144, 32>}, {transform_indices = @transform_2, window_bounds = array<i64: 1, 32>}, {transform_indices = @transform_3, window_bounds = array<i64: 1, 32>}, {transform_indices = @transform_4, window_bounds = array<i64: 32, 32>}]} {
    %c0_i32 = arith.constant 0 : i32
    %0 = arith.cmpi eq, %arg2, %c0_i32 : i32
    %1 = arith.extui %0 : i1 to i32
    %c0_i32_0 = arith.constant 0 : i32
    %2 = arith.cmpi ne, %1, %c0_i32_0 : i32
    scf.if %2 {
      %cst_10 = arith.constant 0.000000e+00 : f32
      %14 = vector.broadcast %cst_10 : f32 to vector<32x32xf32>
      %c0_11 = arith.constant 0 : index
      %c0_12 = arith.constant 0 : index
      %15 = vector.load %arg8[%c0_11, %c0_12] : memref<32x32xf32, #tpu.memory_space<vmem>>, vector<32x32xf32>
      tpu.vector_store %arg8[%c0_11, %c0_12], %14 {strides = array<i32>} : memref<32x32xf32, #tpu.memory_space<vmem>>, vector<32x32xf32>,
    } else {
    }
    %c0 = arith.constant 0 : index
    %c0_1 = arith.constant 0 : index
    %3 = vector.load %arg8[%c0, %c0_1] : memref<32x32xf32, #tpu.memory_space<vmem>>, vector<32x32xf32>
    %c0_2 = arith.constant 0 : index
    %c0_3 = arith.constant 0 : index
    %4 = vector.load %arg3[%c0_2, %c0_3] : memref<32x144xf32, #tpu.memory_space<vmem>>, vector<32x144xf32>
    %5 = arith.truncf %4 : vector<32x144xf32> to vector<32x144xbf16>
    %c0_4 = arith.constant 0 : index
    %c0_5 = arith.constant 0 : index
    %6 = vector.load %arg4[%c0_4, %c0_5] : memref<144x32xf32, #tpu.memory_space<vmem>>, vector<144x32xf32>
    %7 = arith.truncf %6 : vector<144x32xf32> to vector<144x32xbf16>
    %cst = arith.constant dense<0.000000e+00> : vector<32x32xf32>
    %8 = tpu.matmul %5, %7, %cst {dimension_numbers = #tpu.dot_dimension_numbers<[1], [0], [0], [1], [0, 0, 1, 1], [], []>} : vector<32x144xbf16>, vector<144x32xbf16>, vector<32x32xf32> -> vector<32x32xf32>
    %9 = arith.addf %3, %8 : vector<32x32xf32>
    %c0_6 = arith.constant 0 : index
    %c0_7 = arith.constant 0 : index
    %10 = vector.load %arg8[%c0_6, %c0_7] : memref<32x32xf32, #tpu.memory_space<vmem>>, vector<32x32xf32>
    tpu.vector_store %arg8[%c0_6, %c0_7], %9 {strides = array<i32>} : memref<32x32xf32, #tpu.memory_space<vmem>>, vector<32x32xf32>,
    %c0_i32_8 = arith.constant 0 : i32
    %11 = arith.cmpi eq, %arg2, %c0_i32_8 : i32
    %12 = arith.extui %11 : i1 to i32
    %c0_i32_9 = arith.constant 0 : i32
    %13 = arith.cmpi ne, %12, %c0_i32_9 : i32
    scf.if %13 {
      %c0_10 = arith.constant 0 : index
      %c0_11 = arith.constant 0 : index
      %14 = vector.load %arg8[%c0_10, %c0_11] : memref<32x32xf32, #tpu.memory_space<vmem>>, vector<32x32xf32>
      %c0_12 = arith.constant 0 : index
      %c0_13 = arith.constant 0 : index
      %15 = vector.load %arg5[%c0_12, %c0_13] : memref<1x32xf32, #tpu.memory_space<vmem>>, vector<1x32xf32>
      %16 = vector.broadcast %15 : vector<1x32xf32> to vector<32x32xf32>
      %17 = arith.mulf %14, %16 : vector<32x32xf32>
      %c0_14 = arith.constant 0 : index
      %c0_15 = arith.constant 0 : index
      %18 = vector.load %arg6[%c0_14, %c0_15] : memref<1x32xf32, #tpu.memory_space<vmem>>, vector<1x32xf32>
      %19 = vector.broadcast %18 : vector<1x32xf32> to vector<32x32xf32>
      %20 = arith.addf %17, %19 : vector<32x32xf32>
      %cst_16 = arith.constant 0.000000e+00 : f32
      %21 = vector.broadcast %cst_16 : f32 to vector<32x32xf32>
      %22 = arith.maximumf %20, %21 : vector<32x32xf32>
      %c0_17 = arith.constant 0 : index
      %c0_18 = arith.constant 0 : index
      %23 = vector.load %arg7[%c0_17, %c0_18] : memref<32x32xf32, #tpu.memory_space<vmem>>, vector<32x32xf32>
      tpu.vector_store %arg7[%c0_17, %c0_18], %22 {strides = array<i32>} : memref<32x32xf32, #tpu.memory_space<vmem>>, vector<32x32xf32>,
    } else {
    }
    return
  }
  func.func @transform_0(%arg0: i32, %arg1: i32, %arg2: i32) -> (i32, i32) {
    %c0_i32 = arith.constant 0 : i32
    return %arg0, %arg2 : i32, i32
  }
  func.func @transform_1(%arg0: i32, %arg1: i32, %arg2: i32) -> (i32, i32) {
    %c0_i32 = arith.constant 0 : i32
    return %arg2, %arg1 : i32, i32
  }
  func.func @transform_2(%arg0: i32, %arg1: i32, %arg2: i32) -> (i32, i32) {
    %c0_i32 = arith.constant 0 : i32
    %c0_i32_0 = arith.constant 0 : i32
    return %c0_i32, %arg1 : i32, i32
  }
  func.func @transform_3(%arg0: i32, %arg1: i32, %arg2: i32) -> (i32, i32) {
    %c0_i32 = arith.constant 0 : i32
    %c0_i32_0 = arith.constant 0 : i32
    return %c0_i32, %arg1 : i32, i32
  }
  func.func @transform_4(%arg0: i32, %arg1: i32, %arg2: i32) -> (i32, i32) {
    %c0_i32 = arith.constant 0 : i32
    return %arg0, %arg1 : i32, i32
  }
}

module attributes {stable_mosaic.version = 11 : i64} {
  func.func @_matmul_affine_act_kernel(%arg0: i32, %arg1: i32, %arg2: i32, %arg3: memref<128x16xf32, #tpu.memory_space<vmem>>, %arg4: memref<16x8xf32, #tpu.memory_space<vmem>>, %arg5: memref<1x8xf32, #tpu.memory_space<vmem>>, %arg6: memref<1x8xf32, #tpu.memory_space<vmem>>, %arg7: memref<128x8xf32, #tpu.memory_space<vmem>>, %arg8: memref<128x8xf32, #tpu.memory_space<vmem>>) attributes {dimension_semantics = [#tpu.dimension_semantics<parallel>, #tpu.dimension_semantics<parallel>, #tpu.dimension_semantics<arbitrary>], iteration_bounds = array<i64: 1, 1, 1>, scalar_prefetch = 0 : i64, scratch_operands = 1 : i64, tpu.core_type = #tpu.core_type<tc>, window_params = [{transform_indices = @transform_0, window_bounds = array<i64: 128, 16>}, {transform_indices = @transform_1, window_bounds = array<i64: 16, 8>}, {transform_indices = @transform_2, window_bounds = array<i64: 1, 8>}, {transform_indices = @transform_3, window_bounds = array<i64: 1, 8>}, {transform_indices = @transform_4, window_bounds = array<i64: 128, 8>}]} {
    %c0_i32 = arith.constant 0 : i32
    %0 = arith.cmpi eq, %arg2, %c0_i32 : i32
    %1 = arith.extui %0 : i1 to i32
    %c0_i32_0 = arith.constant 0 : i32
    %2 = arith.cmpi ne, %1, %c0_i32_0 : i32
    scf.if %2 {
      %cst_10 = arith.constant 0.000000e+00 : f32
      %14 = vector.broadcast %cst_10 : f32 to vector<128x8xf32>
      %c0_11 = arith.constant 0 : index
      %c0_12 = arith.constant 0 : index
      %15 = vector.load %arg8[%c0_11, %c0_12] : memref<128x8xf32, #tpu.memory_space<vmem>>, vector<128x8xf32>
      tpu.vector_store %arg8[%c0_11, %c0_12], %14 {strides = array<i32>} : memref<128x8xf32, #tpu.memory_space<vmem>>, vector<128x8xf32>,
    } else {
    }
    %c0 = arith.constant 0 : index
    %c0_1 = arith.constant 0 : index
    %3 = vector.load %arg8[%c0, %c0_1] : memref<128x8xf32, #tpu.memory_space<vmem>>, vector<128x8xf32>
    %c0_2 = arith.constant 0 : index
    %c0_3 = arith.constant 0 : index
    %4 = vector.load %arg3[%c0_2, %c0_3] : memref<128x16xf32, #tpu.memory_space<vmem>>, vector<128x16xf32>
    %5 = arith.truncf %4 : vector<128x16xf32> to vector<128x16xbf16>
    %c0_4 = arith.constant 0 : index
    %c0_5 = arith.constant 0 : index
    %6 = vector.load %arg4[%c0_4, %c0_5] : memref<16x8xf32, #tpu.memory_space<vmem>>, vector<16x8xf32>
    %7 = arith.truncf %6 : vector<16x8xf32> to vector<16x8xbf16>
    %cst = arith.constant dense<0.000000e+00> : vector<128x8xf32>
    %8 = tpu.matmul %5, %7, %cst {dimension_numbers = #tpu.dot_dimension_numbers<[1], [0], [0], [1], [0, 0, 1, 1], [], []>} : vector<128x16xbf16>, vector<16x8xbf16>, vector<128x8xf32> -> vector<128x8xf32>
    %9 = arith.addf %3, %8 : vector<128x8xf32>
    %c0_6 = arith.constant 0 : index
    %c0_7 = arith.constant 0 : index
    %10 = vector.load %arg8[%c0_6, %c0_7] : memref<128x8xf32, #tpu.memory_space<vmem>>, vector<128x8xf32>
    tpu.vector_store %arg8[%c0_6, %c0_7], %9 {strides = array<i32>} : memref<128x8xf32, #tpu.memory_space<vmem>>, vector<128x8xf32>,
    %c0_i32_8 = arith.constant 0 : i32
    %11 = arith.cmpi eq, %arg2, %c0_i32_8 : i32
    %12 = arith.extui %11 : i1 to i32
    %c0_i32_9 = arith.constant 0 : i32
    %13 = arith.cmpi ne, %12, %c0_i32_9 : i32
    scf.if %13 {
      %c0_10 = arith.constant 0 : index
      %c0_11 = arith.constant 0 : index
      %14 = vector.load %arg8[%c0_10, %c0_11] : memref<128x8xf32, #tpu.memory_space<vmem>>, vector<128x8xf32>
      %c0_12 = arith.constant 0 : index
      %c0_13 = arith.constant 0 : index
      %15 = vector.load %arg5[%c0_12, %c0_13] : memref<1x8xf32, #tpu.memory_space<vmem>>, vector<1x8xf32>
      %16 = vector.broadcast %15 : vector<1x8xf32> to vector<128x8xf32>
      %17 = arith.mulf %14, %16 : vector<128x8xf32>
      %c0_14 = arith.constant 0 : index
      %c0_15 = arith.constant 0 : index
      %18 = vector.load %arg6[%c0_14, %c0_15] : memref<1x8xf32, #tpu.memory_space<vmem>>, vector<1x8xf32>
      %19 = vector.broadcast %18 : vector<1x8xf32> to vector<128x8xf32>
      %20 = arith.addf %17, %19 : vector<128x8xf32>
      %cst_16 = arith.constant 0.000000e+00 : f32
      %21 = vector.broadcast %cst_16 : f32 to vector<128x8xf32>
      %22 = arith.maximumf %20, %21 : vector<128x8xf32>
      %c0_17 = arith.constant 0 : index
      %c0_18 = arith.constant 0 : index
      %23 = vector.load %arg7[%c0_17, %c0_18] : memref<128x8xf32, #tpu.memory_space<vmem>>, vector<128x8xf32>
      tpu.vector_store %arg7[%c0_17, %c0_18], %22 {strides = array<i32>} : memref<128x8xf32, #tpu.memory_space<vmem>>, vector<128x8xf32>,
    } else {
    }
    return
  }
  func.func @transform_0(%arg0: i32, %arg1: i32, %arg2: i32) -> (i32, i32) {
    %c0_i32 = arith.constant 0 : i32
    return %arg0, %arg2 : i32, i32
  }
  func.func @transform_1(%arg0: i32, %arg1: i32, %arg2: i32) -> (i32, i32) {
    %c0_i32 = arith.constant 0 : i32
    return %arg2, %arg1 : i32, i32
  }
  func.func @transform_2(%arg0: i32, %arg1: i32, %arg2: i32) -> (i32, i32) {
    %c0_i32 = arith.constant 0 : i32
    %c0_i32_0 = arith.constant 0 : i32
    return %c0_i32, %arg1 : i32, i32
  }
  func.func @transform_3(%arg0: i32, %arg1: i32, %arg2: i32) -> (i32, i32) {
    %c0_i32 = arith.constant 0 : i32
    %c0_i32_0 = arith.constant 0 : i32
    return %c0_i32, %arg1 : i32, i32
  }
  func.func @transform_4(%arg0: i32, %arg1: i32, %arg2: i32) -> (i32, i32) {
    %c0_i32 = arith.constant 0 : i32
    return %arg0, %arg1 : i32, i32
  }
}

module attributes {stable_mosaic.version = 11 : i64} {
  func.func @_matmul_affine_act_kernel(%arg0: i32, %arg1: i32, %arg2: i32, %arg3: memref<8x288xf32, #tpu.memory_space<vmem>>, %arg4: memref<288x64xf32, #tpu.memory_space<vmem>>, %arg5: memref<1x64xf32, #tpu.memory_space<vmem>>, %arg6: memref<1x64xf32, #tpu.memory_space<vmem>>, %arg7: memref<8x64xf32, #tpu.memory_space<vmem>>, %arg8: memref<8x64xf32, #tpu.memory_space<vmem>>) attributes {dimension_semantics = [#tpu.dimension_semantics<parallel>, #tpu.dimension_semantics<parallel>, #tpu.dimension_semantics<arbitrary>], iteration_bounds = array<i64: 1, 1, 1>, scalar_prefetch = 0 : i64, scratch_operands = 1 : i64, tpu.core_type = #tpu.core_type<tc>, window_params = [{transform_indices = @transform_0, window_bounds = array<i64: 8, 288>}, {transform_indices = @transform_1, window_bounds = array<i64: 288, 64>}, {transform_indices = @transform_2, window_bounds = array<i64: 1, 64>}, {transform_indices = @transform_3, window_bounds = array<i64: 1, 64>}, {transform_indices = @transform_4, window_bounds = array<i64: 8, 64>}]} {
    %c0_i32 = arith.constant 0 : i32
    %0 = arith.cmpi eq, %arg2, %c0_i32 : i32
    %1 = arith.extui %0 : i1 to i32
    %c0_i32_0 = arith.constant 0 : i32
    %2 = arith.cmpi ne, %1, %c0_i32_0 : i32
    scf.if %2 {
      %cst_10 = arith.constant 0.000000e+00 : f32
      %14 = vector.broadcast %cst_10 : f32 to vector<8x64xf32>
      %c0_11 = arith.constant 0 : index
      %c0_12 = arith.constant 0 : index
      %15 = vector.load %arg8[%c0_11, %c0_12] : memref<8x64xf32, #tpu.memory_space<vmem>>, vector<8x64xf32>
      tpu.vector_store %arg8[%c0_11, %c0_12], %14 {strides = array<i32>} : memref<8x64xf32, #tpu.memory_space<vmem>>, vector<8x64xf32>,
    } else {
    }
    %c0 = arith.constant 0 : index
    %c0_1 = arith.constant 0 : index
    %3 = vector.load %arg8[%c0, %c0_1] : memref<8x64xf32, #tpu.memory_space<vmem>>, vector<8x64xf32>
    %c0_2 = arith.constant 0 : index
    %c0_3 = arith.constant 0 : index
    %4 = vector.load %arg3[%c0_2, %c0_3] : memref<8x288xf32, #tpu.memory_space<vmem>>, vector<8x288xf32>
    %5 = arith.truncf %4 : vector<8x288xf32> to vector<8x288xbf16>
    %c0_4 = arith.constant 0 : index
    %c0_5 = arith.constant 0 : index
    %6 = vector.load %arg4[%c0_4, %c0_5] : memref<288x64xf32, #tpu.memory_space<vmem>>, vector<288x64xf32>
    %7 = arith.truncf %6 : vector<288x64xf32> to vector<288x64xbf16>
    %cst = arith.constant dense<0.000000e+00> : vector<8x64xf32>
    %8 = tpu.matmul %5, %7, %cst {dimension_numbers = #tpu.dot_dimension_numbers<[1], [0], [0], [1], [0, 0, 1, 1], [], []>} : vector<8x288xbf16>, vector<288x64xbf16>, vector<8x64xf32> -> vector<8x64xf32>
    %9 = arith.addf %3, %8 : vector<8x64xf32>
    %c0_6 = arith.constant 0 : index
    %c0_7 = arith.constant 0 : index
    %10 = vector.load %arg8[%c0_6, %c0_7] : memref<8x64xf32, #tpu.memory_space<vmem>>, vector<8x64xf32>
    tpu.vector_store %arg8[%c0_6, %c0_7], %9 {strides = array<i32>} : memref<8x64xf32, #tpu.memory_space<vmem>>, vector<8x64xf32>,
    %c0_i32_8 = arith.constant 0 : i32
    %11 = arith.cmpi eq, %arg2, %c0_i32_8 : i32
    %12 = arith.extui %11 : i1 to i32
    %c0_i32_9 = arith.constant 0 : i32
    %13 = arith.cmpi ne, %12, %c0_i32_9 : i32
    scf.if %13 {
      %c0_10 = arith.constant 0 : index
      %c0_11 = arith.constant 0 : index
      %14 = vector.load %arg8[%c0_10, %c0_11] : memref<8x64xf32, #tpu.memory_space<vmem>>, vector<8x64xf32>
      %c0_12 = arith.constant 0 : index
      %c0_13 = arith.constant 0 : index
      %15 = vector.load %arg5[%c0_12, %c0_13] : memref<1x64xf32, #tpu.memory_space<vmem>>, vector<1x64xf32>
      %16 = vector.broadcast %15 : vector<1x64xf32> to vector<8x64xf32>
      %17 = arith.mulf %14, %16 : vector<8x64xf32>
      %c0_14 = arith.constant 0 : index
      %c0_15 = arith.constant 0 : index
      %18 = vector.load %arg6[%c0_14, %c0_15] : memref<1x64xf32, #tpu.memory_space<vmem>>, vector<1x64xf32>
      %19 = vector.broadcast %18 : vector<1x64xf32> to vector<8x64xf32>
      %20 = arith.addf %17, %19 : vector<8x64xf32>
      %cst_16 = arith.constant 0.000000e+00 : f32
      %21 = vector.broadcast %cst_16 : f32 to vector<8x64xf32>
      %22 = arith.maximumf %20, %21 : vector<8x64xf32>
      %c0_17 = arith.constant 0 : index
      %c0_18 = arith.constant 0 : index
      %23 = vector.load %arg7[%c0_17, %c0_18] : memref<8x64xf32, #tpu.memory_space<vmem>>, vector<8x64xf32>
      tpu.vector_store %arg7[%c0_17, %c0_18], %22 {strides = array<i32>} : memref<8x64xf32, #tpu.memory_space<vmem>>, vector<8x64xf32>,
    } else {
    }
    return
  }
  func.func @transform_0(%arg0: i32, %arg1: i32, %arg2: i32) -> (i32, i32) {
    %c0_i32 = arith.constant 0 : i32
    return %arg0, %arg2 : i32, i32
  }
  func.func @transform_1(%arg0: i32, %arg1: i32, %arg2: i32) -> (i32, i32) {
    %c0_i32 = arith.constant 0 : i32
    return %arg2, %arg1 : i32, i32
  }
  func.func @transform_2(%arg0: i32, %arg1: i32, %arg2: i32) -> (i32, i32) {
    %c0_i32 = arith.constant 0 : i32
    %c0_i32_0 = arith.constant 0 : i32
    return %c0_i32, %arg1 : i32, i32
  }
  func.func @transform_3(%arg0: i32, %arg1: i32, %arg2: i32) -> (i32, i32) {
    %c0_i32 = arith.constant 0 : i32
    %c0_i32_0 = arith.constant 0 : i32
    return %c0_i32, %arg1 : i32, i32
  }
  func.func @transform_4(%arg0: i32, %arg1: i32, %arg2: i32) -> (i32, i32) {
    %c0_i32 = arith.constant 0 : i32
    return %arg0, %arg1 : i32, i32
  }
}

module attributes {stable_mosaic.version = 11 : i64} {
  func.func @_matmul_affine_act_kernel(%arg0: i32, %arg1: i32, %arg2: i32, %arg3: memref<8x576xf32, #tpu.memory_space<vmem>>, %arg4: memref<576x32xf32, #tpu.memory_space<vmem>>, %arg5: memref<1x32xf32, #tpu.memory_space<vmem>>, %arg6: memref<1x32xf32, #tpu.memory_space<vmem>>, %arg7: memref<8x32xf32, #tpu.memory_space<vmem>>, %arg8: memref<8x32xf32, #tpu.memory_space<vmem>>) attributes {dimension_semantics = [#tpu.dimension_semantics<parallel>, #tpu.dimension_semantics<parallel>, #tpu.dimension_semantics<arbitrary>], iteration_bounds = array<i64: 1, 1, 1>, scalar_prefetch = 0 : i64, scratch_operands = 1 : i64, tpu.core_type = #tpu.core_type<tc>, window_params = [{transform_indices = @transform_0, window_bounds = array<i64: 8, 576>}, {transform_indices = @transform_1, window_bounds = array<i64: 576, 32>}, {transform_indices = @transform_2, window_bounds = array<i64: 1, 32>}, {transform_indices = @transform_3, window_bounds = array<i64: 1, 32>}, {transform_indices = @transform_4, window_bounds = array<i64: 8, 32>}]} {
    %c0_i32 = arith.constant 0 : i32
    %0 = arith.cmpi eq, %arg2, %c0_i32 : i32
    %1 = arith.extui %0 : i1 to i32
    %c0_i32_0 = arith.constant 0 : i32
    %2 = arith.cmpi ne, %1, %c0_i32_0 : i32
    scf.if %2 {
      %cst_10 = arith.constant 0.000000e+00 : f32
      %14 = vector.broadcast %cst_10 : f32 to vector<8x32xf32>
      %c0_11 = arith.constant 0 : index
      %c0_12 = arith.constant 0 : index
      %15 = vector.load %arg8[%c0_11, %c0_12] : memref<8x32xf32, #tpu.memory_space<vmem>>, vector<8x32xf32>
      tpu.vector_store %arg8[%c0_11, %c0_12], %14 {strides = array<i32>} : memref<8x32xf32, #tpu.memory_space<vmem>>, vector<8x32xf32>,
    } else {
    }
    %c0 = arith.constant 0 : index
    %c0_1 = arith.constant 0 : index
    %3 = vector.load %arg8[%c0, %c0_1] : memref<8x32xf32, #tpu.memory_space<vmem>>, vector<8x32xf32>
    %c0_2 = arith.constant 0 : index
    %c0_3 = arith.constant 0 : index
    %4 = vector.load %arg3[%c0_2, %c0_3] : memref<8x576xf32, #tpu.memory_space<vmem>>, vector<8x576xf32>
    %5 = arith.truncf %4 : vector<8x576xf32> to vector<8x576xbf16>
    %c0_4 = arith.constant 0 : index
    %c0_5 = arith.constant 0 : index
    %6 = vector.load %arg4[%c0_4, %c0_5] : memref<576x32xf32, #tpu.memory_space<vmem>>, vector<576x32xf32>
    %7 = arith.truncf %6 : vector<576x32xf32> to vector<576x32xbf16>
    %cst = arith.constant dense<0.000000e+00> : vector<8x32xf32>
    %8 = tpu.matmul %5, %7, %cst {dimension_numbers = #tpu.dot_dimension_numbers<[1], [0], [0], [1], [0, 0, 1, 1], [], []>} : vector<8x576xbf16>, vector<576x32xbf16>, vector<8x32xf32> -> vector<8x32xf32>
    %9 = arith.addf %3, %8 : vector<8x32xf32>
    %c0_6 = arith.constant 0 : index
    %c0_7 = arith.constant 0 : index
    %10 = vector.load %arg8[%c0_6, %c0_7] : memref<8x32xf32, #tpu.memory_space<vmem>>, vector<8x32xf32>
    tpu.vector_store %arg8[%c0_6, %c0_7], %9 {strides = array<i32>} : memref<8x32xf32, #tpu.memory_space<vmem>>, vector<8x32xf32>,
    %c0_i32_8 = arith.constant 0 : i32
    %11 = arith.cmpi eq, %arg2, %c0_i32_8 : i32
    %12 = arith.extui %11 : i1 to i32
    %c0_i32_9 = arith.constant 0 : i32
    %13 = arith.cmpi ne, %12, %c0_i32_9 : i32
    scf.if %13 {
      %c0_10 = arith.constant 0 : index
      %c0_11 = arith.constant 0 : index
      %14 = vector.load %arg8[%c0_10, %c0_11] : memref<8x32xf32, #tpu.memory_space<vmem>>, vector<8x32xf32>
      %c0_12 = arith.constant 0 : index
      %c0_13 = arith.constant 0 : index
      %15 = vector.load %arg5[%c0_12, %c0_13] : memref<1x32xf32, #tpu.memory_space<vmem>>, vector<1x32xf32>
      %16 = vector.broadcast %15 : vector<1x32xf32> to vector<8x32xf32>
      %17 = arith.mulf %14, %16 : vector<8x32xf32>
      %c0_14 = arith.constant 0 : index
      %c0_15 = arith.constant 0 : index
      %18 = vector.load %arg6[%c0_14, %c0_15] : memref<1x32xf32, #tpu.memory_space<vmem>>, vector<1x32xf32>
      %19 = vector.broadcast %18 : vector<1x32xf32> to vector<8x32xf32>
      %20 = arith.addf %17, %19 : vector<8x32xf32>
      %cst_16 = arith.constant 0.000000e+00 : f32
      %21 = vector.broadcast %cst_16 : f32 to vector<8x32xf32>
      %22 = arith.maximumf %20, %21 : vector<8x32xf32>
      %c0_17 = arith.constant 0 : index
      %c0_18 = arith.constant 0 : index
      %23 = vector.load %arg7[%c0_17, %c0_18] : memref<8x32xf32, #tpu.memory_space<vmem>>, vector<8x32xf32>
      tpu.vector_store %arg7[%c0_17, %c0_18], %22 {strides = array<i32>} : memref<8x32xf32, #tpu.memory_space<vmem>>, vector<8x32xf32>,
    } else {
    }
    return
  }
  func.func @transform_0(%arg0: i32, %arg1: i32, %arg2: i32) -> (i32, i32) {
    %c0_i32 = arith.constant 0 : i32
    return %arg0, %arg2 : i32, i32
  }
  func.func @transform_1(%arg0: i32, %arg1: i32, %arg2: i32) -> (i32, i32) {
    %c0_i32 = arith.constant 0 : i32
    return %arg2, %arg1 : i32, i32
  }
  func.func @transform_2(%arg0: i32, %arg1: i32, %arg2: i32) -> (i32, i32) {
    %c0_i32 = arith.constant 0 : i32
    %c0_i32_0 = arith.constant 0 : i32
    return %c0_i32, %arg1 : i32, i32
  }
  func.func @transform_3(%arg0: i32, %arg1: i32, %arg2: i32) -> (i32, i32) {
    %c0_i32 = arith.constant 0 : i32
    %c0_i32_0 = arith.constant 0 : i32
    return %c0_i32, %arg1 : i32, i32
  }
  func.func @transform_4(%arg0: i32, %arg1: i32, %arg2: i32) -> (i32, i32) {
    %c0_i32 = arith.constant 0 : i32
    return %arg0, %arg1 : i32, i32
  }
}

module attributes {stable_mosaic.version = 11 : i64} {
  func.func @_matmul_affine_act_kernel(%arg0: i32, %arg1: i32, %arg2: i32, %arg3: memref<8x64xf32, #tpu.memory_space<vmem>>, %arg4: memref<64x32xf32, #tpu.memory_space<vmem>>, %arg5: memref<1x32xf32, #tpu.memory_space<vmem>>, %arg6: memref<1x32xf32, #tpu.memory_space<vmem>>, %arg7: memref<8x32xf32, #tpu.memory_space<vmem>>, %arg8: memref<8x32xf32, #tpu.memory_space<vmem>>) attributes {dimension_semantics = [#tpu.dimension_semantics<parallel>, #tpu.dimension_semantics<parallel>, #tpu.dimension_semantics<arbitrary>], iteration_bounds = array<i64: 1, 1, 1>, scalar_prefetch = 0 : i64, scratch_operands = 1 : i64, tpu.core_type = #tpu.core_type<tc>, window_params = [{transform_indices = @transform_0, window_bounds = array<i64: 8, 64>}, {transform_indices = @transform_1, window_bounds = array<i64: 64, 32>}, {transform_indices = @transform_2, window_bounds = array<i64: 1, 32>}, {transform_indices = @transform_3, window_bounds = array<i64: 1, 32>}, {transform_indices = @transform_4, window_bounds = array<i64: 8, 32>}]} {
    %c0_i32 = arith.constant 0 : i32
    %0 = arith.cmpi eq, %arg2, %c0_i32 : i32
    %1 = arith.extui %0 : i1 to i32
    %c0_i32_0 = arith.constant 0 : i32
    %2 = arith.cmpi ne, %1, %c0_i32_0 : i32
    scf.if %2 {
      %cst_10 = arith.constant 0.000000e+00 : f32
      %14 = vector.broadcast %cst_10 : f32 to vector<8x32xf32>
      %c0_11 = arith.constant 0 : index
      %c0_12 = arith.constant 0 : index
      %15 = vector.load %arg8[%c0_11, %c0_12] : memref<8x32xf32, #tpu.memory_space<vmem>>, vector<8x32xf32>
      tpu.vector_store %arg8[%c0_11, %c0_12], %14 {strides = array<i32>} : memref<8x32xf32, #tpu.memory_space<vmem>>, vector<8x32xf32>,
    } else {
    }
    %c0 = arith.constant 0 : index
    %c0_1 = arith.constant 0 : index
    %3 = vector.load %arg8[%c0, %c0_1] : memref<8x32xf32, #tpu.memory_space<vmem>>, vector<8x32xf32>
    %c0_2 = arith.constant 0 : index
    %c0_3 = arith.constant 0 : index
    %4 = vector.load %arg3[%c0_2, %c0_3] : memref<8x64xf32, #tpu.memory_space<vmem>>, vector<8x64xf32>
    %5 = arith.truncf %4 : vector<8x64xf32> to vector<8x64xbf16>
    %c0_4 = arith.constant 0 : index
    %c0_5 = arith.constant 0 : index
    %6 = vector.load %arg4[%c0_4, %c0_5] : memref<64x32xf32, #tpu.memory_space<vmem>>, vector<64x32xf32>
    %7 = arith.truncf %6 : vector<64x32xf32> to vector<64x32xbf16>
    %cst = arith.constant dense<0.000000e+00> : vector<8x32xf32>
    %8 = tpu.matmul %5, %7, %cst {dimension_numbers = #tpu.dot_dimension_numbers<[1], [0], [0], [1], [0, 0, 1, 1], [], []>} : vector<8x64xbf16>, vector<64x32xbf16>, vector<8x32xf32> -> vector<8x32xf32>
    %9 = arith.addf %3, %8 : vector<8x32xf32>
    %c0_6 = arith.constant 0 : index
    %c0_7 = arith.constant 0 : index
    %10 = vector.load %arg8[%c0_6, %c0_7] : memref<8x32xf32, #tpu.memory_space<vmem>>, vector<8x32xf32>
    tpu.vector_store %arg8[%c0_6, %c0_7], %9 {strides = array<i32>} : memref<8x32xf32, #tpu.memory_space<vmem>>, vector<8x32xf32>,
    %c0_i32_8 = arith.constant 0 : i32
    %11 = arith.cmpi eq, %arg2, %c0_i32_8 : i32
    %12 = arith.extui %11 : i1 to i32
    %c0_i32_9 = arith.constant 0 : i32
    %13 = arith.cmpi ne, %12, %c0_i32_9 : i32
    scf.if %13 {
      %c0_10 = arith.constant 0 : index
      %c0_11 = arith.constant 0 : index
      %14 = vector.load %arg8[%c0_10, %c0_11] : memref<8x32xf32, #tpu.memory_space<vmem>>, vector<8x32xf32>
      %c0_12 = arith.constant 0 : index
      %c0_13 = arith.constant 0 : index
      %15 = vector.load %arg5[%c0_12, %c0_13] : memref<1x32xf32, #tpu.memory_space<vmem>>, vector<1x32xf32>
      %16 = vector.broadcast %15 : vector<1x32xf32> to vector<8x32xf32>
      %17 = arith.mulf %14, %16 : vector<8x32xf32>
      %c0_14 = arith.constant 0 : index
      %c0_15 = arith.constant 0 : index
      %18 = vector.load %arg6[%c0_14, %c0_15] : memref<1x32xf32, #tpu.memory_space<vmem>>, vector<1x32xf32>
      %19 = vector.broadcast %18 : vector<1x32xf32> to vector<8x32xf32>
      %20 = arith.addf %17, %19 : vector<8x32xf32>
      %cst_16 = arith.constant 0.000000e+00 : f32
      %21 = vector.broadcast %cst_16 : f32 to vector<8x32xf32>
      %22 = arith.maximumf %20, %21 : vector<8x32xf32>
      %c0_17 = arith.constant 0 : index
      %c0_18 = arith.constant 0 : index
      %23 = vector.load %arg7[%c0_17, %c0_18] : memref<8x32xf32, #tpu.memory_space<vmem>>, vector<8x32xf32>
      tpu.vector_store %arg7[%c0_17, %c0_18], %22 {strides = array<i32>} : memref<8x32xf32, #tpu.memory_space<vmem>>, vector<8x32xf32>,
    } else {
    }
    return
  }
  func.func @transform_0(%arg0: i32, %arg1: i32, %arg2: i32) -> (i32, i32) {
    %c0_i32 = arith.constant 0 : i32
    return %arg0, %arg2 : i32, i32
  }
  func.func @transform_1(%arg0: i32, %arg1: i32, %arg2: i32) -> (i32, i32) {
    %c0_i32 = arith.constant 0 : i32
    return %arg2, %arg1 : i32, i32
  }
  func.func @transform_2(%arg0: i32, %arg1: i32, %arg2: i32) -> (i32, i32) {
    %c0_i32 = arith.constant 0 : i32
    %c0_i32_0 = arith.constant 0 : i32
    return %c0_i32, %arg1 : i32, i32
  }
  func.func @transform_3(%arg0: i32, %arg1: i32, %arg2: i32) -> (i32, i32) {
    %c0_i32 = arith.constant 0 : i32
    %c0_i32_0 = arith.constant 0 : i32
    return %c0_i32, %arg1 : i32, i32
  }
  func.func @transform_4(%arg0: i32, %arg1: i32, %arg2: i32) -> (i32, i32) {
    %c0_i32 = arith.constant 0 : i32
    return %arg0, %arg1 : i32, i32
  }
}

module attributes {stable_mosaic.version = 11 : i64} {
  func.func @_multi_matmul_affine_kernel(%arg0: i32, %arg1: memref<8x32xf32, #tpu.memory_space<vmem>>, %arg2: memref<8x32xf32, #tpu.memory_space<vmem>>, %arg3: memref<8x32xf32, #tpu.memory_space<vmem>>, %arg4: memref<8x32xf32, #tpu.memory_space<vmem>>, %arg5: memref<8x32xf32, #tpu.memory_space<vmem>>, %arg6: memref<32x32xf32, #tpu.memory_space<vmem>>, %arg7: memref<32x32xf32, #tpu.memory_space<vmem>>, %arg8: memref<32x32xf32, #tpu.memory_space<vmem>>, %arg9: memref<32x32xf32, #tpu.memory_space<vmem>>, %arg10: memref<32x32xf32, #tpu.memory_space<vmem>>, %arg11: memref<1x32xf32, #tpu.memory_space<vmem>>, %arg12: memref<1x32xf32, #tpu.memory_space<vmem>>, %arg13: memref<8x32xf32, #tpu.memory_space<vmem>>) attributes {dimension_semantics = [#tpu.dimension_semantics<parallel>], iteration_bounds = array<i64: 1>, scalar_prefetch = 0 : i64, scratch_operands = 0 : i64, tpu.core_type = #tpu.core_type<tc>, window_params = [{transform_indices = @transform_0, window_bounds = array<i64: 8, 32>}, {transform_indices = @transform_1, window_bounds = array<i64: 8, 32>}, {transform_indices = @transform_2, window_bounds = array<i64: 8, 32>}, {transform_indices = @transform_3, window_bounds = array<i64: 8, 32>}, {transform_indices = @transform_4, window_bounds = array<i64: 8, 32>}, {pipeline_mode = #tpu.pipeline_mode<synchronous>, transform_indices = @transform_5, window_bounds = array<i64: 32, 32>}, {pipeline_mode = #tpu.pipeline_mode<synchronous>, transform_indices = @transform_6, window_bounds = array<i64: 32, 32>}, {pipeline_mode = #tpu.pipeline_mode<synchronous>, transform_indices = @transform_7, window_bounds = array<i64: 32, 32>}, {pipeline_mode = #tpu.pipeline_mode<synchronous>, transform_indices = @transform_8, window_bounds = array<i64: 32, 32>}, {pipeline_mode = #tpu.pipeline_mode<synchronous>, transform_indices = @transform_9, window_bounds = array<i64: 32, 32>}, {pipeline_mode = #tpu.pipeline_mode<synchronous>, transform_indices = @transform_10, window_bounds = array<i64: 1, 32>}, {pipeline_mode = #tpu.pipeline_mode<synchronous>, transform_indices = @transform_11, window_bounds = array<i64: 1, 32>}, {transform_indices = @transform_12, window_bounds = array<i64: 8, 32>}]} {
    %cst = arith.constant 0.000000e+00 : f32
    %0 = vector.broadcast %cst : f32 to vector<8x32xf32>
    %c0 = arith.constant 0 : index
    %c0_0 = arith.constant 0 : index
    %1 = vector.load %arg1[%c0, %c0_0] : memref<8x32xf32, #tpu.memory_space<vmem>>, vector<8x32xf32>
    %2 = arith.truncf %1 : vector<8x32xf32> to vector<8x32xbf16>
    %c0_1 = arith.constant 0 : index
    %c0_2 = arith.constant 0 : index
    %3 = vector.load %arg6[%c0_1, %c0_2] : memref<32x32xf32, #tpu.memory_space<vmem>>, vector<32x32xf32>
    %4 = arith.truncf %3 : vector<32x32xf32> to vector<32x32xbf16>
    %cst_3 = arith.constant dense<0.000000e+00> : vector<8x32xf32>
    %5 = tpu.matmul %2, %4, %cst_3 {dimension_numbers = #tpu.dot_dimension_numbers<[1], [0], [0], [1], [0, 0, 1, 1], [], []>} : vector<8x32xbf16>, vector<32x32xbf16>, vector<8x32xf32> -> vector<8x32xf32>
    %6 = arith.addf %0, %5 : vector<8x32xf32>
    %c0_4 = arith.constant 0 : index
    %c0_5 = arith.constant 0 : index
    %7 = vector.load %arg2[%c0_4, %c0_5] : memref<8x32xf32, #tpu.memory_space<vmem>>, vector<8x32xf32>
    %8 = arith.truncf %7 : vector<8x32xf32> to vector<8x32xbf16>
    %c0_6 = arith.constant 0 : index
    %c0_7 = arith.constant 0 : index
    %9 = vector.load %arg7[%c0_6, %c0_7] : memref<32x32xf32, #tpu.memory_space<vmem>>, vector<32x32xf32>
    %10 = arith.truncf %9 : vector<32x32xf32> to vector<32x32xbf16>
    %cst_8 = arith.constant dense<0.000000e+00> : vector<8x32xf32>
    %11 = tpu.matmul %8, %10, %cst_8 {dimension_numbers = #tpu.dot_dimension_numbers<[1], [0], [0], [1], [0, 0, 1, 1], [], []>} : vector<8x32xbf16>, vector<32x32xbf16>, vector<8x32xf32> -> vector<8x32xf32>
    %12 = arith.addf %6, %11 : vector<8x32xf32>
    %c0_9 = arith.constant 0 : index
    %c0_10 = arith.constant 0 : index
    %13 = vector.load %arg3[%c0_9, %c0_10] : memref<8x32xf32, #tpu.memory_space<vmem>>, vector<8x32xf32>
    %14 = arith.truncf %13 : vector<8x32xf32> to vector<8x32xbf16>
    %c0_11 = arith.constant 0 : index
    %c0_12 = arith.constant 0 : index
    %15 = vector.load %arg8[%c0_11, %c0_12] : memref<32x32xf32, #tpu.memory_space<vmem>>, vector<32x32xf32>
    %16 = arith.truncf %15 : vector<32x32xf32> to vector<32x32xbf16>
    %cst_13 = arith.constant dense<0.000000e+00> : vector<8x32xf32>
    %17 = tpu.matmul %14, %16, %cst_13 {dimension_numbers = #tpu.dot_dimension_numbers<[1], [0], [0], [1], [0, 0, 1, 1], [], []>} : vector<8x32xbf16>, vector<32x32xbf16>, vector<8x32xf32> -> vector<8x32xf32>
    %18 = arith.addf %12, %17 : vector<8x32xf32>
    %c0_14 = arith.constant 0 : index
    %c0_15 = arith.constant 0 : index
    %19 = vector.load %arg4[%c0_14, %c0_15] : memref<8x32xf32, #tpu.memory_space<vmem>>, vector<8x32xf32>
    %20 = arith.truncf %19 : vector<8x32xf32> to vector<8x32xbf16>
    %c0_16 = arith.constant 0 : index
    %c0_17 = arith.constant 0 : index
    %21 = vector.load %arg9[%c0_16, %c0_17] : memref<32x32xf32, #tpu.memory_space<vmem>>, vector<32x32xf32>
    %22 = arith.truncf %21 : vector<32x32xf32> to vector<32x32xbf16>
    %cst_18 = arith.constant dense<0.000000e+00> : vector<8x32xf32>
    %23 = tpu.matmul %20, %22, %cst_18 {dimension_numbers = #tpu.dot_dimension_numbers<[1], [0], [0], [1], [0, 0, 1, 1], [], []>} : vector<8x32xbf16>, vector<32x32xbf16>, vector<8x32xf32> -> vector<8x32xf32>
    %24 = arith.addf %18, %23 : vector<8x32xf32>
    %c0_19 = arith.constant 0 : index
    %c0_20 = arith.constant 0 : index
    %25 = vector.load %arg5[%c0_19, %c0_20] : memref<8x32xf32, #tpu.memory_space<vmem>>, vector<8x32xf32>
    %26 = arith.truncf %25 : vector<8x32xf32> to vector<8x32xbf16>
    %c0_21 = arith.constant 0 : index
    %c0_22 = arith.constant 0 : index
    %27 = vector.load %arg10[%c0_21, %c0_22] : memref<32x32xf32, #tpu.memory_space<vmem>>, vector<32x32xf32>
    %28 = arith.truncf %27 : vector<32x32xf32> to vector<32x32xbf16>
    %cst_23 = arith.constant dense<0.000000e+00> : vector<8x32xf32>
    %29 = tpu.matmul %26, %28, %cst_23 {dimension_numbers = #tpu.dot_dimension_numbers<[1], [0], [0], [1], [0, 0, 1, 1], [], []>} : vector<8x32xbf16>, vector<32x32xbf16>, vector<8x32xf32> -> vector<8x32xf32>
    %30 = arith.addf %24, %29 : vector<8x32xf32>
    %c0_24 = arith.constant 0 : index
    %c0_25 = arith.constant 0 : index
    %31 = vector.load %arg11[%c0_24, %c0_25] : memref<1x32xf32, #tpu.memory_space<vmem>>, vector<1x32xf32>
    %32 = vector.broadcast %31 : vector<1x32xf32> to vector<8x32xf32>
    %33 = arith.mulf %30, %32 : vector<8x32xf32>
    %c0_26 = arith.constant 0 : index
    %c0_27 = arith.constant 0 : index
    %34 = vector.load %arg12[%c0_26, %c0_27] : memref<1x32xf32, #tpu.memory_space<vmem>>, vector<1x32xf32>
    %35 = vector.broadcast %34 : vector<1x32xf32> to vector<8x32xf32>
    %36 = arith.addf %33, %35 : vector<8x32xf32>
    %cst_28 = arith.constant 0.000000e+00 : f32
    %37 = vector.broadcast %cst_28 : f32 to vector<8x32xf32>
    %38 = arith.maximumf %36, %37 : vector<8x32xf32>
    %c0_29 = arith.constant 0 : index
    %c0_30 = arith.constant 0 : index
    %39 = vector.load %arg13[%c0_29, %c0_30] : memref<8x32xf32, #tpu.memory_space<vmem>>, vector<8x32xf32>
    tpu.vector_store %arg13[%c0_29, %c0_30], %38 {strides = array<i32>} : memref<8x32xf32, #tpu.memory_space<vmem>>, vector<8x32xf32>,
    return
  }
  func.func @transform_0(%arg0: i32) -> (i32, i32) {
    %c0_i32 = arith.constant 0 : i32
    %c0_i32_0 = arith.constant 0 : i32
    return %arg0, %c0_i32 : i32, i32
  }
  func.func @transform_1(%arg0: i32) -> (i32, i32) {
    %c0_i32 = arith.constant 0 : i32
    %c0_i32_0 = arith.constant 0 : i32
    return %arg0, %c0_i32 : i32, i32
  }
  func.func @transform_2(%arg0: i32) -> (i32, i32) {
    %c0_i32 = arith.constant 0 : i32
    %c0_i32_0 = arith.constant 0 : i32
    return %arg0, %c0_i32 : i32, i32
  }
  func.func @transform_3(%arg0: i32) -> (i32, i32) {
    %c0_i32 = arith.constant 0 : i32
    %c0_i32_0 = arith.constant 0 : i32
    return %arg0, %c0_i32 : i32, i32
  }
  func.func @transform_4(%arg0: i32) -> (i32, i32) {
    %c0_i32 = arith.constant 0 : i32
    %c0_i32_0 = arith.constant 0 : i32
    return %arg0, %c0_i32 : i32, i32
  }
  func.func @transform_5(%arg0: i32) -> (i32, i32) {
    %c0_i32 = arith.constant 0 : i32
    %c0_i32_0 = arith.constant 0 : i32
    %c0_i32_1 = arith.constant 0 : i32
    return %c0_i32, %c0_i32_0 : i32, i32
  }
  func.func @transform_6(%arg0: i32) -> (i32, i32) {
    %c0_i32 = arith.constant 0 : i32
    %c0_i32_0 = arith.constant 0 : i32
    %c0_i32_1 = arith.constant 0 : i32
    return %c0_i32, %c0_i32_0 : i32, i32
  }
  func.func @transform_7(%arg0: i32) -> (i32, i32) {
    %c0_i32 = arith.constant 0 : i32
    %c0_i32_0 = arith.constant 0 : i32
    %c0_i32_1 = arith.constant 0 : i32
    return %c0_i32, %c0_i32_0 : i32, i32
  }
  func.func @transform_8(%arg0: i32) -> (i32, i32) {
    %c0_i32 = arith.constant 0 : i32
    %c0_i32_0 = arith.constant 0 : i32
    %c0_i32_1 = arith.constant 0 : i32
    return %c0_i32, %c0_i32_0 : i32, i32
  }
  func.func @transform_9(%arg0: i32) -> (i32, i32) {
    %c0_i32 = arith.constant 0 : i32
    %c0_i32_0 = arith.constant 0 : i32
    %c0_i32_1 = arith.constant 0 : i32
    return %c0_i32, %c0_i32_0 : i32, i32
  }
  func.func @transform_10(%arg0: i32) -> (i32, i32) {
    %c0_i32 = arith.constant 0 : i32
    %c0_i32_0 = arith.constant 0 : i32
    %c0_i32_1 = arith.constant 0 : i32
    return %c0_i32, %c0_i32_0 : i32, i32
  }
  func.func @transform_11(%arg0: i32) -> (i32, i32) {
    %c0_i32 = arith.constant 0 : i32
    %c0_i32_0 = arith.constant 0 : i32
    %c0_i32_1 = arith.constant 0 : i32
    return %c0_i32, %c0_i32_0 : i32, i32
  }
  func.func @transform_12(%arg0: i32) -> (i32, i32) {
    %c0_i32 = arith.constant 0 : i32
    %c0_i32_0 = arith.constant 0 : i32
    return %arg0, %c0_i32 : i32, i32
  }
}

module attributes {stable_mosaic.version = 11 : i64} {
  func.func @_resize_kernel(%arg0: memref<2x8x64xf32, #tpu.memory_space<vmem>>, %arg1: memref<8x8xf32, #tpu.memory_space<vmem>>, %arg2: memref<64x256xf32, #tpu.memory_space<vmem>>, %arg3: memref<2x8x256xf32, #tpu.memory_space<vmem>>) attributes {dimension_semantics = [], scalar_prefetch = 0 : i64, scratch_operands = 0 : i64, tpu.core_type = #tpu.core_type<tc>} {
    %c0 = arith.constant 0 : index
    %c0_0 = arith.constant 0 : index
    %0 = vector.load %arg1[%c0, %c0_0] : memref<8x8xf32, #tpu.memory_space<vmem>>, vector<8x8xf32>
    %c0_1 = arith.constant 0 : index
    %c0_2 = arith.constant 0 : index
    %1 = vector.load %arg2[%c0_1, %c0_2] : memref<64x256xf32, #tpu.memory_space<vmem>>, vector<64x256xf32>
    %c0_3 = arith.constant 0 : index
    %c0_4 = arith.constant 0 : index
    %c0_5 = arith.constant 0 : index
    %2 = vector.load %arg0[%c0_3, %c0_4, %c0_5] : memref<2x8x64xf32, #tpu.memory_space<vmem>>, vector<1x8x64xf32>
    %3 = vector.shape_cast %2 : vector<1x8x64xf32> to vector<8x64xf32>
    %cst = arith.constant dense<0.000000e+00> : vector<8x64xf32>
    %4 = tpu.matmul %0, %3, %cst {dimension_numbers = #tpu.dot_dimension_numbers<[1], [0], [0], [1], [0, 0, 1, 1], [], []>} : vector<8x8xf32>, vector<8x64xf32>, vector<8x64xf32> -> vector<8x64xf32>
    %cst_6 = arith.constant dense<0.000000e+00> : vector<8x256xf32>
    %5 = tpu.matmul %4, %1, %cst_6 {dimension_numbers = #tpu.dot_dimension_numbers<[1], [0], [0], [1], [0, 0, 1, 1], [], []>} : vector<8x64xf32>, vector<64x256xf32>, vector<8x256xf32> -> vector<8x256xf32>
    %c0_7 = arith.constant 0 : index
    %c0_8 = arith.constant 0 : index
    %c0_9 = arith.constant 0 : index
    %6 = vector.load %arg3[%c0_7, %c0_8, %c0_9] : memref<2x8x256xf32, #tpu.memory_space<vmem>>, vector<1x8x256xf32>
    %7 = vector.shape_cast %6 : vector<1x8x256xf32> to vector<8x256xf32>
    %8 = vector.shape_cast %5 : vector<8x256xf32> to vector<1x8x256xf32>
    tpu.vector_store %arg3[%c0_7, %c0_8, %c0_9], %8 {strides = array<i32>} : memref<2x8x256xf32, #tpu.memory_space<vmem>>, vector<1x8x256xf32>,
    %c1 = arith.constant 1 : index
    %c0_10 = arith.constant 0 : index
    %c0_11 = arith.constant 0 : index
    %9 = vector.load %arg0[%c1, %c0_10, %c0_11] : memref<2x8x64xf32, #tpu.memory_space<vmem>>, vector<1x8x64xf32>
    %10 = vector.shape_cast %9 : vector<1x8x64xf32> to vector<8x64xf32>
    %cst_12 = arith.constant dense<0.000000e+00> : vector<8x64xf32>
    %11 = tpu.matmul %0, %10, %cst_12 {dimension_numbers = #tpu.dot_dimension_numbers<[1], [0], [0], [1], [0, 0, 1, 1], [], []>} : vector<8x8xf32>, vector<8x64xf32>, vector<8x64xf32> -> vector<8x64xf32>
    %cst_13 = arith.constant dense<0.000000e+00> : vector<8x256xf32>
    %12 = tpu.matmul %11, %1, %cst_13 {dimension_numbers = #tpu.dot_dimension_numbers<[1], [0], [0], [1], [0, 0, 1, 1], [], []>} : vector<8x64xf32>, vector<64x256xf32>, vector<8x256xf32> -> vector<8x256xf32>
    %c1_14 = arith.constant 1 : index
    %c0_15 = arith.constant 0 : index
    %c0_16 = arith.constant 0 : index
    %13 = vector.load %arg3[%c1_14, %c0_15, %c0_16] : memref<2x8x256xf32, #tpu.memory_space<vmem>>, vector<1x8x256xf32>
    %14 = vector.shape_cast %13 : vector<1x8x256xf32> to vector<8x256xf32>
    %15 = vector.shape_cast %12 : vector<8x256xf32> to vector<1x8x256xf32>
    tpu.vector_store %arg3[%c1_14, %c0_15, %c0_16], %15 {strides = array<i32>} : memref<2x8x256xf32, #tpu.memory_space<vmem>>, vector<1x8x256xf32>,
    return
  }
}

module attributes {stable_mosaic.version = 11 : i64} {
  func.func @_matmul_affine_act_kernel(%arg0: i32, %arg1: i32, %arg2: i32, %arg3: memref<128x288xf32, #tpu.memory_space<vmem>>, %arg4: memref<288x32xf32, #tpu.memory_space<vmem>>, %arg5: memref<1x32xf32, #tpu.memory_space<vmem>>, %arg6: memref<1x32xf32, #tpu.memory_space<vmem>>, %arg7: memref<128x32xf32, #tpu.memory_space<vmem>>, %arg8: memref<128x32xf32, #tpu.memory_space<vmem>>) attributes {dimension_semantics = [#tpu.dimension_semantics<parallel>, #tpu.dimension_semantics<parallel>, #tpu.dimension_semantics<arbitrary>], iteration_bounds = array<i64: 1, 1, 1>, scalar_prefetch = 0 : i64, scratch_operands = 1 : i64, tpu.core_type = #tpu.core_type<tc>, window_params = [{transform_indices = @transform_0, window_bounds = array<i64: 128, 288>}, {transform_indices = @transform_1, window_bounds = array<i64: 288, 32>}, {transform_indices = @transform_2, window_bounds = array<i64: 1, 32>}, {transform_indices = @transform_3, window_bounds = array<i64: 1, 32>}, {transform_indices = @transform_4, window_bounds = array<i64: 128, 32>}]} {
    %c0_i32 = arith.constant 0 : i32
    %0 = arith.cmpi eq, %arg2, %c0_i32 : i32
    %1 = arith.extui %0 : i1 to i32
    %c0_i32_0 = arith.constant 0 : i32
    %2 = arith.cmpi ne, %1, %c0_i32_0 : i32
    scf.if %2 {
      %cst_10 = arith.constant 0.000000e+00 : f32
      %14 = vector.broadcast %cst_10 : f32 to vector<128x32xf32>
      %c0_11 = arith.constant 0 : index
      %c0_12 = arith.constant 0 : index
      %15 = vector.load %arg8[%c0_11, %c0_12] : memref<128x32xf32, #tpu.memory_space<vmem>>, vector<128x32xf32>
      tpu.vector_store %arg8[%c0_11, %c0_12], %14 {strides = array<i32>} : memref<128x32xf32, #tpu.memory_space<vmem>>, vector<128x32xf32>,
    } else {
    }
    %c0 = arith.constant 0 : index
    %c0_1 = arith.constant 0 : index
    %3 = vector.load %arg8[%c0, %c0_1] : memref<128x32xf32, #tpu.memory_space<vmem>>, vector<128x32xf32>
    %c0_2 = arith.constant 0 : index
    %c0_3 = arith.constant 0 : index
    %4 = vector.load %arg3[%c0_2, %c0_3] : memref<128x288xf32, #tpu.memory_space<vmem>>, vector<128x288xf32>
    %5 = arith.truncf %4 : vector<128x288xf32> to vector<128x288xbf16>
    %c0_4 = arith.constant 0 : index
    %c0_5 = arith.constant 0 : index
    %6 = vector.load %arg4[%c0_4, %c0_5] : memref<288x32xf32, #tpu.memory_space<vmem>>, vector<288x32xf32>
    %7 = arith.truncf %6 : vector<288x32xf32> to vector<288x32xbf16>
    %cst = arith.constant dense<0.000000e+00> : vector<128x32xf32>
    %8 = tpu.matmul %5, %7, %cst {dimension_numbers = #tpu.dot_dimension_numbers<[1], [0], [0], [1], [0, 0, 1, 1], [], []>} : vector<128x288xbf16>, vector<288x32xbf16>, vector<128x32xf32> -> vector<128x32xf32>
    %9 = arith.addf %3, %8 : vector<128x32xf32>
    %c0_6 = arith.constant 0 : index
    %c0_7 = arith.constant 0 : index
    %10 = vector.load %arg8[%c0_6, %c0_7] : memref<128x32xf32, #tpu.memory_space<vmem>>, vector<128x32xf32>
    tpu.vector_store %arg8[%c0_6, %c0_7], %9 {strides = array<i32>} : memref<128x32xf32, #tpu.memory_space<vmem>>, vector<128x32xf32>,
    %c0_i32_8 = arith.constant 0 : i32
    %11 = arith.cmpi eq, %arg2, %c0_i32_8 : i32
    %12 = arith.extui %11 : i1 to i32
    %c0_i32_9 = arith.constant 0 : i32
    %13 = arith.cmpi ne, %12, %c0_i32_9 : i32
    scf.if %13 {
      %c0_10 = arith.constant 0 : index
      %c0_11 = arith.constant 0 : index
      %14 = vector.load %arg8[%c0_10, %c0_11] : memref<128x32xf32, #tpu.memory_space<vmem>>, vector<128x32xf32>
      %c0_12 = arith.constant 0 : index
      %c0_13 = arith.constant 0 : index
      %15 = vector.load %arg5[%c0_12, %c0_13] : memref<1x32xf32, #tpu.memory_space<vmem>>, vector<1x32xf32>
      %16 = vector.broadcast %15 : vector<1x32xf32> to vector<128x32xf32>
      %17 = arith.mulf %14, %16 : vector<128x32xf32>
      %c0_14 = arith.constant 0 : index
      %c0_15 = arith.constant 0 : index
      %18 = vector.load %arg6[%c0_14, %c0_15] : memref<1x32xf32, #tpu.memory_space<vmem>>, vector<1x32xf32>
      %19 = vector.broadcast %18 : vector<1x32xf32> to vector<128x32xf32>
      %20 = arith.addf %17, %19 : vector<128x32xf32>
      %cst_16 = arith.constant 0.000000e+00 : f32
      %21 = vector.broadcast %cst_16 : f32 to vector<128x32xf32>
      %22 = arith.maximumf %20, %21 : vector<128x32xf32>
      %c0_17 = arith.constant 0 : index
      %c0_18 = arith.constant 0 : index
      %23 = vector.load %arg7[%c0_17, %c0_18] : memref<128x32xf32, #tpu.memory_space<vmem>>, vector<128x32xf32>
      tpu.vector_store %arg7[%c0_17, %c0_18], %22 {strides = array<i32>} : memref<128x32xf32, #tpu.memory_space<vmem>>, vector<128x32xf32>,
    } else {
    }
    return
  }
  func.func @transform_0(%arg0: i32, %arg1: i32, %arg2: i32) -> (i32, i32) {
    %c0_i32 = arith.constant 0 : i32
    return %arg0, %arg2 : i32, i32
  }
  func.func @transform_1(%arg0: i32, %arg1: i32, %arg2: i32) -> (i32, i32) {
    %c0_i32 = arith.constant 0 : i32
    return %arg2, %arg1 : i32, i32
  }
  func.func @transform_2(%arg0: i32, %arg1: i32, %arg2: i32) -> (i32, i32) {
    %c0_i32 = arith.constant 0 : i32
    %c0_i32_0 = arith.constant 0 : i32
    return %c0_i32, %arg1 : i32, i32
  }
  func.func @transform_3(%arg0: i32, %arg1: i32, %arg2: i32) -> (i32, i32) {
    %c0_i32 = arith.constant 0 : i32
    %c0_i32_0 = arith.constant 0 : i32
    return %c0_i32, %arg1 : i32, i32
  }
  func.func @transform_4(%arg0: i32, %arg1: i32, %arg2: i32) -> (i32, i32) {
    %c0_i32 = arith.constant 0 : i32
    return %arg0, %arg1 : i32, i32
  }
}

module attributes {stable_mosaic.version = 11 : i64} {
  func.func @_multi_matmul_affine_kernel(%arg0: i32, %arg1: memref<128x288xf32, #tpu.memory_space<vmem>>, %arg2: memref<128x36xf32, #tpu.memory_space<vmem>>, %arg3: memref<128x72xf32, #tpu.memory_space<vmem>>, %arg4: memref<288x32xf32, #tpu.memory_space<vmem>>, %arg5: memref<36x32xf32, #tpu.memory_space<vmem>>, %arg6: memref<72x32xf32, #tpu.memory_space<vmem>>, %arg7: memref<1x32xf32, #tpu.memory_space<vmem>>, %arg8: memref<1x32xf32, #tpu.memory_space<vmem>>, %arg9: memref<128x32xf32, #tpu.memory_space<vmem>>) attributes {dimension_semantics = [#tpu.dimension_semantics<parallel>], iteration_bounds = array<i64: 1>, scalar_prefetch = 0 : i64, scratch_operands = 0 : i64, tpu.core_type = #tpu.core_type<tc>, window_params = [{transform_indices = @transform_0, window_bounds = array<i64: 128, 288>}, {transform_indices = @transform_1, window_bounds = array<i64: 128, 36>}, {transform_indices = @transform_2, window_bounds = array<i64: 128, 72>}, {pipeline_mode = #tpu.pipeline_mode<synchronous>, transform_indices = @transform_3, window_bounds = array<i64: 288, 32>}, {pipeline_mode = #tpu.pipeline_mode<synchronous>, transform_indices = @transform_4, window_bounds = array<i64: 36, 32>}, {pipeline_mode = #tpu.pipeline_mode<synchronous>, transform_indices = @transform_5, window_bounds = array<i64: 72, 32>}, {pipeline_mode = #tpu.pipeline_mode<synchronous>, transform_indices = @transform_6, window_bounds = array<i64: 1, 32>}, {pipeline_mode = #tpu.pipeline_mode<synchronous>, transform_indices = @transform_7, window_bounds = array<i64: 1, 32>}, {transform_indices = @transform_8, window_bounds = array<i64: 128, 32>}]} {
    %cst = arith.constant 0.000000e+00 : f32
    %0 = vector.broadcast %cst : f32 to vector<128x32xf32>
    %c0 = arith.constant 0 : index
    %c0_0 = arith.constant 0 : index
    %1 = vector.load %arg1[%c0, %c0_0] : memref<128x288xf32, #tpu.memory_space<vmem>>, vector<128x288xf32>
    %2 = arith.truncf %1 : vector<128x288xf32> to vector<128x288xbf16>
    %c0_1 = arith.constant 0 : index
    %c0_2 = arith.constant 0 : index
    %3 = vector.load %arg4[%c0_1, %c0_2] : memref<288x32xf32, #tpu.memory_space<vmem>>, vector<288x32xf32>
    %4 = arith.truncf %3 : vector<288x32xf32> to vector<288x32xbf16>
    %cst_3 = arith.constant dense<0.000000e+00> : vector<128x32xf32>
    %5 = tpu.matmul %2, %4, %cst_3 {dimension_numbers = #tpu.dot_dimension_numbers<[1], [0], [0], [1], [0, 0, 1, 1], [], []>} : vector<128x288xbf16>, vector<288x32xbf16>, vector<128x32xf32> -> vector<128x32xf32>
    %6 = arith.addf %0, %5 : vector<128x32xf32>
    %c0_4 = arith.constant 0 : index
    %c0_5 = arith.constant 0 : index
    %7 = vector.load %arg2[%c0_4, %c0_5] : memref<128x36xf32, #tpu.memory_space<vmem>>, vector<128x36xf32>
    %8 = arith.truncf %7 : vector<128x36xf32> to vector<128x36xbf16>
    %c0_6 = arith.constant 0 : index
    %c0_7 = arith.constant 0 : index
    %9 = vector.load %arg5[%c0_6, %c0_7] : memref<36x32xf32, #tpu.memory_space<vmem>>, vector<36x32xf32>
    %10 = arith.truncf %9 : vector<36x32xf32> to vector<36x32xbf16>
    %cst_8 = arith.constant dense<0.000000e+00> : vector<128x32xf32>
    %11 = tpu.matmul %8, %10, %cst_8 {dimension_numbers = #tpu.dot_dimension_numbers<[1], [0], [0], [1], [0, 0, 1, 1], [], []>} : vector<128x36xbf16>, vector<36x32xbf16>, vector<128x32xf32> -> vector<128x32xf32>
    %12 = arith.addf %6, %11 : vector<128x32xf32>
    %c0_9 = arith.constant 0 : index
    %c0_10 = arith.constant 0 : index
    %13 = vector.load %arg3[%c0_9, %c0_10] : memref<128x72xf32, #tpu.memory_space<vmem>>, vector<128x72xf32>
    %14 = arith.truncf %13 : vector<128x72xf32> to vector<128x72xbf16>
    %c0_11 = arith.constant 0 : index
    %c0_12 = arith.constant 0 : index
    %15 = vector.load %arg6[%c0_11, %c0_12] : memref<72x32xf32, #tpu.memory_space<vmem>>, vector<72x32xf32>
    %16 = arith.truncf %15 : vector<72x32xf32> to vector<72x32xbf16>
    %cst_13 = arith.constant dense<0.000000e+00> : vector<128x32xf32>
    %17 = tpu.matmul %14, %16, %cst_13 {dimension_numbers = #tpu.dot_dimension_numbers<[1], [0], [0], [1], [0, 0, 1, 1], [], []>} : vector<128x72xbf16>, vector<72x32xbf16>, vector<128x32xf32> -> vector<128x32xf32>
    %18 = arith.addf %12, %17 : vector<128x32xf32>
    %c0_14 = arith.constant 0 : index
    %c0_15 = arith.constant 0 : index
    %19 = vector.load %arg7[%c0_14, %c0_15] : memref<1x32xf32, #tpu.memory_space<vmem>>, vector<1x32xf32>
    %20 = vector.broadcast %19 : vector<1x32xf32> to vector<128x32xf32>
    %21 = arith.mulf %18, %20 : vector<128x32xf32>
    %c0_16 = arith.constant 0 : index
    %c0_17 = arith.constant 0 : index
    %22 = vector.load %arg8[%c0_16, %c0_17] : memref<1x32xf32, #tpu.memory_space<vmem>>, vector<1x32xf32>
    %23 = vector.broadcast %22 : vector<1x32xf32> to vector<128x32xf32>
    %24 = arith.addf %21, %23 : vector<128x32xf32>
    %cst_18 = arith.constant 0.000000e+00 : f32
    %25 = vector.broadcast %cst_18 : f32 to vector<128x32xf32>
    %26 = arith.maximumf %24, %25 : vector<128x32xf32>
    %c0_19 = arith.constant 0 : index
    %c0_20 = arith.constant 0 : index
    %27 = vector.load %arg9[%c0_19, %c0_20] : memref<128x32xf32, #tpu.memory_space<vmem>>, vector<128x32xf32>
    tpu.vector_store %arg9[%c0_19, %c0_20], %26 {strides = array<i32>} : memref<128x32xf32, #tpu.memory_space<vmem>>, vector<128x32xf32>,
    return
  }
  func.func @transform_0(%arg0: i32) -> (i32, i32) {
    %c0_i32 = arith.constant 0 : i32
    %c0_i32_0 = arith.constant 0 : i32
    return %arg0, %c0_i32 : i32, i32
  }
  func.func @transform_1(%arg0: i32) -> (i32, i32) {
    %c0_i32 = arith.constant 0 : i32
    %c0_i32_0 = arith.constant 0 : i32
    return %arg0, %c0_i32 : i32, i32
  }
  func.func @transform_2(%arg0: i32) -> (i32, i32) {
    %c0_i32 = arith.constant 0 : i32
    %c0_i32_0 = arith.constant 0 : i32
    return %arg0, %c0_i32 : i32, i32
  }
  func.func @transform_3(%arg0: i32) -> (i32, i32) {
    %c0_i32 = arith.constant 0 : i32
    %c0_i32_0 = arith.constant 0 : i32
    %c0_i32_1 = arith.constant 0 : i32
    return %c0_i32, %c0_i32_0 : i32, i32
  }
  func.func @transform_4(%arg0: i32) -> (i32, i32) {
    %c0_i32 = arith.constant 0 : i32
    %c0_i32_0 = arith.constant 0 : i32
    %c0_i32_1 = arith.constant 0 : i32
    return %c0_i32, %c0_i32_0 : i32, i32
  }
  func.func @transform_5(%arg0: i32) -> (i32, i32) {
    %c0_i32 = arith.constant 0 : i32
    %c0_i32_0 = arith.constant 0 : i32
    %c0_i32_1 = arith.constant 0 : i32
    return %c0_i32, %c0_i32_0 : i32, i32
  }
  func.func @transform_6(%arg0: i32) -> (i32, i32) {
    %c0_i32 = arith.constant 0 : i32
    %c0_i32_0 = arith.constant 0 : i32
    %c0_i32_1 = arith.constant 0 : i32
    return %c0_i32, %c0_i32_0 : i32, i32
  }
  func.func @transform_7(%arg0: i32) -> (i32, i32) {
    %c0_i32 = arith.constant 0 : i32
    %c0_i32_0 = arith.constant 0 : i32
    %c0_i32_1 = arith.constant 0 : i32
    return %c0_i32, %c0_i32_0 : i32, i32
  }
  func.func @transform_8(%arg0: i32) -> (i32, i32) {
    %c0_i32 = arith.constant 0 : i32
    %c0_i32_0 = arith.constant 0 : i32
    return %arg0, %c0_i32 : i32, i32
  }
}

module attributes {stable_mosaic.version = 11 : i64} {
  func.func @_matmul_affine_act_kernel(%arg0: i32, %arg1: i32, %arg2: i32, %arg3: memref<128x32xf32, #tpu.memory_space<vmem>>, %arg4: memref<32x1xf32, #tpu.memory_space<vmem>>, %arg5: memref<1x1xf32, #tpu.memory_space<vmem>>, %arg6: memref<1x1xf32, #tpu.memory_space<vmem>>, %arg7: memref<128x1xf32, #tpu.memory_space<vmem>>, %arg8: memref<128x1xf32, #tpu.memory_space<vmem>>) attributes {dimension_semantics = [#tpu.dimension_semantics<parallel>, #tpu.dimension_semantics<parallel>, #tpu.dimension_semantics<arbitrary>], iteration_bounds = array<i64: 1, 1, 1>, scalar_prefetch = 0 : i64, scratch_operands = 1 : i64, tpu.core_type = #tpu.core_type<tc>, window_params = [{transform_indices = @transform_0, window_bounds = array<i64: 128, 32>}, {transform_indices = @transform_1, window_bounds = array<i64: 32, 1>}, {transform_indices = @transform_2, window_bounds = array<i64: 1, 1>}, {transform_indices = @transform_3, window_bounds = array<i64: 1, 1>}, {transform_indices = @transform_4, window_bounds = array<i64: 128, 1>}]} {
    %c0_i32 = arith.constant 0 : i32
    %0 = arith.cmpi eq, %arg2, %c0_i32 : i32
    %1 = arith.extui %0 : i1 to i32
    %c0_i32_0 = arith.constant 0 : i32
    %2 = arith.cmpi ne, %1, %c0_i32_0 : i32
    scf.if %2 {
      %cst_10 = arith.constant 0.000000e+00 : f32
      %14 = vector.broadcast %cst_10 : f32 to vector<128x1xf32>
      %c0_11 = arith.constant 0 : index
      %c0_12 = arith.constant 0 : index
      %15 = vector.load %arg8[%c0_11, %c0_12] : memref<128x1xf32, #tpu.memory_space<vmem>>, vector<128x1xf32>
      tpu.vector_store %arg8[%c0_11, %c0_12], %14 {strides = array<i32>} : memref<128x1xf32, #tpu.memory_space<vmem>>, vector<128x1xf32>,
    } else {
    }
    %c0 = arith.constant 0 : index
    %c0_1 = arith.constant 0 : index
    %3 = vector.load %arg8[%c0, %c0_1] : memref<128x1xf32, #tpu.memory_space<vmem>>, vector<128x1xf32>
    %c0_2 = arith.constant 0 : index
    %c0_3 = arith.constant 0 : index
    %4 = vector.load %arg3[%c0_2, %c0_3] : memref<128x32xf32, #tpu.memory_space<vmem>>, vector<128x32xf32>
    %5 = arith.truncf %4 : vector<128x32xf32> to vector<128x32xbf16>
    %c0_4 = arith.constant 0 : index
    %c0_5 = arith.constant 0 : index
    %6 = vector.load %arg4[%c0_4, %c0_5] : memref<32x1xf32, #tpu.memory_space<vmem>>, vector<32x1xf32>
    %7 = arith.truncf %6 : vector<32x1xf32> to vector<32x1xbf16>
    %cst = arith.constant dense<0.000000e+00> : vector<128x1xf32>
    %8 = tpu.matmul %5, %7, %cst {dimension_numbers = #tpu.dot_dimension_numbers<[1], [0], [0], [1], [0, 0, 1, 1], [], []>} : vector<128x32xbf16>, vector<32x1xbf16>, vector<128x1xf32> -> vector<128x1xf32>
    %9 = arith.addf %3, %8 : vector<128x1xf32>
    %c0_6 = arith.constant 0 : index
    %c0_7 = arith.constant 0 : index
    %10 = vector.load %arg8[%c0_6, %c0_7] : memref<128x1xf32, #tpu.memory_space<vmem>>, vector<128x1xf32>
    tpu.vector_store %arg8[%c0_6, %c0_7], %9 {strides = array<i32>} : memref<128x1xf32, #tpu.memory_space<vmem>>, vector<128x1xf32>,
    %c0_i32_8 = arith.constant 0 : i32
    %11 = arith.cmpi eq, %arg2, %c0_i32_8 : i32
    %12 = arith.extui %11 : i1 to i32
    %c0_i32_9 = arith.constant 0 : i32
    %13 = arith.cmpi ne, %12, %c0_i32_9 : i32
    scf.if %13 {
      %c0_10 = arith.constant 0 : index
      %c0_11 = arith.constant 0 : index
      %14 = vector.load %arg8[%c0_10, %c0_11] : memref<128x1xf32, #tpu.memory_space<vmem>>, vector<128x1xf32>
      %c0_12 = arith.constant 0 : index
      %c0_13 = arith.constant 0 : index
      %15 = vector.load %arg5[%c0_12, %c0_13] : memref<1x1xf32, #tpu.memory_space<vmem>>, vector<1x1xf32>
      %16 = vector.broadcast %15 : vector<1x1xf32> to vector<128x1xf32>
      %17 = arith.mulf %14, %16 : vector<128x1xf32>
      %c0_14 = arith.constant 0 : index
      %c0_15 = arith.constant 0 : index
      %18 = vector.load %arg6[%c0_14, %c0_15] : memref<1x1xf32, #tpu.memory_space<vmem>>, vector<1x1xf32>
      %19 = vector.broadcast %18 : vector<1x1xf32> to vector<128x1xf32>
      %20 = arith.addf %17, %19 : vector<128x1xf32>
      %c0_16 = arith.constant 0 : index
      %c0_17 = arith.constant 0 : index
      %21 = vector.load %arg7[%c0_16, %c0_17] : memref<128x1xf32, #tpu.memory_space<vmem>>, vector<128x1xf32>
      tpu.vector_store %arg7[%c0_16, %c0_17], %20 {strides = array<i32>} : memref<128x1xf32, #tpu.memory_space<vmem>>, vector<128x1xf32>,
    } else {
    }
    return
  }
  func.func @transform_0(%arg0: i32, %arg1: i32, %arg2: i32) -> (i32, i32) {
    %c0_i32 = arith.constant 0 : i32
    return %arg0, %arg2 : i32, i32
  }
  func.func @transform_1(%arg0: i32, %arg1: i32, %arg2: i32) -> (i32, i32) {
    %c0_i32 = arith.constant 0 : i32
    return %arg2, %arg1 : i32, i32
  }
  func.func @transform_2(%arg0: i32, %arg1: i32, %arg2: i32) -> (i32, i32) {
    %c0_i32 = arith.constant 0 : i32
    %c0_i32_0 = arith.constant 0 : i32
    return %c0_i32, %arg1 : i32, i32
  }
  func.func @transform_3(%arg0: i32, %arg1: i32, %arg2: i32) -> (i32, i32) {
    %c0_i32 = arith.constant 0 : i32
    %c0_i32_0 = arith.constant 0 : i32
    return %c0_i32, %arg1 : i32, i32
  }
  func.func @transform_4(%arg0: i32, %arg1: i32, %arg2: i32) -> (i32, i32) {
    %c0_i32 = arith.constant 0 : i32
    return %arg0, %arg1 : i32, i32
  }
}

module attributes {stable_mosaic.version = 11 : i64} {
  func.func @_resize_heads_kernel(%arg0: memref<2x8x8xf32, #tpu.memory_space<vmem>>, %arg1: memref<32x8xf32, #tpu.memory_space<vmem>>, %arg2: memref<8x32xf32, #tpu.memory_space<vmem>>, %arg3: memref<2x32x32xf32, #tpu.memory_space<vmem>>, %arg4: memref<2x32x32xf32, #tpu.memory_space<vmem>>, %arg5: memref<2x32x32xf32, #tpu.memory_space<vmem>>) attributes {dimension_semantics = [], scalar_prefetch = 0 : i64, scratch_operands = 0 : i64, tpu.core_type = #tpu.core_type<tc>} {
    %c0 = arith.constant 0 : index
    %c0_0 = arith.constant 0 : index
    %0 = vector.load %arg1[%c0, %c0_0] : memref<32x8xf32, #tpu.memory_space<vmem>>, vector<32x8xf32>
    %c0_1 = arith.constant 0 : index
    %c0_2 = arith.constant 0 : index
    %1 = vector.load %arg2[%c0_1, %c0_2] : memref<8x32xf32, #tpu.memory_space<vmem>>, vector<8x32xf32>
    %c0_3 = arith.constant 0 : index
    %c0_4 = arith.constant 0 : index
    %c0_5 = arith.constant 0 : index
    %2 = vector.load %arg0[%c0_3, %c0_4, %c0_5] : memref<2x8x8xf32, #tpu.memory_space<vmem>>, vector<1x8x8xf32>
    %3 = vector.shape_cast %2 : vector<1x8x8xf32> to vector<8x8xf32>
    %cst = arith.constant dense<0.000000e+00> : vector<32x8xf32>
    %4 = tpu.matmul %0, %3, %cst {dimension_numbers = #tpu.dot_dimension_numbers<[1], [0], [0], [1], [0, 0, 1, 1], [], []>} : vector<32x8xf32>, vector<8x8xf32>, vector<32x8xf32> -> vector<32x8xf32>
    %cst_6 = arith.constant dense<0.000000e+00> : vector<32x32xf32>
    %5 = tpu.matmul %4, %1, %cst_6 {dimension_numbers = #tpu.dot_dimension_numbers<[1], [0], [0], [1], [0, 0, 1, 1], [], []>} : vector<32x8xf32>, vector<8x32xf32>, vector<32x32xf32> -> vector<32x32xf32>
    %c0_7 = arith.constant 0 : index
    %c0_8 = arith.constant 0 : index
    %c0_9 = arith.constant 0 : index
    %6 = vector.load %arg3[%c0_7, %c0_8, %c0_9] : memref<2x32x32xf32, #tpu.memory_space<vmem>>, vector<1x32x32xf32>
    %7 = vector.shape_cast %6 : vector<1x32x32xf32> to vector<32x32xf32>
    %8 = vector.shape_cast %5 : vector<32x32xf32> to vector<1x32x32xf32>
    tpu.vector_store %arg3[%c0_7, %c0_8, %c0_9], %8 {strides = array<i32>} : memref<2x32x32xf32, #tpu.memory_space<vmem>>, vector<1x32x32xf32>,
    %9 = math.tanh %5 : vector<32x32xf32>
    %c0_10 = arith.constant 0 : index
    %c0_11 = arith.constant 0 : index
    %c0_12 = arith.constant 0 : index
    %10 = vector.load %arg4[%c0_10, %c0_11, %c0_12] : memref<2x32x32xf32, #tpu.memory_space<vmem>>, vector<1x32x32xf32>
    %11 = vector.shape_cast %10 : vector<1x32x32xf32> to vector<32x32xf32>
    %12 = vector.shape_cast %9 : vector<32x32xf32> to vector<1x32x32xf32>
    tpu.vector_store %arg4[%c0_10, %c0_11, %c0_12], %12 {strides = array<i32>} : memref<2x32x32xf32, #tpu.memory_space<vmem>>, vector<1x32x32xf32>,
    %cst_13 = arith.constant 5.000000e-01 : f32
    %13 = vector.broadcast %cst_13 : f32 to vector<32x32xf32>
    %14 = arith.mulf %13, %5 : vector<32x32xf32>
    %15 = math.tanh %14 : vector<32x32xf32>
    %cst_14 = arith.constant 1.000000e+00 : f32
    %16 = vector.broadcast %cst_14 : f32 to vector<32x32xf32>
    %17 = arith.addf %15, %16 : vector<32x32xf32>
    %cst_15 = arith.constant 5.000000e-01 : f32
    %18 = vector.broadcast %cst_15 : f32 to vector<32x32xf32>
    %19 = arith.mulf %18, %17 : vector<32x32xf32>
    %c0_16 = arith.constant 0 : index
    %c0_17 = arith.constant 0 : index
    %c0_18 = arith.constant 0 : index
    %20 = vector.load %arg5[%c0_16, %c0_17, %c0_18] : memref<2x32x32xf32, #tpu.memory_space<vmem>>, vector<1x32x32xf32>
    %21 = vector.shape_cast %20 : vector<1x32x32xf32> to vector<32x32xf32>
    %22 = vector.shape_cast %19 : vector<32x32xf32> to vector<1x32x32xf32>
    tpu.vector_store %arg5[%c0_16, %c0_17, %c0_18], %22 {strides = array<i32>} : memref<2x32x32xf32, #tpu.memory_space<vmem>>, vector<1x32x32xf32>,
    %c1 = arith.constant 1 : index
    %c0_19 = arith.constant 0 : index
    %c0_20 = arith.constant 0 : index
    %23 = vector.load %arg0[%c1, %c0_19, %c0_20] : memref<2x8x8xf32, #tpu.memory_space<vmem>>, vector<1x8x8xf32>
    %24 = vector.shape_cast %23 : vector<1x8x8xf32> to vector<8x8xf32>
    %cst_21 = arith.constant dense<0.000000e+00> : vector<32x8xf32>
    %25 = tpu.matmul %0, %24, %cst_21 {dimension_numbers = #tpu.dot_dimension_numbers<[1], [0], [0], [1], [0, 0, 1, 1], [], []>} : vector<32x8xf32>, vector<8x8xf32>, vector<32x8xf32> -> vector<32x8xf32>
    %cst_22 = arith.constant dense<0.000000e+00> : vector<32x32xf32>
    %26 = tpu.matmul %25, %1, %cst_22 {dimension_numbers = #tpu.dot_dimension_numbers<[1], [0], [0], [1], [0, 0, 1, 1], [], []>} : vector<32x8xf32>, vector<8x32xf32>, vector<32x32xf32> -> vector<32x32xf32>
    %c1_23 = arith.constant 1 : index
    %c0_24 = arith.constant 0 : index
    %c0_25 = arith.constant 0 : index
    %27 = vector.load %arg3[%c1_23, %c0_24, %c0_25] : memref<2x32x32xf32, #tpu.memory_space<vmem>>, vector<1x32x32xf32>
    %28 = vector.shape_cast %27 : vector<1x32x32xf32> to vector<32x32xf32>
    %29 = vector.shape_cast %26 : vector<32x32xf32> to vector<1x32x32xf32>
    tpu.vector_store %arg3[%c1_23, %c0_24, %c0_25], %29 {strides = array<i32>} : memref<2x32x32xf32, #tpu.memory_space<vmem>>, vector<1x32x32xf32>,
    %30 = math.tanh %26 : vector<32x32xf32>
    %c1_26 = arith.constant 1 : index
    %c0_27 = arith.constant 0 : index
    %c0_28 = arith.constant 0 : index
    %31 = vector.load %arg4[%c1_26, %c0_27, %c0_28] : memref<2x32x32xf32, #tpu.memory_space<vmem>>, vector<1x32x32xf32>
    %32 = vector.shape_cast %31 : vector<1x32x32xf32> to vector<32x32xf32>
    %33 = vector.shape_cast %30 : vector<32x32xf32> to vector<1x32x32xf32>
    tpu.vector_store %arg4[%c1_26, %c0_27, %c0_28], %33 {strides = array<i32>} : memref<2x32x32xf32, #tpu.memory_space<vmem>>, vector<1x32x32xf32>,
    %cst_29 = arith.constant 5.000000e-01 : f32
    %34 = vector.broadcast %cst_29 : f32 to vector<32x32xf32>
    %35 = arith.mulf %34, %26 : vector<32x32xf32>
    %36 = math.tanh %35 : vector<32x32xf32>
    %cst_30 = arith.constant 1.000000e+00 : f32
    %37 = vector.broadcast %cst_30 : f32 to vector<32x32xf32>
    %38 = arith.addf %36, %37 : vector<32x32xf32>
    %cst_31 = arith.constant 5.000000e-01 : f32
    %39 = vector.broadcast %cst_31 : f32 to vector<32x32xf32>
    %40 = arith.mulf %39, %38 : vector<32x32xf32>
    %c1_32 = arith.constant 1 : index
    %c0_33 = arith.constant 0 : index
    %c0_34 = arith.constant 0 : index
    %41 = vector.load %arg5[%c1_32, %c0_33, %c0_34] : memref<2x32x32xf32, #tpu.memory_space<vmem>>, vector<1x32x32xf32>
    %42 = vector.shape_cast %41 : vector<1x32x32xf32> to vector<32x32xf32>
    %43 = vector.shape_cast %40 : vector<32x32xf32> to vector<1x32x32xf32>
    tpu.vector_store %arg5[%c1_32, %c0_33, %c0_34], %43 {strides = array<i32>} : memref<2x32x32xf32, #tpu.memory_space<vmem>>, vector<1x32x32xf32>,
    return
  }
}

</mosaic_0001>

<llo_original>
// kernel: deeplab_bottleneck_forward.16
$region0: #{deeplab_bottleneck_forward.16}
  #allocation0 [shape = 'u32[]', space=smem, size = 0x4, offset = 0x4, fixed_abs, tag = 'smem constant byte address 0x4 - core index']
  #allocation1 [shape = 'u32[144,128]{1,0:T(1,128)}', space=vmem, size = 0x12000, scoped, tag = 'internal scratch']
  #allocation2 [shape = 'f32[256,16]{1,0:T(8,128)}', space=vmem, size = 0x20000, scoped, tag = 'scratch operand']
  %s0 = inlined_call_operand.vmem [shape: f32[512,9], index: 0, kind: input, shape index: {}]
  %s1 = inlined_call_operand.vmem [shape: f32[9,16], index: 1, kind: input, shape index: {}]
  %s2 = inlined_call_operand.vmem [shape: f32[1,16], index: 2, kind: input, shape index: {}]
  %s3 = inlined_call_operand.vmem [shape: f32[1,16], index: 3, kind: input, shape index: {}]
  %s4 = inlined_call_operand.vmem [shape: f32[512,16], index: 4, kind: output, shape index: {}]
  %s5 = sld [smem:[#allocation0]]
  $region57: #{deeplab_bottleneck_forward.16} parent=0
    _
  %s7 = ssub.s32 1, %s5
  %s8 = scalar_select 0, %s7, %s5
  loop: start=0, step=1, limit=4
  $region2: #{deeplab_bottleneck_forward.16} parent=0 // loop_pre_header
    _
  $region3: #{deeplab_bottleneck_forward.16} parent=0 // loop_header
    %s10 = sphi 0, %s14
    %p11 = scmp.ge.s32.totalorder %s10, 4
    %s17 = sphi 0, %s36
    %s18 = sphi 0, %s32
    %s19 = sphi 0, %s28
    %s20 = sphi 0, %s17
    %s21 = sphi 0, %s18
    %s22 = sphi 0, %s19
    %s23 = sphi 0, %s20
    %s24 = sphi 0, %s21
    %s25 = sphi 0, %s22
    %s41 = sphi 0, %s43
    %s44 = sphi 0, %s41
    %s45 = sphi 0, %s44
    %s61 = sphi 0, %s45
    %s69 = sphi 0, %s71
    %s72 = sphi 0, %s69
    %s73 = sphi 0, %s72
    %s89 = sphi 0, %s73
    %s95 = sphi 0, %s97
    %s98 = sphi 0, %s95
    %s99 = sphi 0, %s98
    %s115 = sphi 0, %s99
    %s121 = sphi 0, %s123
    %s124 = sphi 0, %s121
    %s125 = sphi 0, %s124
    %s141 = sphi 0, %s125
    %s149 = sphi 0, %s151
    %s152 = sphi 0, %s149
    %s153 = sphi 0, %s152
    %s169 = sphi 0, %s153
  $region4: #{deeplab_bottleneck_forward.16} parent=0 // loop_header_branch
    %13 = sbr.rel (%p11) target = $region8
  $region5: #{deeplab_bottleneck_forward.16} parent=0 // loop_body
    %s15 = ssub.s32 %s10, 1
    %s16 = ssub.s32 %s10, 2
    %s26 = sadd.s32 1, %s19
    %p27 = scmp.ge.s32.totalorder %s26, 1
    %s28 = scalar_select %p27, 0, %s26
    %s29 = sadd.s32 1, %s18
    %s30 = scalar_select %p27, %s29, %s18
    %p31 = scmp.ge.s32.totalorder %s30, 1
    %s32 = scalar_select %p31, 0, %s30
    %s33 = sadd.s32 1, %s17
    %s34 = scalar_select %p31, %s33, %s17
    %p35 = scmp.ge.s32.totalorder %s34, 2
    %s36 = scalar_select %p35, 0, %s34
    %s37 = ssub.s32 %s17, %s36
    %s38 = ssub.s32 %s19, %s28
    %s39 = sor.u32 %s37, %s38
    %p40 = scmp.eq.s32.totalorder %s39, 0
    %s42 = sadd.s32 %s41, 1
    %s43 = scalar_select %p40, %s41, %s42
    %p46 = pneg %p40
    %p47 = scmp.eq.s32.totalorder %s10, 1
    %p48 = por %p46, %p47
    %p49 = scmp.ne.s32.totalorder %s41, %s44
    %p50 = scmp.eq.s32.totalorder %s10, 0
    %p51 = por %p49, %p50
    %p52 = scmp.ne.s32.totalorder %s41, %s44
    %p53 = scmp.eq.s32.totalorder %s15, 1
    %p54 = por %p52, %p53
    %p55 = scmp.ne.s32.totalorder %s44, %s45
    %p56 = scmp.eq.s32.totalorder %s15, 0
    %p57 = por %p55, %p56
    %p58 = scmp.ne.s32.totalorder %s44, %s45
    %p59 = scmp.eq.s32.totalorder %s16, 1
    %p60 = por %p58, %p59
    %p62 = scmp.ne.s32.totalorder %s45, %s61
    %p63 = scmp.eq.s32.totalorder %s16, 0
    %p64 = por %p62, %p63
    %s65 = ssub.s32 %s19, %s28
    %s66 = ssub.s32 %s18, %s32
    %s67 = sor.u32 %s65, %s66
    %p68 = scmp.eq.s32.totalorder %s67, 0
    %s70 = sadd.s32 %s69, 1
    %s71 = scalar_select %p68, %s69, %s70
    %p74 = pneg %p68
    %p75 = scmp.eq.s32.totalorder %s10, 1
    %p76 = por %p74, %p75
    %p77 = scmp.ne.s32.totalorder %s69, %s72
    %p78 = scmp.eq.s32.totalorder %s10, 0
    %p79 = por %p77, %p78
    %p80 = scmp.ne.s32.totalorder %s69, %s72
    %p81 = scmp.eq.s32.totalorder %s15, 1
    %p82 = por %p80, %p81
    %p83 = scmp.ne.s32.totalorder %s72, %s73
    %p84 = scmp.eq.s32.totalorder %s15, 0
    %p85 = por %p83, %p84
    %p86 = scmp.ne.s32.totalorder %s72, %s73
    %p87 = scmp.eq.s32.totalorder %s16, 1
    %p88 = por %p86, %p87
    %p90 = scmp.ne.s32.totalorder %s73, %s89
    %p91 = scmp.eq.s32.totalorder %s16, 0
    %p92 = por %p90, %p91
    %s93 = ssub.s32 %s18, %s32
    %p94 = scmp.eq.s32.totalorder %s93, 0
    %s96 = sadd.s32 %s95, 1
    %s97 = scalar_select %p94, %s95, %s96
    %p100 = pneg %p94
    %p101 = scmp.eq.s32.totalorder %s10, 1
    %p102 = por %p100, %p101
    %p103 = scmp.ne.s32.totalorder %s95, %s98
    %p104 = scmp.eq.s32.totalorder %s10, 0
    %p105 = por %p103, %p104
    %p106 = scmp.ne.s32.totalorder %s95, %s98
    %p107 = scmp.eq.s32.totalorder %s15, 1
    %p108 = por %p106, %p107
    %p109 = scmp.ne.s32.totalorder %s98, %s99
    %p110 = scmp.eq.s32.totalorder %s15, 0
    %p111 = por %p109, %p110
    %p112 = scmp.ne.s32.totalorder %s98, %s99
    %p113 = scmp.eq.s32.totalorder %s16, 1
    %p114 = por %p112, %p113
    %p116 = scmp.ne.s32.totalorder %s99, %s115
    %p117 = scmp.eq.s32.totalorder %s16, 0
    %p118 = por %p116, %p117
    %s119 = ssub.s32 %s18, %s32
    %p120 = scmp.eq.s32.totalorder %s119, 0
    %s122 = sadd.s32 %s121, 1
    %s123 = scalar_select %p120, %s121, %s122
    %p126 = pneg %p120
    %p127 = scmp.eq.s32.totalorder %s10, 1
    %p128 = por %p126, %p127
    %p129 = scmp.ne.s32.totalorder %s121, %s124
    %p130 = scmp.eq.s32.totalorder %s10, 0
    %p131 = por %p129, %p130
    %p132 = scmp.ne.s32.totalorder %s121, %s124
    %p133 = scmp.eq.s32.totalorder %s15, 1
    %p134 = por %p132, %p133
    %p135 = scmp.ne.s32.totalorder %s124, %s125
    %p136 = scmp.eq.s32.totalorder %s15, 0
    %p137 = por %p135, %p136
    %p138 = scmp.ne.s32.totalorder %s124, %s125
    %p139 = scmp.eq.s32.totalorder %s16, 1
    %p140 = por %p138, %p139
    %p142 = scmp.ne.s32.totalorder %s125, %s141
    %p143 = scmp.eq.s32.totalorder %s16, 0
    %p144 = por %p142, %p143
    %s145 = ssub.s32 %s17, %s36
    %s146 = ssub.s32 %s18, %s32
    %s147 = sor.u32 %s145, %s146
    %p148 = scmp.eq.s32.totalorder %s147, 0
    %s150 = sadd.s32 %s149, 1
    %s151 = scalar_select %p148, %s149, %s150
    %p154 = pneg %p148
    %p155 = scmp.eq.s32.totalorder %s10, 1
    %p156 = por %p154, %p155
    %p157 = scmp.ne.s32.totalorder %s149, %s152
    %p158 = scmp.eq.s32.totalorder %s10, 0
    %p159 = por %p157, %p158
    %p160 = scmp.ne.s32.totalorder %s149, %s152
    %p161 = scmp.eq.s32.totalorder %s15, 1
    %p162 = por %p160, %p161
    %p163 = scmp.ne.s32.totalorder %s152, %s153
    %p164 = scmp.eq.s32.totalorder %s15, 0
    %p165 = por %p163, %p164
    %p166 = scmp.ne.s32.totalorder %s152, %s153
    %p167 = scmp.eq.s32.totalorder %s16, 1
    %p168 = por %p166, %p167
    %p170 = scmp.ne.s32.totalorder %s153, %s169
    %p171 = scmp.eq.s32.totalorder %s16, 0
    %p172 = por %p170, %p171
    %p173 = scmp.le.s32.totalorder 1, %s10
    %p174 = scmp.lt.s32.totalorder %s10, 3
    %p175 = pnand %p173, %p174
    %p176 = pneg %p175
    // Predicated region
    $region9: #{deeplab_bottleneck_forward.16} parent=5 // pred_check
      _
    $region10: #{deeplab_bottleneck_forward.16} parent=5 // pred_check_branch
      %178 = sbr.rel (%p175) target = $region12
    $region11: #{deeplab_bottleneck_forward.16} parent=5 // pred_region
      %s179 = ssub.s32 %s10, 1
      // Predicated region
      $region13: #{deeplab_bottleneck_forward.16} parent=11 // pred_check
        %p180 = pneg %p85
      $region14: #{deeplab_bottleneck_forward.16} parent=11 // pred_check_branch
        %182 = sbr.rel (%p180) target = $region16
      $region15: #{deeplab_bottleneck_forward.16} parent=11 // pred_region
        %s183 = smul.u32 2, %s22
        %p184 = scmp.lt.s32.totalorder %s183, 1
        %s185 = scalar_select %p184, %s183, 1
        %p186 = scmp.lt.s32.totalorder %s21, 0
        %s187 = scalar_select %p186, %s21, 0
        %s188 = sadd.s32 %s187, %s185
        %s189 = smul.addr %s188, 8
        %s190 = scalar_lea.vmem %s1, %s189
        %s191 = smul.u32 2, %s22
      $region16: #{deeplab_bottleneck_forward.16} parent=11 // pred_fallthru
        _
      // Predicated region
      $region17: #{deeplab_bottleneck_forward.16} parent=11 // pred_check
        %p192 = pneg %p111
      $region18: #{deeplab_bottleneck_forward.16} parent=11 // pred_check_branch
        %194 = sbr.rel (%p192) target = $region20
      $region19: #{deeplab_bottleneck_forward.16} parent=11 // pred_region
        %p195 = scmp.lt.s32.totalorder %s21, 0
        %s196 = scalar_select %p195, %s21, 0
        %s197 = scalar_lea.vmem %s2, %s196
      $region20: #{deeplab_bottleneck_forward.16} parent=11 // pred_fallthru
        _
      // Predicated region
      $region21: #{deeplab_bottleneck_forward.16} parent=11 // pred_check
        %p198 = pneg %p137
      $region22: #{deeplab_bottleneck_forward.16} parent=11 // pred_check_branch
        %200 = sbr.rel (%p198) target = $region24
      $region23: #{deeplab_bottleneck_forward.16} parent=11 // pred_region
        %p201 = scmp.lt.s32.totalorder %s21, 0
        %s202 = scalar_select %p201, %s21, 0
        %s203 = scalar_lea.vmem %s3, %s202
      $region24: #{deeplab_bottleneck_forward.16} parent=11 // pred_fallthru
        _
    $region12: #{deeplab_bottleneck_forward.16} parent=5 // pred_fallthru
      _
    %p204 = scmp.lt.s32.totalorder %s10, 2
    // Predicated region
    $region25: #{deeplab_bottleneck_forward.16} parent=5 // pred_check
      %p205 = pneg %p204
    $region26: #{deeplab_bottleneck_forward.16} parent=5 // pred_check_branch
      %207 = sbr.rel (%p205) target = $region28
    $region27: #{deeplab_bottleneck_forward.16} parent=5 // pred_region
      // Predicated region
      $region29: #{deeplab_bottleneck_forward.16} parent=27 // pred_check
        %p208 = pneg %p51
      $region30: #{deeplab_bottleneck_forward.16} parent=27 // pred_check_branch
        %210 = sbr.rel (%p208) target = $region32
      $region31: #{deeplab_bottleneck_forward.16} parent=27 // pred_region
        %s211 = smul.u32 32, %s17
        %p212 = scmp.lt.s32.totalorder %s211, 63
        %s213 = scalar_select %p212, %s211, 63
        %p214 = scmp.lt.s32.totalorder %s19, 0
        %s215 = scalar_select %p214, %s19, 0
        %s216 = sadd.s32 %s215, %s213
        %s217 = smul.addr %s216, 8
        %s218 = scalar_lea.vmem %s0, %s217
        %s219 = smul.u32 32, %s17
      $region32: #{deeplab_bottleneck_forward.16} parent=27 // pred_fallthru
        _
    $region28: #{deeplab_bottleneck_forward.16} parent=5 // pred_fallthru
      _
    %p220 = scmp.le.s32.totalorder 1, %s10
    %p221 = scmp.lt.s32.totalorder %s10, 3
    %p222 = pnand %p220, %p221
    %p223 = pneg %p222
    // Predicated region
    $region33: #{deeplab_bottleneck_forward.16} parent=5 // pred_check
      _
    $region34: #{deeplab_bottleneck_forward.16} parent=5 // pred_check_branch
      %225 = sbr.rel (%p222) target = $region36
    $region35: #{deeplab_bottleneck_forward.16} parent=5 // pred_region
      %s226 = ssub.s32 %s10, 1
      %s227 = smul.u32 32, %s20
      %p228 = scmp.lt.s32.totalorder %s227, 63
      %s229 = scalar_select %p228, %s227, 63
      %p230 = scmp.lt.s32.totalorder %s22, 0
      %s231 = scalar_select %p230, %s22, 0
      %s232 = sadd.s32 %s231, %s229
      %s233 = smul.addr %s232, 8
      %s234 = scalar_lea.vmem %s0, %s233
      %p235 = pneg %p57
      %p236 = pneg %p54
      %s237 = smul.u32 2, %s22
      %p238 = scmp.lt.s32.totalorder %s237, 1
      %s239 = scalar_select %p238, %s237, 1
      %p240 = scmp.lt.s32.totalorder %s21, 0
      %s241 = scalar_select %p240, %s21, 0
      %s242 = sadd.s32 %s241, %s239
      %s243 = smul.addr %s242, 8
      %s244 = scalar_lea.vmem %s1, %s243
      %p245 = pneg %p85
      %p246 = pneg %p82
      %p247 = scmp.lt.s32.totalorder %s21, 0
      %s248 = scalar_select %p247, %s21, 0
      %s249 = scalar_lea.vmem %s2, %s248
      %p250 = pneg %p111
      %p251 = pneg %p108
      %p252 = scmp.lt.s32.totalorder %s21, 0
      %s253 = scalar_select %p252, %s21, 0
      %s254 = scalar_lea.vmem %s3, %s253
      %p255 = pneg %p137
      %p256 = pneg %p134
      %p257 = pneg %p165
      %p258 = pneg %p162
      %s259 = smul.u32 32, %s20
      %p260 = scmp.lt.s32.totalorder %s259, 63
      %s261 = scalar_select %p260, %s259, 63
      %p262 = scmp.lt.s32.totalorder %s21, 0
      %s263 = scalar_select %p262, %s21, 0
      %s264 = sadd.s32 %s263, %s261
      %s265 = smul.addr %s264, 8
      %s266 = scalar_lea.vmem %s4, %s265
      %s267 = smul.u32 32, %s20
      %p268 = scmp.lt.s32.totalorder %s267, 63
      %s269 = scalar_select %p268, %s267, 63
      %p270 = scmp.lt.s32.totalorder %s22, 0
      %s271 = scalar_select %p270, %s22, 0
      %s272 = sadd.s32 %s271, %s269
      %s273 = smul.addr %s272, 8
      %s274 = scalar_lea.vmem %s0, %s273
      %s275 = smul.u32 32, %s20
      %s276 = smul.u32 2, %s22
      %p277 = scmp.lt.s32.totalorder %s276, 1
      %s278 = scalar_select %p277, %s276, 1
      %p279 = scmp.lt.s32.totalorder %s21, 0
      %s280 = scalar_select %p279, %s21, 0
      %s281 = sadd.s32 %s280, %s278
      %s282 = smul.addr %s281, 8
      %s283 = scalar_lea.vmem %s1, %s282
      %s284 = smul.u32 2, %s22
      %p285 = scmp.lt.s32.totalorder %s21, 0
      %s286 = scalar_select %p285, %s21, 0
      %s287 = scalar_lea.vmem %s2, %s286
      %p288 = scmp.lt.s32.totalorder %s21, 0
      %s289 = scalar_select %p288, %s21, 0
      %s290 = scalar_lea.vmem %s3, %s289
      %s291 = smul.u32 32, %s20
      %p292 = scmp.lt.s32.totalorder %s291, 63
      %s293 = scalar_select %p292, %s291, 63
      %p294 = scmp.lt.s32.totalorder %s21, 0
      %s295 = scalar_select %p294, %s21, 0
      %s296 = sadd.s32 %s295, %s293
      %s297 = smul.addr %s296, 8
      %s298 = scalar_lea.vmem %s4, %s297
      %s299 = smul.u32 32, %s20
      %p301 = scmp.eq.s32.totalorder %s22, 0
      // Predicated region
      $region37: #{deeplab_bottleneck_forward.16} parent=35 // pred_check
        %p302 = pneg %p301
      $region38: #{deeplab_bottleneck_forward.16} parent=35 // pred_check_branch
        %304 = sbr.rel (%p302) target = $region40
      $region39: #{deeplab_bottleneck_forward.16} parent=35 // pred_region
        %vm305 = vcmask 130048
        %306 = vst.msk [vmem:[#allocation2] sm:$0xff] %vm305, 0.0
        %307 = vst.msk [vmem:[#allocation2 + $0x8] sm:$0xff] %vm305, 0.0
        %308 = vst.msk [vmem:[#allocation2 + $0x10] sm:$0xff] %vm305, 0.0
        %309 = vst.msk [vmem:[#allocation2 + $0x18] sm:$0xff] %vm305, 0.0
        %310 = vst.msk [vmem:[#allocation2 + $0x20] sm:$0xff] %vm305, 0.0
        %311 = vst.msk [vmem:[#allocation2 + $0x28] sm:$0xff] %vm305, 0.0
        %312 = vst.msk [vmem:[#allocation2 + $0x30] sm:$0xff] %vm305, 0.0
        %313 = vst.msk [vmem:[#allocation2 + $0x38] sm:$0xff] %vm305, 0.0
        %314 = vst.msk [vmem:[#allocation2 + $0x40] sm:$0xff] %vm305, 0.0
        %315 = vst.msk [vmem:[#allocation2 + $0x48] sm:$0xff] %vm305, 0.0
        %316 = vst.msk [vmem:[#allocation2 + $0x50] sm:$0xff] %vm305, 0.0
        %317 = vst.msk [vmem:[#allocation2 + $0x58] sm:$0xff] %vm305, 0.0
        %318 = vst.msk [vmem:[#allocation2 + $0x60] sm:$0xff] %vm305, 0.0
        %319 = vst.msk [vmem:[#allocation2 + $0x68] sm:$0xff] %vm305, 0.0
        %320 = vst.msk [vmem:[#allocation2 + $0x70] sm:$0xff] %vm305, 0.0
        %321 = vst.msk [vmem:[#allocation2 + $0x78] sm:$0xff] %vm305, 0.0
        %322 = vst.msk [vmem:[#allocation2 + $0x80] sm:$0xff] %vm305, 0.0
        %323 = vst.msk [vmem:[#allocation2 + $0x88] sm:$0xff] %vm305, 0.0
        %324 = vst.msk [vmem:[#allocation2 + $0x90] sm:$0xff] %vm305, 0.0
        %325 = vst.msk [vmem:[#allocation2 + $0x98] sm:$0xff] %vm305, 0.0
        %326 = vst.msk [vmem:[#allocation2 + $0xa0] sm:$0xff] %vm305, 0.0
        %327 = vst.msk [vmem:[#allocation2 + $0xa8] sm:$0xff] %vm305, 0.0
        %328 = vst.msk [vmem:[#allocation2 + $0xb0] sm:$0xff] %vm305, 0.0
        %329 = vst.msk [vmem:[#allocation2 + $0xb8] sm:$0xff] %vm305, 0.0
        %330 = vst.msk [vmem:[#allocation2 + $0xc0] sm:$0xff] %vm305, 0.0
        %331 = vst.msk [vmem:[#allocation2 + $0xc8] sm:$0xff] %vm305, 0.0
        %332 = vst.msk [vmem:[#allocation2 + $0xd0] sm:$0xff] %vm305, 0.0
        %333 = vst.msk [vmem:[#allocation2 + $0xd8] sm:$0xff] %vm305, 0.0
        %334 = vst.msk [vmem:[#allocation2 + $0xe0] sm:$0xff] %vm305, 0.0
        %335 = vst.msk [vmem:[#allocation2 + $0xe8] sm:$0xff] %vm305, 0.0
        %336 = vst.msk [vmem:[#allocation2 + $0xf0] sm:$0xff] %vm305, 0.0
        %337 = vst.msk [vmem:[#allocation2 + $0xf8] sm:$0xff] %vm305, 0.0
      $region40: #{deeplab_bottleneck_forward.16} parent=35 // pred_fallthru
        _
      %v338 = vld [vmem:[#allocation2] sm:$0xff]
      %v339 = vld [vmem:[#allocation2 + $0x8] sm:$0xff]
      %v340 = vld [vmem:[#allocation2 + $0x10] sm:$0xff]
      %v341 = vld [vmem:[#allocation2 + $0x18] sm:$0xff]
      %v342 = vld [vmem:[#allocation2 + $0x20] sm:$0xff]
      %v343 = vld [vmem:[#allocation2 + $0x28] sm:$0xff]
      %v344 = vld [vmem:[#allocation2 + $0x30] sm:$0xff]
      %v345 = vld [vmem:[#allocation2 + $0x38] sm:$0xff]
      %v346 = vld [vmem:[#allocation2 + $0x40] sm:$0xff]
      %v347 = vld [vmem:[#allocation2 + $0x48] sm:$0xff]
      %v348 = vld [vmem:[#allocation2 + $0x50] sm:$0xff]
      %v349 = vld [vmem:[#allocation2 + $0x58] sm:$0xff]
      %v350 = vld [vmem:[#allocation2 + $0x60] sm:$0xff]
      %v351 = vld [vmem:[#allocation2 + $0x68] sm:$0xff]
      %v352 = vld [vmem:[#allocation2 + $0x70] sm:$0xff]
      %v353 = vld [vmem:[#allocation2 + $0x78] sm:$0xff]
      %v354 = vld [vmem:[#allocation2 + $0x80] sm:$0xff]
      %v355 = vld [vmem:[#allocation2 + $0x88] sm:$0xff]
      %v356 = vld [vmem:[#allocation2 + $0x90] sm:$0xff]
      %v357 = vld [vmem:[#allocation2 + $0x98] sm:$0xff]
      %v358 = vld [vmem:[#allocation2 + $0xa0] sm:$0xff]
      %v359 = vld [vmem:[#allocation2 + $0xa8] sm:$0xff]
      %v360 = vld [vmem:[#allocation2 + $0xb0] sm:$0xff]
      %v361 = vld [vmem:[#allocation2 + $0xb8] sm:$0xff]
      %v362 = vld [vmem:[#allocation2 + $0xc0] sm:$0xff]
      %v363 = vld [vmem:[#allocation2 + $0xc8] sm:$0xff]
      %v364 = vld [vmem:[#allocation2 + $0xd0] sm:$0xff]
      %v365 = vld [vmem:[#allocation2 + $0xd8] sm:$0xff]
      %v366 = vld [vmem:[#allocation2 + $0xe0] sm:$0xff]
      %v367 = vld [vmem:[#allocation2 + $0xe8] sm:$0xff]
      %v368 = vld [vmem:[#allocation2 + $0xf0] sm:$0xff]
      %v369 = vld [vmem:[#allocation2 + $0xf8] sm:$0xff]
      %v370 = vld [vmem:[%s274] sm:$0xff]
      %v371 = vld [vmem:[%s274 + $0x8] sm:$0xff]
      %v372 = vld [vmem:[%s274 + $0x10] sm:$0xff]
      %v373 = vld [vmem:[%s274 + $0x18] sm:$0xff]
      %v374 = vld [vmem:[%s274 + $0x20] sm:$0xff]
      %v375 = vld [vmem:[%s274 + $0x28] sm:$0xff]
      %v376 = vld [vmem:[%s274 + $0x30] sm:$0xff]
      %v377 = vld [vmem:[%s274 + $0x38] sm:$0xff]
      %v378 = vld [vmem:[%s274 + $0x40] sm:$0xff]
      %v379 = vld [vmem:[%s274 + $0x48] sm:$0xff]
      %v380 = vld [vmem:[%s274 + $0x50] sm:$0xff]
      %v381 = vld [vmem:[%s274 + $0x58] sm:$0xff]
      %v382 = vld [vmem:[%s274 + $0x60] sm:$0xff]
      %v383 = vld [vmem:[%s274 + $0x68] sm:$0xff]
      %v384 = vld [vmem:[%s274 + $0x70] sm:$0xff]
      %v385 = vld [vmem:[%s274 + $0x78] sm:$0xff]
      %v386 = vld [vmem:[%s274 + $0x80] sm:$0xff]
      %v387 = vld [vmem:[%s274 + $0x88] sm:$0xff]
      %v388 = vld [vmem:[%s274 + $0x90] sm:$0xff]
      %v389 = vld [vmem:[%s274 + $0x98] sm:$0xff]
      %v390 = vld [vmem:[%s274 + $0xa0] sm:$0xff]
      %v391 = vld [vmem:[%s274 + $0xa8] sm:$0xff]
      %v392 = vld [vmem:[%s274 + $0xb0] sm:$0xff]
      %v393 = vld [vmem:[%s274 + $0xb8] sm:$0xff]
      %v394 = vld [vmem:[%s274 + $0xc0] sm:$0xff]
      %v395 = vld [vmem:[%s274 + $0xc8] sm:$0xff]
      %v396 = vld [vmem:[%s274 + $0xd0] sm:$0xff]
      %v397 = vld [vmem:[%s274 + $0xd8] sm:$0xff]
      %v398 = vld [vmem:[%s274 + $0xe0] sm:$0xff]
      %v399 = vld [vmem:[%s274 + $0xe8] sm:$0xff]
      %v400 = vld [vmem:[%s274 + $0xf0] sm:$0xff]
      %v401 = vld [vmem:[%s274 + $0xf8] sm:$0xff]
      %v402 = vpack.c.bf16 %v371, %v370
      %v403 = vpack.c.bf16 %v373, %v372
      %v404 = vpack.c.bf16 %v375, %v374
      %v405 = vpack.c.bf16 %v377, %v376
      %v406 = vpack.c.bf16 %v379, %v378
      %v407 = vpack.c.bf16 %v381, %v380
      %v408 = vpack.c.bf16 %v383, %v382
      %v409 = vpack.c.bf16 %v385, %v384
      %v410 = vpack.c.bf16 %v387, %v386
      %v411 = vpack.c.bf16 %v389, %v388
      %v412 = vpack.c.bf16 %v391, %v390
      %v413 = vpack.c.bf16 %v393, %v392
      %v414 = vpack.c.bf16 %v395, %v394
      %v415 = vpack.c.bf16 %v397, %v396
      %v416 = vpack.c.bf16 %v399, %v398
      %v417 = vpack.c.bf16 %v401, %v400
      %v418 = vld [vmem:[%s283] sm:$0xff]
      %v419 = vld [vmem:[%s283 + $0x8] sm:$0x1]
      %v420 = vpack.c.bf16 %v419, %v418
      %vm421 = vcmask 72704
      %v423 = vsel %vm421, %v402, 0
      %v426 = vsel %vm421, %v403, 0
      %v429 = vsel %vm421, %v404, 0
      %v432 = vsel %vm421, %v405, 0
      %v435 = vsel %vm421, %v406, 0
      %v438 = vsel %vm421, %v407, 0
      %v441 = vsel %vm421, %v408, 0
      %v444 = vsel %vm421, %v409, 0
      %v447 = vsel %vm421, %v410, 0
      %v450 = vsel %vm421, %v411, 0
      %v453 = vsel %vm421, %v412, 0
      %v456 = vsel %vm421, %v413, 0
      %v459 = vsel %vm421, %v414, 0
      %v462 = vsel %vm421, %v415, 0
      %v465 = vsel %vm421, %v416, 0
      %v468 = vsel %vm421, %v417, 0
      %vm470 = vcmask 1043456
      %vm471 = vcmask 1044480
      %v472 = vsel %vm470, 4294967295, 65535
      %v473 = vsel %vm471, %v472, 0
      %v475 = vand.u32 %v420, %v473
      %477 = vmatprep.subr.bf16.mxu0 0
      %478 = vmatpush1.bf16.msra.mxu0 0
      %479 = vmatprep.subr.bf16.mxu0 0
      %480 = vmatpush1.bf16.msra.mxu0 0
      %481 = vmatprep.subr.bf16.mxu0 0
      %482 = vmatpush1.bf16.msra.mxu0 0
      %483 = vmatprep.subr.bf16.mxu0 0
      %484 = vmatpush1.bf16.msra.mxu0 0
      %485 = vmatprep.subr.bf16.mxu0 0
      %486 = vmatpush1.bf16.msra.mxu0 0
      %487 = vmatprep.subr.bf16.mxu0 0
      %488 = vmatpush1.bf16.msra.mxu0 0
      %489 = vmatprep.subr.bf16.mxu0 0
      %490 = vmatpush1.bf16.msra.mxu0 0
      %491 = vmatprep.subr.bf16.mxu0 0
      %492 = vmatpush1.bf16.msra.mxu0 %v475
      %493 = vmatprep.subr.bf16.mxu0 0
      %494 = vmatpush2.bf16.msra.mxu0 0
      %495 = vmatprep.subr.bf16.mxu0 0
      %496 = vmatpush2.bf16.msra.mxu0 0
      %497 = vmatprep.subr.bf16.mxu0 0
      %498 = vmatpush2.bf16.msra.mxu0 0
      %499 = vmatprep.subr.bf16.mxu0 0
      %500 = vmatpush2.bf16.msra.mxu0 0
      %501 = vmatprep.subr.bf16.mxu0 0
      %502 = vmatpush2.bf16.msra.mxu0 0
      %503 = vmatprep.subr.bf16.mxu0 0
      %504 = vmatpush2.bf16.msra.mxu0 0
      %505 = vmatprep.subr.bf16.mxu0 0
      %506 = vmatpush2.bf16.msra.mxu0 0
      %507 = vmatprep.subr.bf16.mxu0 0
      %508 = vmatpush2.bf16.msra.mxu0 0
      %509 = vmatprep.mubr.bf16.mxu0 0
      %510 = vmatmul.mubr.bf16.gmra.mxu0 %v423
      %v511 = vpop.f32.mrf.mxu0
      %v512 = vadd.f32 0.0, %v511
      %v513 = vpop.f32.mrf.mxu0
      %v514 = vpop.f32.mrf.mxu0
      %v515 = vadd.f32 0.0, %v514
      %v516 = vpop.f32.mrf.mxu0
      %517 = vmatprep.mubr.bf16.mxu0 0
      %518 = vmatmul.mubr.bf16.gmra.mxu0 %v426
      %v519 = vpop.f32.mrf.mxu0
      %v520 = vadd.f32 0.0, %v519
      %v521 = vpop.f32.mrf.mxu0
      %v522 = vpop.f32.mrf.mxu0
      %v523 = vadd.f32 0.0, %v522
      %v524 = vpop.f32.mrf.mxu0
      %525 = vmatprep.mubr.bf16.mxu0 0
      %526 = vmatmul.mubr.bf16.gmra.mxu0 %v429
      %v527 = vpop.f32.mrf.mxu0
      %v528 = vadd.f32 0.0, %v527
      %v529 = vpop.f32.mrf.mxu0
      %v530 = vpop.f32.mrf.mxu0
      %v531 = vadd.f32 0.0, %v530
      %v532 = vpop.f32.mrf.mxu0
      %533 = vmatprep.mubr.bf16.mxu0 0
      %534 = vmatmul.mubr.bf16.gmra.mxu0 %v432
      %v535 = vpop.f32.mrf.mxu0
      %v536 = vadd.f32 0.0, %v535
      %v537 = vpop.f32.mrf.mxu0
      %v538 = vpop.f32.mrf.mxu0
      %v539 = vadd.f32 0.0, %v538
      %v540 = vpop.f32.mrf.mxu0
      %541 = vmatprep.mubr.bf16.mxu0 0
      %542 = vmatmul.mubr.bf16.gmra.mxu0 %v435
      %v543 = vpop.f32.mrf.mxu0
      %v544 = vadd.f32 0.0, %v543
      %v545 = vpop.f32.mrf.mxu0
      %v546 = vpop.f32.mrf.mxu0
      %v547 = vadd.f32 0.0, %v546
      %v548 = vpop.f32.mrf.mxu0
      %549 = vmatprep.mubr.bf16.mxu0 0
      %550 = vmatmul.mubr.bf16.gmra.mxu0 %v438
      %v551 = vpop.f32.mrf.mxu0
      %v552 = vadd.f32 0.0, %v551
      %v553 = vpop.f32.mrf.mxu0
      %v554 = vpop.f32.mrf.mxu0
      %v555 = vadd.f32 0.0, %v554
      %v556 = vpop.f32.mrf.mxu0
      %557 = vmatprep.mubr.bf16.mxu0 0
      %558 = vmatmul.mubr.bf16.gmra.mxu0 %v441
      %v559 = vpop.f32.mrf.mxu0
      %v560 = vadd.f32 0.0, %v559
      %v561 = vpop.f32.mrf.mxu0
      %v562 = vpop.f32.mrf.mxu0
      %v563 = vadd.f32 0.0, %v562
      %v564 = vpop.f32.mrf.mxu0
      %565 = vmatprep.mubr.bf16.mxu0 0
      %566 = vmatmul.mubr.bf16.gmra.mxu0 %v444
      %v567 = vpop.f32.mrf.mxu0
      %v568 = vadd.f32 0.0, %v567
      %v569 = vpop.f32.mrf.mxu0
      %v570 = vpop.f32.mrf.mxu0
      %v571 = vadd.f32 0.0, %v570
      %v572 = vpop.f32.mrf.mxu0
      %573 = vmatprep.mubr.bf16.mxu0 0
      %574 = vmatmul.mubr.bf16.gmra.mxu0 %v447
      %v575 = vpop.f32.mrf.mxu0
      %v576 = vadd.f32 0.0, %v575
      %v577 = vpop.f32.mrf.mxu0
      %v578 = vpop.f32.mrf.mxu0
      %v579 = vadd.f32 0.0, %v578
      %v580 = vpop.f32.mrf.mxu0
      %581 = vmatprep.mubr.bf16.mxu0 0
      %582 = vmatmul.mubr.bf16.gmra.mxu0 %v450
      %v583 = vpop.f32.mrf.mxu0
      %v584 = vadd.f32 0.0, %v583
      %v585 = vpop.f32.mrf.mxu0
      %v586 = vpop.f32.mrf.mxu0
      %v587 = vadd.f32 0.0, %v586
      %v588 = vpop.f32.mrf.mxu0
      %589 = vmatprep.mubr.bf16.mxu0 0
      %590 = vmatmul.mubr.bf16.gmra.mxu0 %v453
      %v591 = vpop.f32.mrf.mxu0
      %v592 = vadd.f32 0.0, %v591
      %v593 = vpop.f32.mrf.mxu0
      %v594 = vpop.f32.mrf.mxu0
      %v595 = vadd.f32 0.0, %v594
      %v596 = vpop.f32.mrf.mxu0
      %597 = vmatprep.mubr.bf16.mxu0 0
      %598 = vmatmul.mubr.bf16.gmra.mxu0 %v456
      %v599 = vpop.f32.mrf.mxu0
      %v600 = vadd.f32 0.0, %v599
      %v601 = vpop.f32.mrf.mxu0
      %v602 = vpop.f32.mrf.mxu0
      %v603 = vadd.f32 0.0, %v602
      %v604 = vpop.f32.mrf.mxu0
      %605 = vmatprep.mubr.bf16.mxu0 0
      %606 = vmatmul.mubr.bf16.gmra.mxu0 %v459
      %v607 = vpop.f32.mrf.mxu0
      %v608 = vadd.f32 0.0, %v607
      %v609 = vpop.f32.mrf.mxu0
      %v610 = vpop.f32.mrf.mxu0
      %v611 = vadd.f32 0.0, %v610
      %v612 = vpop.f32.mrf.mxu0
      %613 = vmatprep.mubr.bf16.mxu0 0
      %614 = vmatmul.mubr.bf16.gmra.mxu0 %v462
      %v615 = vpop.f32.mrf.mxu0
      %v616 = vadd.f32 0.0, %v615
      %v617 = vpop.f32.mrf.mxu0
      %v618 = vpop.f32.mrf.mxu0
      %v619 = vadd.f32 0.0, %v618
      %v620 = vpop.f32.mrf.mxu0
      %621 = vmatprep.mubr.bf16.mxu0 0
      %622 = vmatmul.mubr.bf16.gmra.mxu0 %v465
      %v623 = vpop.f32.mrf.mxu0
      %v624 = vadd.f32 0.0, %v623
      %v625 = vpop.f32.mrf.mxu0
      %v626 = vpop.f32.mrf.mxu0
      %v627 = vadd.f32 0.0, %v626
      %v628 = vpop.f32.mrf.mxu0
      %629 = vmatprep.mubr.bf16.mxu0 0
      %630 = vmatmul.mubr.bf16.gmra.mxu0 %v468
      %v631 = vpop.f32.mrf.mxu0
      %v632 = vadd.f32 0.0, %v631
      %v633 = vpop.f32.mrf.mxu0
      %v634 = vpop.f32.mrf.mxu0
      %v635 = vadd.f32 0.0, %v634
      %v636 = vpop.f32.mrf.mxu0
      %637 = vdwg.mxu0
      %v638 = vadd.f32 %v338, %v512
      %v639 = vadd.f32 %v339, %v515
      %v640 = vadd.f32 %v340, %v520
      %v641 = vadd.f32 %v341, %v523
      %v642 = vadd.f32 %v342, %v528
      %v643 = vadd.f32 %v343, %v531
      %v644 = vadd.f32 %v344, %v536
      %v645 = vadd.f32 %v345, %v539
      %v646 = vadd.f32 %v346, %v544
      %v647 = vadd.f32 %v347, %v547
      %v648 = vadd.f32 %v348, %v552
      %v649 = vadd.f32 %v349, %v555
      %v650 = vadd.f32 %v350, %v560
      %v651 = vadd.f32 %v351, %v563
      %v652 = vadd.f32 %v352, %v568
      %v653 = vadd.f32 %v353, %v571
      %v654 = vadd.f32 %v354, %v576
      %v655 = vadd.f32 %v355, %v579
      %v656 = vadd.f32 %v356, %v584
      %v657 = vadd.f32 %v357, %v587
      %v658 = vadd.f32 %v358, %v592
      %v659 = vadd.f32 %v359, %v595
      %v660 = vadd.f32 %v360, %v600
      %v661 = vadd.f32 %v361, %v603
      %v662 = vadd.f32 %v362, %v608
      %v663 = vadd.f32 %v363, %v611
      %v664 = vadd.f32 %v364, %v616
      %v665 = vadd.f32 %v365, %v619
      %v666 = vadd.f32 %v366, %v624
      %v667 = vadd.f32 %v367, %v627
      %v668 = vadd.f32 %v368, %v632
      %v669 = vadd.f32 %v369, %v635
      %vm670 = vcmask 130048
      %671 = vst.msk [vmem:[#allocation2] sm:$0xff] %vm670, %v638
      %672 = vst.msk [vmem:[#allocation2 + $0x8] sm:$0xff] %vm670, %v639
      %673 = vst.msk [vmem:[#allocation2 + $0x10] sm:$0xff] %vm670, %v640
      %674 = vst.msk [vmem:[#allocation2 + $0x18] sm:$0xff] %vm670, %v641
      %675 = vst.msk [vmem:[#allocation2 + $0x20] sm:$0xff] %vm670, %v642
      %676 = vst.msk [vmem:[#allocation2 + $0x28] sm:$0xff] %vm670, %v643
      %677 = vst.msk [vmem:[#allocation2 + $0x30] sm:$0xff] %vm670, %v644
      %678 = vst.msk [vmem:[#allocation2 + $0x38] sm:$0xff] %vm670, %v645
      %679 = vst.msk [vmem:[#allocation2 + $0x40] sm:$0xff] %vm670, %v646
      %680 = vst.msk [vmem:[#allocation2 + $0x48] sm:$0xff] %vm670, %v647
      %681 = vst.msk [vmem:[#allocation2 + $0x50] sm:$0xff] %vm670, %v648
      %682 = vst.msk [vmem:[#allocation2 + $0x58] sm:$0xff] %vm670, %v649
      %683 = vst.msk [vmem:[#allocation2 + $0x60] sm:$0xff] %vm670, %v650
      %684 = vst.msk [vmem:[#allocation2 + $0x68] sm:$0xff] %vm670, %v651
      %685 = vst.msk [vmem:[#allocation2 + $0x70] sm:$0xff] %vm670, %v652
      %686 = vst.msk [vmem:[#allocation2 + $0x78] sm:$0xff] %vm670, %v653
      %687 = vst.msk [vmem:[#allocation2 + $0x80] sm:$0xff] %vm670, %v654
      %688 = vst.msk [vmem:[#allocation2 + $0x88] sm:$0xff] %vm670, %v655
      %689 = vst.msk [vmem:[#allocation2 + $0x90] sm:$0xff] %vm670, %v656
      %690 = vst.msk [vmem:[#allocation2 + $0x98] sm:$0xff] %vm670, %v657
      %691 = vst.msk [vmem:[#allocation2 + $0xa0] sm:$0xff] %vm670, %v658
      %692 = vst.msk [vmem:[#allocation2 + $0xa8] sm:$0xff] %vm670, %v659
      %693 = vst.msk [vmem:[#allocation2 + $0xb0] sm:$0xff] %vm670, %v660
      %694 = vst.msk [vmem:[#allocation2 + $0xb8] sm:$0xff] %vm670, %v661
      %695 = vst.msk [vmem:[#allocation2 + $0xc0] sm:$0xff] %vm670, %v662
      %696 = vst.msk [vmem:[#allocation2 + $0xc8] sm:$0xff] %vm670, %v663
      %697 = vst.msk [vmem:[#allocation2 + $0xd0] sm:$0xff] %vm670, %v664
      %698 = vst.msk [vmem:[#allocation2 + $0xd8] sm:$0xff] %vm670, %v665
      %699 = vst.msk [vmem:[#allocation2 + $0xe0] sm:$0xff] %vm670, %v666
      %700 = vst.msk [vmem:[#allocation2 + $0xe8] sm:$0xff] %vm670, %v667
      %701 = vst.msk [vmem:[#allocation2 + $0xf0] sm:$0xff] %vm670, %v668
      %702 = vst.msk [vmem:[#allocation2 + $0xf8] sm:$0xff] %vm670, %v669
      // Predicated region
      $region41: #{deeplab_bottleneck_forward.16} parent=35 // pred_check
        %p703 = pneg %p301
      $region42: #{deeplab_bottleneck_forward.16} parent=35 // pred_check_branch
        %705 = sbr.rel (%p703) target = $region44
      $region43: #{deeplab_bottleneck_forward.16} parent=35 // pred_region
        %v706 = vld [vmem:[#allocation2] sm:$0xff]
        %v707 = vld [vmem:[#allocation2 + $0x8] sm:$0xff]
        %v708 = vld [vmem:[#allocation2 + $0x10] sm:$0xff]
        %v709 = vld [vmem:[#allocation2 + $0x18] sm:$0xff]
        %v710 = vld [vmem:[#allocation2 + $0x20] sm:$0xff]
        %v711 = vld [vmem:[#allocation2 + $0x28] sm:$0xff]
        %v712 = vld [vmem:[#allocation2 + $0x30] sm:$0xff]
        %v713 = vld [vmem:[#allocation2 + $0x38] sm:$0xff]
        %v714 = vld [vmem:[#allocation2 + $0x40] sm:$0xff]
        %v715 = vld [vmem:[#allocation2 + $0x48] sm:$0xff]
        %v716 = vld [vmem:[#allocation2 + $0x50] sm:$0xff]
        %v717 = vld [vmem:[#allocation2 + $0x58] sm:$0xff]
        %v718 = vld [vmem:[#allocation2 + $0x60] sm:$0xff]
        %v719 = vld [vmem:[#allocation2 + $0x68] sm:$0xff]
        %v720 = vld [vmem:[#allocation2 + $0x70] sm:$0xff]
        %v721 = vld [vmem:[#allocation2 + $0x78] sm:$0xff]
        %v722 = vld [vmem:[#allocation2 + $0x80] sm:$0xff]
        %v723 = vld [vmem:[#allocation2 + $0x88] sm:$0xff]
        %v724 = vld [vmem:[#allocation2 + $0x90] sm:$0xff]
        %v725 = vld [vmem:[#allocation2 + $0x98] sm:$0xff]
        %v726 = vld [vmem:[#allocation2 + $0xa0] sm:$0xff]
        %v727 = vld [vmem:[#allocation2 + $0xa8] sm:$0xff]
        %v728 = vld [vmem:[#allocation2 + $0xb0] sm:$0xff]
        %v729 = vld [vmem:[#allocation2 + $0xb8] sm:$0xff]
        %v730 = vld [vmem:[#allocation2 + $0xc0] sm:$0xff]
        %v731 = vld [vmem:[#allocation2 + $0xc8] sm:$0xff]
        %v732 = vld [vmem:[#allocation2 + $0xd0] sm:$0xff]
        %v733 = vld [vmem:[#allocation2 + $0xd8] sm:$0xff]
        %v734 = vld [vmem:[#allocation2 + $0xe0] sm:$0xff]
        %v735 = vld [vmem:[#allocation2 + $0xe8] sm:$0xff]
        %v736 = vld [vmem:[#allocation2 + $0xf0] sm:$0xff]
        %v737 = vld [vmem:[#allocation2 + $0xf8] sm:$0xff]
        %v738 = vld [vmem:[%s287] sm:$0x1]
        %v740 = vlaneseq
        %v741 = vshrl.u32 %v740, 7
        %v742 = vsub.s32 0, %v741
        %v743 = vrot.slane %v738, %v742
        %v745 = vmul.f32 %v706, %v743
        %v746 = vmul.f32 %v707, %v743
        %v747 = vmul.f32 %v708, %v743
        %v748 = vmul.f32 %v709, %v743
        %v749 = vmul.f32 %v710, %v743
        %v750 = vmul.f32 %v711, %v743
        %v751 = vmul.f32 %v712, %v743
        %v752 = vmul.f32 %v713, %v743
        %v753 = vmul.f32 %v714, %v743
        %v754 = vmul.f32 %v715, %v743
        %v755 = vmul.f32 %v716, %v743
        %v756 = vmul.f32 %v717, %v743
        %v757 = vmul.f32 %v718, %v743
        %v758 = vmul.f32 %v719, %v743
        %v759 = vmul.f32 %v720, %v743
        %v760 = vmul.f32 %v721, %v743
        %v761 = vmul.f32 %v722, %v743
        %v762 = vmul.f32 %v723, %v743
        %v763 = vmul.f32 %v724, %v743
        %v764 = vmul.f32 %v725, %v743
        %v765 = vmul.f32 %v726, %v743
        %v766 = vmul.f32 %v727, %v743
        %v767 = vmul.f32 %v728, %v743
        %v768 = vmul.f32 %v729, %v743
        %v769 = vmul.f32 %v730, %v743
        %v770 = vmul.f32 %v731, %v743
        %v771 = vmul.f32 %v732, %v743
        %v772 = vmul.f32 %v733, %v743
        %v773 = vmul.f32 %v734, %v743
        %v774 = vmul.f32 %v735, %v743
        %v775 = vmul.f32 %v736, %v743
        %v776 = vmul.f32 %v737, %v743
        %v777 = vld [vmem:[%s290] sm:$0x1]
        %v779 = vlaneseq
        %v780 = vshrl.u32 %v779, 7
        %v781 = vsub.s32 0, %v780
        %v782 = vrot.slane %v777, %v781
        %v784 = vadd.f32 %v745, %v782
        %v785 = vadd.f32 %v746, %v782
        %v786 = vadd.f32 %v747, %v782
        %v787 = vadd.f32 %v748, %v782
        %v788 = vadd.f32 %v749, %v782
        %v789 = vadd.f32 %v750, %v782
        %v790 = vadd.f32 %v751, %v782
        %v791 = vadd.f32 %v752, %v782
        %v792 = vadd.f32 %v753, %v782
        %v793 = vadd.f32 %v754, %v782
        %v794 = vadd.f32 %v755, %v782
        %v795 = vadd.f32 %v756, %v782
        %v796 = vadd.f32 %v757, %v782
        %v797 = vadd.f32 %v758, %v782
        %v798 = vadd.f32 %v759, %v782
        %v799 = vadd.f32 %v760, %v782
        %v800 = vadd.f32 %v761, %v782
        %v801 = vadd.f32 %v762, %v782
        %v802 = vadd.f32 %v763, %v782
        %v803 = vadd.f32 %v764, %v782
        %v804 = vadd.f32 %v765, %v782
        %v805 = vadd.f32 %v766, %v782
        %v806 = vadd.f32 %v767, %v782
        %v807 = vadd.f32 %v768, %v782
        %v808 = vadd.f32 %v769, %v782
        %v809 = vadd.f32 %v770, %v782
        %v810 = vadd.f32 %v771, %v782
        %v811 = vadd.f32 %v772, %v782
        %v812 = vadd.f32 %v773, %v782
        %v813 = vadd.f32 %v774, %v782
        %v814 = vadd.f32 %v775, %v782
        %v815 = vadd.f32 %v776, %v782
        %v816 = vmax.f32 %v784, 0.0
        %v817 = vmax.f32 %v785, 0.0
        %v818 = vmax.f32 %v786, 0.0
        %v819 = vmax.f32 %v787, 0.0
        %v820 = vmax.f32 %v788, 0.0
        %v821 = vmax.f32 %v789, 0.0
        %v822 = vmax.f32 %v790, 0.0
        %v823 = vmax.f32 %v791, 0.0
        %v824 = vmax.f32 %v792, 0.0
        %v825 = vmax.f32 %v793, 0.0
        %v826 = vmax.f32 %v794, 0.0
        %v827 = vmax.f32 %v795, 0.0
        %v828 = vmax.f32 %v796, 0.0
        %v829 = vmax.f32 %v797, 0.0
        %v830 = vmax.f32 %v798, 0.0
        %v831 = vmax.f32 %v799, 0.0
        %v832 = vmax.f32 %v800, 0.0
        %v833 = vmax.f32 %v801, 0.0
        %v834 = vmax.f32 %v802, 0.0
        %v835 = vmax.f32 %v803, 0.0
        %v836 = vmax.f32 %v804, 0.0
        %v837 = vmax.f32 %v805, 0.0
        %v838 = vmax.f32 %v806, 0.0
        %v839 = vmax.f32 %v807, 0.0
        %v840 = vmax.f32 %v808, 0.0
        %v841 = vmax.f32 %v809, 0.0
        %v842 = vmax.f32 %v810, 0.0
        %v843 = vmax.f32 %v811, 0.0
        %v844 = vmax.f32 %v812, 0.0
        %v845 = vmax.f32 %v813, 0.0
        %v846 = vmax.f32 %v814, 0.0
        %v847 = vmax.f32 %v815, 0.0
        %848 = vst.msk [vmem:[%s298] sm:$0xff] %vm670, %v816
        %849 = vst.msk [vmem:[%s298 + $0x8] sm:$0xff] %vm670, %v817
        %850 = vst.msk [vmem:[%s298 + $0x10] sm:$0xff] %vm670, %v818
        %851 = vst.msk [vmem:[%s298 + $0x18] sm:$0xff] %vm670, %v819
        %852 = vst.msk [vmem:[%s298 + $0x20] sm:$0xff] %vm670, %v820
        %853 = vst.msk [vmem:[%s298 + $0x28] sm:$0xff] %vm670, %v821
        %854 = vst.msk [vmem:[%s298 + $0x30] sm:$0xff] %vm670, %v822
        %855 = vst.msk [vmem:[%s298 + $0x38] sm:$0xff] %vm670, %v823
        %856 = vst.msk [vmem:[%s298 + $0x40] sm:$0xff] %vm670, %v824
        %857 = vst.msk [vmem:[%s298 + $0x48] sm:$0xff] %vm670, %v825
        %858 = vst.msk [vmem:[%s298 + $0x50] sm:$0xff] %vm670, %v826
        %859 = vst.msk [vmem:[%s298 + $0x58] sm:$0xff] %vm670, %v827
        %860 = vst.msk [vmem:[%s298 + $0x60] sm:$0xff] %vm670, %v828
        %861 = vst.msk [vmem:[%s298 + $0x68] sm:$0xff] %vm670, %v829
        %862 = vst.msk [vmem:[%s298 + $0x70] sm:$0xff] %vm670, %v830
        %863 = vst.msk [vmem:[%s298 + $0x78] sm:$0xff] %vm670, %v831
        %864 = vst.msk [vmem:[%s298 + $0x80] sm:$0xff] %vm670, %v832
        %865 = vst.msk [vmem:[%s298 + $0x88] sm:$0xff] %vm670, %v833
        %866 = vst.msk [vmem:[%s298 + $0x90] sm:$0xff] %vm670, %v834
        %867 = vst.msk [vmem:[%s298 + $0x98] sm:$0xff] %vm670, %v835
        %868 = vst.msk [vmem:[%s298 + $0xa0] sm:$0xff] %vm670, %v836
        %869 = vst.msk [vmem:[%s298 + $0xa8] sm:$0xff] %vm670, %v837
        %870 = vst.msk [vmem:[%s298 + $0xb0] sm:$0xff] %vm670, %v838
        %871 = vst.msk [vmem:[%s298 + $0xb8] sm:$0xff] %vm670, %v839
        %872 = vst.msk [vmem:[%s298 + $0xc0] sm:$0xff] %vm670, %v840
        %873 = vst.msk [vmem:[%s298 + $0xc8] sm:$0xff] %vm670, %v841
        %874 = vst.msk [vmem:[%s298 + $0xd0] sm:$0xff] %vm670, %v842
        %875 = vst.msk [vmem:[%s298 + $0xd8] sm:$0xff] %vm670, %v843
        %876 = vst.msk [vmem:[%s298 + $0xe0] sm:$0xff] %vm670, %v844
        %877 = vst.msk [vmem:[%s298 + $0xe8] sm:$0xff] %vm670, %v845
        %878 = vst.msk [vmem:[%s298 + $0xf0] sm:$0xff] %vm670, %v846
        %879 = vst.msk [vmem:[%s298 + $0xf8] sm:$0xff] %vm670, %v847
      $region44: #{deeplab_bottleneck_forward.16} parent=35 // pred_fallthru
        _
      %s880 = smul.u32 32, %s20
      %p881 = scmp.lt.s32.totalorder %s880, 63
      %s882 = scalar_select %p881, %s880, 63
      %p883 = scmp.lt.s32.totalorder %s21, 0
      %s884 = scalar_select %p883, %s21, 0
      %s885 = sadd.s32 %s884, %s882
      %s886 = smul.addr %s885, 8
      %s887 = scalar_lea.vmem %s4, %s886
      // Predicated region
      $region45: #{deeplab_bottleneck_forward.16} parent=35 // pred_check
        %p888 = pneg %p162
      $region46: #{deeplab_bottleneck_forward.16} parent=35 // pred_check_branch
        %890 = sbr.rel (%p888) target = $region48
      $region47: #{deeplab_bottleneck_forward.16} parent=35 // pred_region
        %s891 = smul.u32 32, %s20
      $region48: #{deeplab_bottleneck_forward.16} parent=35 // pred_fallthru
        _
    $region36: #{deeplab_bottleneck_forward.16} parent=5 // pred_fallthru
      _
    %p892 = scmp.le.s32.totalorder 2, %s10
    // Predicated region
    $region49: #{deeplab_bottleneck_forward.16} parent=5 // pred_check
      %p893 = pneg %p892
    $region50: #{deeplab_bottleneck_forward.16} parent=5 // pred_check_branch
      %895 = sbr.rel (%p893) target = $region52
    $region51: #{deeplab_bottleneck_forward.16} parent=5 // pred_region
      %s896 = ssub.s32 %s10, 2
      // Predicated region
      $region53: #{deeplab_bottleneck_forward.16} parent=51 // pred_check
        %p897 = pneg %p168
      $region54: #{deeplab_bottleneck_forward.16} parent=51 // pred_check_branch
        %899 = sbr.rel (%p897) target = $region56
      $region55: #{deeplab_bottleneck_forward.16} parent=51 // pred_region
        %s900 = smul.u32 32, %s23
        %p901 = scmp.lt.s32.totalorder %s900, 63
        %s902 = scalar_select %p901, %s900, 63
        %p903 = scmp.lt.s32.totalorder %s24, 0
        %s904 = scalar_select %p903, %s24, 0
        %s905 = sadd.s32 %s904, %s902
        %s906 = smul.addr %s905, 8
        %s907 = scalar_lea.vmem %s4, %s906
      $region56: #{deeplab_bottleneck_forward.16} parent=51 // pred_fallthru
        _
    $region52: #{deeplab_bottleneck_forward.16} parent=5 // pred_fallthru
      _
  $region6: #{deeplab_bottleneck_forward.16} parent=0 // loop_footer
    %s14 = sadd.s32 1, %s10
  $region7: #{deeplab_bottleneck_forward.16} parent=0 // loop_footer_branch
    %9 = sbr.rel target = $region3
  $region8: #{deeplab_bottleneck_forward.16} parent=0 // loop_exit
    _

// kernel: deeplab_bottleneck_forward.17
$region0: #{deeplab_bottleneck_forward.17}
  #allocation0 [shape = 'u32[]', space=smem, size = 0x4, offset = 0x4, fixed_abs, tag = 'smem constant byte address 0x4 - core index']
  #allocation1 [shape = 'u32[144,128]{1,0:T(1,128)}', space=vmem, size = 0x12000, scoped, tag = 'internal scratch']
  #allocation2 [shape = 'f32[128,16]{1,0:T(8,128)}', space=vmem, size = 0x10000, scoped, tag = 'scratch operand']
  %s0 = inlined_call_operand.vmem [shape: f32[128,144], index: 0, kind: input, shape index: {}]
  %s1 = inlined_call_operand.vmem [shape: f32[144,16], index: 1, kind: input, shape index: {}]
  %s2 = inlined_call_operand.vmem [shape: f32[1,16], index: 2, kind: input, shape index: {}]
  %s3 = inlined_call_operand.vmem [shape: f32[1,16], index: 3, kind: input, shape index: {}]
  %s4 = inlined_call_operand.vmem [shape: f32[128,16], index: 4, kind: output, shape index: {}]
  %s5 = sld [smem:[#allocation0]]
  $region34: #{deeplab_bottleneck_forward.17} parent=0
    _
  %s7 = ssub.s32 1, %s5
  %s8 = scalar_select 0, %s7, %s5
  // Predicated region
  $region2: #{deeplab_bottleneck_forward.17} parent=0 // pred_check
    _
  $region3: #{deeplab_bottleneck_forward.17} parent=0 // pred_check_branch
    %10 = sbr.rel (0) target = $region5
  $region4: #{deeplab_bottleneck_forward.17} parent=0 // pred_region
    _
  $region5: #{deeplab_bottleneck_forward.17} parent=0 // pred_fallthru
    _
  // Predicated region
  $region6: #{deeplab_bottleneck_forward.17} parent=0 // pred_check
    _
  $region7: #{deeplab_bottleneck_forward.17} parent=0 // pred_check_branch
    %12 = sbr.rel (0) target = $region9
  $region8: #{deeplab_bottleneck_forward.17} parent=0 // pred_region
    _
  $region9: #{deeplab_bottleneck_forward.17} parent=0 // pred_fallthru
    _
  // Predicated region
  $region10: #{deeplab_bottleneck_forward.17} parent=0 // pred_check
    _
  $region11: #{deeplab_bottleneck_forward.17} parent=0 // pred_check_branch
    %14 = sbr.rel (0) target = $region13
  $region12: #{deeplab_bottleneck_forward.17} parent=0 // pred_region
    _
  $region13: #{deeplab_bottleneck_forward.17} parent=0 // pred_fallthru
    _
  // Predicated region
  $region14: #{deeplab_bottleneck_forward.17} parent=0 // pred_check
    _
  $region15: #{deeplab_bottleneck_forward.17} parent=0 // pred_check_branch
    %16 = sbr.rel (0) target = $region17
  $region16: #{deeplab_bottleneck_forward.17} parent=0 // pred_region
    _
  $region17: #{deeplab_bottleneck_forward.17} parent=0 // pred_fallthru
    _
  %p18 = scmp.eq.s32.totalorder 0, 0
  // Predicated region
  $region18: #{deeplab_bottleneck_forward.17} parent=0 // pred_check
    %p19 = pneg %p18
  $region19: #{deeplab_bottleneck_forward.17} parent=0 // pred_check_branch
    %21 = sbr.rel (%p19) target = $region21
  $region20: #{deeplab_bottleneck_forward.17} parent=0 // pred_region
    %vm22 = vcmask 130048
    %23 = vst.msk [vmem:[#allocation2] sm:$0xff] %vm22, 0.0
    %24 = vst.msk [vmem:[#allocation2 + $0x8] sm:$0xff] %vm22, 0.0
    %25 = vst.msk [vmem:[#allocation2 + $0x10] sm:$0xff] %vm22, 0.0
    %26 = vst.msk [vmem:[#allocation2 + $0x18] sm:$0xff] %vm22, 0.0
    %27 = vst.msk [vmem:[#allocation2 + $0x20] sm:$0xff] %vm22, 0.0
    %28 = vst.msk [vmem:[#allocation2 + $0x28] sm:$0xff] %vm22, 0.0
    %29 = vst.msk [vmem:[#allocation2 + $0x30] sm:$0xff] %vm22, 0.0
    %30 = vst.msk [vmem:[#allocation2 + $0x38] sm:$0xff] %vm22, 0.0
    %31 = vst.msk [vmem:[#allocation2 + $0x40] sm:$0xff] %vm22, 0.0
    %32 = vst.msk [vmem:[#allocation2 + $0x48] sm:$0xff] %vm22, 0.0
    %33 = vst.msk [vmem:[#allocation2 + $0x50] sm:$0xff] %vm22, 0.0
    %34 = vst.msk [vmem:[#allocation2 + $0x58] sm:$0xff] %vm22, 0.0
    %35 = vst.msk [vmem:[#allocation2 + $0x60] sm:$0xff] %vm22, 0.0
    %36 = vst.msk [vmem:[#allocation2 + $0x68] sm:$0xff] %vm22, 0.0
    %37 = vst.msk [vmem:[#allocation2 + $0x70] sm:$0xff] %vm22, 0.0
    %38 = vst.msk [vmem:[#allocation2 + $0x78] sm:$0xff] %vm22, 0.0
  $region21: #{deeplab_bottleneck_forward.17} parent=0 // pred_fallthru
    _
  %v39 = vld [vmem:[#allocation2] sm:$0xff]
  %v40 = vld [vmem:[#allocation2 + $0x8] sm:$0xff]
  %v41 = vld [vmem:[#allocation2 + $0x10] sm:$0xff]
  %v42 = vld [vmem:[#allocation2 + $0x18] sm:$0xff]
  %v43 = vld [vmem:[#allocation2 + $0x20] sm:$0xff]
  %v44 = vld [vmem:[#allocation2 + $0x28] sm:$0xff]
  %v45 = vld [vmem:[#allocation2 + $0x30] sm:$0xff]
  %v46 = vld [vmem:[#allocation2 + $0x38] sm:$0xff]
  %v47 = vld [vmem:[#allocation2 + $0x40] sm:$0xff]
  %v48 = vld [vmem:[#allocation2 + $0x48] sm:$0xff]
  %v49 = vld [vmem:[#allocation2 + $0x50] sm:$0xff]
  %v50 = vld [vmem:[#allocation2 + $0x58] sm:$0xff]
  %v51 = vld [vmem:[#allocation2 + $0x60] sm:$0xff]
  %v52 = vld [vmem:[#allocation2 + $0x68] sm:$0xff]
  %v53 = vld [vmem:[#allocation2 + $0x70] sm:$0xff]
  %v54 = vld [vmem:[#allocation2 + $0x78] sm:$0xff]
  %v55 = vld [vmem:[%s0] sm:$0xff]
  %v56 = vld [vmem:[%s0 + $0x8] sm:$0xff]
  %v57 = vld [vmem:[%s0 + $0x10] sm:$0xff]
  %v58 = vld [vmem:[%s0 + $0x18] sm:$0xff]
  %v59 = vld [vmem:[%s0 + $0x20] sm:$0xff]
  %v60 = vld [vmem:[%s0 + $0x28] sm:$0xff]
  %v61 = vld [vmem:[%s0 + $0x30] sm:$0xff]
  %v62 = vld [vmem:[%s0 + $0x38] sm:$0xff]
  %v63 = vld [vmem:[%s0 + $0x40] sm:$0xff]
  %v64 = vld [vmem:[%s0 + $0x48] sm:$0xff]
  %v65 = vld [vmem:[%s0 + $0x50] sm:$0xff]
  %v66 = vld [vmem:[%s0 + $0x58] sm:$0xff]
  %v67 = vld [vmem:[%s0 + $0x60] sm:$0xff]
  %v68 = vld [vmem:[%s0 + $0x68] sm:$0xff]
  %v69 = vld [vmem:[%s0 + $0x70] sm:$0xff]
  %v70 = vld [vmem:[%s0 + $0x78] sm:$0xff]
  %v71 = vld [vmem:[%s0 + $0x80] sm:$0xff]
  %v72 = vld [vmem:[%s0 + $0x88] sm:$0xff]
  %v73 = vld [vmem:[%s0 + $0x90] sm:$0xff]
  %v74 = vld [vmem:[%s0 + $0x98] sm:$0xff]
  %v75 = vld [vmem:[%s0 + $0xa0] sm:$0xff]
  %v76 = vld [vmem:[%s0 + $0xa8] sm:$0xff]
  %v77 = vld [vmem:[%s0 + $0xb0] sm:$0xff]
  %v78 = vld [vmem:[%s0 + $0xb8] sm:$0xff]
  %v79 = vld [vmem:[%s0 + $0xc0] sm:$0xff]
  %v80 = vld [vmem:[%s0 + $0xc8] sm:$0xff]
  %v81 = vld [vmem:[%s0 + $0xd0] sm:$0xff]
  %v82 = vld [vmem:[%s0 + $0xd8] sm:$0xff]
  %v83 = vld [vmem:[%s0 + $0xe0] sm:$0xff]
  %v84 = vld [vmem:[%s0 + $0xe8] sm:$0xff]
  %v85 = vld [vmem:[%s0 + $0xf0] sm:$0xff]
  %v86 = vld [vmem:[%s0 + $0xf8] sm:$0xff]
  %v87 = vpack.c.bf16 %v57, %v55
  %v88 = vpack.c.bf16 %v58, %v56
  %v89 = vpack.c.bf16 %v61, %v59
  %v90 = vpack.c.bf16 %v62, %v60
  %v91 = vpack.c.bf16 %v65, %v63
  %v92 = vpack.c.bf16 %v66, %v64
  %v93 = vpack.c.bf16 %v69, %v67
  %v94 = vpack.c.bf16 %v70, %v68
  %v95 = vpack.c.bf16 %v73, %v71
  %v96 = vpack.c.bf16 %v74, %v72
  %v97 = vpack.c.bf16 %v77, %v75
  %v98 = vpack.c.bf16 %v78, %v76
  %v99 = vpack.c.bf16 %v81, %v79
  %v100 = vpack.c.bf16 %v82, %v80
  %v101 = vpack.c.bf16 %v85, %v83
  %v102 = vpack.c.bf16 %v86, %v84
  %v103 = vld [vmem:[%s1] sm:$0xff]
  %v104 = vld [vmem:[%s1 + $0x8] sm:$0xff]
  %v105 = vld [vmem:[%s1 + $0x10] sm:$0xff]
  %v106 = vld [vmem:[%s1 + $0x18] sm:$0xff]
  %v107 = vld [vmem:[%s1 + $0x20] sm:$0xff]
  %v108 = vld [vmem:[%s1 + $0x28] sm:$0xff]
  %v109 = vld [vmem:[%s1 + $0x30] sm:$0xff]
  %v110 = vld [vmem:[%s1 + $0x38] sm:$0xff]
  %v111 = vld [vmem:[%s1 + $0x40] sm:$0xff]
  %v112 = vld [vmem:[%s1 + $0x48] sm:$0xff]
  %v113 = vld [vmem:[%s1 + $0x50] sm:$0xff]
  %v114 = vld [vmem:[%s1 + $0x58] sm:$0xff]
  %v115 = vld [vmem:[%s1 + $0x60] sm:$0xff]
  %v116 = vld [vmem:[%s1 + $0x68] sm:$0xff]
  %v117 = vld [vmem:[%s1 + $0x70] sm:$0xff]
  %v118 = vld [vmem:[%s1 + $0x78] sm:$0xff]
  %v119 = vld [vmem:[%s1 + $0x80] sm:$0xff]
  %v120 = vld [vmem:[%s1 + $0x88] sm:$0xff]
  %v121 = vpack.c.bf16 %v104, %v103
  %v122 = vpack.c.bf16 %v106, %v105
  %v123 = vpack.c.bf16 %v108, %v107
  %v124 = vpack.c.bf16 %v110, %v109
  %v125 = vpack.c.bf16 %v112, %v111
  %v126 = vpack.c.bf16 %v114, %v113
  %v127 = vpack.c.bf16 %v116, %v115
  %v128 = vpack.c.bf16 %v118, %v117
  %v129 = vpack.c.bf16 %v120, %v119
  %vm130 = vcmask 130048
  %v132 = vsel %vm130, %v88, 0
  %v135 = vsel %vm130, %v90, 0
  %v138 = vsel %vm130, %v92, 0
  %v141 = vsel %vm130, %v94, 0
  %v144 = vsel %vm130, %v96, 0
  %v147 = vsel %vm130, %v98, 0
  %v150 = vsel %vm130, %v100, 0
  %v153 = vsel %vm130, %v102, 0
  %155 = vmatprep.subr.bf16.mxu0 0
  %156 = vmatpush1.bf16.msra.mxu0 %v128
  %157 = vmatprep.subr.bf16.mxu0 0
  %158 = vmatpush1.bf16.msra.mxu0 %v127
  %159 = vmatprep.subr.bf16.mxu0 0
  %160 = vmatpush1.bf16.msra.mxu0 %v126
  %161 = vmatprep.subr.bf16.mxu0 0
  %162 = vmatpush1.bf16.msra.mxu0 %v125
  %163 = vmatprep.subr.bf16.mxu0 0
  %164 = vmatpush1.bf16.msra.mxu0 %v124
  %165 = vmatprep.subr.bf16.mxu0 0
  %166 = vmatpush1.bf16.msra.mxu0 %v123
  %167 = vmatprep.subr.bf16.mxu0 0
  %168 = vmatpush1.bf16.msra.mxu0 %v122
  %169 = vmatprep.subr.bf16.mxu0 0
  %170 = vmatpush1.bf16.msra.mxu0 %v121
  %171 = vmatprep.subr.bf16.mxu0 0
  %172 = vmatpush2.bf16.msra.mxu0 0
  %173 = vmatprep.subr.bf16.mxu0 0
  %174 = vmatpush2.bf16.msra.mxu0 0
  %175 = vmatprep.subr.bf16.mxu0 0
  %176 = vmatpush2.bf16.msra.mxu0 0
  %177 = vmatprep.subr.bf16.mxu0 0
  %178 = vmatpush2.bf16.msra.mxu0 0
  %179 = vmatprep.subr.bf16.mxu0 0
  %180 = vmatpush2.bf16.msra.mxu0 0
  %181 = vmatprep.subr.bf16.mxu0 0
  %182 = vmatpush2.bf16.msra.mxu0 0
  %183 = vmatprep.subr.bf16.mxu0 0
  %184 = vmatpush2.bf16.msra.mxu0 0
  %185 = vmatprep.subr.bf16.mxu0 0
  %186 = vmatpush2.bf16.msra.mxu0 %v129
  %187 = vmatprep.mubr.bf16.mxu0 %v132
  %188 = vmatmul.mubr.bf16.gmra.mxu0 %v87
  %v189 = vpop.f32.mrf.mxu0
  %v190 = vadd.f32 0.0, %v189
  %v191 = vpop.f32.mrf.mxu0
  %v192 = vpop.f32.mrf.mxu0
  %v193 = vadd.f32 0.0, %v192
  %v194 = vpop.f32.mrf.mxu0
  %195 = vmatprep.mubr.bf16.mxu0 %v135
  %196 = vmatmul.mubr.bf16.gmra.mxu0 %v89
  %v197 = vpop.f32.mrf.mxu0
  %v198 = vadd.f32 0.0, %v197
  %v199 = vpop.f32.mrf.mxu0
  %v200 = vpop.f32.mrf.mxu0
  %v201 = vadd.f32 0.0, %v200
  %v202 = vpop.f32.mrf.mxu0
  %203 = vmatprep.mubr.bf16.mxu0 %v138
  %204 = vmatmul.mubr.bf16.gmra.mxu0 %v91
  %v205 = vpop.f32.mrf.mxu0
  %v206 = vadd.f32 0.0, %v205
  %v207 = vpop.f32.mrf.mxu0
  %v208 = vpop.f32.mrf.mxu0
  %v209 = vadd.f32 0.0, %v208
  %v210 = vpop.f32.mrf.mxu0
  %211 = vmatprep.mubr.bf16.mxu0 %v141
  %212 = vmatmul.mubr.bf16.gmra.mxu0 %v93
  %v213 = vpop.f32.mrf.mxu0
  %v214 = vadd.f32 0.0, %v213
  %v215 = vpop.f32.mrf.mxu0
  %v216 = vpop.f32.mrf.mxu0
  %v217 = vadd.f32 0.0, %v216
  %v218 = vpop.f32.mrf.mxu0
  %219 = vmatprep.mubr.bf16.mxu0 %v144
  %220 = vmatmul.mubr.bf16.gmra.mxu0 %v95
  %v221 = vpop.f32.mrf.mxu0
  %v222 = vadd.f32 0.0, %v221
  %v223 = vpop.f32.mrf.mxu0
  %v224 = vpop.f32.mrf.mxu0
  %v225 = vadd.f32 0.0, %v224
  %v226 = vpop.f32.mrf.mxu0
  %227 = vmatprep.mubr.bf16.mxu0 %v147
  %228 = vmatmul.mubr.bf16.gmra.mxu0 %v97
  %v229 = vpop.f32.mrf.mxu0
  %v230 = vadd.f32 0.0, %v229
  %v231 = vpop.f32.mrf.mxu0
  %v232 = vpop.f32.mrf.mxu0
  %v233 = vadd.f32 0.0, %v232
  %v234 = vpop.f32.mrf.mxu0
  %235 = vmatprep.mubr.bf16.mxu0 %v150
  %236 = vmatmul.mubr.bf16.gmra.mxu0 %v99
  %v237 = vpop.f32.mrf.mxu0
  %v238 = vadd.f32 0.0, %v237
  %v239 = vpop.f32.mrf.mxu0
  %v240 = vpop.f32.mrf.mxu0
  %v241 = vadd.f32 0.0, %v240
  %v242 = vpop.f32.mrf.mxu0
  %243 = vmatprep.mubr.bf16.mxu0 %v153
  %244 = vmatmul.mubr.bf16.gmra.mxu0 %v101
  %v245 = vpop.f32.mrf.mxu0
  %v246 = vadd.f32 0.0, %v245
  %v247 = vpop.f32.mrf.mxu0
  %v248 = vpop.f32.mrf.mxu0
  %v249 = vadd.f32 0.0, %v248
  %v250 = vpop.f32.mrf.mxu0
  %251 = vdwg.mxu0
  %v252 = vadd.f32 %v39, %v190
  %v253 = vadd.f32 %v40, %v193
  %v254 = vadd.f32 %v41, %v198
  %v255 = vadd.f32 %v42, %v201
  %v256 = vadd.f32 %v43, %v206
  %v257 = vadd.f32 %v44, %v209
  %v258 = vadd.f32 %v45, %v214
  %v259 = vadd.f32 %v46, %v217
  %v260 = vadd.f32 %v47, %v222
  %v261 = vadd.f32 %v48, %v225
  %v262 = vadd.f32 %v49, %v230
  %v263 = vadd.f32 %v50, %v233
  %v264 = vadd.f32 %v51, %v238
  %v265 = vadd.f32 %v52, %v241
  %v266 = vadd.f32 %v53, %v246
  %v267 = vadd.f32 %v54, %v249
  %268 = vst.msk [vmem:[#allocation2] sm:$0xff] %vm130, %v252
  %269 = vst.msk [vmem:[#allocation2 + $0x8] sm:$0xff] %vm130, %v253
  %270 = vst.msk [vmem:[#allocation2 + $0x10] sm:$0xff] %vm130, %v254
  %271 = vst.msk [vmem:[#allocation2 + $0x18] sm:$0xff] %vm130, %v255
  %272 = vst.msk [vmem:[#allocation2 + $0x20] sm:$0xff] %vm130, %v256
  %273 = vst.msk [vmem:[#allocation2 + $0x28] sm:$0xff] %vm130, %v257
  %274 = vst.msk [vmem:[#allocation2 + $0x30] sm:$0xff] %vm130, %v258
  %275 = vst.msk [vmem:[#allocation2 + $0x38] sm:$0xff] %vm130, %v259
  %276 = vst.msk [vmem:[#allocation2 + $0x40] sm:$0xff] %vm130, %v260
  %277 = vst.msk [vmem:[#allocation2 + $0x48] sm:$0xff] %vm130, %v261
  %278 = vst.msk [vmem:[#allocation2 + $0x50] sm:$0xff] %vm130, %v262
  %279 = vst.msk [vmem:[#allocation2 + $0x58] sm:$0xff] %vm130, %v263
  %280 = vst.msk [vmem:[#allocation2 + $0x60] sm:$0xff] %vm130, %v264
  %281 = vst.msk [vmem:[#allocation2 + $0x68] sm:$0xff] %vm130, %v265
  %282 = vst.msk [vmem:[#allocation2 + $0x70] sm:$0xff] %vm130, %v266
  %283 = vst.msk [vmem:[#allocation2 + $0x78] sm:$0xff] %vm130, %v267
  // Predicated region
  $region22: #{deeplab_bottleneck_forward.17} parent=0 // pred_check
    %p284 = pneg %p18
  $region23: #{deeplab_bottleneck_forward.17} parent=0 // pred_check_branch
    %286 = sbr.rel (%p284) target = $region25
  $region24: #{deeplab_bottleneck_forward.17} parent=0 // pred_region
    %v287 = vld [vmem:[#allocation2] sm:$0xff]
    %v288 = vld [vmem:[#allocation2 + $0x8] sm:$0xff]
    %v289 = vld [vmem:[#allocation2 + $0x10] sm:$0xff]
    %v290 = vld [vmem:[#allocation2 + $0x18] sm:$0xff]
    %v291 = vld [vmem:[#allocation2 + $0x20] sm:$0xff]
    %v292 = vld [vmem:[#allocation2 + $0x28] sm:$0xff]
    %v293 = vld [vmem:[#allocation2 + $0x30] sm:$0xff]
    %v294 = vld [vmem:[#allocation2 + $0x38] sm:$0xff]
    %v295 = vld [vmem:[#allocation2 + $0x40] sm:$0xff]
    %v296 = vld [vmem:[#allocation2 + $0x48] sm:$0xff]
    %v297 = vld [vmem:[#allocation2 + $0x50] sm:$0xff]
    %v298 = vld [vmem:[#allocation2 + $0x58] sm:$0xff]
    %v299 = vld [vmem:[#allocation2 + $0x60] sm:$0xff]
    %v300 = vld [vmem:[#allocation2 + $0x68] sm:$0xff]
    %v301 = vld [vmem:[#allocation2 + $0x70] sm:$0xff]
    %v302 = vld [vmem:[#allocation2 + $0x78] sm:$0xff]
    %v303 = vld [vmem:[%s2] sm:$0x1]
    %v305 = vlaneseq
    %v306 = vshrl.u32 %v305, 7
    %v307 = vsub.s32 0, %v306
    %v308 = vrot.slane %v303, %v307
    %v310 = vmul.f32 %v287, %v308
    %v311 = vmul.f32 %v288, %v308
    %v312 = vmul.f32 %v289, %v308
    %v313 = vmul.f32 %v290, %v308
    %v314 = vmul.f32 %v291, %v308
    %v315 = vmul.f32 %v292, %v308
    %v316 = vmul.f32 %v293, %v308
    %v317 = vmul.f32 %v294, %v308
    %v318 = vmul.f32 %v295, %v308
    %v319 = vmul.f32 %v296, %v308
    %v320 = vmul.f32 %v297, %v308
    %v321 = vmul.f32 %v298, %v308
    %v322 = vmul.f32 %v299, %v308
    %v323 = vmul.f32 %v300, %v308
    %v324 = vmul.f32 %v301, %v308
    %v325 = vmul.f32 %v302, %v308
    %v326 = vld [vmem:[%s3] sm:$0x1]
    %v328 = vlaneseq
    %v329 = vshrl.u32 %v328, 7
    %v330 = vsub.s32 0, %v329
    %v331 = vrot.slane %v326, %v330
    %v333 = vadd.f32 %v310, %v331
    %v334 = vadd.f32 %v311, %v331
    %v335 = vadd.f32 %v312, %v331
    %v336 = vadd.f32 %v313, %v331
    %v337 = vadd.f32 %v314, %v331
    %v338 = vadd.f32 %v315, %v331
    %v339 = vadd.f32 %v316, %v331
    %v340 = vadd.f32 %v317, %v331
    %v341 = vadd.f32 %v318, %v331
    %v342 = vadd.f32 %v319, %v331
    %v343 = vadd.f32 %v320, %v331
    %v344 = vadd.f32 %v321, %v331
    %v345 = vadd.f32 %v322, %v331
    %v346 = vadd.f32 %v323, %v331
    %v347 = vadd.f32 %v324, %v331
    %v348 = vadd.f32 %v325, %v331
    %v349 = vmax.f32 %v333, 0.0
    %v350 = vmax.f32 %v334, 0.0
    %v351 = vmax.f32 %v335, 0.0
    %v352 = vmax.f32 %v336, 0.0
    %v353 = vmax.f32 %v337, 0.0
    %v354 = vmax.f32 %v338, 0.0
    %v355 = vmax.f32 %v339, 0.0
    %v356 = vmax.f32 %v340, 0.0
    %v357 = vmax.f32 %v341, 0.0
    %v358 = vmax.f32 %v342, 0.0
    %v359 = vmax.f32 %v343, 0.0
    %v360 = vmax.f32 %v344, 0.0
    %v361 = vmax.f32 %v345, 0.0
    %v362 = vmax.f32 %v346, 0.0
    %v363 = vmax.f32 %v347, 0.0
    %v364 = vmax.f32 %v348, 0.0
    %365 = vst.msk [vmem:[%s4] sm:$0xff] %vm130, %v349
    %366 = vst.msk [vmem:[%s4 + $0x8] sm:$0xff] %vm130, %v350
    %367 = vst.msk [vmem:[%s4 + $0x10] sm:$0xff] %vm130, %v351
    %368 = vst.msk [vmem:[%s4 + $0x18] sm:$0xff] %vm130, %v352
    %369 = vst.msk [vmem:[%s4 + $0x20] sm:$0xff] %vm130, %v353
    %370 = vst.msk [vmem:[%s4 + $0x28] sm:$0xff] %vm130, %v354
    %371 = vst.msk [vmem:[%s4 + $0x30] sm:$0xff] %vm130, %v355
    %372 = vst.msk [vmem:[%s4 + $0x38] sm:$0xff] %vm130, %v356
    %373 = vst.msk [vmem:[%s4 + $0x40] sm:$0xff] %vm130, %v357
    %374 = vst.msk [vmem:[%s4 + $0x48] sm:$0xff] %vm130, %v358
    %375 = vst.msk [vmem:[%s4 + $0x50] sm:$0xff] %vm130, %v359
    %376 = vst.msk [vmem:[%s4 + $0x58] sm:$0xff] %vm130, %v360
    %377 = vst.msk [vmem:[%s4 + $0x60] sm:$0xff] %vm130, %v361
    %378 = vst.msk [vmem:[%s4 + $0x68] sm:$0xff] %vm130, %v362
    %379 = vst.msk [vmem:[%s4 + $0x70] sm:$0xff] %vm130, %v363
    %380 = vst.msk [vmem:[%s4 + $0x78] sm:$0xff] %vm130, %v364
  $region25: #{deeplab_bottleneck_forward.17} parent=0 // pred_fallthru
    _
  // Predicated region
  $region26: #{deeplab_bottleneck_forward.17} parent=0 // pred_check
    _
  $region27: #{deeplab_bottleneck_forward.17} parent=0 // pred_check_branch
    %382 = sbr.rel (0) target = $region29
  $region28: #{deeplab_bottleneck_forward.17} parent=0 // pred_region
    _
  $region29: #{deeplab_bottleneck_forward.17} parent=0 // pred_fallthru
    _
  // Predicated region
  $region30: #{deeplab_bottleneck_forward.17} parent=0 // pred_check
    _
  $region31: #{deeplab_bottleneck_forward.17} parent=0 // pred_check_branch
    %384 = sbr.rel (0) target = $region33
  $region32: #{deeplab_bottleneck_forward.17} parent=0 // pred_region
    _
  $region33: #{deeplab_bottleneck_forward.17} parent=0 // pred_fallthru
    _

// kernel: deeplab_bottleneck_forward.18
$region0: #{deeplab_bottleneck_forward.18}
  #allocation0 [shape = 'u32[]', space=smem, size = 0x4, offset = 0x4, fixed_abs, tag = 'smem constant byte address 0x4 - core index']
  #allocation1 [shape = 'u32[144,128]{1,0:T(1,128)}', space=vmem, size = 0x12000, scoped, tag = 'internal scratch']
  #allocation2 [shape = 'f32[32,32]{1,0:T(8,128)}', space=vmem, size = 0x4000, scoped, tag = 'scratch operand']
  %s0 = inlined_call_operand.vmem [shape: f32[32,144], index: 0, kind: input, shape index: {}]
  %s1 = inlined_call_operand.vmem [shape: f32[144,32], index: 1, kind: input, shape index: {}]
  %s2 = inlined_call_operand.vmem [shape: f32[1,32], index: 2, kind: input, shape index: {}]
  %s3 = inlined_call_operand.vmem [shape: f32[1,32], index: 3, kind: input, shape index: {}]
  %s4 = inlined_call_operand.vmem [shape: f32[32,32], index: 4, kind: output, shape index: {}]
  %s5 = sld [smem:[#allocation0]]
  $region34: #{deeplab_bottleneck_forward.18} parent=0
    _
  %s7 = ssub.s32 1, %s5
  %s8 = scalar_select 0, %s7, %s5
  // Predicated region
  $region2: #{deeplab_bottleneck_forward.18} parent=0 // pred_check
    _
  $region3: #{deeplab_bottleneck_forward.18} parent=0 // pred_check_branch
    %10 = sbr.rel (0) target = $region5
  $region4: #{deeplab_bottleneck_forward.18} parent=0 // pred_region
    _
  $region5: #{deeplab_bottleneck_forward.18} parent=0 // pred_fallthru
    _
  // Predicated region
  $region6: #{deeplab_bottleneck_forward.18} parent=0 // pred_check
    _
  $region7: #{deeplab_bottleneck_forward.18} parent=0 // pred_check_branch
    %12 = sbr.rel (0) target = $region9
  $region8: #{deeplab_bottleneck_forward.18} parent=0 // pred_region
    _
  $region9: #{deeplab_bottleneck_forward.18} parent=0 // pred_fallthru
    _
  // Predicated region
  $region10: #{deeplab_bottleneck_forward.18} parent=0 // pred_check
    _
  $region11: #{deeplab_bottleneck_forward.18} parent=0 // pred_check_branch
    %14 = sbr.rel (0) target = $region13
  $region12: #{deeplab_bottleneck_forward.18} parent=0 // pred_region
    _
  $region13: #{deeplab_bottleneck_forward.18} parent=0 // pred_fallthru
    _
  // Predicated region
  $region14: #{deeplab_bottleneck_forward.18} parent=0 // pred_check
    _
  $region15: #{deeplab_bottleneck_forward.18} parent=0 // pred_check_branch
    %16 = sbr.rel (0) target = $region17
  $region16: #{deeplab_bottleneck_forward.18} parent=0 // pred_region
    _
  $region17: #{deeplab_bottleneck_forward.18} parent=0 // pred_fallthru
    _
  %p18 = scmp.eq.s32.totalorder 0, 0
  // Predicated region
  $region18: #{deeplab_bottleneck_forward.18} parent=0 // pred_check
    %p19 = pneg %p18
  $region19: #{deeplab_bottleneck_forward.18} parent=0 // pred_check_branch
    %21 = sbr.rel (%p19) target = $region21
  $region20: #{deeplab_bottleneck_forward.18} parent=0 // pred_region
    %vm22 = vcmask 261120
    %23 = vst.msk [vmem:[#allocation2] sm:$0xff] %vm22, 0.0
    %24 = vst.msk [vmem:[#allocation2 + $0x8] sm:$0xff] %vm22, 0.0
    %25 = vst.msk [vmem:[#allocation2 + $0x10] sm:$0xff] %vm22, 0.0
    %26 = vst.msk [vmem:[#allocation2 + $0x18] sm:$0xff] %vm22, 0.0
  $region21: #{deeplab_bottleneck_forward.18} parent=0 // pred_fallthru
    _
  %v27 = vld [vmem:[#allocation2] sm:$0xff]
  %v28 = vld [vmem:[#allocation2 + $0x8] sm:$0xff]
  %v29 = vld [vmem:[#allocation2 + $0x10] sm:$0xff]
  %v30 = vld [vmem:[#allocation2 + $0x18] sm:$0xff]
  %v31 = vld [vmem:[%s0] sm:$0xff]
  %v32 = vld [vmem:[%s0 + $0x8] sm:$0xff]
  %v33 = vld [vmem:[%s0 + $0x10] sm:$0xff]
  %v34 = vld [vmem:[%s0 + $0x18] sm:$0xff]
  %v35 = vld [vmem:[%s0 + $0x20] sm:$0xff]
  %v36 = vld [vmem:[%s0 + $0x28] sm:$0xff]
  %v37 = vld [vmem:[%s0 + $0x30] sm:$0xff]
  %v38 = vld [vmem:[%s0 + $0x38] sm:$0xff]
  %v39 = vpack.c.bf16 %v33, %v31
  %v40 = vpack.c.bf16 %v34, %v32
  %v41 = vpack.c.bf16 %v37, %v35
  %v42 = vpack.c.bf16 %v38, %v36
  %v43 = vld [vmem:[%s1] sm:$0xff]
  %v44 = vld [vmem:[%s1 + $0x8] sm:$0xff]
  %v45 = vld [vmem:[%s1 + $0x10] sm:$0xff]
  %v46 = vld [vmem:[%s1 + $0x18] sm:$0xff]
  %v47 = vld [vmem:[%s1 + $0x20] sm:$0xff]
  %v48 = vld [vmem:[%s1 + $0x28] sm:$0xff]
  %v49 = vld [vmem:[%s1 + $0x30] sm:$0xff]
  %v50 = vld [vmem:[%s1 + $0x38] sm:$0xff]
  %v51 = vld [vmem:[%s1 + $0x40] sm:$0xff]
  %v52 = vld [vmem:[%s1 + $0x48] sm:$0xff]
  %v53 = vld [vmem:[%s1 + $0x50] sm:$0xff]
  %v54 = vld [vmem:[%s1 + $0x58] sm:$0xff]
  %v55 = vld [vmem:[%s1 + $0x60] sm:$0xff]
  %v56 = vld [vmem:[%s1 + $0x68] sm:$0xff]
  %v57 = vld [vmem:[%s1 + $0x70] sm:$0xff]
  %v58 = vld [vmem:[%s1 + $0x78] sm:$0xff]
  %v59 = vld [vmem:[%s1 + $0x80] sm:$0xff]
  %v60 = vld [vmem:[%s1 + $0x88] sm:$0xff]
  %v61 = vpack.c.bf16 %v44, %v43
  %v62 = vpack.c.bf16 %v46, %v45
  %v63 = vpack.c.bf16 %v48, %v47
  %v64 = vpack.c.bf16 %v50, %v49
  %v65 = vpack.c.bf16 %v52, %v51
  %v66 = vpack.c.bf16 %v54, %v53
  %v67 = vpack.c.bf16 %v56, %v55
  %v68 = vpack.c.bf16 %v58, %v57
  %v69 = vpack.c.bf16 %v60, %v59
  %vm70 = vcmask 130048
  %v72 = vsel %vm70, %v40, 0
  %v75 = vsel %vm70, %v42, 0
  %77 = vmatprep.subr.bf16.mxu0 0
  %78 = vmatpush1.bf16.msra.mxu0 %v68
  %79 = vmatprep.subr.bf16.mxu0 0
  %80 = vmatpush1.bf16.msra.mxu0 %v67
  %81 = vmatprep.subr.bf16.mxu0 0
  %82 = vmatpush1.bf16.msra.mxu0 %v66
  %83 = vmatprep.subr.bf16.mxu0 0
  %84 = vmatpush1.bf16.msra.mxu0 %v65
  %85 = vmatprep.subr.bf16.mxu0 0
  %86 = vmatpush1.bf16.msra.mxu0 %v64
  %87 = vmatprep.subr.bf16.mxu0 0
  %88 = vmatpush1.bf16.msra.mxu0 %v63
  %89 = vmatprep.subr.bf16.mxu0 0
  %90 = vmatpush1.bf16.msra.mxu0 %v62
  %91 = vmatprep.subr.bf16.mxu0 0
  %92 = vmatpush1.bf16.msra.mxu0 %v61
  %93 = vmatprep.subr.bf16.mxu0 0
  %94 = vmatpush2.bf16.msra.mxu0 0
  %95 = vmatprep.subr.bf16.mxu0 0
  %96 = vmatpush2.bf16.msra.mxu0 0
  %97 = vmatprep.subr.bf16.mxu0 0
  %98 = vmatpush2.bf16.msra.mxu0 0
  %99 = vmatprep.subr.bf16.mxu0 0
  %100 = vmatpush2.bf16.msra.mxu0 0
  %101 = vmatprep.subr.bf16.mxu0 0
  %102 = vmatpush2.bf16.msra.mxu0 0
  %103 = vmatprep.subr.bf16.mxu0 0
  %104 = vmatpush2.bf16.msra.mxu0 0
  %105 = vmatprep.subr.bf16.mxu0 0
  %106 = vmatpush2.bf16.msra.mxu0 0
  %107 = vmatprep.subr.bf16.mxu0 0
  %108 = vmatpush2.bf16.msra.mxu0 %v69
  %109 = vmatprep.mubr.bf16.mxu0 %v72
  %110 = vmatmul.mubr.bf16.gmra.mxu0 %v39
  %v111 = vpop.f32.mrf.mxu0
  %v112 = vadd.f32 0.0, %v111
  %v113 = vpop.f32.mrf.mxu0
  %v114 = vpop.f32.mrf.mxu0
  %v115 = vadd.f32 0.0, %v114
  %v116 = vpop.f32.mrf.mxu0
  %117 = vmatprep.mubr.bf16.mxu0 %v75
  %118 = vmatmul.mubr.bf16.gmra.mxu0 %v41
  %v119 = vpop.f32.mrf.mxu0
  %v120 = vadd.f32 0.0, %v119
  %v121 = vpop.f32.mrf.mxu0
  %v122 = vpop.f32.mrf.mxu0
  %v123 = vadd.f32 0.0, %v122
  %v124 = vpop.f32.mrf.mxu0
  %125 = vdwg.mxu0
  %v126 = vadd.f32 %v27, %v112
  %v127 = vadd.f32 %v28, %v115
  %v128 = vadd.f32 %v29, %v120
  %v129 = vadd.f32 %v30, %v123
  %vm130 = vcmask 261120
  %131 = vst.msk [vmem:[#allocation2] sm:$0xff] %vm130, %v126
  %132 = vst.msk [vmem:[#allocation2 + $0x8] sm:$0xff] %vm130, %v127
  %133 = vst.msk [vmem:[#allocation2 + $0x10] sm:$0xff] %vm130, %v128
  %134 = vst.msk [vmem:[#allocation2 + $0x18] sm:$0xff] %vm130, %v129
  // Predicated region
  $region22: #{deeplab_bottleneck_forward.18} parent=0 // pred_check
    %p135 = pneg %p18
  $region23: #{deeplab_bottleneck_forward.18} parent=0 // pred_check_branch
    %137 = sbr.rel (%p135) target = $region25
  $region24: #{deeplab_bottleneck_forward.18} parent=0 // pred_region
    %v138 = vld [vmem:[#allocation2] sm:$0xff]
    %v139 = vld [vmem:[#allocation2 + $0x8] sm:$0xff]
    %v140 = vld [vmem:[#allocation2 + $0x10] sm:$0xff]
    %v141 = vld [vmem:[#allocation2 + $0x18] sm:$0xff]
    %v142 = vld [vmem:[%s2] sm:$0x1]
    %v144 = vlaneseq
    %v145 = vshrl.u32 %v144, 7
    %v146 = vsub.s32 0, %v145
    %v147 = vrot.slane %v142, %v146
    %v149 = vmul.f32 %v138, %v147
    %v150 = vmul.f32 %v139, %v147
    %v151 = vmul.f32 %v140, %v147
    %v152 = vmul.f32 %v141, %v147
    %v153 = vld [vmem:[%s3] sm:$0x1]
    %v155 = vlaneseq
    %v156 = vshrl.u32 %v155, 7
    %v157 = vsub.s32 0, %v156
    %v158 = vrot.slane %v153, %v157
    %v160 = vadd.f32 %v149, %v158
    %v161 = vadd.f32 %v150, %v158
    %v162 = vadd.f32 %v151, %v158
    %v163 = vadd.f32 %v152, %v158
    %v164 = vmax.f32 %v160, 0.0
    %v165 = vmax.f32 %v161, 0.0
    %v166 = vmax.f32 %v162, 0.0
    %v167 = vmax.f32 %v163, 0.0
    %168 = vst.msk [vmem:[%s4] sm:$0xff] %vm130, %v164
    %169 = vst.msk [vmem:[%s4 + $0x8] sm:$0xff] %vm130, %v165
    %170 = vst.msk [vmem:[%s4 + $0x10] sm:$0xff] %vm130, %v166
    %171 = vst.msk [vmem:[%s4 + $0x18] sm:$0xff] %vm130, %v167
  $region25: #{deeplab_bottleneck_forward.18} parent=0 // pred_fallthru
    _
  // Predicated region
  $region26: #{deeplab_bottleneck_forward.18} parent=0 // pred_check
    _
  $region27: #{deeplab_bottleneck_forward.18} parent=0 // pred_check_branch
    %173 = sbr.rel (0) target = $region29
  $region28: #{deeplab_bottleneck_forward.18} parent=0 // pred_region
    _
  $region29: #{deeplab_bottleneck_forward.18} parent=0 // pred_fallthru
    _
  // Predicated region
  $region30: #{deeplab_bottleneck_forward.18} parent=0 // pred_check
    _
  $region31: #{deeplab_bottleneck_forward.18} parent=0 // pred_check_branch
    %175 = sbr.rel (0) target = $region33
  $region32: #{deeplab_bottleneck_forward.18} parent=0 // pred_region
    _
  $region33: #{deeplab_bottleneck_forward.18} parent=0 // pred_fallthru
    _

// kernel: deeplab_bottleneck_forward.26
$region0: #{deeplab_bottleneck_forward.26}
  #allocation0 [shape = 'u32[]', space=smem, size = 0x4, offset = 0x4, fixed_abs, tag = 'smem constant byte address 0x4 - core index']
  #allocation1 [shape = 'u32[144,128]{1,0:T(1,128)}', space=vmem, size = 0x12000, scoped, tag = 'internal scratch']
  #allocation2 [shape = 'f32[128,8]{1,0:T(8,128)}', space=vmem, size = 0x10000, scoped, tag = 'scratch operand']
  %s0 = inlined_call_operand.vmem [shape: f32[128,16], index: 0, kind: input, shape index: {}]
  %s1 = inlined_call_operand.vmem [shape: f32[16,8], index: 1, kind: input, shape index: {}]
  %s2 = inlined_call_operand.vmem [shape: f32[1,8], index: 2, kind: input, shape index: {}]
  %s3 = inlined_call_operand.vmem [shape: f32[1,8], index: 3, kind: input, shape index: {}]
  %s4 = inlined_call_operand.vmem [shape: f32[128,8], index: 4, kind: output, shape index: {}]
  %s5 = sld [smem:[#allocation0]]
  $region34: #{deeplab_bottleneck_forward.26} parent=0
    _
  %s7 = ssub.s32 1, %s5
  %s8 = scalar_select 0, %s7, %s5
  // Predicated region
  $region2: #{deeplab_bottleneck_forward.26} parent=0 // pred_check
    _
  $region3: #{deeplab_bottleneck_forward.26} parent=0 // pred_check_branch
    %10 = sbr.rel (0) target = $region5
  $region4: #{deeplab_bottleneck_forward.26} parent=0 // pred_region
    _
  $region5: #{deeplab_bottleneck_forward.26} parent=0 // pred_fallthru
    _
  // Predicated region
  $region6: #{deeplab_bottleneck_forward.26} parent=0 // pred_check
    _
  $region7: #{deeplab_bottleneck_forward.26} parent=0 // pred_check_branch
    %12 = sbr.rel (0) target = $region9
  $region8: #{deeplab_bottleneck_forward.26} parent=0 // pred_region
    _
  $region9: #{deeplab_bottleneck_forward.26} parent=0 // pred_fallthru
    _
  // Predicated region
  $region10: #{deeplab_bottleneck_forward.26} parent=0 // pred_check
    _
  $region11: #{deeplab_bottleneck_forward.26} parent=0 // pred_check_branch
    %14 = sbr.rel (0) target = $region13
  $region12: #{deeplab_bottleneck_forward.26} parent=0 // pred_region
    _
  $region13: #{deeplab_bottleneck_forward.26} parent=0 // pred_fallthru
    _
  // Predicated region
  $region14: #{deeplab_bottleneck_forward.26} parent=0 // pred_check
    _
  $region15: #{deeplab_bottleneck_forward.26} parent=0 // pred_check_branch
    %16 = sbr.rel (0) target = $region17
  $region16: #{deeplab_bottleneck_forward.26} parent=0 // pred_region
    _
  $region17: #{deeplab_bottleneck_forward.26} parent=0 // pred_fallthru
    _
  %p18 = scmp.eq.s32.totalorder 0, 0
  // Predicated region
  $region18: #{deeplab_bottleneck_forward.26} parent=0 // pred_check
    %p19 = pneg %p18
  $region19: #{deeplab_bottleneck_forward.26} parent=0 // pred_check_branch
    %21 = sbr.rel (%p19) target = $region21
  $region20: #{deeplab_bottleneck_forward.26} parent=0 // pred_region
    %vm22 = vcmask 64512
    %23 = vst.msk [vmem:[#allocation2] sm:$0xff] %vm22, 0.0
    %24 = vst.msk [vmem:[#allocation2 + $0x8] sm:$0xff] %vm22, 0.0
    %25 = vst.msk [vmem:[#allocation2 + $0x10] sm:$0xff] %vm22, 0.0
    %26 = vst.msk [vmem:[#allocation2 + $0x18] sm:$0xff] %vm22, 0.0
    %27 = vst.msk [vmem:[#allocation2 + $0x20] sm:$0xff] %vm22, 0.0
    %28 = vst.msk [vmem:[#allocation2 + $0x28] sm:$0xff] %vm22, 0.0
    %29 = vst.msk [vmem:[#allocation2 + $0x30] sm:$0xff] %vm22, 0.0
    %30 = vst.msk [vmem:[#allocation2 + $0x38] sm:$0xff] %vm22, 0.0
    %31 = vst.msk [vmem:[#allocation2 + $0x40] sm:$0xff] %vm22, 0.0
    %32 = vst.msk [vmem:[#allocation2 + $0x48] sm:$0xff] %vm22, 0.0
    %33 = vst.msk [vmem:[#allocation2 + $0x50] sm:$0xff] %vm22, 0.0
    %34 = vst.msk [vmem:[#allocation2 + $0x58] sm:$0xff] %vm22, 0.0
    %35 = vst.msk [vmem:[#allocation2 + $0x60] sm:$0xff] %vm22, 0.0
    %36 = vst.msk [vmem:[#allocation2 + $0x68] sm:$0xff] %vm22, 0.0
    %37 = vst.msk [vmem:[#allocation2 + $0x70] sm:$0xff] %vm22, 0.0
    %38 = vst.msk [vmem:[#allocation2 + $0x78] sm:$0xff] %vm22, 0.0
  $region21: #{deeplab_bottleneck_forward.26} parent=0 // pred_fallthru
    _
  %v39 = vld [vmem:[#allocation2] sm:$0xff]
  %v40 = vld [vmem:[#allocation2 + $0x8] sm:$0xff]
  %v41 = vld [vmem:[#allocation2 + $0x10] sm:$0xff]
  %v42 = vld [vmem:[#allocation2 + $0x18] sm:$0xff]
  %v43 = vld [vmem:[#allocation2 + $0x20] sm:$0xff]
  %v44 = vld [vmem:[#allocation2 + $0x28] sm:$0xff]
  %v45 = vld [vmem:[#allocation2 + $0x30] sm:$0xff]
  %v46 = vld [vmem:[#allocation2 + $0x38] sm:$0xff]
  %v47 = vld [vmem:[#allocation2 + $0x40] sm:$0xff]
  %v48 = vld [vmem:[#allocation2 + $0x48] sm:$0xff]
  %v49 = vld [vmem:[#allocation2 + $0x50] sm:$0xff]
  %v50 = vld [vmem:[#allocation2 + $0x58] sm:$0xff]
  %v51 = vld [vmem:[#allocation2 + $0x60] sm:$0xff]
  %v52 = vld [vmem:[#allocation2 + $0x68] sm:$0xff]
  %v53 = vld [vmem:[#allocation2 + $0x70] sm:$0xff]
  %v54 = vld [vmem:[#allocation2 + $0x78] sm:$0xff]
  %v55 = vld [vmem:[%s0] sm:$0xff]
  %v56 = vld [vmem:[%s0 + $0x8] sm:$0xff]
  %v57 = vld [vmem:[%s0 + $0x10] sm:$0xff]
  %v58 = vld [vmem:[%s0 + $0x18] sm:$0xff]
  %v59 = vld [vmem:[%s0 + $0x20] sm:$0xff]
  %v60 = vld [vmem:[%s0 + $0x28] sm:$0xff]
  %v61 = vld [vmem:[%s0 + $0x30] sm:$0xff]
  %v62 = vld [vmem:[%s0 + $0x38] sm:$0xff]
  %v63 = vld [vmem:[%s0 + $0x40] sm:$0xff]
  %v64 = vld [vmem:[%s0 + $0x48] sm:$0xff]
  %v65 = vld [vmem:[%s0 + $0x50] sm:$0xff]
  %v66 = vld [vmem:[%s0 + $0x58] sm:$0xff]
  %v67 = vld [vmem:[%s0 + $0x60] sm:$0xff]
  %v68 = vld [vmem:[%s0 + $0x68] sm:$0xff]
  %v69 = vld [vmem:[%s0 + $0x70] sm:$0xff]
  %v70 = vld [vmem:[%s0 + $0x78] sm:$0xff]
  %v71 = vpack.c.bf16 %v56, %v55
  %v72 = vpack.c.bf16 %v58, %v57
  %v73 = vpack.c.bf16 %v60, %v59
  %v74 = vpack.c.bf16 %v62, %v61
  %v75 = vpack.c.bf16 %v64, %v63
  %v76 = vpack.c.bf16 %v66, %v65
  %v77 = vpack.c.bf16 %v68, %v67
  %v78 = vpack.c.bf16 %v70, %v69
  %v79 = vld [vmem:[%s1] sm:$0xff]
  %v80 = vld [vmem:[%s1 + $0x8] sm:$0xff]
  %v81 = vpack.c.bf16 %v80, %v79
  %vm82 = vcmask 130048
  %v84 = vsel %vm82, %v71, 0
  %v87 = vsel %vm82, %v72, 0
  %v90 = vsel %vm82, %v73, 0
  %v93 = vsel %vm82, %v74, 0
  %v96 = vsel %vm82, %v75, 0
  %v99 = vsel %vm82, %v76, 0
  %v102 = vsel %vm82, %v77, 0
  %v105 = vsel %vm82, %v78, 0
  %107 = vmatprep.subr.bf16.mxu0 0
  %108 = vmatpush1.bf16.msra.mxu0 0
  %109 = vmatprep.subr.bf16.mxu0 0
  %110 = vmatpush1.bf16.msra.mxu0 0
  %111 = vmatprep.subr.bf16.mxu0 0
  %112 = vmatpush1.bf16.msra.mxu0 0
  %113 = vmatprep.subr.bf16.mxu0 0
  %114 = vmatpush1.bf16.msra.mxu0 0
  %115 = vmatprep.subr.bf16.mxu0 0
  %116 = vmatpush1.bf16.msra.mxu0 0
  %117 = vmatprep.subr.bf16.mxu0 0
  %118 = vmatpush1.bf16.msra.mxu0 0
  %119 = vmatprep.subr.bf16.mxu0 0
  %120 = vmatpush1.bf16.msra.mxu0 0
  %121 = vmatprep.subr.bf16.mxu0 0
  %122 = vmatpush1.bf16.msra.mxu0 %v81
  %123 = vmatprep.subr.bf16.mxu0 0
  %124 = vmatpush2.bf16.msra.mxu0 0
  %125 = vmatprep.subr.bf16.mxu0 0
  %126 = vmatpush2.bf16.msra.mxu0 0
  %127 = vmatprep.subr.bf16.mxu0 0
  %128 = vmatpush2.bf16.msra.mxu0 0
  %129 = vmatprep.subr.bf16.mxu0 0
  %130 = vmatpush2.bf16.msra.mxu0 0
  %131 = vmatprep.subr.bf16.mxu0 0
  %132 = vmatpush2.bf16.msra.mxu0 0
  %133 = vmatprep.subr.bf16.mxu0 0
  %134 = vmatpush2.bf16.msra.mxu0 0
  %135 = vmatprep.subr.bf16.mxu0 0
  %136 = vmatpush2.bf16.msra.mxu0 0
  %137 = vmatprep.subr.bf16.mxu0 0
  %138 = vmatpush2.bf16.msra.mxu0 0
  %139 = vmatprep.mubr.bf16.mxu0 0
  %140 = vmatmul.mubr.bf16.gmra.mxu0 %v84
  %v141 = vpop.f32.mrf.mxu0
  %v142 = vadd.f32 0.0, %v141
  %v143 = vpop.f32.mrf.mxu0
  %v144 = vpop.f32.mrf.mxu0
  %v145 = vadd.f32 0.0, %v144
  %v146 = vpop.f32.mrf.mxu0
  %147 = vmatprep.mubr.bf16.mxu0 0
  %148 = vmatmul.mubr.bf16.gmra.mxu0 %v87
  %v149 = vpop.f32.mrf.mxu0
  %v150 = vadd.f32 0.0, %v149
  %v151 = vpop.f32.mrf.mxu0
  %v152 = vpop.f32.mrf.mxu0
  %v153 = vadd.f32 0.0, %v152
  %v154 = vpop.f32.mrf.mxu0
  %155 = vmatprep.mubr.bf16.mxu0 0
  %156 = vmatmul.mubr.bf16.gmra.mxu0 %v90
  %v157 = vpop.f32.mrf.mxu0
  %v158 = vadd.f32 0.0, %v157
  %v159 = vpop.f32.mrf.mxu0
  %v160 = vpop.f32.mrf.mxu0
  %v161 = vadd.f32 0.0, %v160
  %v162 = vpop.f32.mrf.mxu0
  %163 = vmatprep.mubr.bf16.mxu0 0
  %164 = vmatmul.mubr.bf16.gmra.mxu0 %v93
  %v165 = vpop.f32.mrf.mxu0
  %v166 = vadd.f32 0.0, %v165
  %v167 = vpop.f32.mrf.mxu0
  %v168 = vpop.f32.mrf.mxu0
  %v169 = vadd.f32 0.0, %v168
  %v170 = vpop.f32.mrf.mxu0
  %171 = vmatprep.mubr.bf16.mxu0 0
  %172 = vmatmul.mubr.bf16.gmra.mxu0 %v96
  %v173 = vpop.f32.mrf.mxu0
  %v174 = vadd.f32 0.0, %v173
  %v175 = vpop.f32.mrf.mxu0
  %v176 = vpop.f32.mrf.mxu0
  %v177 = vadd.f32 0.0, %v176
  %v178 = vpop.f32.mrf.mxu0
  %179 = vmatprep.mubr.bf16.mxu0 0
  %180 = vmatmul.mubr.bf16.gmra.mxu0 %v99
  %v181 = vpop.f32.mrf.mxu0
  %v182 = vadd.f32 0.0, %v181
  %v183 = vpop.f32.mrf.mxu0
  %v184 = vpop.f32.mrf.mxu0
  %v185 = vadd.f32 0.0, %v184
  %v186 = vpop.f32.mrf.mxu0
  %187 = vmatprep.mubr.bf16.mxu0 0
  %188 = vmatmul.mubr.bf16.gmra.mxu0 %v102
  %v189 = vpop.f32.mrf.mxu0
  %v190 = vadd.f32 0.0, %v189
  %v191 = vpop.f32.mrf.mxu0
  %v192 = vpop.f32.mrf.mxu0
  %v193 = vadd.f32 0.0, %v192
  %v194 = vpop.f32.mrf.mxu0
  %195 = vmatprep.mubr.bf16.mxu0 0
  %196 = vmatmul.mubr.bf16.gmra.mxu0 %v105
  %v197 = vpop.f32.mrf.mxu0
  %v198 = vadd.f32 0.0, %v197
  %v199 = vpop.f32.mrf.mxu0
  %v200 = vpop.f32.mrf.mxu0
  %v201 = vadd.f32 0.0, %v200
  %v202 = vpop.f32.mrf.mxu0
  %203 = vdwg.mxu0
  %v204 = vadd.f32 %v39, %v142
  %v205 = vadd.f32 %v40, %v145
  %v206 = vadd.f32 %v41, %v150
  %v207 = vadd.f32 %v42, %v153
  %v208 = vadd.f32 %v43, %v158
  %v209 = vadd.f32 %v44, %v161
  %v210 = vadd.f32 %v45, %v166
  %v211 = vadd.f32 %v46, %v169
  %v212 = vadd.f32 %v47, %v174
  %v213 = vadd.f32 %v48, %v177
  %v214 = vadd.f32 %v49, %v182
  %v215 = vadd.f32 %v50, %v185
  %v216 = vadd.f32 %v51, %v190
  %v217 = vadd.f32 %v52, %v193
  %v218 = vadd.f32 %v53, %v198
  %v219 = vadd.f32 %v54, %v201
  %vm220 = vcmask 64512
  %221 = vst.msk [vmem:[#allocation2] sm:$0xff] %vm220, %v204
  %222 = vst.msk [vmem:[#allocation2 + $0x8] sm:$0xff] %vm220, %v205
  %223 = vst.msk [vmem:[#allocation2 + $0x10] sm:$0xff] %vm220, %v206
  %224 = vst.msk [vmem:[#allocation2 + $0x18] sm:$0xff] %vm220, %v207
  %225 = vst.msk [vmem:[#allocation2 + $0x20] sm:$0xff] %vm220, %v208
  %226 = vst.msk [vmem:[#allocation2 + $0x28] sm:$0xff] %vm220, %v209
  %227 = vst.msk [vmem:[#allocation2 + $0x30] sm:$0xff] %vm220, %v210
  %228 = vst.msk [vmem:[#allocation2 + $0x38] sm:$0xff] %vm220, %v211
  %229 = vst.msk [vmem:[#allocation2 + $0x40] sm:$0xff] %vm220, %v212
  %230 = vst.msk [vmem:[#allocation2 + $0x48] sm:$0xff] %vm220, %v213
  %231 = vst.msk [vmem:[#allocation2 + $0x50] sm:$0xff] %vm220, %v214
  %232 = vst.msk [vmem:[#allocation2 + $0x58] sm:$0xff] %vm220, %v215
  %233 = vst.msk [vmem:[#allocation2 + $0x60] sm:$0xff] %vm220, %v216
  %234 = vst.msk [vmem:[#allocation2 + $0x68] sm:$0xff] %vm220, %v217
  %235 = vst.msk [vmem:[#allocation2 + $0x70] sm:$0xff] %vm220, %v218
  %236 = vst.msk [vmem:[#allocation2 + $0x78] sm:$0xff] %vm220, %v219
  // Predicated region
  $region22: #{deeplab_bottleneck_forward.26} parent=0 // pred_check
    %p237 = pneg %p18
  $region23: #{deeplab_bottleneck_forward.26} parent=0 // pred_check_branch
    %239 = sbr.rel (%p237) target = $region25
  $region24: #{deeplab_bottleneck_forward.26} parent=0 // pred_region
    %v240 = vld [vmem:[#allocation2] sm:$0xff]
    %v241 = vld [vmem:[#allocation2 + $0x8] sm:$0xff]
    %v242 = vld [vmem:[#allocation2 + $0x10] sm:$0xff]
    %v243 = vld [vmem:[#allocation2 + $0x18] sm:$0xff]
    %v244 = vld [vmem:[#allocation2 + $0x20] sm:$0xff]
    %v245 = vld [vmem:[#allocation2 + $0x28] sm:$0xff]
    %v246 = vld [vmem:[#allocation2 + $0x30] sm:$0xff]
    %v247 = vld [vmem:[#allocation2 + $0x38] sm:$0xff]
    %v248 = vld [vmem:[#allocation2 + $0x40] sm:$0xff]
    %v249 = vld [vmem:[#allocation2 + $0x48] sm:$0xff]
    %v250 = vld [vmem:[#allocation2 + $0x50] sm:$0xff]
    %v251 = vld [vmem:[#allocation2 + $0x58] sm:$0xff]
    %v252 = vld [vmem:[#allocation2 + $0x60] sm:$0xff]
    %v253 = vld [vmem:[#allocation2 + $0x68] sm:$0xff]
    %v254 = vld [vmem:[#allocation2 + $0x70] sm:$0xff]
    %v255 = vld [vmem:[#allocation2 + $0x78] sm:$0xff]
    %v256 = vld [vmem:[%s2] sm:$0x1]
    %v258 = vlaneseq
    %v259 = vshrl.u32 %v258, 7
    %v260 = vsub.s32 0, %v259
    %v261 = vrot.slane %v256, %v260
    %v263 = vmul.f32 %v240, %v261
    %v264 = vmul.f32 %v241, %v261
    %v265 = vmul.f32 %v242, %v261
    %v266 = vmul.f32 %v243, %v261
    %v267 = vmul.f32 %v244, %v261
    %v268 = vmul.f32 %v245, %v261
    %v269 = vmul.f32 %v246, %v261
    %v270 = vmul.f32 %v247, %v261
    %v271 = vmul.f32 %v248, %v261
    %v272 = vmul.f32 %v249, %v261
    %v273 = vmul.f32 %v250, %v261
    %v274 = vmul.f32 %v251, %v261
    %v275 = vmul.f32 %v252, %v261
    %v276 = vmul.f32 %v253, %v261
    %v277 = vmul.f32 %v254, %v261
    %v278 = vmul.f32 %v255, %v261
    %v279 = vld [vmem:[%s3] sm:$0x1]
    %v281 = vlaneseq
    %v282 = vshrl.u32 %v281, 7
    %v283 = vsub.s32 0, %v282
    %v284 = vrot.slane %v279, %v283
    %v286 = vadd.f32 %v263, %v284
    %v287 = vadd.f32 %v264, %v284
    %v288 = vadd.f32 %v265, %v284
    %v289 = vadd.f32 %v266, %v284
    %v290 = vadd.f32 %v267, %v284
    %v291 = vadd.f32 %v268, %v284
    %v292 = vadd.f32 %v269, %v284
    %v293 = vadd.f32 %v270, %v284
    %v294 = vadd.f32 %v271, %v284
    %v295 = vadd.f32 %v272, %v284
    %v296 = vadd.f32 %v273, %v284
    %v297 = vadd.f32 %v274, %v284
    %v298 = vadd.f32 %v275, %v284
    %v299 = vadd.f32 %v276, %v284
    %v300 = vadd.f32 %v277, %v284
    %v301 = vadd.f32 %v278, %v284
    %v302 = vmax.f32 %v286, 0.0
    %v303 = vmax.f32 %v287, 0.0
    %v304 = vmax.f32 %v288, 0.0
    %v305 = vmax.f32 %v289, 0.0
    %v306 = vmax.f32 %v290, 0.0
    %v307 = vmax.f32 %v291, 0.0
    %v308 = vmax.f32 %v292, 0.0
    %v309 = vmax.f32 %v293, 0.0
    %v310 = vmax.f32 %v294, 0.0
    %v311 = vmax.f32 %v295, 0.0
    %v312 = vmax.f32 %v296, 0.0
    %v313 = vmax.f32 %v297, 0.0
    %v314 = vmax.f32 %v298, 0.0
    %v315 = vmax.f32 %v299, 0.0
    %v316 = vmax.f32 %v300, 0.0
    %v317 = vmax.f32 %v301, 0.0
    %318 = vst.msk [vmem:[%s4] sm:$0xff] %vm220, %v302
    %319 = vst.msk [vmem:[%s4 + $0x8] sm:$0xff] %vm220, %v303
    %320 = vst.msk [vmem:[%s4 + $0x10] sm:$0xff] %vm220, %v304
    %321 = vst.msk [vmem:[%s4 + $0x18] sm:$0xff] %vm220, %v305
    %322 = vst.msk [vmem:[%s4 + $0x20] sm:$0xff] %vm220, %v306
    %323 = vst.msk [vmem:[%s4 + $0x28] sm:$0xff] %vm220, %v307
    %324 = vst.msk [vmem:[%s4 + $0x30] sm:$0xff] %vm220, %v308
    %325 = vst.msk [vmem:[%s4 + $0x38] sm:$0xff] %vm220, %v309
    %326 = vst.msk [vmem:[%s4 + $0x40] sm:$0xff] %vm220, %v310
    %327 = vst.msk [vmem:[%s4 + $0x48] sm:$0xff] %vm220, %v311
    %328 = vst.msk [vmem:[%s4 + $0x50] sm:$0xff] %vm220, %v312
    %329 = vst.msk [vmem:[%s4 + $0x58] sm:$0xff] %vm220, %v313
    %330 = vst.msk [vmem:[%s4 + $0x60] sm:$0xff] %vm220, %v314
    %331 = vst.msk [vmem:[%s4 + $0x68] sm:$0xff] %vm220, %v315
    %332 = vst.msk [vmem:[%s4 + $0x70] sm:$0xff] %vm220, %v316
    %333 = vst.msk [vmem:[%s4 + $0x78] sm:$0xff] %vm220, %v317
  $region25: #{deeplab_bottleneck_forward.26} parent=0 // pred_fallthru
    _
  // Predicated region
  $region26: #{deeplab_bottleneck_forward.26} parent=0 // pred_check
    _
  $region27: #{deeplab_bottleneck_forward.26} parent=0 // pred_check_branch
    %335 = sbr.rel (0) target = $region29
  $region28: #{deeplab_bottleneck_forward.26} parent=0 // pred_region
    _
  $region29: #{deeplab_bottleneck_forward.26} parent=0 // pred_fallthru
    _
  // Predicated region
  $region30: #{deeplab_bottleneck_forward.26} parent=0 // pred_check
    _
  $region31: #{deeplab_bottleneck_forward.26} parent=0 // pred_check_branch
    %337 = sbr.rel (0) target = $region33
  $region32: #{deeplab_bottleneck_forward.26} parent=0 // pred_region
    _
  $region33: #{deeplab_bottleneck_forward.26} parent=0 // pred_fallthru
    _

// kernel: deeplab_bottleneck_forward.19
$region0: #{deeplab_bottleneck_forward.19}
  #allocation0 [shape = 'u32[]', space=smem, size = 0x4, offset = 0x4, fixed_abs, tag = 'smem constant byte address 0x4 - core index']
  #allocation1 [shape = 'u32[144,128]{1,0:T(1,128)}', space=vmem, size = 0x12000, scoped, tag = 'internal scratch']
  #allocation2 [shape = 'f32[8,64]{1,0:T(8,128)}', space=vmem, size = 0x1000, scoped, tag = 'scratch operand']
  %s0 = inlined_call_operand.vmem [shape: f32[8,288], index: 0, kind: input, shape index: {}]
  %s1 = inlined_call_operand.vmem [shape: f32[288,64], index: 1, kind: input, shape index: {}]
  %s2 = inlined_call_operand.vmem [shape: f32[1,64], index: 2, kind: input, shape index: {}]
  %s3 = inlined_call_operand.vmem [shape: f32[1,64], index: 3, kind: input, shape index: {}]
  %s4 = inlined_call_operand.vmem [shape: f32[8,64], index: 4, kind: output, shape index: {}]
  %s5 = sld [smem:[#allocation0]]
  $region34: #{deeplab_bottleneck_forward.19} parent=0
    _
  %s7 = ssub.s32 1, %s5
  %s8 = scalar_select 0, %s7, %s5
  // Predicated region
  $region2: #{deeplab_bottleneck_forward.19} parent=0 // pred_check
    _
  $region3: #{deeplab_bottleneck_forward.19} parent=0 // pred_check_branch
    %10 = sbr.rel (0) target = $region5
  $region4: #{deeplab_bottleneck_forward.19} parent=0 // pred_region
    _
  $region5: #{deeplab_bottleneck_forward.19} parent=0 // pred_fallthru
    _
  // Predicated region
  $region6: #{deeplab_bottleneck_forward.19} parent=0 // pred_check
    _
  $region7: #{deeplab_bottleneck_forward.19} parent=0 // pred_check_branch
    %12 = sbr.rel (0) target = $region9
  $region8: #{deeplab_bottleneck_forward.19} parent=0 // pred_region
    _
  $region9: #{deeplab_bottleneck_forward.19} parent=0 // pred_fallthru
    _
  // Predicated region
  $region10: #{deeplab_bottleneck_forward.19} parent=0 // pred_check
    _
  $region11: #{deeplab_bottleneck_forward.19} parent=0 // pred_check_branch
    %14 = sbr.rel (0) target = $region13
  $region12: #{deeplab_bottleneck_forward.19} parent=0 // pred_region
    _
  $region13: #{deeplab_bottleneck_forward.19} parent=0 // pred_fallthru
    _
  // Predicated region
  $region14: #{deeplab_bottleneck_forward.19} parent=0 // pred_check
    _
  $region15: #{deeplab_bottleneck_forward.19} parent=0 // pred_check_branch
    %16 = sbr.rel (0) target = $region17
  $region16: #{deeplab_bottleneck_forward.19} parent=0 // pred_region
    _
  $region17: #{deeplab_bottleneck_forward.19} parent=0 // pred_fallthru
    _
  %p18 = scmp.eq.s32.totalorder 0, 0
  // Predicated region
  $region18: #{deeplab_bottleneck_forward.19} parent=0 // pred_check
    %p19 = pneg %p18
  $region19: #{deeplab_bottleneck_forward.19} parent=0 // pred_check_branch
    %21 = sbr.rel (%p19) target = $region21
  $region20: #{deeplab_bottleneck_forward.19} parent=0 // pred_region
    %vm22 = vcmask 523264
    %23 = vst.msk [vmem:[#allocation2] sm:$0xff] %vm22, 0.0
  $region21: #{deeplab_bottleneck_forward.19} parent=0 // pred_fallthru
    _
  %v24 = vld [vmem:[#allocation2] sm:$0xff]
  %v25 = vld [vmem:[%s0] sm:$0xff]
  %v26 = vld [vmem:[%s0 + $0x8] sm:$0xff]
  %v27 = vld [vmem:[%s0 + $0x10] sm:$0xff]
  %v28 = vpack.c.bf16 %v25, %v25
  %v29 = vpack.c.bf16 %v26, %v26
  %v30 = vpack.c.bf16 %v27, %v27
  %v31 = vld [vmem:[%s1] sm:$0xff]
  %v32 = vld [vmem:[%s1 + $0x8] sm:$0xff]
  %v33 = vld [vmem:[%s1 + $0x10] sm:$0xff]
  %v34 = vld [vmem:[%s1 + $0x18] sm:$0xff]
  %v35 = vld [vmem:[%s1 + $0x20] sm:$0xff]
  %v36 = vld [vmem:[%s1 + $0x28] sm:$0xff]
  %v37 = vld [vmem:[%s1 + $0x30] sm:$0xff]
  %v38 = vld [vmem:[%s1 + $0x38] sm:$0xff]
  %v39 = vld [vmem:[%s1 + $0x40] sm:$0xff]
  %v40 = vld [vmem:[%s1 + $0x48] sm:$0xff]
  %v41 = vld [vmem:[%s1 + $0x50] sm:$0xff]
  %v42 = vld [vmem:[%s1 + $0x58] sm:$0xff]
  %v43 = vld [vmem:[%s1 + $0x60] sm:$0xff]
  %v44 = vld [vmem:[%s1 + $0x68] sm:$0xff]
  %v45 = vld [vmem:[%s1 + $0x70] sm:$0xff]
  %v46 = vld [vmem:[%s1 + $0x78] sm:$0xff]
  %v47 = vld [vmem:[%s1 + $0x80] sm:$0xff]
  %v48 = vld [vmem:[%s1 + $0x88] sm:$0xff]
  %v49 = vld [vmem:[%s1 + $0x90] sm:$0xff]
  %v50 = vld [vmem:[%s1 + $0x98] sm:$0xff]
  %v51 = vld [vmem:[%s1 + $0xa0] sm:$0xff]
  %v52 = vld [vmem:[%s1 + $0xa8] sm:$0xff]
  %v53 = vld [vmem:[%s1 + $0xb0] sm:$0xff]
  %v54 = vld [vmem:[%s1 + $0xb8] sm:$0xff]
  %v55 = vld [vmem:[%s1 + $0xc0] sm:$0xff]
  %v56 = vld [vmem:[%s1 + $0xc8] sm:$0xff]
  %v57 = vld [vmem:[%s1 + $0xd0] sm:$0xff]
  %v58 = vld [vmem:[%s1 + $0xd8] sm:$0xff]
  %v59 = vld [vmem:[%s1 + $0xe0] sm:$0xff]
  %v60 = vld [vmem:[%s1 + $0xe8] sm:$0xff]
  %v61 = vld [vmem:[%s1 + $0xf0] sm:$0xff]
  %v62 = vld [vmem:[%s1 + $0xf8] sm:$0xff]
  %v63 = vld [vmem:[%s1 + $0x100] sm:$0xff]
  %v64 = vld [vmem:[%s1 + $0x108] sm:$0xff]
  %v65 = vld [vmem:[%s1 + $0x110] sm:$0xff]
  %v66 = vld [vmem:[%s1 + $0x118] sm:$0xff]
  %v67 = vpack.c.bf16 %v32, %v31
  %v68 = vpack.c.bf16 %v34, %v33
  %v69 = vpack.c.bf16 %v36, %v35
  %v70 = vpack.c.bf16 %v38, %v37
  %v71 = vpack.c.bf16 %v40, %v39
  %v72 = vpack.c.bf16 %v42, %v41
  %v73 = vpack.c.bf16 %v44, %v43
  %v74 = vpack.c.bf16 %v46, %v45
  %v75 = vpack.c.bf16 %v48, %v47
  %v76 = vpack.c.bf16 %v50, %v49
  %v77 = vpack.c.bf16 %v52, %v51
  %v78 = vpack.c.bf16 %v54, %v53
  %v79 = vpack.c.bf16 %v56, %v55
  %v80 = vpack.c.bf16 %v58, %v57
  %v81 = vpack.c.bf16 %v60, %v59
  %v82 = vpack.c.bf16 %v62, %v61
  %v83 = vpack.c.bf16 %v64, %v63
  %v84 = vpack.c.bf16 %v66, %v65
  %vm85 = vcmask 261120
  %v87 = vsel %vm85, %v30, 0
  %89 = vmatprep.subr.bf16.mxu0 0
  %90 = vmatpush1.bf16.msra.mxu0 %v74
  %91 = vmatprep.subr.bf16.mxu0 0
  %92 = vmatpush1.bf16.msra.mxu0 %v73
  %93 = vmatprep.subr.bf16.mxu0 0
  %94 = vmatpush1.bf16.msra.mxu0 %v72
  %95 = vmatprep.subr.bf16.mxu0 0
  %96 = vmatpush1.bf16.msra.mxu0 %v71
  %97 = vmatprep.subr.bf16.mxu0 0
  %98 = vmatpush1.bf16.msra.mxu0 %v70
  %99 = vmatprep.subr.bf16.mxu0 0
  %100 = vmatpush1.bf16.msra.mxu0 %v69
  %101 = vmatprep.subr.bf16.mxu0 0
  %102 = vmatpush1.bf16.msra.mxu0 %v68
  %103 = vmatprep.subr.bf16.mxu0 0
  %104 = vmatpush1.bf16.msra.mxu0 %v67
  %105 = vmatprep.subr.bf16.mxu0 0
  %106 = vmatpush2.bf16.msra.mxu0 %v82
  %107 = vmatprep.subr.bf16.mxu0 0
  %108 = vmatpush2.bf16.msra.mxu0 %v81
  %109 = vmatprep.subr.bf16.mxu0 0
  %110 = vmatpush2.bf16.msra.mxu0 %v80
  %111 = vmatprep.subr.bf16.mxu0 0
  %112 = vmatpush2.bf16.msra.mxu0 %v79
  %113 = vmatprep.subr.bf16.mxu0 0
  %114 = vmatpush2.bf16.msra.mxu0 %v78
  %115 = vmatprep.subr.bf16.mxu0 0
  %116 = vmatpush2.bf16.msra.mxu0 %v77
  %117 = vmatprep.subr.bf16.mxu0 0
  %118 = vmatpush2.bf16.msra.mxu0 %v76
  %119 = vmatprep.subr.bf16.mxu0 0
  %120 = vmatpush2.bf16.msra.mxu0 %v75
  %121 = vmatprep.mubr.bf16.mxu0 %v29
  %122 = vmatmul.mubr.bf16.gmra.mxu0 %v28
  %v123 = vpop.f32.mrf.mxu0
  %v124 = vadd.f32 0.0, %v123
  %v125 = vpop.f32.mrf.mxu0
  %v126 = vpop.f32.mrf.mxu0
  %v127 = vpop.f32.mrf.mxu0
  %128 = vdwg.mxu0
  %129 = vmatprep.subr.bf16.mxu0 0
  %130 = vmatpush1.bf16.msra.mxu0 0
  %131 = vmatprep.subr.bf16.mxu0 0
  %132 = vmatpush1.bf16.msra.mxu0 0
  %133 = vmatprep.subr.bf16.mxu0 0
  %134 = vmatpush1.bf16.msra.mxu0 0
  %135 = vmatprep.subr.bf16.mxu0 0
  %136 = vmatpush1.bf16.msra.mxu0 0
  %137 = vmatprep.subr.bf16.mxu0 0
  %138 = vmatpush1.bf16.msra.mxu0 0
  %139 = vmatprep.subr.bf16.mxu0 0
  %140 = vmatpush1.bf16.msra.mxu0 0
  %141 = vmatprep.subr.bf16.mxu0 0
  %142 = vmatpush1.bf16.msra.mxu0 %v84
  %143 = vmatprep.subr.bf16.mxu0 0
  %144 = vmatpush1.bf16.msra.mxu0 %v83
  %145 = vmatprep.subr.bf16.mxu0 0
  %146 = vmatpush2.bf16.msra.mxu0 0
  %147 = vmatprep.subr.bf16.mxu0 0
  %148 = vmatpush2.bf16.msra.mxu0 0
  %149 = vmatprep.subr.bf16.mxu0 0
  %150 = vmatpush2.bf16.msra.mxu0 0
  %151 = vmatprep.subr.bf16.mxu0 0
  %152 = vmatpush2.bf16.msra.mxu0 0
  %153 = vmatprep.subr.bf16.mxu0 0
  %154 = vmatpush2.bf16.msra.mxu0 0
  %155 = vmatprep.subr.bf16.mxu0 0
  %156 = vmatpush2.bf16.msra.mxu0 0
  %157 = vmatprep.subr.bf16.mxu0 0
  %158 = vmatpush2.bf16.msra.mxu0 0
  %159 = vmatprep.subr.bf16.mxu0 0
  %160 = vmatpush2.bf16.msra.mxu0 0
  %161 = vmatprep.mubr.bf16.mxu0 0
  %162 = vmatmul.mubr.bf16.gmra.mxu0 %v87
  %v163 = vpop.f32.mrf.mxu0
  %v164 = vadd.f32 %v124, %v163
  %v165 = vpop.f32.mrf.mxu0
  %v166 = vpop.f32.mrf.mxu0
  %v167 = vpop.f32.mrf.mxu0
  %168 = vdwg.mxu0
  %v169 = vadd.f32 %v24, %v164
  %vm170 = vcmask 523264
  %171 = vst.msk [vmem:[#allocation2] sm:$0xff] %vm170, %v169
  // Predicated region
  $region22: #{deeplab_bottleneck_forward.19} parent=0 // pred_check
    %p172 = pneg %p18
  $region23: #{deeplab_bottleneck_forward.19} parent=0 // pred_check_branch
    %174 = sbr.rel (%p172) target = $region25
  $region24: #{deeplab_bottleneck_forward.19} parent=0 // pred_region
    %v175 = vld [vmem:[#allocation2] sm:$0xff]
    %v176 = vld [vmem:[%s2] sm:$0x1]
    %v178 = vlaneseq
    %v179 = vshrl.u32 %v178, 7
    %v180 = vsub.s32 0, %v179
    %v181 = vrot.slane %v176, %v180
    %v183 = vmul.f32 %v175, %v181
    %v184 = vld [vmem:[%s3] sm:$0x1]
    %v186 = vlaneseq
    %v187 = vshrl.u32 %v186, 7
    %v188 = vsub.s32 0, %v187
    %v189 = vrot.slane %v184, %v188
    %v191 = vadd.f32 %v183, %v189
    %v192 = vmax.f32 %v191, 0.0
    %193 = vst.msk [vmem:[%s4] sm:$0xff] %vm170, %v192
  $region25: #{deeplab_bottleneck_forward.19} parent=0 // pred_fallthru
    _
  // Predicated region
  $region26: #{deeplab_bottleneck_forward.19} parent=0 // pred_check
    _
  $region27: #{deeplab_bottleneck_forward.19} parent=0 // pred_check_branch
    %195 = sbr.rel (0) target = $region29
  $region28: #{deeplab_bottleneck_forward.19} parent=0 // pred_region
    _
  $region29: #{deeplab_bottleneck_forward.19} parent=0 // pred_fallthru
    _
  // Predicated region
  $region30: #{deeplab_bottleneck_forward.19} parent=0 // pred_check
    _
  $region31: #{deeplab_bottleneck_forward.19} parent=0 // pred_check_branch
    %197 = sbr.rel (0) target = $region33
  $region32: #{deeplab_bottleneck_forward.19} parent=0 // pred_region
    _
  $region33: #{deeplab_bottleneck_forward.19} parent=0 // pred_fallthru
    _

// kernel: deeplab_bottleneck_forward.24
$region0: #{deeplab_bottleneck_forward.24}
  #allocation0 [shape = 'u32[]', space=smem, size = 0x4, offset = 0x4, fixed_abs, tag = 'smem constant byte address 0x4 - core index']
  #allocation1 [shape = 'u32[144,128]{1,0:T(1,128)}', space=vmem, size = 0x12000, scoped, tag = 'internal scratch']
  #allocation2 [shape = 'f32[8,32]{1,0:T(8,128)}', space=vmem, size = 0x1000, scoped, tag = 'scratch operand']
  %s0 = inlined_call_operand.vmem [shape: f32[8,64], index: 0, kind: input, shape index: {}]
  %s1 = inlined_call_operand.vmem [shape: f32[64,32], index: 1, kind: input, shape index: {}]
  %s2 = inlined_call_operand.vmem [shape: f32[1,32], index: 2, kind: input, shape index: {}]
  %s3 = inlined_call_operand.vmem [shape: f32[1,32], index: 3, kind: input, shape index: {}]
  %s4 = inlined_call_operand.vmem [shape: f32[8,32], index: 4, kind: output, shape index: {}]
  %s5 = sld [smem:[#allocation0]]
  $region34: #{deeplab_bottleneck_forward.24} parent=0
    _
  %s7 = ssub.s32 1, %s5
  %s8 = scalar_select 0, %s7, %s5
  // Predicated region
  $region2: #{deeplab_bottleneck_forward.24} parent=0 // pred_check
    _
  $region3: #{deeplab_bottleneck_forward.24} parent=0 // pred_check_branch
    %10 = sbr.rel (0) target = $region5
  $region4: #{deeplab_bottleneck_forward.24} parent=0 // pred_region
    _
  $region5: #{deeplab_bottleneck_forward.24} parent=0 // pred_fallthru
    _
  // Predicated region
  $region6: #{deeplab_bottleneck_forward.24} parent=0 // pred_check
    _
  $region7: #{deeplab_bottleneck_forward.24} parent=0 // pred_check_branch
    %12 = sbr.rel (0) target = $region9
  $region8: #{deeplab_bottleneck_forward.24} parent=0 // pred_region
    _
  $region9: #{deeplab_bottleneck_forward.24} parent=0 // pred_fallthru
    _
  // Predicated region
  $region10: #{deeplab_bottleneck_forward.24} parent=0 // pred_check
    _
  $region11: #{deeplab_bottleneck_forward.24} parent=0 // pred_check_branch
    %14 = sbr.rel (0) target = $region13
  $region12: #{deeplab_bottleneck_forward.24} parent=0 // pred_region
    _
  $region13: #{deeplab_bottleneck_forward.24} parent=0 // pred_fallthru
    _
  // Predicated region
  $region14: #{deeplab_bottleneck_forward.24} parent=0 // pred_check
    _
  $region15: #{deeplab_bottleneck_forward.24} parent=0 // pred_check_branch
    %16 = sbr.rel (0) target = $region17
  $region16: #{deeplab_bottleneck_forward.24} parent=0 // pred_region
    _
  $region17: #{deeplab_bottleneck_forward.24} parent=0 // pred_fallthru
    _
  %p18 = scmp.eq.s32.totalorder 0, 0
  // Predicated region
  $region18: #{deeplab_bottleneck_forward.24} parent=0 // pred_check
    %p19 = pneg %p18
  $region19: #{deeplab_bottleneck_forward.24} parent=0 // pred_check_branch
    %21 = sbr.rel (%p19) target = $region21
  $region20: #{deeplab_bottleneck_forward.24} parent=0 // pred_region
    %vm22 = vcmask 261120
    %23 = vst.msk [vmem:[#allocation2] sm:$0xff] %vm22, 0.0
  $region21: #{deeplab_bottleneck_forward.24} parent=0 // pred_fallthru
    _
  %v24 = vld [vmem:[#allocation2] sm:$0xff]
  %v25 = vld [vmem:[%s0] sm:$0xff]
  %v26 = vpack.c.bf16 %v25, %v25
  %v27 = vld [vmem:[%s1] sm:$0xff]
  %v28 = vld [vmem:[%s1 + $0x8] sm:$0xff]
  %v29 = vld [vmem:[%s1 + $0x10] sm:$0xff]
  %v30 = vld [vmem:[%s1 + $0x18] sm:$0xff]
  %v31 = vld [vmem:[%s1 + $0x20] sm:$0xff]
  %v32 = vld [vmem:[%s1 + $0x28] sm:$0xff]
  %v33 = vld [vmem:[%s1 + $0x30] sm:$0xff]
  %v34 = vld [vmem:[%s1 + $0x38] sm:$0xff]
  %v35 = vpack.c.bf16 %v28, %v27
  %v36 = vpack.c.bf16 %v30, %v29
  %v37 = vpack.c.bf16 %v32, %v31
  %v38 = vpack.c.bf16 %v34, %v33
  %vm39 = vcmask 523264
  %v41 = vsel %vm39, %v26, 0
  %43 = vmatprep.subr.bf16.mxu0 0
  %44 = vmatpush1.bf16.msra.mxu0 0
  %45 = vmatprep.subr.bf16.mxu0 0
  %46 = vmatpush1.bf16.msra.mxu0 0
  %47 = vmatprep.subr.bf16.mxu0 0
  %48 = vmatpush1.bf16.msra.mxu0 0
  %49 = vmatprep.subr.bf16.mxu0 0
  %50 = vmatpush1.bf16.msra.mxu0 0
  %51 = vmatprep.subr.bf16.mxu0 0
  %52 = vmatpush1.bf16.msra.mxu0 %v38
  %53 = vmatprep.subr.bf16.mxu0 0
  %54 = vmatpush1.bf16.msra.mxu0 %v37
  %55 = vmatprep.subr.bf16.mxu0 0
  %56 = vmatpush1.bf16.msra.mxu0 %v36
  %57 = vmatprep.subr.bf16.mxu0 0
  %58 = vmatpush1.bf16.msra.mxu0 %v35
  %59 = vmatprep.subr.bf16.mxu0 0
  %60 = vmatpush2.bf16.msra.mxu0 0
  %61 = vmatprep.subr.bf16.mxu0 0
  %62 = vmatpush2.bf16.msra.mxu0 0
  %63 = vmatprep.subr.bf16.mxu0 0
  %64 = vmatpush2.bf16.msra.mxu0 0
  %65 = vmatprep.subr.bf16.mxu0 0
  %66 = vmatpush2.bf16.msra.mxu0 0
  %67 = vmatprep.subr.bf16.mxu0 0
  %68 = vmatpush2.bf16.msra.mxu0 0
  %69 = vmatprep.subr.bf16.mxu0 0
  %70 = vmatpush2.bf16.msra.mxu0 0
  %71 = vmatprep.subr.bf16.mxu0 0
  %72 = vmatpush2.bf16.msra.mxu0 0
  %73 = vmatprep.subr.bf16.mxu0 0
  %74 = vmatpush2.bf16.msra.mxu0 0
  %75 = vmatprep.mubr.bf16.mxu0 0
  %76 = vmatmul.mubr.bf16.gmra.mxu0 %v41
  %v77 = vpop.f32.mrf.mxu0
  %v78 = vadd.f32 0.0, %v77
  %v79 = vpop.f32.mrf.mxu0
  %v80 = vpop.f32.mrf.mxu0
  %v81 = vpop.f32.mrf.mxu0
  %82 = vdwg.mxu0
  %v83 = vadd.f32 %v24, %v78
  %vm84 = vcmask 261120
  %85 = vst.msk [vmem:[#allocation2] sm:$0xff] %vm84, %v83
  // Predicated region
  $region22: #{deeplab_bottleneck_forward.24} parent=0 // pred_check
    %p86 = pneg %p18
  $region23: #{deeplab_bottleneck_forward.24} parent=0 // pred_check_branch
    %88 = sbr.rel (%p86) target = $region25
  $region24: #{deeplab_bottleneck_forward.24} parent=0 // pred_region
    %v89 = vld [vmem:[#allocation2] sm:$0xff]
    %v90 = vld [vmem:[%s2] sm:$0x1]
    %v92 = vlaneseq
    %v93 = vshrl.u32 %v92, 7
    %v94 = vsub.s32 0, %v93
    %v95 = vrot.slane %v90, %v94
    %v97 = vmul.f32 %v89, %v95
    %v98 = vld [vmem:[%s3] sm:$0x1]
    %v100 = vlaneseq
    %v101 = vshrl.u32 %v100, 7
    %v102 = vsub.s32 0, %v101
    %v103 = vrot.slane %v98, %v102
    %v105 = vadd.f32 %v97, %v103
    %v106 = vmax.f32 %v105, 0.0
    %107 = vst.msk [vmem:[%s4] sm:$0xff] %vm84, %v106
  $region25: #{deeplab_bottleneck_forward.24} parent=0 // pred_fallthru
    _
  // Predicated region
  $region26: #{deeplab_bottleneck_forward.24} parent=0 // pred_check
    _
  $region27: #{deeplab_bottleneck_forward.24} parent=0 // pred_check_branch
    %109 = sbr.rel (0) target = $region29
  $region28: #{deeplab_bottleneck_forward.24} parent=0 // pred_region
    _
  $region29: #{deeplab_bottleneck_forward.24} parent=0 // pred_fallthru
    _
  // Predicated region
  $region30: #{deeplab_bottleneck_forward.24} parent=0 // pred_check
    _
  $region31: #{deeplab_bottleneck_forward.24} parent=0 // pred_check_branch
    %111 = sbr.rel (0) target = $region33
  $region32: #{deeplab_bottleneck_forward.24} parent=0 // pred_region
    _
  $region33: #{deeplab_bottleneck_forward.24} parent=0 // pred_fallthru
    _

// kernel: deeplab_bottleneck_forward.21
$region0: #{deeplab_bottleneck_forward.21}
  #allocation0 [shape = 'u32[]', space=smem, size = 0x4, offset = 0x4, fixed_abs, tag = 'smem constant byte address 0x4 - core index']
  #allocation1 [shape = 'u32[144,128]{1,0:T(1,128)}', space=vmem, size = 0x12000, scoped, tag = 'internal scratch']
  #allocation2 [shape = 'f32[8,32]{1,0:T(8,128)}', space=vmem, size = 0x1000, scoped, tag = 'scratch operand']
  %s0 = inlined_call_operand.vmem [shape: f32[8,576], index: 0, kind: input, shape index: {}]
  %s1 = inlined_call_operand.vmem [shape: f32[576,32], index: 1, kind: input, shape index: {}]
  %s2 = inlined_call_operand.vmem [shape: f32[1,32], index: 2, kind: input, shape index: {}]
  %s3 = inlined_call_operand.vmem [shape: f32[1,32], index: 3, kind: input, shape index: {}]
  %s4 = inlined_call_operand.vmem [shape: f32[8,32], index: 4, kind: output, shape index: {}]
  %s5 = sld [smem:[#allocation0]]
  $region34: #{deeplab_bottleneck_forward.21} parent=0
    _
  %s7 = ssub.s32 1, %s5
  %s8 = scalar_select 0, %s7, %s5
  // Predicated region
  $region2: #{deeplab_bottleneck_forward.21} parent=0 // pred_check
    _
  $region3: #{deeplab_bottleneck_forward.21} parent=0 // pred_check_branch
    %10 = sbr.rel (0) target = $region5
  $region4: #{deeplab_bottleneck_forward.21} parent=0 // pred_region
    _
  $region5: #{deeplab_bottleneck_forward.21} parent=0 // pred_fallthru
    _
  // Predicated region
  $region6: #{deeplab_bottleneck_forward.21} parent=0 // pred_check
    _
  $region7: #{deeplab_bottleneck_forward.21} parent=0 // pred_check_branch
    %12 = sbr.rel (0) target = $region9
  $region8: #{deeplab_bottleneck_forward.21} parent=0 // pred_region
    _
  $region9: #{deeplab_bottleneck_forward.21} parent=0 // pred_fallthru
    _
  // Predicated region
  $region10: #{deeplab_bottleneck_forward.21} parent=0 // pred_check
    _
  $region11: #{deeplab_bottleneck_forward.21} parent=0 // pred_check_branch
    %14 = sbr.rel (0) target = $region13
  $region12: #{deeplab_bottleneck_forward.21} parent=0 // pred_region
    _
  $region13: #{deeplab_bottleneck_forward.21} parent=0 // pred_fallthru
    _
  // Predicated region
  $region14: #{deeplab_bottleneck_forward.21} parent=0 // pred_check
    _
  $region15: #{deeplab_bottleneck_forward.21} parent=0 // pred_check_branch
    %16 = sbr.rel (0) target = $region17
  $region16: #{deeplab_bottleneck_forward.21} parent=0 // pred_region
    _
  $region17: #{deeplab_bottleneck_forward.21} parent=0 // pred_fallthru
    _
  %p18 = scmp.eq.s32.totalorder 0, 0
  // Predicated region
  $region18: #{deeplab_bottleneck_forward.21} parent=0 // pred_check
    %p19 = pneg %p18
  $region19: #{deeplab_bottleneck_forward.21} parent=0 // pred_check_branch
    %21 = sbr.rel (%p19) target = $region21
  $region20: #{deeplab_bottleneck_forward.21} parent=0 // pred_region
    %vm22 = vcmask 261120
    %23 = vst.msk [vmem:[#allocation2] sm:$0xff] %vm22, 0.0
  $region21: #{deeplab_bottleneck_forward.21} parent=0 // pred_fallthru
    _
  %v24 = vld [vmem:[#allocation2] sm:$0xff]
  %v25 = vld [vmem:[%s0] sm:$0xff]
  %v26 = vld [vmem:[%s0 + $0x8] sm:$0xff]
  %v27 = vld [vmem:[%s0 + $0x10] sm:$0xff]
  %v28 = vld [vmem:[%s0 + $0x18] sm:$0xff]
  %v29 = vld [vmem:[%s0 + $0x20] sm:$0xff]
  %v30 = vpack.c.bf16 %v25, %v25
  %v31 = vpack.c.bf16 %v26, %v26
  %v32 = vpack.c.bf16 %v27, %v27
  %v33 = vpack.c.bf16 %v28, %v28
  %v34 = vpack.c.bf16 %v29, %v29
  %v35 = vld [vmem:[%s1] sm:$0xff]
  %v36 = vld [vmem:[%s1 + $0x8] sm:$0xff]
  %v37 = vld [vmem:[%s1 + $0x10] sm:$0xff]
  %v38 = vld [vmem:[%s1 + $0x18] sm:$0xff]
  %v39 = vld [vmem:[%s1 + $0x20] sm:$0xff]
  %v40 = vld [vmem:[%s1 + $0x28] sm:$0xff]
  %v41 = vld [vmem:[%s1 + $0x30] sm:$0xff]
  %v42 = vld [vmem:[%s1 + $0x38] sm:$0xff]
  %v43 = vld [vmem:[%s1 + $0x40] sm:$0xff]
  %v44 = vld [vmem:[%s1 + $0x48] sm:$0xff]
  %v45 = vld [vmem:[%s1 + $0x50] sm:$0xff]
  %v46 = vld [vmem:[%s1 + $0x58] sm:$0xff]
  %v47 = vld [vmem:[%s1 + $0x60] sm:$0xff]
  %v48 = vld [vmem:[%s1 + $0x68] sm:$0xff]
  %v49 = vld [vmem:[%s1 + $0x70] sm:$0xff]
  %v50 = vld [vmem:[%s1 + $0x78] sm:$0xff]
  %v51 = vld [vmem:[%s1 + $0x80] sm:$0xff]
  %v52 = vld [vmem:[%s1 + $0x88] sm:$0xff]
  %v53 = vld [vmem:[%s1 + $0x90] sm:$0xff]
  %v54 = vld [vmem:[%s1 + $0x98] sm:$0xff]
  %v55 = vld [vmem:[%s1 + $0xa0] sm:$0xff]
  %v56 = vld [vmem:[%s1 + $0xa8] sm:$0xff]
  %v57 = vld [vmem:[%s1 + $0xb0] sm:$0xff]
  %v58 = vld [vmem:[%s1 + $0xb8] sm:$0xff]
  %v59 = vld [vmem:[%s1 + $0xc0] sm:$0xff]
  %v60 = vld [vmem:[%s1 + $0xc8] sm:$0xff]
  %v61 = vld [vmem:[%s1 + $0xd0] sm:$0xff]
  %v62 = vld [vmem:[%s1 + $0xd8] sm:$0xff]
  %v63 = vld [vmem:[%s1 + $0xe0] sm:$0xff]
  %v64 = vld [vmem:[%s1 + $0xe8] sm:$0xff]
  %v65 = vld [vmem:[%s1 + $0xf0] sm:$0xff]
  %v66 = vld [vmem:[%s1 + $0xf8] sm:$0xff]
  %v67 = vld [vmem:[%s1 + $0x100] sm:$0xff]
  %v68 = vld [vmem:[%s1 + $0x108] sm:$0xff]
  %v69 = vld [vmem:[%s1 + $0x110] sm:$0xff]
  %v70 = vld [vmem:[%s1 + $0x118] sm:$0xff]
  %v71 = vld [vmem:[%s1 + $0x120] sm:$0xff]
  %v72 = vld [vmem:[%s1 + $0x128] sm:$0xff]
  %v73 = vld [vmem:[%s1 + $0x130] sm:$0xff]
  %v74 = vld [vmem:[%s1 + $0x138] sm:$0xff]
  %v75 = vld [vmem:[%s1 + $0x140] sm:$0xff]
  %v76 = vld [vmem:[%s1 + $0x148] sm:$0xff]
  %v77 = vld [vmem:[%s1 + $0x150] sm:$0xff]
  %v78 = vld [vmem:[%s1 + $0x158] sm:$0xff]
  %v79 = vld [vmem:[%s1 + $0x160] sm:$0xff]
  %v80 = vld [vmem:[%s1 + $0x168] sm:$0xff]
  %v81 = vld [vmem:[%s1 + $0x170] sm:$0xff]
  %v82 = vld [vmem:[%s1 + $0x178] sm:$0xff]
  %v83 = vld [vmem:[%s1 + $0x180] sm:$0xff]
  %v84 = vld [vmem:[%s1 + $0x188] sm:$0xff]
  %v85 = vld [vmem:[%s1 + $0x190] sm:$0xff]
  %v86 = vld [vmem:[%s1 + $0x198] sm:$0xff]
  %v87 = vld [vmem:[%s1 + $0x1a0] sm:$0xff]
  %v88 = vld [vmem:[%s1 + $0x1a8] sm:$0xff]
  %v89 = vld [vmem:[%s1 + $0x1b0] sm:$0xff]
  %v90 = vld [vmem:[%s1 + $0x1b8] sm:$0xff]
  %v91 = vld [vmem:[%s1 + $0x1c0] sm:$0xff]
  %v92 = vld [vmem:[%s1 + $0x1c8] sm:$0xff]
  %v93 = vld [vmem:[%s1 + $0x1d0] sm:$0xff]
  %v94 = vld [vmem:[%s1 + $0x1d8] sm:$0xff]
  %v95 = vld [vmem:[%s1 + $0x1e0] sm:$0xff]
  %v96 = vld [vmem:[%s1 + $0x1e8] sm:$0xff]
  %v97 = vld [vmem:[%s1 + $0x1f0] sm:$0xff]
  %v98 = vld [vmem:[%s1 + $0x1f8] sm:$0xff]
  %v99 = vld [vmem:[%s1 + $0x200] sm:$0xff]
  %v100 = vld [vmem:[%s1 + $0x208] sm:$0xff]
  %v101 = vld [vmem:[%s1 + $0x210] sm:$0xff]
  %v102 = vld [vmem:[%s1 + $0x218] sm:$0xff]
  %v103 = vld [vmem:[%s1 + $0x220] sm:$0xff]
  %v104 = vld [vmem:[%s1 + $0x228] sm:$0xff]
  %v105 = vld [vmem:[%s1 + $0x230] sm:$0xff]
  %v106 = vld [vmem:[%s1 + $0x238] sm:$0xff]
  %v107 = vpack.c.bf16 %v36, %v35
  %v108 = vpack.c.bf16 %v38, %v37
  %v109 = vpack.c.bf16 %v40, %v39
  %v110 = vpack.c.bf16 %v42, %v41
  %v111 = vpack.c.bf16 %v44, %v43
  %v112 = vpack.c.bf16 %v46, %v45
  %v113 = vpack.c.bf16 %v48, %v47
  %v114 = vpack.c.bf16 %v50, %v49
  %v115 = vpack.c.bf16 %v52, %v51
  %v116 = vpack.c.bf16 %v54, %v53
  %v117 = vpack.c.bf16 %v56, %v55
  %v118 = vpack.c.bf16 %v58, %v57
  %v119 = vpack.c.bf16 %v60, %v59
  %v120 = vpack.c.bf16 %v62, %v61
  %v121 = vpack.c.bf16 %v64, %v63
  %v122 = vpack.c.bf16 %v66, %v65
  %v123 = vpack.c.bf16 %v68, %v67
  %v124 = vpack.c.bf16 %v70, %v69
  %v125 = vpack.c.bf16 %v72, %v71
  %v126 = vpack.c.bf16 %v74, %v73
  %v127 = vpack.c.bf16 %v76, %v75
  %v128 = vpack.c.bf16 %v78, %v77
  %v129 = vpack.c.bf16 %v80, %v79
  %v130 = vpack.c.bf16 %v82, %v81
  %v131 = vpack.c.bf16 %v84, %v83
  %v132 = vpack.c.bf16 %v86, %v85
  %v133 = vpack.c.bf16 %v88, %v87
  %v134 = vpack.c.bf16 %v90, %v89
  %v135 = vpack.c.bf16 %v92, %v91
  %v136 = vpack.c.bf16 %v94, %v93
  %v137 = vpack.c.bf16 %v96, %v95
  %v138 = vpack.c.bf16 %v98, %v97
  %v139 = vpack.c.bf16 %v100, %v99
  %v140 = vpack.c.bf16 %v102, %v101
  %v141 = vpack.c.bf16 %v104, %v103
  %v142 = vpack.c.bf16 %v106, %v105
  %vm143 = vcmask 523264
  %v145 = vsel %vm143, %v34, 0
  %147 = vmatprep.subr.bf16.mxu0 0
  %148 = vmatpush1.bf16.msra.mxu0 %v114
  %149 = vmatprep.subr.bf16.mxu0 0
  %150 = vmatpush1.bf16.msra.mxu0 %v113
  %151 = vmatprep.subr.bf16.mxu0 0
  %152 = vmatpush1.bf16.msra.mxu0 %v112
  %153 = vmatprep.subr.bf16.mxu0 0
  %154 = vmatpush1.bf16.msra.mxu0 %v111
  %155 = vmatprep.subr.bf16.mxu0 0
  %156 = vmatpush1.bf16.msra.mxu0 %v110
  %157 = vmatprep.subr.bf16.mxu0 0
  %158 = vmatpush1.bf16.msra.mxu0 %v109
  %159 = vmatprep.subr.bf16.mxu0 0
  %160 = vmatpush1.bf16.msra.mxu0 %v108
  %161 = vmatprep.subr.bf16.mxu0 0
  %162 = vmatpush1.bf16.msra.mxu0 %v107
  %163 = vmatprep.subr.bf16.mxu0 0
  %164 = vmatpush2.bf16.msra.mxu0 %v122
  %165 = vmatprep.subr.bf16.mxu0 0
  %166 = vmatpush2.bf16.msra.mxu0 %v121
  %167 = vmatprep.subr.bf16.mxu0 0
  %168 = vmatpush2.bf16.msra.mxu0 %v120
  %169 = vmatprep.subr.bf16.mxu0 0
  %170 = vmatpush2.bf16.msra.mxu0 %v119
  %171 = vmatprep.subr.bf16.mxu0 0
  %172 = vmatpush2.bf16.msra.mxu0 %v118
  %173 = vmatprep.subr.bf16.mxu0 0
  %174 = vmatpush2.bf16.msra.mxu0 %v117
  %175 = vmatprep.subr.bf16.mxu0 0
  %176 = vmatpush2.bf16.msra.mxu0 %v116
  %177 = vmatprep.subr.bf16.mxu0 0
  %178 = vmatpush2.bf16.msra.mxu0 %v115
  %179 = vmatprep.mubr.bf16.mxu0 %v31
  %180 = vmatmul.mubr.bf16.gmra.mxu0 %v30
  %v181 = vpop.f32.mrf.mxu0
  %v182 = vadd.f32 0.0, %v181
  %v183 = vpop.f32.mrf.mxu0
  %v184 = vpop.f32.mrf.mxu0
  %v185 = vpop.f32.mrf.mxu0
  %186 = vdwg.mxu0
  %187 = vmatprep.subr.bf16.mxu0 0
  %188 = vmatpush1.bf16.msra.mxu0 %v130
  %189 = vmatprep.subr.bf16.mxu0 0
  %190 = vmatpush1.bf16.msra.mxu0 %v129
  %191 = vmatprep.subr.bf16.mxu0 0
  %192 = vmatpush1.bf16.msra.mxu0 %v128
  %193 = vmatprep.subr.bf16.mxu0 0
  %194 = vmatpush1.bf16.msra.mxu0 %v127
  %195 = vmatprep.subr.bf16.mxu0 0
  %196 = vmatpush1.bf16.msra.mxu0 %v126
  %197 = vmatprep.subr.bf16.mxu0 0
  %198 = vmatpush1.bf16.msra.mxu0 %v125
  %199 = vmatprep.subr.bf16.mxu0 0
  %200 = vmatpush1.bf16.msra.mxu0 %v124
  %201 = vmatprep.subr.bf16.mxu0 0
  %202 = vmatpush1.bf16.msra.mxu0 %v123
  %203 = vmatprep.subr.bf16.mxu0 0
  %204 = vmatpush2.bf16.msra.mxu0 %v138
  %205 = vmatprep.subr.bf16.mxu0 0
  %206 = vmatpush2.bf16.msra.mxu0 %v137
  %207 = vmatprep.subr.bf16.mxu0 0
  %208 = vmatpush2.bf16.msra.mxu0 %v136
  %209 = vmatprep.subr.bf16.mxu0 0
  %210 = vmatpush2.bf16.msra.mxu0 %v135
  %211 = vmatprep.subr.bf16.mxu0 0
  %212 = vmatpush2.bf16.msra.mxu0 %v134
  %213 = vmatprep.subr.bf16.mxu0 0
  %214 = vmatpush2.bf16.msra.mxu0 %v133
  %215 = vmatprep.subr.bf16.mxu0 0
  %216 = vmatpush2.bf16.msra.mxu0 %v132
  %217 = vmatprep.subr.bf16.mxu0 0
  %218 = vmatpush2.bf16.msra.mxu0 %v131
  %219 = vmatprep.mubr.bf16.mxu0 %v33
  %220 = vmatmul.mubr.bf16.gmra.mxu0 %v32
  %v221 = vpop.f32.mrf.mxu0
  %v222 = vadd.f32 %v182, %v221
  %v223 = vpop.f32.mrf.mxu0
  %v224 = vpop.f32.mrf.mxu0
  %v225 = vpop.f32.mrf.mxu0
  %226 = vdwg.mxu0
  %227 = vmatprep.subr.bf16.mxu0 0
  %228 = vmatpush1.bf16.msra.mxu0 0
  %229 = vmatprep.subr.bf16.mxu0 0
  %230 = vmatpush1.bf16.msra.mxu0 0
  %231 = vmatprep.subr.bf16.mxu0 0
  %232 = vmatpush1.bf16.msra.mxu0 0
  %233 = vmatprep.subr.bf16.mxu0 0
  %234 = vmatpush1.bf16.msra.mxu0 0
  %235 = vmatprep.subr.bf16.mxu0 0
  %236 = vmatpush1.bf16.msra.mxu0 %v142
  %237 = vmatprep.subr.bf16.mxu0 0
  %238 = vmatpush1.bf16.msra.mxu0 %v141
  %239 = vmatprep.subr.bf16.mxu0 0
  %240 = vmatpush1.bf16.msra.mxu0 %v140
  %241 = vmatprep.subr.bf16.mxu0 0
  %242 = vmatpush1.bf16.msra.mxu0 %v139
  %243 = vmatprep.subr.bf16.mxu0 0
  %244 = vmatpush2.bf16.msra.mxu0 0
  %245 = vmatprep.subr.bf16.mxu0 0
  %246 = vmatpush2.bf16.msra.mxu0 0
  %247 = vmatprep.subr.bf16.mxu0 0
  %248 = vmatpush2.bf16.msra.mxu0 0
  %249 = vmatprep.subr.bf16.mxu0 0
  %250 = vmatpush2.bf16.msra.mxu0 0
  %251 = vmatprep.subr.bf16.mxu0 0
  %252 = vmatpush2.bf16.msra.mxu0 0
  %253 = vmatprep.subr.bf16.mxu0 0
  %254 = vmatpush2.bf16.msra.mxu0 0
  %255 = vmatprep.subr.bf16.mxu0 0
  %256 = vmatpush2.bf16.msra.mxu0 0
  %257 = vmatprep.subr.bf16.mxu0 0
  %258 = vmatpush2.bf16.msra.mxu0 0
  %259 = vmatprep.mubr.bf16.mxu0 0
  %260 = vmatmul.mubr.bf16.gmra.mxu0 %v145
  %v261 = vpop.f32.mrf.mxu0
  %v262 = vadd.f32 %v222, %v261
  %v263 = vpop.f32.mrf.mxu0
  %v264 = vpop.f32.mrf.mxu0
  %v265 = vpop.f32.mrf.mxu0
  %266 = vdwg.mxu0
  %v267 = vadd.f32 %v24, %v262
  %vm268 = vcmask 261120
  %269 = vst.msk [vmem:[#allocation2] sm:$0xff] %vm268, %v267
  // Predicated region
  $region22: #{deeplab_bottleneck_forward.21} parent=0 // pred_check
    %p270 = pneg %p18
  $region23: #{deeplab_bottleneck_forward.21} parent=0 // pred_check_branch
    %272 = sbr.rel (%p270) target = $region25
  $region24: #{deeplab_bottleneck_forward.21} parent=0 // pred_region
    %v273 = vld [vmem:[#allocation2] sm:$0xff]
    %v274 = vld [vmem:[%s2] sm:$0x1]
    %v276 = vlaneseq
    %v277 = vshrl.u32 %v276, 7
    %v278 = vsub.s32 0, %v277
    %v279 = vrot.slane %v274, %v278
    %v281 = vmul.f32 %v273, %v279
    %v282 = vld [vmem:[%s3] sm:$0x1]
    %v284 = vlaneseq
    %v285 = vshrl.u32 %v284, 7
    %v286 = vsub.s32 0, %v285
    %v287 = vrot.slane %v282, %v286
    %v289 = vadd.f32 %v281, %v287
    %v290 = vmax.f32 %v289, 0.0
    %291 = vst.msk [vmem:[%s4] sm:$0xff] %vm268, %v290
  $region25: #{deeplab_bottleneck_forward.21} parent=0 // pred_fallthru
    _
  // Predicated region
  $region26: #{deeplab_bottleneck_forward.21} parent=0 // pred_check
    _
  $region27: #{deeplab_bottleneck_forward.21} parent=0 // pred_check_branch
    %293 = sbr.rel (0) target = $region29
  $region28: #{deeplab_bottleneck_forward.21} parent=0 // pred_region
    _
  $region29: #{deeplab_bottleneck_forward.21} parent=0 // pred_fallthru
    _
  // Predicated region
  $region30: #{deeplab_bottleneck_forward.21} parent=0 // pred_check
    _
  $region31: #{deeplab_bottleneck_forward.21} parent=0 // pred_check_branch
    %295 = sbr.rel (0) target = $region33
  $region32: #{deeplab_bottleneck_forward.21} parent=0 // pred_region
    _
  $region33: #{deeplab_bottleneck_forward.21} parent=0 // pred_fallthru
    _

// kernel: deeplab_bottleneck_forward.25
$region0: #{deeplab_bottleneck_forward.25}
  #allocation0 [shape = 'u32[]', space=smem, size = 0x4, offset = 0x4, fixed_abs, tag = 'smem constant byte address 0x4 - core index']
  #allocation1 [shape = 'u32[144,128]{1,0:T(1,128)}', space=vmem, size = 0x12000, scoped, tag = 'internal scratch']
  %s0 = inlined_call_operand.vmem [shape: f32[8,32], index: 0, kind: input, shape index: {}]
  %s1 = inlined_call_operand.vmem [shape: f32[8,32], index: 1, kind: input, shape index: {}]
  %s2 = inlined_call_operand.vmem [shape: f32[8,32], index: 2, kind: input, shape index: {}]
  %s3 = inlined_call_operand.vmem [shape: f32[8,32], index: 3, kind: input, shape index: {}]
  %s4 = inlined_call_operand.vmem [shape: f32[8,32], index: 4, kind: input, shape index: {}]
  %s5 = inlined_call_operand.vmem [shape: f32[32,32], index: 5, kind: input, shape index: {}]
  %s6 = inlined_call_operand.vmem [shape: f32[32,32], index: 6, kind: input, shape index: {}]
  %s7 = inlined_call_operand.vmem [shape: f32[32,32], index: 7, kind: input, shape index: {}]
  %s8 = inlined_call_operand.vmem [shape: f32[32,32], index: 8, kind: input, shape index: {}]
  %s9 = inlined_call_operand.vmem [shape: f32[32,32], index: 9, kind: input, shape index: {}]
  %s10 = inlined_call_operand.vmem [shape: f32[1,32], index: 10, kind: input, shape index: {}]
  %s11 = inlined_call_operand.vmem [shape: f32[1,32], index: 11, kind: input, shape index: {}]
  %s12 = inlined_call_operand.vmem [shape: f32[8,32], index: 12, kind: output, shape index: {}]
  %s13 = sld [smem:[#allocation0]]
  $region58: #{deeplab_bottleneck_forward.25} parent=0
    _
  %s15 = ssub.s32 1, %s13
  %s16 = scalar_select 0, %s15, %s13
  // Predicated region
  $region2: #{deeplab_bottleneck_forward.25} parent=0 // pred_check
    _
  $region3: #{deeplab_bottleneck_forward.25} parent=0 // pred_check_branch
    %18 = sbr.rel (0) target = $region5
  $region4: #{deeplab_bottleneck_forward.25} parent=0 // pred_region
    _
  $region5: #{deeplab_bottleneck_forward.25} parent=0 // pred_fallthru
    _
  // Predicated region
  $region6: #{deeplab_bottleneck_forward.25} parent=0 // pred_check
    _
  $region7: #{deeplab_bottleneck_forward.25} parent=0 // pred_check_branch
    %20 = sbr.rel (0) target = $region9
  $region8: #{deeplab_bottleneck_forward.25} parent=0 // pred_region
    _
  $region9: #{deeplab_bottleneck_forward.25} parent=0 // pred_fallthru
    _
  // Predicated region
  $region10: #{deeplab_bottleneck_forward.25} parent=0 // pred_check
    _
  $region11: #{deeplab_bottleneck_forward.25} parent=0 // pred_check_branch
    %22 = sbr.rel (0) target = $region13
  $region12: #{deeplab_bottleneck_forward.25} parent=0 // pred_region
    _
  $region13: #{deeplab_bottleneck_forward.25} parent=0 // pred_fallthru
    _
  // Predicated region
  $region14: #{deeplab_bottleneck_forward.25} parent=0 // pred_check
    _
  $region15: #{deeplab_bottleneck_forward.25} parent=0 // pred_check_branch
    %24 = sbr.rel (0) target = $region17
  $region16: #{deeplab_bottleneck_forward.25} parent=0 // pred_region
    _
  $region17: #{deeplab_bottleneck_forward.25} parent=0 // pred_fallthru
    _
  // Predicated region
  $region18: #{deeplab_bottleneck_forward.25} parent=0 // pred_check
    _
  $region19: #{deeplab_bottleneck_forward.25} parent=0 // pred_check_branch
    %26 = sbr.rel (0) target = $region21
  $region20: #{deeplab_bottleneck_forward.25} parent=0 // pred_region
    _
  $region21: #{deeplab_bottleneck_forward.25} parent=0 // pred_fallthru
    _
  // Predicated region
  $region22: #{deeplab_bottleneck_forward.25} parent=0 // pred_check
    _
  $region23: #{deeplab_bottleneck_forward.25} parent=0 // pred_check_branch
    %28 = sbr.rel (0) target = $region25
  $region24: #{deeplab_bottleneck_forward.25} parent=0 // pred_region
    _
  $region25: #{deeplab_bottleneck_forward.25} parent=0 // pred_fallthru
    _
  // Predicated region
  $region26: #{deeplab_bottleneck_forward.25} parent=0 // pred_check
    _
  $region27: #{deeplab_bottleneck_forward.25} parent=0 // pred_check_branch
    %30 = sbr.rel (0) target = $region29
  $region28: #{deeplab_bottleneck_forward.25} parent=0 // pred_region
    _
  $region29: #{deeplab_bottleneck_forward.25} parent=0 // pred_fallthru
    _
  // Predicated region
  $region30: #{deeplab_bottleneck_forward.25} parent=0 // pred_check
    _
  $region31: #{deeplab_bottleneck_forward.25} parent=0 // pred_check_branch
    %32 = sbr.rel (0) target = $region33
  $region32: #{deeplab_bottleneck_forward.25} parent=0 // pred_region
    _
  $region33: #{deeplab_bottleneck_forward.25} parent=0 // pred_fallthru
    _
  // Predicated region
  $region34: #{deeplab_bottleneck_forward.25} parent=0 // pred_check
    _
  $region35: #{deeplab_bottleneck_forward.25} parent=0 // pred_check_branch
    %34 = sbr.rel (0) target = $region37
  $region36: #{deeplab_bottleneck_forward.25} parent=0 // pred_region
    _
  $region37: #{deeplab_bottleneck_forward.25} parent=0 // pred_fallthru
    _
  // Predicated region
  $region38: #{deeplab_bottleneck_forward.25} parent=0 // pred_check
    _
  $region39: #{deeplab_bottleneck_forward.25} parent=0 // pred_check_branch
    %36 = sbr.rel (0) target = $region41
  $region40: #{deeplab_bottleneck_forward.25} parent=0 // pred_region
    _
  $region41: #{deeplab_bottleneck_forward.25} parent=0 // pred_fallthru
    _
  // Predicated region
  $region42: #{deeplab_bottleneck_forward.25} parent=0 // pred_check
    _
  $region43: #{deeplab_bottleneck_forward.25} parent=0 // pred_check_branch
    %38 = sbr.rel (0) target = $region45
  $region44: #{deeplab_bottleneck_forward.25} parent=0 // pred_region
    _
  $region45: #{deeplab_bottleneck_forward.25} parent=0 // pred_fallthru
    _
  // Predicated region
  $region46: #{deeplab_bottleneck_forward.25} parent=0 // pred_check
    _
  $region47: #{deeplab_bottleneck_forward.25} parent=0 // pred_check_branch
    %40 = sbr.rel (0) target = $region49
  $region48: #{deeplab_bottleneck_forward.25} parent=0 // pred_region
    _
  $region49: #{deeplab_bottleneck_forward.25} parent=0 // pred_fallthru
    _
  %v42 = vld [vmem:[%s0] sm:$0xff]
  %v43 = vpack.c.bf16 %v42, %v42
  %v44 = vld [vmem:[%s5] sm:$0xff]
  %v45 = vld [vmem:[%s5 + $0x8] sm:$0xff]
  %v46 = vld [vmem:[%s5 + $0x10] sm:$0xff]
  %v47 = vld [vmem:[%s5 + $0x18] sm:$0xff]
  %v48 = vpack.c.bf16 %v45, %v44
  %v49 = vpack.c.bf16 %v47, %v46
  %v50 = vld [vmem:[%s1] sm:$0xff]
  %v51 = vpack.c.bf16 %v50, %v50
  %v52 = vld [vmem:[%s6] sm:$0xff]
  %v53 = vld [vmem:[%s6 + $0x8] sm:$0xff]
  %v54 = vld [vmem:[%s6 + $0x10] sm:$0xff]
  %v55 = vld [vmem:[%s6 + $0x18] sm:$0xff]
  %v56 = vpack.c.bf16 %v53, %v52
  %v57 = vpack.c.bf16 %v55, %v54
  %vm58 = vcmask 261120
  %v60 = vsel %vm58, %v51, 0
  %62 = vmatprep.subr.bf16.mxu0 0
  %63 = vmatpush1.bf16.msra.mxu0 0
  %64 = vmatprep.subr.bf16.mxu0 0
  %65 = vmatpush1.bf16.msra.mxu0 0
  %66 = vmatprep.subr.bf16.mxu0 0
  %67 = vmatpush1.bf16.msra.mxu0 0
  %68 = vmatprep.subr.bf16.mxu0 0
  %69 = vmatpush1.bf16.msra.mxu0 0
  %70 = vmatprep.subr.bf16.mxu0 0
  %71 = vmatpush1.bf16.msra.mxu0 0
  %72 = vmatprep.subr.bf16.mxu0 0
  %73 = vmatpush1.bf16.msra.mxu0 0
  %74 = vmatprep.subr.bf16.mxu0 0
  %75 = vmatpush1.bf16.msra.mxu0 %v57
  %76 = vmatprep.subr.bf16.mxu0 0
  %77 = vmatpush1.bf16.msra.mxu0 %v56
  %78 = vmatprep.subr.bf16.mxu0 0
  %79 = vmatpush2.bf16.msra.mxu0 0
  %80 = vmatprep.subr.bf16.mxu0 0
  %81 = vmatpush2.bf16.msra.mxu0 0
  %82 = vmatprep.subr.bf16.mxu0 0
  %83 = vmatpush2.bf16.msra.mxu0 0
  %84 = vmatprep.subr.bf16.mxu0 0
  %85 = vmatpush2.bf16.msra.mxu0 0
  %86 = vmatprep.subr.bf16.mxu0 0
  %87 = vmatpush2.bf16.msra.mxu0 0
  %88 = vmatprep.subr.bf16.mxu0 0
  %89 = vmatpush2.bf16.msra.mxu0 0
  %90 = vmatprep.subr.bf16.mxu0 0
  %91 = vmatpush2.bf16.msra.mxu0 0
  %92 = vmatprep.subr.bf16.mxu0 0
  %93 = vmatpush2.bf16.msra.mxu0 0
  %94 = vmatprep.mubr.bf16.mxu0 0
  %95 = vmatmul.mubr.bf16.gmra.mxu0 %v60
  %v96 = vpop.f32.mrf.mxu0
  %v97 = vadd.f32 0.0, %v96
  %v98 = vpop.f32.mrf.mxu0
  %v99 = vpop.f32.mrf.mxu0
  %v100 = vpop.f32.mrf.mxu0
  %101 = vdwg.mxu0
  %v103 = vsel %vm58, %v43, 0
  %105 = vmatprep.subr.bf16.mxu0 0
  %106 = vmatpush1.bf16.msra.mxu0 0
  %107 = vmatprep.subr.bf16.mxu0 0
  %108 = vmatpush1.bf16.msra.mxu0 0
  %109 = vmatprep.subr.bf16.mxu0 0
  %110 = vmatpush1.bf16.msra.mxu0 0
  %111 = vmatprep.subr.bf16.mxu0 0
  %112 = vmatpush1.bf16.msra.mxu0 0
  %113 = vmatprep.subr.bf16.mxu0 0
  %114 = vmatpush1.bf16.msra.mxu0 0
  %115 = vmatprep.subr.bf16.mxu0 0
  %116 = vmatpush1.bf16.msra.mxu0 0
  %117 = vmatprep.subr.bf16.mxu0 0
  %118 = vmatpush1.bf16.msra.mxu0 %v49
  %119 = vmatprep.subr.bf16.mxu0 0
  %120 = vmatpush1.bf16.msra.mxu0 %v48
  %121 = vmatprep.subr.bf16.mxu0 0
  %122 = vmatpush2.bf16.msra.mxu0 0
  %123 = vmatprep.subr.bf16.mxu0 0
  %124 = vmatpush2.bf16.msra.mxu0 0
  %125 = vmatprep.subr.bf16.mxu0 0
  %126 = vmatpush2.bf16.msra.mxu0 0
  %127 = vmatprep.subr.bf16.mxu0 0
  %128 = vmatpush2.bf16.msra.mxu0 0
  %129 = vmatprep.subr.bf16.mxu0 0
  %130 = vmatpush2.bf16.msra.mxu0 0
  %131 = vmatprep.subr.bf16.mxu0 0
  %132 = vmatpush2.bf16.msra.mxu0 0
  %133 = vmatprep.subr.bf16.mxu0 0
  %134 = vmatpush2.bf16.msra.mxu0 0
  %135 = vmatprep.subr.bf16.mxu0 0
  %136 = vmatpush2.bf16.msra.mxu0 0
  %137 = vmatprep.mubr.bf16.mxu0 0
  %138 = vmatmul.mubr.bf16.gmra.mxu0 %v103
  %v139 = vpop.f32.mrf.mxu0
  %v140 = vadd.f32 %v97, %v139
  %v141 = vpop.f32.mrf.mxu0
  %v142 = vpop.f32.mrf.mxu0
  %v143 = vpop.f32.mrf.mxu0
  %144 = vdwg.mxu0
  %v145 = vld [vmem:[%s2] sm:$0xff]
  %v146 = vpack.c.bf16 %v145, %v145
  %v147 = vld [vmem:[%s7] sm:$0xff]
  %v148 = vld [vmem:[%s7 + $0x8] sm:$0xff]
  %v149 = vld [vmem:[%s7 + $0x10] sm:$0xff]
  %v150 = vld [vmem:[%s7 + $0x18] sm:$0xff]
  %v151 = vpack.c.bf16 %v148, %v147
  %v152 = vpack.c.bf16 %v150, %v149
  %v154 = vsel %vm58, %v146, 0
  %156 = vmatprep.subr.bf16.mxu0 0
  %157 = vmatpush1.bf16.msra.mxu0 0
  %158 = vmatprep.subr.bf16.mxu0 0
  %159 = vmatpush1.bf16.msra.mxu0 0
  %160 = vmatprep.subr.bf16.mxu0 0
  %161 = vmatpush1.bf16.msra.mxu0 0
  %162 = vmatprep.subr.bf16.mxu0 0
  %163 = vmatpush1.bf16.msra.mxu0 0
  %164 = vmatprep.subr.bf16.mxu0 0
  %165 = vmatpush1.bf16.msra.mxu0 0
  %166 = vmatprep.subr.bf16.mxu0 0
  %167 = vmatpush1.bf16.msra.mxu0 0
  %168 = vmatprep.subr.bf16.mxu0 0
  %169 = vmatpush1.bf16.msra.mxu0 %v152
  %170 = vmatprep.subr.bf16.mxu0 0
  %171 = vmatpush1.bf16.msra.mxu0 %v151
  %172 = vmatprep.subr.bf16.mxu0 0
  %173 = vmatpush2.bf16.msra.mxu0 0
  %174 = vmatprep.subr.bf16.mxu0 0
  %175 = vmatpush2.bf16.msra.mxu0 0
  %176 = vmatprep.subr.bf16.mxu0 0
  %177 = vmatpush2.bf16.msra.mxu0 0
  %178 = vmatprep.subr.bf16.mxu0 0
  %179 = vmatpush2.bf16.msra.mxu0 0
  %180 = vmatprep.subr.bf16.mxu0 0
  %181 = vmatpush2.bf16.msra.mxu0 0
  %182 = vmatprep.subr.bf16.mxu0 0
  %183 = vmatpush2.bf16.msra.mxu0 0
  %184 = vmatprep.subr.bf16.mxu0 0
  %185 = vmatpush2.bf16.msra.mxu0 0
  %186 = vmatprep.subr.bf16.mxu0 0
  %187 = vmatpush2.bf16.msra.mxu0 0
  %188 = vmatprep.mubr.bf16.mxu0 0
  %189 = vmatmul.mubr.bf16.gmra.mxu0 %v154
  %v190 = vpop.f32.mrf.mxu0
  %v191 = vadd.f32 0.0, %v190
  %v192 = vpop.f32.mrf.mxu0
  %v193 = vpop.f32.mrf.mxu0
  %v194 = vpop.f32.mrf.mxu0
  %195 = vdwg.mxu0
  %v196 = vadd.f32 %v140, %v191
  %v197 = vld [vmem:[%s3] sm:$0xff]
  %v198 = vpack.c.bf16 %v197, %v197
  %v199 = vld [vmem:[%s8] sm:$0xff]
  %v200 = vld [vmem:[%s8 + $0x8] sm:$0xff]
  %v201 = vld [vmem:[%s8 + $0x10] sm:$0xff]
  %v202 = vld [vmem:[%s8 + $0x18] sm:$0xff]
  %v203 = vpack.c.bf16 %v200, %v199
  %v204 = vpack.c.bf16 %v202, %v201
  %v206 = vsel %vm58, %v198, 0
  %208 = vmatprep.subr.bf16.mxu0 0
  %209 = vmatpush1.bf16.msra.mxu0 0
  %210 = vmatprep.subr.bf16.mxu0 0
  %211 = vmatpush1.bf16.msra.mxu0 0
  %212 = vmatprep.subr.bf16.mxu0 0
  %213 = vmatpush1.bf16.msra.mxu0 0
  %214 = vmatprep.subr.bf16.mxu0 0
  %215 = vmatpush1.bf16.msra.mxu0 0
  %216 = vmatprep.subr.bf16.mxu0 0
  %217 = vmatpush1.bf16.msra.mxu0 0
  %218 = vmatprep.subr.bf16.mxu0 0
  %219 = vmatpush1.bf16.msra.mxu0 0
  %220 = vmatprep.subr.bf16.mxu0 0
  %221 = vmatpush1.bf16.msra.mxu0 %v204
  %222 = vmatprep.subr.bf16.mxu0 0
  %223 = vmatpush1.bf16.msra.mxu0 %v203
  %224 = vmatprep.subr.bf16.mxu0 0
  %225 = vmatpush2.bf16.msra.mxu0 0
  %226 = vmatprep.subr.bf16.mxu0 0
  %227 = vmatpush2.bf16.msra.mxu0 0
  %228 = vmatprep.subr.bf16.mxu0 0
  %229 = vmatpush2.bf16.msra.mxu0 0
  %230 = vmatprep.subr.bf16.mxu0 0
  %231 = vmatpush2.bf16.msra.mxu0 0
  %232 = vmatprep.subr.bf16.mxu0 0
  %233 = vmatpush2.bf16.msra.mxu0 0
  %234 = vmatprep.subr.bf16.mxu0 0
  %235 = vmatpush2.bf16.msra.mxu0 0
  %236 = vmatprep.subr.bf16.mxu0 0
  %237 = vmatpush2.bf16.msra.mxu0 0
  %238 = vmatprep.subr.bf16.mxu0 0
  %239 = vmatpush2.bf16.msra.mxu0 0
  %240 = vmatprep.mubr.bf16.mxu0 0
  %241 = vmatmul.mubr.bf16.gmra.mxu0 %v206
  %v242 = vpop.f32.mrf.mxu0
  %v243 = vadd.f32 0.0, %v242
  %v244 = vpop.f32.mrf.mxu0
  %v245 = vpop.f32.mrf.mxu0
  %v246 = vpop.f32.mrf.mxu0
  %247 = vdwg.mxu0
  %v248 = vadd.f32 %v196, %v243
  %v249 = vld [vmem:[%s4] sm:$0xff]
  %v250 = vpack.c.bf16 %v249, %v249
  %v251 = vld [vmem:[%s9] sm:$0xff]
  %v252 = vld [vmem:[%s9 + $0x8] sm:$0xff]
  %v253 = vld [vmem:[%s9 + $0x10] sm:$0xff]
  %v254 = vld [vmem:[%s9 + $0x18] sm:$0xff]
  %v255 = vpack.c.bf16 %v252, %v251
  %v256 = vpack.c.bf16 %v254, %v253
  %v258 = vsel %vm58, %v250, 0
  %260 = vmatprep.subr.bf16.mxu0 0
  %261 = vmatpush1.bf16.msra.mxu0 0
  %262 = vmatprep.subr.bf16.mxu0 0
  %263 = vmatpush1.bf16.msra.mxu0 0
  %264 = vmatprep.subr.bf16.mxu0 0
  %265 = vmatpush1.bf16.msra.mxu0 0
  %266 = vmatprep.subr.bf16.mxu0 0
  %267 = vmatpush1.bf16.msra.mxu0 0
  %268 = vmatprep.subr.bf16.mxu0 0
  %269 = vmatpush1.bf16.msra.mxu0 0
  %270 = vmatprep.subr.bf16.mxu0 0
  %271 = vmatpush1.bf16.msra.mxu0 0
  %272 = vmatprep.subr.bf16.mxu0 0
  %273 = vmatpush1.bf16.msra.mxu0 %v256
  %274 = vmatprep.subr.bf16.mxu0 0
  %275 = vmatpush1.bf16.msra.mxu0 %v255
  %276 = vmatprep.subr.bf16.mxu0 0
  %277 = vmatpush2.bf16.msra.mxu0 0
  %278 = vmatprep.subr.bf16.mxu0 0
  %279 = vmatpush2.bf16.msra.mxu0 0
  %280 = vmatprep.subr.bf16.mxu0 0
  %281 = vmatpush2.bf16.msra.mxu0 0
  %282 = vmatprep.subr.bf16.mxu0 0
  %283 = vmatpush2.bf16.msra.mxu0 0
  %284 = vmatprep.subr.bf16.mxu0 0
  %285 = vmatpush2.bf16.msra.mxu0 0
  %286 = vmatprep.subr.bf16.mxu0 0
  %287 = vmatpush2.bf16.msra.mxu0 0
  %288 = vmatprep.subr.bf16.mxu0 0
  %289 = vmatpush2.bf16.msra.mxu0 0
  %290 = vmatprep.subr.bf16.mxu0 0
  %291 = vmatpush2.bf16.msra.mxu0 0
  %292 = vmatprep.mubr.bf16.mxu0 0
  %293 = vmatmul.mubr.bf16.gmra.mxu0 %v258
  %v294 = vpop.f32.mrf.mxu0
  %v295 = vadd.f32 0.0, %v294
  %v296 = vpop.f32.mrf.mxu0
  %v297 = vpop.f32.mrf.mxu0
  %v298 = vpop.f32.mrf.mxu0
  %299 = vdwg.mxu0
  %v300 = vadd.f32 %v248, %v295
  %v301 = vld [vmem:[%s10] sm:$0x1]
  %v303 = vlaneseq
  %v304 = vshrl.u32 %v303, 7
  %v305 = vsub.s32 0, %v304
  %v306 = vrot.slane %v301, %v305
  %v308 = vmul.f32 %v300, %v306
  %v309 = vld [vmem:[%s11] sm:$0x1]
  %v311 = vlaneseq
  %v312 = vshrl.u32 %v311, 7
  %v313 = vsub.s32 0, %v312
  %v314 = vrot.slane %v309, %v313
  %v316 = vadd.f32 %v308, %v314
  %v317 = vmax.f32 %v316, 0.0
  %318 = vst.msk [vmem:[%s12] sm:$0xff] %vm58, %v317
  // Predicated region
  $region50: #{deeplab_bottleneck_forward.25} parent=0 // pred_check
    _
  $region51: #{deeplab_bottleneck_forward.25} parent=0 // pred_check_branch
    %320 = sbr.rel (0) target = $region53
  $region52: #{deeplab_bottleneck_forward.25} parent=0 // pred_region
    _
  $region53: #{deeplab_bottleneck_forward.25} parent=0 // pred_fallthru
    _
  // Predicated region
  $region54: #{deeplab_bottleneck_forward.25} parent=0 // pred_check
    _
  $region55: #{deeplab_bottleneck_forward.25} parent=0 // pred_check_branch
    %322 = sbr.rel (0) target = $region57
  $region56: #{deeplab_bottleneck_forward.25} parent=0 // pred_region
    _
  $region57: #{deeplab_bottleneck_forward.25} parent=0 // pred_fallthru
    _

// kernel: deeplab_bottleneck_forward.27
$region0: #{deeplab_bottleneck_forward.27}
  #allocation0 [shape = 'u32[]', space=smem, size = 0x4, offset = 0x4, fixed_abs, tag = 'smem constant byte address 0x4 - core index']
  #allocation1 [shape = 'u32[144,128]{1,0:T(1,128)}', space=vmem, size = 0x12000, scoped, tag = 'internal scratch']
  %s0 = inlined_call_operand.vmem [shape: f32[2,8,64], index: 0, kind: input, shape index: {}]
  %s1 = inlined_call_operand.vmem [shape: f32[8,8], index: 1, kind: input, shape index: {}]
  %s2 = inlined_call_operand.vmem [shape: f32[64,256], index: 2, kind: input, shape index: {}]
  %s3 = inlined_call_operand.vmem [shape: f32[2,8,256], index: 3, kind: output, shape index: {}]
  %s4 = sld [smem:[#allocation0]]
  $region22: #{deeplab_bottleneck_forward.27} parent=0
    _
  %s6 = ssub.s32 1, %s4
  %s7 = scalar_select 0, %s6, %s4
  // Predicated region
  $region2: #{deeplab_bottleneck_forward.27} parent=0 // pred_check
    _
  $region3: #{deeplab_bottleneck_forward.27} parent=0 // pred_check_branch
    %9 = sbr.rel (0) target = $region5
  $region4: #{deeplab_bottleneck_forward.27} parent=0 // pred_region
    _
  $region5: #{deeplab_bottleneck_forward.27} parent=0 // pred_fallthru
    _
  // Predicated region
  $region6: #{deeplab_bottleneck_forward.27} parent=0 // pred_check
    _
  $region7: #{deeplab_bottleneck_forward.27} parent=0 // pred_check_branch
    %11 = sbr.rel (0) target = $region9
  $region8: #{deeplab_bottleneck_forward.27} parent=0 // pred_region
    _
  $region9: #{deeplab_bottleneck_forward.27} parent=0 // pred_fallthru
    _
  // Predicated region
  $region10: #{deeplab_bottleneck_forward.27} parent=0 // pred_check
    _
  $region11: #{deeplab_bottleneck_forward.27} parent=0 // pred_check_branch
    %13 = sbr.rel (0) target = $region13
  $region12: #{deeplab_bottleneck_forward.27} parent=0 // pred_region
    _
  $region13: #{deeplab_bottleneck_forward.27} parent=0 // pred_fallthru
    _
  %v14 = vld [vmem:[%s1] sm:$0xff]
  %v15 = vld [vmem:[%s2] sm:$0xff]
  %v16 = vld [vmem:[%s2 + $0x8] sm:$0xff]
  %v17 = vld [vmem:[%s2 + $0x10] sm:$0xff]
  %v18 = vld [vmem:[%s2 + $0x18] sm:$0xff]
  %v19 = vld [vmem:[%s2 + $0x20] sm:$0xff]
  %v20 = vld [vmem:[%s2 + $0x28] sm:$0xff]
  %v21 = vld [vmem:[%s2 + $0x30] sm:$0xff]
  %v22 = vld [vmem:[%s2 + $0x38] sm:$0xff]
  %v23 = vld [vmem:[%s2 + $0x40] sm:$0xff]
  %v24 = vld [vmem:[%s2 + $0x48] sm:$0xff]
  %v25 = vld [vmem:[%s2 + $0x50] sm:$0xff]
  %v26 = vld [vmem:[%s2 + $0x58] sm:$0xff]
  %v27 = vld [vmem:[%s2 + $0x60] sm:$0xff]
  %v28 = vld [vmem:[%s2 + $0x68] sm:$0xff]
  %v29 = vld [vmem:[%s2 + $0x70] sm:$0xff]
  %v30 = vld [vmem:[%s2 + $0x78] sm:$0xff]
  %v31 = vld [vmem:[%s0] sm:$0xff]
  %vm32 = vcmask 64512
  %v34 = vsel %vm32, %v14, 0
  %36 = vmatprep.subr.mxu0 0.0
  %37 = vmatpush1.msra.mxu0 0.0
  %38 = vmatprep.subr.mxu0 0.0
  %39 = vmatpush1.msra.mxu0 0.0
  %40 = vmatprep.subr.mxu0 0.0
  %41 = vmatpush1.msra.mxu0 0.0
  %42 = vmatprep.subr.mxu0 0.0
  %43 = vmatpush1.msra.mxu0 0.0
  %44 = vmatprep.subr.mxu0 0.0
  %45 = vmatpush1.msra.mxu0 0.0
  %46 = vmatprep.subr.mxu0 0.0
  %47 = vmatpush1.msra.mxu0 0.0
  %48 = vmatprep.subr.mxu0 0.0
  %49 = vmatpush1.msra.mxu0 0.0
  %50 = vmatprep.subr.mxu0 0.0
  %51 = vmatpush1.msra.mxu0 0.0
  %52 = vmatprep.subr.mxu0 0.0
  %53 = vmatpush1.msra.mxu0 0.0
  %54 = vmatprep.subr.mxu0 0.0
  %55 = vmatpush1.msra.mxu0 0.0
  %56 = vmatprep.subr.mxu0 0.0
  %57 = vmatpush1.msra.mxu0 0.0
  %58 = vmatprep.subr.mxu0 0.0
  %59 = vmatpush1.msra.mxu0 0.0
  %60 = vmatprep.subr.mxu0 0.0
  %61 = vmatpush1.msra.mxu0 0.0
  %62 = vmatprep.subr.mxu0 0.0
  %63 = vmatpush1.msra.mxu0 0.0
  %64 = vmatprep.subr.mxu0 0.0
  %65 = vmatpush1.msra.mxu0 0.0
  %66 = vmatprep.subr.mxu0 0.0
  %67 = vmatpush1.msra.mxu0 %v31
  %68 = vmatprep.subr.mxu0 0.0
  %69 = vmatpush2.msra.mxu0 0.0
  %70 = vmatprep.subr.mxu0 0.0
  %71 = vmatpush2.msra.mxu0 0.0
  %72 = vmatprep.subr.mxu0 0.0
  %73 = vmatpush2.msra.mxu0 0.0
  %74 = vmatprep.subr.mxu0 0.0
  %75 = vmatpush2.msra.mxu0 0.0
  %76 = vmatprep.subr.mxu0 0.0
  %77 = vmatpush2.msra.mxu0 0.0
  %78 = vmatprep.subr.mxu0 0.0
  %79 = vmatpush2.msra.mxu0 0.0
  %80 = vmatprep.subr.mxu0 0.0
  %81 = vmatpush2.msra.mxu0 0.0
  %82 = vmatprep.subr.mxu0 0.0
  %83 = vmatpush2.msra.mxu0 0.0
  %84 = vmatprep.subr.mxu0 0.0
  %85 = vmatpush2.msra.mxu0 0.0
  %86 = vmatprep.subr.mxu0 0.0
  %87 = vmatpush2.msra.mxu0 0.0
  %88 = vmatprep.subr.mxu0 0.0
  %89 = vmatpush2.msra.mxu0 0.0
  %90 = vmatprep.subr.mxu0 0.0
  %91 = vmatpush2.msra.mxu0 0.0
  %92 = vmatprep.subr.mxu0 0.0
  %93 = vmatpush2.msra.mxu0 0.0
  %94 = vmatprep.subr.mxu0 0.0
  %95 = vmatpush2.msra.mxu0 0.0
  %96 = vmatprep.subr.mxu0 0.0
  %97 = vmatpush2.msra.mxu0 0.0
  %98 = vmatprep.subr.mxu0 0.0
  %99 = vmatpush2.msra.mxu0 0.0
  %100 = vmatprep.mubr.f32.mxu0 0.0
  %101 = vmatmul.mubr.f32.gmra.mxu0 %v34
  %v102 = vpop.f32.mrf.mxu0
  %v103 = vadd.f32 0.0, %v102
  %v104 = vpop.f32.mrf.mxu0
  %105 = vdwg.mxu0
  %vm106 = vcmask 523264
  %v108 = vsel %vm106, %v103, 0
  %110 = vmatprep.subr.mxu0 0.0
  %111 = vmatpush1.msra.mxu0 0.0
  %112 = vmatprep.subr.mxu0 0.0
  %113 = vmatpush1.msra.mxu0 0.0
  %114 = vmatprep.subr.mxu0 0.0
  %115 = vmatpush1.msra.mxu0 0.0
  %116 = vmatprep.subr.mxu0 0.0
  %117 = vmatpush1.msra.mxu0 0.0
  %118 = vmatprep.subr.mxu0 0.0
  %119 = vmatpush1.msra.mxu0 0.0
  %120 = vmatprep.subr.mxu0 0.0
  %121 = vmatpush1.msra.mxu0 0.0
  %122 = vmatprep.subr.mxu0 0.0
  %123 = vmatpush1.msra.mxu0 0.0
  %124 = vmatprep.subr.mxu0 0.0
  %125 = vmatpush1.msra.mxu0 0.0
  %126 = vmatprep.subr.mxu0 %v30
  %127 = vmatpush1.msra.mxu0 %v29
  %128 = vmatprep.subr.mxu0 %v28
  %129 = vmatpush1.msra.mxu0 %v27
  %130 = vmatprep.subr.mxu0 %v26
  %131 = vmatpush1.msra.mxu0 %v25
  %132 = vmatprep.subr.mxu0 %v24
  %133 = vmatpush1.msra.mxu0 %v23
  %134 = vmatprep.subr.mxu0 %v22
  %135 = vmatpush1.msra.mxu0 %v21
  %136 = vmatprep.subr.mxu0 %v20
  %137 = vmatpush1.msra.mxu0 %v19
  %138 = vmatprep.subr.mxu0 %v18
  %139 = vmatpush1.msra.mxu0 %v17
  %140 = vmatprep.subr.mxu0 %v16
  %141 = vmatpush1.msra.mxu0 %v15
  %142 = vmatprep.subr.mxu0 0.0
  %143 = vmatpush2.msra.mxu0 0.0
  %144 = vmatprep.subr.mxu0 0.0
  %145 = vmatpush2.msra.mxu0 0.0
  %146 = vmatprep.subr.mxu0 0.0
  %147 = vmatpush2.msra.mxu0 0.0
  %148 = vmatprep.subr.mxu0 0.0
  %149 = vmatpush2.msra.mxu0 0.0
  %150 = vmatprep.subr.mxu0 0.0
  %151 = vmatpush2.msra.mxu0 0.0
  %152 = vmatprep.subr.mxu0 0.0
  %153 = vmatpush2.msra.mxu0 0.0
  %154 = vmatprep.subr.mxu0 0.0
  %155 = vmatpush2.msra.mxu0 0.0
  %156 = vmatprep.subr.mxu0 0.0
  %157 = vmatpush2.msra.mxu0 0.0
  %158 = vmatprep.subr.mxu0 0.0
  %159 = vmatpush2.msra.mxu0 0.0
  %160 = vmatprep.subr.mxu0 0.0
  %161 = vmatpush2.msra.mxu0 0.0
  %162 = vmatprep.subr.mxu0 0.0
  %163 = vmatpush2.msra.mxu0 0.0
  %164 = vmatprep.subr.mxu0 0.0
  %165 = vmatpush2.msra.mxu0 0.0
  %166 = vmatprep.subr.mxu0 0.0
  %167 = vmatpush2.msra.mxu0 0.0
  %168 = vmatprep.subr.mxu0 0.0
  %169 = vmatpush2.msra.mxu0 0.0
  %170 = vmatprep.subr.mxu0 0.0
  %171 = vmatpush2.msra.mxu0 0.0
  %172 = vmatprep.subr.mxu0 0.0
  %173 = vmatpush2.msra.mxu0 0.0
  %174 = vmatprep.mubr.f32.mxu0 0.0
  %175 = vmatmul.mubr.f32.gmra.mxu0 %v108
  %v176 = vpop.f32.mrf.mxu0
  %v177 = vadd.f32 0.0, %v176
  %v178 = vpop.f32.mrf.mxu0
  %v179 = vadd.f32 0.0, %v178
  %180 = vdwg.mxu0
  %181 = vst [vmem:[%s3] sm:$0xff] %v177
  %182 = vst [vmem:[%s3 + $0x8] sm:$0xff] %v179
  %s183 = scalar_lea.vmem %s0, 8
  %v184 = vld [vmem:[%s183] sm:$0xff]
  %185 = vmatprep.subr.mxu0 0.0
  %186 = vmatpush1.msra.mxu0 0.0
  %187 = vmatprep.subr.mxu0 0.0
  %188 = vmatpush1.msra.mxu0 0.0
  %189 = vmatprep.subr.mxu0 0.0
  %190 = vmatpush1.msra.mxu0 0.0
  %191 = vmatprep.subr.mxu0 0.0
  %192 = vmatpush1.msra.mxu0 0.0
  %193 = vmatprep.subr.mxu0 0.0
  %194 = vmatpush1.msra.mxu0 0.0
  %195 = vmatprep.subr.mxu0 0.0
  %196 = vmatpush1.msra.mxu0 0.0
  %197 = vmatprep.subr.mxu0 0.0
  %198 = vmatpush1.msra.mxu0 0.0
  %199 = vmatprep.subr.mxu0 0.0
  %200 = vmatpush1.msra.mxu0 0.0
  %201 = vmatprep.subr.mxu0 0.0
  %202 = vmatpush1.msra.mxu0 0.0
  %203 = vmatprep.subr.mxu0 0.0
  %204 = vmatpush1.msra.mxu0 0.0
  %205 = vmatprep.subr.mxu0 0.0
  %206 = vmatpush1.msra.mxu0 0.0
  %207 = vmatprep.subr.mxu0 0.0
  %208 = vmatpush1.msra.mxu0 0.0
  %209 = vmatprep.subr.mxu0 0.0
  %210 = vmatpush1.msra.mxu0 0.0
  %211 = vmatprep.subr.mxu0 0.0
  %212 = vmatpush1.msra.mxu0 0.0
  %213 = vmatprep.subr.mxu0 0.0
  %214 = vmatpush1.msra.mxu0 0.0
  %215 = vmatprep.subr.mxu0 0.0
  %216 = vmatpush1.msra.mxu0 %v184
  %217 = vmatprep.subr.mxu0 0.0
  %218 = vmatpush2.msra.mxu0 0.0
  %219 = vmatprep.subr.mxu0 0.0
  %220 = vmatpush2.msra.mxu0 0.0
  %221 = vmatprep.subr.mxu0 0.0
  %222 = vmatpush2.msra.mxu0 0.0
  %223 = vmatprep.subr.mxu0 0.0
  %224 = vmatpush2.msra.mxu0 0.0
  %225 = vmatprep.subr.mxu0 0.0
  %226 = vmatpush2.msra.mxu0 0.0
  %227 = vmatprep.subr.mxu0 0.0
  %228 = vmatpush2.msra.mxu0 0.0
  %229 = vmatprep.subr.mxu0 0.0
  %230 = vmatpush2.msra.mxu0 0.0
  %231 = vmatprep.subr.mxu0 0.0
  %232 = vmatpush2.msra.mxu0 0.0
  %233 = vmatprep.subr.mxu0 0.0
  %234 = vmatpush2.msra.mxu0 0.0
  %235 = vmatprep.subr.mxu0 0.0
  %236 = vmatpush2.msra.mxu0 0.0
  %237 = vmatprep.subr.mxu0 0.0
  %238 = vmatpush2.msra.mxu0 0.0
  %239 = vmatprep.subr.mxu0 0.0
  %240 = vmatpush2.msra.mxu0 0.0
  %241 = vmatprep.subr.mxu0 0.0
  %242 = vmatpush2.msra.mxu0 0.0
  %243 = vmatprep.subr.mxu0 0.0
  %244 = vmatpush2.msra.mxu0 0.0
  %245 = vmatprep.subr.mxu0 0.0
  %246 = vmatpush2.msra.mxu0 0.0
  %247 = vmatprep.subr.mxu0 0.0
  %248 = vmatpush2.msra.mxu0 0.0
  %249 = vmatprep.mubr.f32.mxu0 0.0
  %250 = vmatmul.mubr.f32.gmra.mxu0 %v34
  %v251 = vpop.f32.mrf.mxu0
  %v252 = vadd.f32 0.0, %v251
  %v253 = vpop.f32.mrf.mxu0
  %254 = vdwg.mxu0
  %v256 = vsel %vm106, %v252, 0
  %258 = vmatprep.subr.mxu0 0.0
  %259 = vmatpush1.msra.mxu0 0.0
  %260 = vmatprep.subr.mxu0 0.0
  %261 = vmatpush1.msra.mxu0 0.0
  %262 = vmatprep.subr.mxu0 0.0
  %263 = vmatpush1.msra.mxu0 0.0
  %264 = vmatprep.subr.mxu0 0.0
  %265 = vmatpush1.msra.mxu0 0.0
  %266 = vmatprep.subr.mxu0 0.0
  %267 = vmatpush1.msra.mxu0 0.0
  %268 = vmatprep.subr.mxu0 0.0
  %269 = vmatpush1.msra.mxu0 0.0
  %270 = vmatprep.subr.mxu0 0.0
  %271 = vmatpush1.msra.mxu0 0.0
  %272 = vmatprep.subr.mxu0 0.0
  %273 = vmatpush1.msra.mxu0 0.0
  %274 = vmatprep.subr.mxu0 %v30
  %275 = vmatpush1.msra.mxu0 %v29
  %276 = vmatprep.subr.mxu0 %v28
  %277 = vmatpush1.msra.mxu0 %v27
  %278 = vmatprep.subr.mxu0 %v26
  %279 = vmatpush1.msra.mxu0 %v25
  %280 = vmatprep.subr.mxu0 %v24
  %281 = vmatpush1.msra.mxu0 %v23
  %282 = vmatprep.subr.mxu0 %v22
  %283 = vmatpush1.msra.mxu0 %v21
  %284 = vmatprep.subr.mxu0 %v20
  %285 = vmatpush1.msra.mxu0 %v19
  %286 = vmatprep.subr.mxu0 %v18
  %287 = vmatpush1.msra.mxu0 %v17
  %288 = vmatprep.subr.mxu0 %v16
  %289 = vmatpush1.msra.mxu0 %v15
  %290 = vmatprep.subr.mxu0 0.0
  %291 = vmatpush2.msra.mxu0 0.0
  %292 = vmatprep.subr.mxu0 0.0
  %293 = vmatpush2.msra.mxu0 0.0
  %294 = vmatprep.subr.mxu0 0.0
  %295 = vmatpush2.msra.mxu0 0.0
  %296 = vmatprep.subr.mxu0 0.0
  %297 = vmatpush2.msra.mxu0 0.0
  %298 = vmatprep.subr.mxu0 0.0
  %299 = vmatpush2.msra.mxu0 0.0
  %300 = vmatprep.subr.mxu0 0.0
  %301 = vmatpush2.msra.mxu0 0.0
  %302 = vmatprep.subr.mxu0 0.0
  %303 = vmatpush2.msra.mxu0 0.0
  %304 = vmatprep.subr.mxu0 0.0
  %305 = vmatpush2.msra.mxu0 0.0
  %306 = vmatprep.subr.mxu0 0.0
  %307 = vmatpush2.msra.mxu0 0.0
  %308 = vmatprep.subr.mxu0 0.0
  %309 = vmatpush2.msra.mxu0 0.0
  %310 = vmatprep.subr.mxu0 0.0
  %311 = vmatpush2.msra.mxu0 0.0
  %312 = vmatprep.subr.mxu0 0.0
  %313 = vmatpush2.msra.mxu0 0.0
  %314 = vmatprep.subr.mxu0 0.0
  %315 = vmatpush2.msra.mxu0 0.0
  %316 = vmatprep.subr.mxu0 0.0
  %317 = vmatpush2.msra.mxu0 0.0
  %318 = vmatprep.subr.mxu0 0.0
  %319 = vmatpush2.msra.mxu0 0.0
  %320 = vmatprep.subr.mxu0 0.0
  %321 = vmatpush2.msra.mxu0 0.0
  %322 = vmatprep.mubr.f32.mxu0 0.0
  %323 = vmatmul.mubr.f32.gmra.mxu0 %v256
  %v324 = vpop.f32.mrf.mxu0
  %v325 = vadd.f32 0.0, %v324
  %v326 = vpop.f32.mrf.mxu0
  %v327 = vadd.f32 0.0, %v326
  %328 = vdwg.mxu0
  %s329 = scalar_lea.vmem %s3, 16
  %330 = vst [vmem:[%s329] sm:$0xff] %v325
  %331 = vst [vmem:[%s329 + $0x8] sm:$0xff] %v327
  // Predicated region
  $region14: #{deeplab_bottleneck_forward.27} parent=0 // pred_check
    _
  $region15: #{deeplab_bottleneck_forward.27} parent=0 // pred_check_branch
    %333 = sbr.rel (0) target = $region17
  $region16: #{deeplab_bottleneck_forward.27} parent=0 // pred_region
    _
  $region17: #{deeplab_bottleneck_forward.27} parent=0 // pred_fallthru
    _
  // Predicated region
  $region18: #{deeplab_bottleneck_forward.27} parent=0 // pred_check
    _
  $region19: #{deeplab_bottleneck_forward.27} parent=0 // pred_check_branch
    %335 = sbr.rel (0) target = $region21
  $region20: #{deeplab_bottleneck_forward.27} parent=0 // pred_region
    _
  $region21: #{deeplab_bottleneck_forward.27} parent=0 // pred_fallthru
    _

// kernel: deeplab_bottleneck_forward.29
$region0: #{deeplab_bottleneck_forward.29}
  #allocation0 [shape = 'u32[]', space=smem, size = 0x4, offset = 0x4, fixed_abs, tag = 'smem constant byte address 0x4 - core index']
  #allocation1 [shape = 'u32[144,128]{1,0:T(1,128)}', space=vmem, size = 0x12000, scoped, tag = 'internal scratch']
  #allocation2 [shape = 'f32[128,32]{1,0:T(8,128)}', space=vmem, size = 0x10000, scoped, tag = 'scratch operand']
  %s0 = inlined_call_operand.vmem [shape: f32[128,288], index: 0, kind: input, shape index: {}]
  %s1 = inlined_call_operand.vmem [shape: f32[288,32], index: 1, kind: input, shape index: {}]
  %s2 = inlined_call_operand.vmem [shape: f32[1,32], index: 2, kind: input, shape index: {}]
  %s3 = inlined_call_operand.vmem [shape: f32[1,32], index: 3, kind: input, shape index: {}]
  %s4 = inlined_call_operand.vmem [shape: f32[128,32], index: 4, kind: output, shape index: {}]
  %s5 = sld [smem:[#allocation0]]
  $region34: #{deeplab_bottleneck_forward.29} parent=0
    _
  %s7 = ssub.s32 1, %s5
  %s8 = scalar_select 0, %s7, %s5
  // Predicated region
  $region2: #{deeplab_bottleneck_forward.29} parent=0 // pred_check
    _
  $region3: #{deeplab_bottleneck_forward.29} parent=0 // pred_check_branch
    %10 = sbr.rel (0) target = $region5
  $region4: #{deeplab_bottleneck_forward.29} parent=0 // pred_region
    _
  $region5: #{deeplab_bottleneck_forward.29} parent=0 // pred_fallthru
    _
  // Predicated region
  $region6: #{deeplab_bottleneck_forward.29} parent=0 // pred_check
    _
  $region7: #{deeplab_bottleneck_forward.29} parent=0 // pred_check_branch
    %12 = sbr.rel (0) target = $region9
  $region8: #{deeplab_bottleneck_forward.29} parent=0 // pred_region
    _
  $region9: #{deeplab_bottleneck_forward.29} parent=0 // pred_fallthru
    _
  // Predicated region
  $region10: #{deeplab_bottleneck_forward.29} parent=0 // pred_check
    _
  $region11: #{deeplab_bottleneck_forward.29} parent=0 // pred_check_branch
    %14 = sbr.rel (0) target = $region13
  $region12: #{deeplab_bottleneck_forward.29} parent=0 // pred_region
    _
  $region13: #{deeplab_bottleneck_forward.29} parent=0 // pred_fallthru
    _
  // Predicated region
  $region14: #{deeplab_bottleneck_forward.29} parent=0 // pred_check
    _
  $region15: #{deeplab_bottleneck_forward.29} parent=0 // pred_check_branch
    %16 = sbr.rel (0) target = $region17
  $region16: #{deeplab_bottleneck_forward.29} parent=0 // pred_region
    _
  $region17: #{deeplab_bottleneck_forward.29} parent=0 // pred_fallthru
    _
  %p18 = scmp.eq.s32.totalorder 0, 0
  // Predicated region
  $region18: #{deeplab_bottleneck_forward.29} parent=0 // pred_check
    %p19 = pneg %p18
  $region19: #{deeplab_bottleneck_forward.29} parent=0 // pred_check_branch
    %21 = sbr.rel (%p19) target = $region21
  $region20: #{deeplab_bottleneck_forward.29} parent=0 // pred_region
    %vm22 = vcmask 261120
    %23 = vst.msk [vmem:[#allocation2] sm:$0xff] %vm22, 0.0
    %24 = vst.msk [vmem:[#allocation2 + $0x8] sm:$0xff] %vm22, 0.0
    %25 = vst.msk [vmem:[#allocation2 + $0x10] sm:$0xff] %vm22, 0.0
    %26 = vst.msk [vmem:[#allocation2 + $0x18] sm:$0xff] %vm22, 0.0
    %27 = vst.msk [vmem:[#allocation2 + $0x20] sm:$0xff] %vm22, 0.0
    %28 = vst.msk [vmem:[#allocation2 + $0x28] sm:$0xff] %vm22, 0.0
    %29 = vst.msk [vmem:[#allocation2 + $0x30] sm:$0xff] %vm22, 0.0
    %30 = vst.msk [vmem:[#allocation2 + $0x38] sm:$0xff] %vm22, 0.0
    %31 = vst.msk [vmem:[#allocation2 + $0x40] sm:$0xff] %vm22, 0.0
    %32 = vst.msk [vmem:[#allocation2 + $0x48] sm:$0xff] %vm22, 0.0
    %33 = vst.msk [vmem:[#allocation2 + $0x50] sm:$0xff] %vm22, 0.0
    %34 = vst.msk [vmem:[#allocation2 + $0x58] sm:$0xff] %vm22, 0.0
    %35 = vst.msk [vmem:[#allocation2 + $0x60] sm:$0xff] %vm22, 0.0
    %36 = vst.msk [vmem:[#allocation2 + $0x68] sm:$0xff] %vm22, 0.0
    %37 = vst.msk [vmem:[#allocation2 + $0x70] sm:$0xff] %vm22, 0.0
    %38 = vst.msk [vmem:[#allocation2 + $0x78] sm:$0xff] %vm22, 0.0
  $region21: #{deeplab_bottleneck_forward.29} parent=0 // pred_fallthru
    _
  %v39 = vld [vmem:[#allocation2] sm:$0xff]
  %v40 = vld [vmem:[#allocation2 + $0x8] sm:$0xff]
  %v41 = vld [vmem:[#allocation2 + $0x10] sm:$0xff]
  %v42 = vld [vmem:[#allocation2 + $0x18] sm:$0xff]
  %v43 = vld [vmem:[#allocation2 + $0x20] sm:$0xff]
  %v44 = vld [vmem:[#allocation2 + $0x28] sm:$0xff]
  %v45 = vld [vmem:[#allocation2 + $0x30] sm:$0xff]
  %v46 = vld [vmem:[#allocation2 + $0x38] sm:$0xff]
  %v47 = vld [vmem:[#allocation2 + $0x40] sm:$0xff]
  %v48 = vld [vmem:[#allocation2 + $0x48] sm:$0xff]
  %v49 = vld [vmem:[#allocation2 + $0x50] sm:$0xff]
  %v50 = vld [vmem:[#allocation2 + $0x58] sm:$0xff]
  %v51 = vld [vmem:[#allocation2 + $0x60] sm:$0xff]
  %v52 = vld [vmem:[#allocation2 + $0x68] sm:$0xff]
  %v53 = vld [vmem:[#allocation2 + $0x70] sm:$0xff]
  %v54 = vld [vmem:[#allocation2 + $0x78] sm:$0xff]
  %v55 = vld [vmem:[%s0] sm:$0xff]
  %v56 = vld [vmem:[%s0 + $0x8] sm:$0xff]
  %v57 = vld [vmem:[%s0 + $0x10] sm:$0xff]
  %v58 = vld [vmem:[%s0 + $0x18] sm:$0xff]
  %v59 = vld [vmem:[%s0 + $0x20] sm:$0xff]
  %v60 = vld [vmem:[%s0 + $0x28] sm:$0xff]
  %v61 = vld [vmem:[%s0 + $0x30] sm:$0xff]
  %v62 = vld [vmem:[%s0 + $0x38] sm:$0xff]
  %v63 = vld [vmem:[%s0 + $0x40] sm:$0xff]
  %v64 = vld [vmem:[%s0 + $0x48] sm:$0xff]
  %v65 = vld [vmem:[%s0 + $0x50] sm:$0xff]
  %v66 = vld [vmem:[%s0 + $0x58] sm:$0xff]
  %v67 = vld [vmem:[%s0 + $0x60] sm:$0xff]
  %v68 = vld [vmem:[%s0 + $0x68] sm:$0xff]
  %v69 = vld [vmem:[%s0 + $0x70] sm:$0xff]
  %v70 = vld [vmem:[%s0 + $0x78] sm:$0xff]
  %v71 = vld [vmem:[%s0 + $0x80] sm:$0xff]
  %v72 = vld [vmem:[%s0 + $0x88] sm:$0xff]
  %v73 = vld [vmem:[%s0 + $0x90] sm:$0xff]
  %v74 = vld [vmem:[%s0 + $0x98] sm:$0xff]
  %v75 = vld [vmem:[%s0 + $0xa0] sm:$0xff]
  %v76 = vld [vmem:[%s0 + $0xa8] sm:$0xff]
  %v77 = vld [vmem:[%s0 + $0xb0] sm:$0xff]
  %v78 = vld [vmem:[%s0 + $0xb8] sm:$0xff]
  %v79 = vld [vmem:[%s0 + $0xc0] sm:$0xff]
  %v80 = vld [vmem:[%s0 + $0xc8] sm:$0xff]
  %v81 = vld [vmem:[%s0 + $0xd0] sm:$0xff]
  %v82 = vld [vmem:[%s0 + $0xd8] sm:$0xff]
  %v83 = vld [vmem:[%s0 + $0xe0] sm:$0xff]
  %v84 = vld [vmem:[%s0 + $0xe8] sm:$0xff]
  %v85 = vld [vmem:[%s0 + $0xf0] sm:$0xff]
  %v86 = vld [vmem:[%s0 + $0xf8] sm:$0xff]
  %v87 = vld [vmem:[%s0 + $0x100] sm:$0xff]
  %v88 = vld [vmem:[%s0 + $0x108] sm:$0xff]
  %v89 = vld [vmem:[%s0 + $0x110] sm:$0xff]
  %v90 = vld [vmem:[%s0 + $0x118] sm:$0xff]
  %v91 = vld [vmem:[%s0 + $0x120] sm:$0xff]
  %v92 = vld [vmem:[%s0 + $0x128] sm:$0xff]
  %v93 = vld [vmem:[%s0 + $0x130] sm:$0xff]
  %v94 = vld [vmem:[%s0 + $0x138] sm:$0xff]
  %v95 = vld [vmem:[%s0 + $0x140] sm:$0xff]
  %v96 = vld [vmem:[%s0 + $0x148] sm:$0xff]
  %v97 = vld [vmem:[%s0 + $0x150] sm:$0xff]
  %v98 = vld [vmem:[%s0 + $0x158] sm:$0xff]
  %v99 = vld [vmem:[%s0 + $0x160] sm:$0xff]
  %v100 = vld [vmem:[%s0 + $0x168] sm:$0xff]
  %v101 = vld [vmem:[%s0 + $0x170] sm:$0xff]
  %v102 = vld [vmem:[%s0 + $0x178] sm:$0xff]
  %v103 = vpack.c.bf16 %v58, %v55
  %v104 = vpack.c.bf16 %v59, %v56
  %v105 = vpack.c.bf16 %v60, %v57
  %v106 = vpack.c.bf16 %v64, %v61
  %v107 = vpack.c.bf16 %v65, %v62
  %v108 = vpack.c.bf16 %v66, %v63
  %v109 = vpack.c.bf16 %v70, %v67
  %v110 = vpack.c.bf16 %v71, %v68
  %v111 = vpack.c.bf16 %v72, %v69
  %v112 = vpack.c.bf16 %v76, %v73
  %v113 = vpack.c.bf16 %v77, %v74
  %v114 = vpack.c.bf16 %v78, %v75
  %v115 = vpack.c.bf16 %v82, %v79
  %v116 = vpack.c.bf16 %v83, %v80
  %v117 = vpack.c.bf16 %v84, %v81
  %v118 = vpack.c.bf16 %v88, %v85
  %v119 = vpack.c.bf16 %v89, %v86
  %v120 = vpack.c.bf16 %v90, %v87
  %v121 = vpack.c.bf16 %v94, %v91
  %v122 = vpack.c.bf16 %v95, %v92
  %v123 = vpack.c.bf16 %v96, %v93
  %v124 = vpack.c.bf16 %v100, %v97
  %v125 = vpack.c.bf16 %v101, %v98
  %v126 = vpack.c.bf16 %v102, %v99
  %v127 = vld [vmem:[%s1] sm:$0xff]
  %v128 = vld [vmem:[%s1 + $0x8] sm:$0xff]
  %v129 = vld [vmem:[%s1 + $0x10] sm:$0xff]
  %v130 = vld [vmem:[%s1 + $0x18] sm:$0xff]
  %v131 = vld [vmem:[%s1 + $0x20] sm:$0xff]
  %v132 = vld [vmem:[%s1 + $0x28] sm:$0xff]
  %v133 = vld [vmem:[%s1 + $0x30] sm:$0xff]
  %v134 = vld [vmem:[%s1 + $0x38] sm:$0xff]
  %v135 = vld [vmem:[%s1 + $0x40] sm:$0xff]
  %v136 = vld [vmem:[%s1 + $0x48] sm:$0xff]
  %v137 = vld [vmem:[%s1 + $0x50] sm:$0xff]
  %v138 = vld [vmem:[%s1 + $0x58] sm:$0xff]
  %v139 = vld [vmem:[%s1 + $0x60] sm:$0xff]
  %v140 = vld [vmem:[%s1 + $0x68] sm:$0xff]
  %v141 = vld [vmem:[%s1 + $0x70] sm:$0xff]
  %v142 = vld [vmem:[%s1 + $0x78] sm:$0xff]
  %v143 = vld [vmem:[%s1 + $0x80] sm:$0xff]
  %v144 = vld [vmem:[%s1 + $0x88] sm:$0xff]
  %v145 = vld [vmem:[%s1 + $0x90] sm:$0xff]
  %v146 = vld [vmem:[%s1 + $0x98] sm:$0xff]
  %v147 = vld [vmem:[%s1 + $0xa0] sm:$0xff]
  %v148 = vld [vmem:[%s1 + $0xa8] sm:$0xff]
  %v149 = vld [vmem:[%s1 + $0xb0] sm:$0xff]
  %v150 = vld [vmem:[%s1 + $0xb8] sm:$0xff]
  %v151 = vld [vmem:[%s1 + $0xc0] sm:$0xff]
  %v152 = vld [vmem:[%s1 + $0xc8] sm:$0xff]
  %v153 = vld [vmem:[%s1 + $0xd0] sm:$0xff]
  %v154 = vld [vmem:[%s1 + $0xd8] sm:$0xff]
  %v155 = vld [vmem:[%s1 + $0xe0] sm:$0xff]
  %v156 = vld [vmem:[%s1 + $0xe8] sm:$0xff]
  %v157 = vld [vmem:[%s1 + $0xf0] sm:$0xff]
  %v158 = vld [vmem:[%s1 + $0xf8] sm:$0xff]
  %v159 = vld [vmem:[%s1 + $0x100] sm:$0xff]
  %v160 = vld [vmem:[%s1 + $0x108] sm:$0xff]
  %v161 = vld [vmem:[%s1 + $0x110] sm:$0xff]
  %v162 = vld [vmem:[%s1 + $0x118] sm:$0xff]
  %v163 = vpack.c.bf16 %v128, %v127
  %v164 = vpack.c.bf16 %v130, %v129
  %v165 = vpack.c.bf16 %v132, %v131
  %v166 = vpack.c.bf16 %v134, %v133
  %v167 = vpack.c.bf16 %v136, %v135
  %v168 = vpack.c.bf16 %v138, %v137
  %v169 = vpack.c.bf16 %v140, %v139
  %v170 = vpack.c.bf16 %v142, %v141
  %v171 = vpack.c.bf16 %v144, %v143
  %v172 = vpack.c.bf16 %v146, %v145
  %v173 = vpack.c.bf16 %v148, %v147
  %v174 = vpack.c.bf16 %v150, %v149
  %v175 = vpack.c.bf16 %v152, %v151
  %v176 = vpack.c.bf16 %v154, %v153
  %v177 = vpack.c.bf16 %v156, %v155
  %v178 = vpack.c.bf16 %v158, %v157
  %v179 = vpack.c.bf16 %v160, %v159
  %v180 = vpack.c.bf16 %v162, %v161
  %vm181 = vcmask 261120
  %v183 = vsel %vm181, %v105, 0
  %v186 = vsel %vm181, %v108, 0
  %v189 = vsel %vm181, %v111, 0
  %v192 = vsel %vm181, %v114, 0
  %v195 = vsel %vm181, %v117, 0
  %v198 = vsel %vm181, %v120, 0
  %v201 = vsel %vm181, %v123, 0
  %v204 = vsel %vm181, %v126, 0
  %206 = vmatprep.subr.bf16.mxu0 0
  %207 = vmatpush1.bf16.msra.mxu0 %v170
  %208 = vmatprep.subr.bf16.mxu0 0
  %209 = vmatpush1.bf16.msra.mxu0 %v169
  %210 = vmatprep.subr.bf16.mxu0 0
  %211 = vmatpush1.bf16.msra.mxu0 %v168
  %212 = vmatprep.subr.bf16.mxu0 0
  %213 = vmatpush1.bf16.msra.mxu0 %v167
  %214 = vmatprep.subr.bf16.mxu0 0
  %215 = vmatpush1.bf16.msra.mxu0 %v166
  %216 = vmatprep.subr.bf16.mxu0 0
  %217 = vmatpush1.bf16.msra.mxu0 %v165
  %218 = vmatprep.subr.bf16.mxu0 0
  %219 = vmatpush1.bf16.msra.mxu0 %v164
  %220 = vmatprep.subr.bf16.mxu0 0
  %221 = vmatpush1.bf16.msra.mxu0 %v163
  %222 = vmatprep.subr.bf16.mxu0 0
  %223 = vmatpush2.bf16.msra.mxu0 %v178
  %224 = vmatprep.subr.bf16.mxu0 0
  %225 = vmatpush2.bf16.msra.mxu0 %v177
  %226 = vmatprep.subr.bf16.mxu0 0
  %227 = vmatpush2.bf16.msra.mxu0 %v176
  %228 = vmatprep.subr.bf16.mxu0 0
  %229 = vmatpush2.bf16.msra.mxu0 %v175
  %230 = vmatprep.subr.bf16.mxu0 0
  %231 = vmatpush2.bf16.msra.mxu0 %v174
  %232 = vmatprep.subr.bf16.mxu0 0
  %233 = vmatpush2.bf16.msra.mxu0 %v173
  %234 = vmatprep.subr.bf16.mxu0 0
  %235 = vmatpush2.bf16.msra.mxu0 %v172
  %236 = vmatprep.subr.bf16.mxu0 0
  %237 = vmatpush2.bf16.msra.mxu0 %v171
  %238 = vmatprep.mubr.bf16.mxu0 %v104
  %239 = vmatmul.mubr.bf16.gmra.mxu0 %v103
  %v240 = vpop.f32.mrf.mxu0
  %v241 = vadd.f32 0.0, %v240
  %v242 = vpop.f32.mrf.mxu0
  %v243 = vpop.f32.mrf.mxu0
  %v244 = vadd.f32 0.0, %v243
  %v245 = vpop.f32.mrf.mxu0
  %246 = vmatprep.mubr.bf16.mxu0 %v107
  %247 = vmatmul.mubr.bf16.gmra.mxu0 %v106
  %v248 = vpop.f32.mrf.mxu0
  %v249 = vadd.f32 0.0, %v248
  %v250 = vpop.f32.mrf.mxu0
  %v251 = vpop.f32.mrf.mxu0
  %v252 = vadd.f32 0.0, %v251
  %v253 = vpop.f32.mrf.mxu0
  %254 = vmatprep.mubr.bf16.mxu0 %v110
  %255 = vmatmul.mubr.bf16.gmra.mxu0 %v109
  %v256 = vpop.f32.mrf.mxu0
  %v257 = vadd.f32 0.0, %v256
  %v258 = vpop.f32.mrf.mxu0
  %v259 = vpop.f32.mrf.mxu0
  %v260 = vadd.f32 0.0, %v259
  %v261 = vpop.f32.mrf.mxu0
  %262 = vmatprep.mubr.bf16.mxu0 %v113
  %263 = vmatmul.mubr.bf16.gmra.mxu0 %v112
  %v264 = vpop.f32.mrf.mxu0
  %v265 = vadd.f32 0.0, %v264
  %v266 = vpop.f32.mrf.mxu0
  %v267 = vpop.f32.mrf.mxu0
  %v268 = vadd.f32 0.0, %v267
  %v269 = vpop.f32.mrf.mxu0
  %270 = vmatprep.mubr.bf16.mxu0 %v116
  %271 = vmatmul.mubr.bf16.gmra.mxu0 %v115
  %v272 = vpop.f32.mrf.mxu0
  %v273 = vadd.f32 0.0, %v272
  %v274 = vpop.f32.mrf.mxu0
  %v275 = vpop.f32.mrf.mxu0
  %v276 = vadd.f32 0.0, %v275
  %v277 = vpop.f32.mrf.mxu0
  %278 = vmatprep.mubr.bf16.mxu0 %v119
  %279 = vmatmul.mubr.bf16.gmra.mxu0 %v118
  %v280 = vpop.f32.mrf.mxu0
  %v281 = vadd.f32 0.0, %v280
  %v282 = vpop.f32.mrf.mxu0
  %v283 = vpop.f32.mrf.mxu0
  %v284 = vadd.f32 0.0, %v283
  %v285 = vpop.f32.mrf.mxu0
  %286 = vmatprep.mubr.bf16.mxu0 %v122
  %287 = vmatmul.mubr.bf16.gmra.mxu0 %v121
  %v288 = vpop.f32.mrf.mxu0
  %v289 = vadd.f32 0.0, %v288
  %v290 = vpop.f32.mrf.mxu0
  %v291 = vpop.f32.mrf.mxu0
  %v292 = vadd.f32 0.0, %v291
  %v293 = vpop.f32.mrf.mxu0
  %294 = vmatprep.mubr.bf16.mxu0 %v125
  %295 = vmatmul.mubr.bf16.gmra.mxu0 %v124
  %v296 = vpop.f32.mrf.mxu0
  %v297 = vadd.f32 0.0, %v296
  %v298 = vpop.f32.mrf.mxu0
  %v299 = vpop.f32.mrf.mxu0
  %v300 = vadd.f32 0.0, %v299
  %v301 = vpop.f32.mrf.mxu0
  %302 = vdwg.mxu0
  %303 = vmatprep.subr.bf16.mxu0 0
  %304 = vmatpush1.bf16.msra.mxu0 0
  %305 = vmatprep.subr.bf16.mxu0 0
  %306 = vmatpush1.bf16.msra.mxu0 0
  %307 = vmatprep.subr.bf16.mxu0 0
  %308 = vmatpush1.bf16.msra.mxu0 0
  %309 = vmatprep.subr.bf16.mxu0 0
  %310 = vmatpush1.bf16.msra.mxu0 0
  %311 = vmatprep.subr.bf16.mxu0 0
  %312 = vmatpush1.bf16.msra.mxu0 0
  %313 = vmatprep.subr.bf16.mxu0 0
  %314 = vmatpush1.bf16.msra.mxu0 0
  %315 = vmatprep.subr.bf16.mxu0 0
  %316 = vmatpush1.bf16.msra.mxu0 %v180
  %317 = vmatprep.subr.bf16.mxu0 0
  %318 = vmatpush1.bf16.msra.mxu0 %v179
  %319 = vmatprep.subr.bf16.mxu0 0
  %320 = vmatpush2.bf16.msra.mxu0 0
  %321 = vmatprep.subr.bf16.mxu0 0
  %322 = vmatpush2.bf16.msra.mxu0 0
  %323 = vmatprep.subr.bf16.mxu0 0
  %324 = vmatpush2.bf16.msra.mxu0 0
  %325 = vmatprep.subr.bf16.mxu0 0
  %326 = vmatpush2.bf16.msra.mxu0 0
  %327 = vmatprep.subr.bf16.mxu0 0
  %328 = vmatpush2.bf16.msra.mxu0 0
  %329 = vmatprep.subr.bf16.mxu0 0
  %330 = vmatpush2.bf16.msra.mxu0 0
  %331 = vmatprep.subr.bf16.mxu0 0
  %332 = vmatpush2.bf16.msra.mxu0 0
  %333 = vmatprep.subr.bf16.mxu0 0
  %334 = vmatpush2.bf16.msra.mxu0 0
  %335 = vmatprep.mubr.bf16.mxu0 0
  %336 = vmatmul.mubr.bf16.gmra.mxu0 %v183
  %v337 = vpop.f32.mrf.mxu0
  %v338 = vadd.f32 %v241, %v337
  %v339 = vpop.f32.mrf.mxu0
  %v340 = vpop.f32.mrf.mxu0
  %v341 = vadd.f32 %v244, %v340
  %v342 = vpop.f32.mrf.mxu0
  %343 = vmatprep.mubr.bf16.mxu0 0
  %344 = vmatmul.mubr.bf16.gmra.mxu0 %v186
  %v345 = vpop.f32.mrf.mxu0
  %v346 = vadd.f32 %v249, %v345
  %v347 = vpop.f32.mrf.mxu0
  %v348 = vpop.f32.mrf.mxu0
  %v349 = vadd.f32 %v252, %v348
  %v350 = vpop.f32.mrf.mxu0
  %351 = vmatprep.mubr.bf16.mxu0 0
  %352 = vmatmul.mubr.bf16.gmra.mxu0 %v189
  %v353 = vpop.f32.mrf.mxu0
  %v354 = vadd.f32 %v257, %v353
  %v355 = vpop.f32.mrf.mxu0
  %v356 = vpop.f32.mrf.mxu0
  %v357 = vadd.f32 %v260, %v356
  %v358 = vpop.f32.mrf.mxu0
  %359 = vmatprep.mubr.bf16.mxu0 0
  %360 = vmatmul.mubr.bf16.gmra.mxu0 %v192
  %v361 = vpop.f32.mrf.mxu0
  %v362 = vadd.f32 %v265, %v361
  %v363 = vpop.f32.mrf.mxu0
  %v364 = vpop.f32.mrf.mxu0
  %v365 = vadd.f32 %v268, %v364
  %v366 = vpop.f32.mrf.mxu0
  %367 = vmatprep.mubr.bf16.mxu0 0
  %368 = vmatmul.mubr.bf16.gmra.mxu0 %v195
  %v369 = vpop.f32.mrf.mxu0
  %v370 = vadd.f32 %v273, %v369
  %v371 = vpop.f32.mrf.mxu0
  %v372 = vpop.f32.mrf.mxu0
  %v373 = vadd.f32 %v276, %v372
  %v374 = vpop.f32.mrf.mxu0
  %375 = vmatprep.mubr.bf16.mxu0 0
  %376 = vmatmul.mubr.bf16.gmra.mxu0 %v198
  %v377 = vpop.f32.mrf.mxu0
  %v378 = vadd.f32 %v281, %v377
  %v379 = vpop.f32.mrf.mxu0
  %v380 = vpop.f32.mrf.mxu0
  %v381 = vadd.f32 %v284, %v380
  %v382 = vpop.f32.mrf.mxu0
  %383 = vmatprep.mubr.bf16.mxu0 0
  %384 = vmatmul.mubr.bf16.gmra.mxu0 %v201
  %v385 = vpop.f32.mrf.mxu0
  %v386 = vadd.f32 %v289, %v385
  %v387 = vpop.f32.mrf.mxu0
  %v388 = vpop.f32.mrf.mxu0
  %v389 = vadd.f32 %v292, %v388
  %v390 = vpop.f32.mrf.mxu0
  %391 = vmatprep.mubr.bf16.mxu0 0
  %392 = vmatmul.mubr.bf16.gmra.mxu0 %v204
  %v393 = vpop.f32.mrf.mxu0
  %v394 = vadd.f32 %v297, %v393
  %v395 = vpop.f32.mrf.mxu0
  %v396 = vpop.f32.mrf.mxu0
  %v397 = vadd.f32 %v300, %v396
  %v398 = vpop.f32.mrf.mxu0
  %399 = vdwg.mxu0
  %v400 = vadd.f32 %v39, %v338
  %v401 = vadd.f32 %v40, %v341
  %v402 = vadd.f32 %v41, %v346
  %v403 = vadd.f32 %v42, %v349
  %v404 = vadd.f32 %v43, %v354
  %v405 = vadd.f32 %v44, %v357
  %v406 = vadd.f32 %v45, %v362
  %v407 = vadd.f32 %v46, %v365
  %v408 = vadd.f32 %v47, %v370
  %v409 = vadd.f32 %v48, %v373
  %v410 = vadd.f32 %v49, %v378
  %v411 = vadd.f32 %v50, %v381
  %v412 = vadd.f32 %v51, %v386
  %v413 = vadd.f32 %v52, %v389
  %v414 = vadd.f32 %v53, %v394
  %v415 = vadd.f32 %v54, %v397
  %416 = vst.msk [vmem:[#allocation2] sm:$0xff] %vm181, %v400
  %417 = vst.msk [vmem:[#allocation2 + $0x8] sm:$0xff] %vm181, %v401
  %418 = vst.msk [vmem:[#allocation2 + $0x10] sm:$0xff] %vm181, %v402
  %419 = vst.msk [vmem:[#allocation2 + $0x18] sm:$0xff] %vm181, %v403
  %420 = vst.msk [vmem:[#allocation2 + $0x20] sm:$0xff] %vm181, %v404
  %421 = vst.msk [vmem:[#allocation2 + $0x28] sm:$0xff] %vm181, %v405
  %422 = vst.msk [vmem:[#allocation2 + $0x30] sm:$0xff] %vm181, %v406
  %423 = vst.msk [vmem:[#allocation2 + $0x38] sm:$0xff] %vm181, %v407
  %424 = vst.msk [vmem:[#allocation2 + $0x40] sm:$0xff] %vm181, %v408
  %425 = vst.msk [vmem:[#allocation2 + $0x48] sm:$0xff] %vm181, %v409
  %426 = vst.msk [vmem:[#allocation2 + $0x50] sm:$0xff] %vm181, %v410
  %427 = vst.msk [vmem:[#allocation2 + $0x58] sm:$0xff] %vm181, %v411
  %428 = vst.msk [vmem:[#allocation2 + $0x60] sm:$0xff] %vm181, %v412
  %429 = vst.msk [vmem:[#allocation2 + $0x68] sm:$0xff] %vm181, %v413
  %430 = vst.msk [vmem:[#allocation2 + $0x70] sm:$0xff] %vm181, %v414
  %431 = vst.msk [vmem:[#allocation2 + $0x78] sm:$0xff] %vm181, %v415
  // Predicated region
  $region22: #{deeplab_bottleneck_forward.29} parent=0 // pred_check
    %p432 = pneg %p18
  $region23: #{deeplab_bottleneck_forward.29} parent=0 // pred_check_branch
    %434 = sbr.rel (%p432) target = $region25
  $region24: #{deeplab_bottleneck_forward.29} parent=0 // pred_region
    %v435 = vld [vmem:[#allocation2] sm:$0xff]
    %v436 = vld [vmem:[#allocation2 + $0x8] sm:$0xff]
    %v437 = vld [vmem:[#allocation2 + $0x10] sm:$0xff]
    %v438 = vld [vmem:[#allocation2 + $0x18] sm:$0xff]
    %v439 = vld [vmem:[#allocation2 + $0x20] sm:$0xff]
    %v440 = vld [vmem:[#allocation2 + $0x28] sm:$0xff]
    %v441 = vld [vmem:[#allocation2 + $0x30] sm:$0xff]
    %v442 = vld [vmem:[#allocation2 + $0x38] sm:$0xff]
    %v443 = vld [vmem:[#allocation2 + $0x40] sm:$0xff]
    %v444 = vld [vmem:[#allocation2 + $0x48] sm:$0xff]
    %v445 = vld [vmem:[#allocation2 + $0x50] sm:$0xff]
    %v446 = vld [vmem:[#allocation2 + $0x58] sm:$0xff]
    %v447 = vld [vmem:[#allocation2 + $0x60] sm:$0xff]
    %v448 = vld [vmem:[#allocation2 + $0x68] sm:$0xff]
    %v449 = vld [vmem:[#allocation2 + $0x70] sm:$0xff]
    %v450 = vld [vmem:[#allocation2 + $0x78] sm:$0xff]
    %v451 = vld [vmem:[%s2] sm:$0x1]
    %v453 = vlaneseq
    %v454 = vshrl.u32 %v453, 7
    %v455 = vsub.s32 0, %v454
    %v456 = vrot.slane %v451, %v455
    %v458 = vmul.f32 %v435, %v456
    %v459 = vmul.f32 %v436, %v456
    %v460 = vmul.f32 %v437, %v456
    %v461 = vmul.f32 %v438, %v456
    %v462 = vmul.f32 %v439, %v456
    %v463 = vmul.f32 %v440, %v456
    %v464 = vmul.f32 %v441, %v456
    %v465 = vmul.f32 %v442, %v456
    %v466 = vmul.f32 %v443, %v456
    %v467 = vmul.f32 %v444, %v456
    %v468 = vmul.f32 %v445, %v456
    %v469 = vmul.f32 %v446, %v456
    %v470 = vmul.f32 %v447, %v456
    %v471 = vmul.f32 %v448, %v456
    %v472 = vmul.f32 %v449, %v456
    %v473 = vmul.f32 %v450, %v456
    %v474 = vld [vmem:[%s3] sm:$0x1]
    %v476 = vlaneseq
    %v477 = vshrl.u32 %v476, 7
    %v478 = vsub.s32 0, %v477
    %v479 = vrot.slane %v474, %v478
    %v481 = vadd.f32 %v458, %v479
    %v482 = vadd.f32 %v459, %v479
    %v483 = vadd.f32 %v460, %v479
    %v484 = vadd.f32 %v461, %v479
    %v485 = vadd.f32 %v462, %v479
    %v486 = vadd.f32 %v463, %v479
    %v487 = vadd.f32 %v464, %v479
    %v488 = vadd.f32 %v465, %v479
    %v489 = vadd.f32 %v466, %v479
    %v490 = vadd.f32 %v467, %v479
    %v491 = vadd.f32 %v468, %v479
    %v492 = vadd.f32 %v469, %v479
    %v493 = vadd.f32 %v470, %v479
    %v494 = vadd.f32 %v471, %v479
    %v495 = vadd.f32 %v472, %v479
    %v496 = vadd.f32 %v473, %v479
    %v497 = vmax.f32 %v481, 0.0
    %v498 = vmax.f32 %v482, 0.0
    %v499 = vmax.f32 %v483, 0.0
    %v500 = vmax.f32 %v484, 0.0
    %v501 = vmax.f32 %v485, 0.0
    %v502 = vmax.f32 %v486, 0.0
    %v503 = vmax.f32 %v487, 0.0
    %v504 = vmax.f32 %v488, 0.0
    %v505 = vmax.f32 %v489, 0.0
    %v506 = vmax.f32 %v490, 0.0
    %v507 = vmax.f32 %v491, 0.0
    %v508 = vmax.f32 %v492, 0.0
    %v509 = vmax.f32 %v493, 0.0
    %v510 = vmax.f32 %v494, 0.0
    %v511 = vmax.f32 %v495, 0.0
    %v512 = vmax.f32 %v496, 0.0
    %513 = vst.msk [vmem:[%s4] sm:$0xff] %vm181, %v497
    %514 = vst.msk [vmem:[%s4 + $0x8] sm:$0xff] %vm181, %v498
    %515 = vst.msk [vmem:[%s4 + $0x10] sm:$0xff] %vm181, %v499
    %516 = vst.msk [vmem:[%s4 + $0x18] sm:$0xff] %vm181, %v500
    %517 = vst.msk [vmem:[%s4 + $0x20] sm:$0xff] %vm181, %v501
    %518 = vst.msk [vmem:[%s4 + $0x28] sm:$0xff] %vm181, %v502
    %519 = vst.msk [vmem:[%s4 + $0x30] sm:$0xff] %vm181, %v503
    %520 = vst.msk [vmem:[%s4 + $0x38] sm:$0xff] %vm181, %v504
    %521 = vst.msk [vmem:[%s4 + $0x40] sm:$0xff] %vm181, %v505
    %522 = vst.msk [vmem:[%s4 + $0x48] sm:$0xff] %vm181, %v506
    %523 = vst.msk [vmem:[%s4 + $0x50] sm:$0xff] %vm181, %v507
    %524 = vst.msk [vmem:[%s4 + $0x58] sm:$0xff] %vm181, %v508
    %525 = vst.msk [vmem:[%s4 + $0x60] sm:$0xff] %vm181, %v509
    %526 = vst.msk [vmem:[%s4 + $0x68] sm:$0xff] %vm181, %v510
    %527 = vst.msk [vmem:[%s4 + $0x70] sm:$0xff] %vm181, %v511
    %528 = vst.msk [vmem:[%s4 + $0x78] sm:$0xff] %vm181, %v512
  $region25: #{deeplab_bottleneck_forward.29} parent=0 // pred_fallthru
    _
  // Predicated region
  $region26: #{deeplab_bottleneck_forward.29} parent=0 // pred_check
    _
  $region27: #{deeplab_bottleneck_forward.29} parent=0 // pred_check_branch
    %530 = sbr.rel (0) target = $region29
  $region28: #{deeplab_bottleneck_forward.29} parent=0 // pred_region
    _
  $region29: #{deeplab_bottleneck_forward.29} parent=0 // pred_fallthru
    _
  // Predicated region
  $region30: #{deeplab_bottleneck_forward.29} parent=0 // pred_check
    _
  $region31: #{deeplab_bottleneck_forward.29} parent=0 // pred_check_branch
    %532 = sbr.rel (0) target = $region33
  $region32: #{deeplab_bottleneck_forward.29} parent=0 // pred_region
    _
  $region33: #{deeplab_bottleneck_forward.29} parent=0 // pred_fallthru
    _

// kernel: deeplab_bottleneck_forward.30
$region0: #{deeplab_bottleneck_forward.30}
  #allocation0 [shape = 'u32[]', space=smem, size = 0x4, offset = 0x4, fixed_abs, tag = 'smem constant byte address 0x4 - core index']
  #allocation1 [shape = 'u32[144,128]{1,0:T(1,128)}', space=vmem, size = 0x12000, scoped, tag = 'internal scratch']
  #allocation2 [shape = 'f32[128,1]{1,0:T(8,128)}', space=vmem, size = 0x10000, scoped, tag = 'scratch operand']
  #allocation3 [shape = 'f32[1,1]{1,0:T(1,128)S(1)}', space=vmem, size = 0x200, scoped, tag = 'scoped memory for deeplab_bottleneck_forward.30']
  #allocation4 [shape = 'f32[1,1]{1,0:T(1,128)S(1)}', space=vmem, size = 0x200, scoped, tag = 'scoped memory for deeplab_bottleneck_forward.30']
  %s0 = inlined_call_operand.vmem [shape: f32[128,32], index: 0, kind: input, shape index: {}]
  %s1 = inlined_call_operand.vmem [shape: f32[32,1], index: 1, kind: input, shape index: {}]
  %s2 = inlined_call_operand.<no memory space> [shape: f32[1,1], index: 2, kind: input, shape index: {}]
  %s3 = inlined_call_operand.<no memory space> [shape: f32[1,1], index: 3, kind: input, shape index: {}]
  %s4 = inlined_call_operand.vmem [shape: f32[128,1], index: 4, kind: output, shape index: {}]
  %s5 = sld [smem:[#allocation0]]
  $region34: #{deeplab_bottleneck_forward.30} parent=0
    _
  %s7 = ssub.s32 1, %s5
  %s8 = scalar_select 0, %s7, %s5
  %v9 = vstv %s2
  %10 = vst [vmem:[#allocation3] sm:$0x1] %v9
  %v11 = vstv %s3
  %12 = vst [vmem:[#allocation4] sm:$0x1] %v11
  // Predicated region
  $region2: #{deeplab_bottleneck_forward.30} parent=0 // pred_check
    _
  $region3: #{deeplab_bottleneck_forward.30} parent=0 // pred_check_branch
    %14 = sbr.rel (0) target = $region5
  $region4: #{deeplab_bottleneck_forward.30} parent=0 // pred_region
    _
  $region5: #{deeplab_bottleneck_forward.30} parent=0 // pred_fallthru
    _
  // Predicated region
  $region6: #{deeplab_bottleneck_forward.30} parent=0 // pred_check
    _
  $region7: #{deeplab_bottleneck_forward.30} parent=0 // pred_check_branch
    %16 = sbr.rel (0) target = $region9
  $region8: #{deeplab_bottleneck_forward.30} parent=0 // pred_region
    _
  $region9: #{deeplab_bottleneck_forward.30} parent=0 // pred_fallthru
    _
  // Predicated region
  $region10: #{deeplab_bottleneck_forward.30} parent=0 // pred_check
    _
  $region11: #{deeplab_bottleneck_forward.30} parent=0 // pred_check_branch
    %18 = sbr.rel (0) target = $region13
  $region12: #{deeplab_bottleneck_forward.30} parent=0 // pred_region
    _
  $region13: #{deeplab_bottleneck_forward.30} parent=0 // pred_fallthru
    _
  // Predicated region
  $region14: #{deeplab_bottleneck_forward.30} parent=0 // pred_check
    _
  $region15: #{deeplab_bottleneck_forward.30} parent=0 // pred_check_branch
    %20 = sbr.rel (0) target = $region17
  $region16: #{deeplab_bottleneck_forward.30} parent=0 // pred_region
    _
  $region17: #{deeplab_bottleneck_forward.30} parent=0 // pred_fallthru
    _
  %p22 = scmp.eq.s32.totalorder 0, 0
  // Predicated region
  $region18: #{deeplab_bottleneck_forward.30} parent=0 // pred_check
    %p23 = pneg %p22
  $region19: #{deeplab_bottleneck_forward.30} parent=0 // pred_check_branch
    %25 = sbr.rel (%p23) target = $region21
  $region20: #{deeplab_bottleneck_forward.30} parent=0 // pred_region
    %vm26 = vcmask 7168
    %27 = vst.msk [vmem:[#allocation2] sm:$0xff] %vm26, 0.0
    %28 = vst.msk [vmem:[#allocation2 + $0x8] sm:$0xff] %vm26, 0.0
    %29 = vst.msk [vmem:[#allocation2 + $0x10] sm:$0xff] %vm26, 0.0
    %30 = vst.msk [vmem:[#allocation2 + $0x18] sm:$0xff] %vm26, 0.0
    %31 = vst.msk [vmem:[#allocation2 + $0x20] sm:$0xff] %vm26, 0.0
    %32 = vst.msk [vmem:[#allocation2 + $0x28] sm:$0xff] %vm26, 0.0
    %33 = vst.msk [vmem:[#allocation2 + $0x30] sm:$0xff] %vm26, 0.0
    %34 = vst.msk [vmem:[#allocation2 + $0x38] sm:$0xff] %vm26, 0.0
    %35 = vst.msk [vmem:[#allocation2 + $0x40] sm:$0xff] %vm26, 0.0
    %36 = vst.msk [vmem:[#allocation2 + $0x48] sm:$0xff] %vm26, 0.0
    %37 = vst.msk [vmem:[#allocation2 + $0x50] sm:$0xff] %vm26, 0.0
    %38 = vst.msk [vmem:[#allocation2 + $0x58] sm:$0xff] %vm26, 0.0
    %39 = vst.msk [vmem:[#allocation2 + $0x60] sm:$0xff] %vm26, 0.0
    %40 = vst.msk [vmem:[#allocation2 + $0x68] sm:$0xff] %vm26, 0.0
    %41 = vst.msk [vmem:[#allocation2 + $0x70] sm:$0xff] %vm26, 0.0
    %42 = vst.msk [vmem:[#allocation2 + $0x78] sm:$0xff] %vm26, 0.0
  $region21: #{deeplab_bottleneck_forward.30} parent=0 // pred_fallthru
    _
  %v43 = vld [vmem:[#allocation2] sm:$0xff]
  %v44 = vld [vmem:[#allocation2 + $0x8] sm:$0xff]
  %v45 = vld [vmem:[#allocation2 + $0x10] sm:$0xff]
  %v46 = vld [vmem:[#allocation2 + $0x18] sm:$0xff]
  %v47 = vld [vmem:[#allocation2 + $0x20] sm:$0xff]
  %v48 = vld [vmem:[#allocation2 + $0x28] sm:$0xff]
  %v49 = vld [vmem:[#allocation2 + $0x30] sm:$0xff]
  %v50 = vld [vmem:[#allocation2 + $0x38] sm:$0xff]
  %v51 = vld [vmem:[#allocation2 + $0x40] sm:$0xff]
  %v52 = vld [vmem:[#allocation2 + $0x48] sm:$0xff]
  %v53 = vld [vmem:[#allocation2 + $0x50] sm:$0xff]
  %v54 = vld [vmem:[#allocation2 + $0x58] sm:$0xff]
  %v55 = vld [vmem:[#allocation2 + $0x60] sm:$0xff]
  %v56 = vld [vmem:[#allocation2 + $0x68] sm:$0xff]
  %v57 = vld [vmem:[#allocation2 + $0x70] sm:$0xff]
  %v58 = vld [vmem:[#allocation2 + $0x78] sm:$0xff]
  %v59 = vld [vmem:[%s0] sm:$0xff]
  %v60 = vld [vmem:[%s0 + $0x8] sm:$0xff]
  %v61 = vld [vmem:[%s0 + $0x10] sm:$0xff]
  %v62 = vld [vmem:[%s0 + $0x18] sm:$0xff]
  %v63 = vld [vmem:[%s0 + $0x20] sm:$0xff]
  %v64 = vld [vmem:[%s0 + $0x28] sm:$0xff]
  %v65 = vld [vmem:[%s0 + $0x30] sm:$0xff]
  %v66 = vld [vmem:[%s0 + $0x38] sm:$0xff]
  %v67 = vld [vmem:[%s0 + $0x40] sm:$0xff]
  %v68 = vld [vmem:[%s0 + $0x48] sm:$0xff]
  %v69 = vld [vmem:[%s0 + $0x50] sm:$0xff]
  %v70 = vld [vmem:[%s0 + $0x58] sm:$0xff]
  %v71 = vld [vmem:[%s0 + $0x60] sm:$0xff]
  %v72 = vld [vmem:[%s0 + $0x68] sm:$0xff]
  %v73 = vld [vmem:[%s0 + $0x70] sm:$0xff]
  %v74 = vld [vmem:[%s0 + $0x78] sm:$0xff]
  %v75 = vpack.c.bf16 %v60, %v59
  %v76 = vpack.c.bf16 %v62, %v61
  %v77 = vpack.c.bf16 %v64, %v63
  %v78 = vpack.c.bf16 %v66, %v65
  %v79 = vpack.c.bf16 %v68, %v67
  %v80 = vpack.c.bf16 %v70, %v69
  %v81 = vpack.c.bf16 %v72, %v71
  %v82 = vpack.c.bf16 %v74, %v73
  %v83 = vld [vmem:[%s1] sm:$0xff]
  %v84 = vld [vmem:[%s1 + $0x8] sm:$0xff]
  %v85 = vld [vmem:[%s1 + $0x10] sm:$0xff]
  %v86 = vld [vmem:[%s1 + $0x18] sm:$0xff]
  %v87 = vpack.c.bf16 %v84, %v83
  %v88 = vpack.c.bf16 %v86, %v85
  %vm89 = vcmask 261120
  %v91 = vsel %vm89, %v75, 0
  %v94 = vsel %vm89, %v76, 0
  %v97 = vsel %vm89, %v77, 0
  %v100 = vsel %vm89, %v78, 0
  %v103 = vsel %vm89, %v79, 0
  %v106 = vsel %vm89, %v80, 0
  %v109 = vsel %vm89, %v81, 0
  %v112 = vsel %vm89, %v82, 0
  %114 = vmatprep.subr.bf16.mxu0 0
  %115 = vmatpush1.bf16.msra.mxu0 0
  %116 = vmatprep.subr.bf16.mxu0 0
  %117 = vmatpush1.bf16.msra.mxu0 0
  %118 = vmatprep.subr.bf16.mxu0 0
  %119 = vmatpush1.bf16.msra.mxu0 0
  %120 = vmatprep.subr.bf16.mxu0 0
  %121 = vmatpush1.bf16.msra.mxu0 0
  %122 = vmatprep.subr.bf16.mxu0 0
  %123 = vmatpush1.bf16.msra.mxu0 0
  %124 = vmatprep.subr.bf16.mxu0 0
  %125 = vmatpush1.bf16.msra.mxu0 0
  %126 = vmatprep.subr.bf16.mxu0 0
  %127 = vmatpush1.bf16.msra.mxu0 %v88
  %128 = vmatprep.subr.bf16.mxu0 0
  %129 = vmatpush1.bf16.msra.mxu0 %v87
  %130 = vmatprep.subr.bf16.mxu0 0
  %131 = vmatpush2.bf16.msra.mxu0 0
  %132 = vmatprep.subr.bf16.mxu0 0
  %133 = vmatpush2.bf16.msra.mxu0 0
  %134 = vmatprep.subr.bf16.mxu0 0
  %135 = vmatpush2.bf16.msra.mxu0 0
  %136 = vmatprep.subr.bf16.mxu0 0
  %137 = vmatpush2.bf16.msra.mxu0 0
  %138 = vmatprep.subr.bf16.mxu0 0
  %139 = vmatpush2.bf16.msra.mxu0 0
  %140 = vmatprep.subr.bf16.mxu0 0
  %141 = vmatpush2.bf16.msra.mxu0 0
  %142 = vmatprep.subr.bf16.mxu0 0
  %143 = vmatpush2.bf16.msra.mxu0 0
  %144 = vmatprep.subr.bf16.mxu0 0
  %145 = vmatpush2.bf16.msra.mxu0 0
  %146 = vmatprep.mubr.bf16.mxu0 0
  %147 = vmatmul.mubr.bf16.gmra.mxu0 %v91
  %v148 = vpop.f32.mrf.mxu0
  %v149 = vadd.f32 0.0, %v148
  %v150 = vpop.f32.mrf.mxu0
  %v151 = vpop.f32.mrf.mxu0
  %v152 = vadd.f32 0.0, %v151
  %v153 = vpop.f32.mrf.mxu0
  %154 = vmatprep.mubr.bf16.mxu0 0
  %155 = vmatmul.mubr.bf16.gmra.mxu0 %v94
  %v156 = vpop.f32.mrf.mxu0
  %v157 = vadd.f32 0.0, %v156
  %v158 = vpop.f32.mrf.mxu0
  %v159 = vpop.f32.mrf.mxu0
  %v160 = vadd.f32 0.0, %v159
  %v161 = vpop.f32.mrf.mxu0
  %162 = vmatprep.mubr.bf16.mxu0 0
  %163 = vmatmul.mubr.bf16.gmra.mxu0 %v97
  %v164 = vpop.f32.mrf.mxu0
  %v165 = vadd.f32 0.0, %v164
  %v166 = vpop.f32.mrf.mxu0
  %v167 = vpop.f32.mrf.mxu0
  %v168 = vadd.f32 0.0, %v167
  %v169 = vpop.f32.mrf.mxu0
  %170 = vmatprep.mubr.bf16.mxu0 0
  %171 = vmatmul.mubr.bf16.gmra.mxu0 %v100
  %v172 = vpop.f32.mrf.mxu0
  %v173 = vadd.f32 0.0, %v172
  %v174 = vpop.f32.mrf.mxu0
  %v175 = vpop.f32.mrf.mxu0
  %v176 = vadd.f32 0.0, %v175
  %v177 = vpop.f32.mrf.mxu0
  %178 = vmatprep.mubr.bf16.mxu0 0
  %179 = vmatmul.mubr.bf16.gmra.mxu0 %v103
  %v180 = vpop.f32.mrf.mxu0
  %v181 = vadd.f32 0.0, %v180
  %v182 = vpop.f32.mrf.mxu0
  %v183 = vpop.f32.mrf.mxu0
  %v184 = vadd.f32 0.0, %v183
  %v185 = vpop.f32.mrf.mxu0
  %186 = vmatprep.mubr.bf16.mxu0 0
  %187 = vmatmul.mubr.bf16.gmra.mxu0 %v106
  %v188 = vpop.f32.mrf.mxu0
  %v189 = vadd.f32 0.0, %v188
  %v190 = vpop.f32.mrf.mxu0
  %v191 = vpop.f32.mrf.mxu0
  %v192 = vadd.f32 0.0, %v191
  %v193 = vpop.f32.mrf.mxu0
  %194 = vmatprep.mubr.bf16.mxu0 0
  %195 = vmatmul.mubr.bf16.gmra.mxu0 %v109
  %v196 = vpop.f32.mrf.mxu0
  %v197 = vadd.f32 0.0, %v196
  %v198 = vpop.f32.mrf.mxu0
  %v199 = vpop.f32.mrf.mxu0
  %v200 = vadd.f32 0.0, %v199
  %v201 = vpop.f32.mrf.mxu0
  %202 = vmatprep.mubr.bf16.mxu0 0
  %203 = vmatmul.mubr.bf16.gmra.mxu0 %v112
  %v204 = vpop.f32.mrf.mxu0
  %v205 = vadd.f32 0.0, %v204
  %v206 = vpop.f32.mrf.mxu0
  %v207 = vpop.f32.mrf.mxu0
  %v208 = vadd.f32 0.0, %v207
  %v209 = vpop.f32.mrf.mxu0
  %210 = vdwg.mxu0
  %v211 = vadd.f32 %v43, %v149
  %v212 = vadd.f32 %v44, %v152
  %v213 = vadd.f32 %v45, %v157
  %v214 = vadd.f32 %v46, %v160
  %v215 = vadd.f32 %v47, %v165
  %v216 = vadd.f32 %v48, %v168
  %v217 = vadd.f32 %v49, %v173
  %v218 = vadd.f32 %v50, %v176
  %v219 = vadd.f32 %v51, %v181
  %v220 = vadd.f32 %v52, %v184
  %v221 = vadd.f32 %v53, %v189
  %v222 = vadd.f32 %v54, %v192
  %v223 = vadd.f32 %v55, %v197
  %v224 = vadd.f32 %v56, %v200
  %v225 = vadd.f32 %v57, %v205
  %v226 = vadd.f32 %v58, %v208
  %vm227 = vcmask 7168
  %228 = vst.msk [vmem:[#allocation2] sm:$0xff] %vm227, %v211
  %229 = vst.msk [vmem:[#allocation2 + $0x8] sm:$0xff] %vm227, %v212
  %230 = vst.msk [vmem:[#allocation2 + $0x10] sm:$0xff] %vm227, %v213
  %231 = vst.msk [vmem:[#allocation2 + $0x18] sm:$0xff] %vm227, %v214
  %232 = vst.msk [vmem:[#allocation2 + $0x20] sm:$0xff] %vm227, %v215
  %233 = vst.msk [vmem:[#allocation2 + $0x28] sm:$0xff] %vm227, %v216
  %234 = vst.msk [vmem:[#allocation2 + $0x30] sm:$0xff] %vm227, %v217
  %235 = vst.msk [vmem:[#allocation2 + $0x38] sm:$0xff] %vm227, %v218
  %236 = vst.msk [vmem:[#allocation2 + $0x40] sm:$0xff] %vm227, %v219
  %237 = vst.msk [vmem:[#allocation2 + $0x48] sm:$0xff] %vm227, %v220
  %238 = vst.msk [vmem:[#allocation2 + $0x50] sm:$0xff] %vm227, %v221
  %239 = vst.msk [vmem:[#allocation2 + $0x58] sm:$0xff] %vm227, %v222
  %240 = vst.msk [vmem:[#allocation2 + $0x60] sm:$0xff] %vm227, %v223
  %241 = vst.msk [vmem:[#allocation2 + $0x68] sm:$0xff] %vm227, %v224
  %242 = vst.msk [vmem:[#allocation2 + $0x70] sm:$0xff] %vm227, %v225
  %243 = vst.msk [vmem:[#allocation2 + $0x78] sm:$0xff] %vm227, %v226
  // Predicated region
  $region22: #{deeplab_bottleneck_forward.30} parent=0 // pred_check
    %p244 = pneg %p22
  $region23: #{deeplab_bottleneck_forward.30} parent=0 // pred_check_branch
    %246 = sbr.rel (%p244) target = $region25
  $region24: #{deeplab_bottleneck_forward.30} parent=0 // pred_region
    %v247 = vld [vmem:[#allocation2] sm:$0xff]
    %v248 = vld [vmem:[#allocation2 + $0x8] sm:$0xff]
    %v249 = vld [vmem:[#allocation2 + $0x10] sm:$0xff]
    %v250 = vld [vmem:[#allocation2 + $0x18] sm:$0xff]
    %v251 = vld [vmem:[#allocation2 + $0x20] sm:$0xff]
    %v252 = vld [vmem:[#allocation2 + $0x28] sm:$0xff]
    %v253 = vld [vmem:[#allocation2 + $0x30] sm:$0xff]
    %v254 = vld [vmem:[#allocation2 + $0x38] sm:$0xff]
    %v255 = vld [vmem:[#allocation2 + $0x40] sm:$0xff]
    %v256 = vld [vmem:[#allocation2 + $0x48] sm:$0xff]
    %v257 = vld [vmem:[#allocation2 + $0x50] sm:$0xff]
    %v258 = vld [vmem:[#allocation2 + $0x58] sm:$0xff]
    %v259 = vld [vmem:[#allocation2 + $0x60] sm:$0xff]
    %v260 = vld [vmem:[#allocation2 + $0x68] sm:$0xff]
    %v261 = vld [vmem:[#allocation2 + $0x70] sm:$0xff]
    %v262 = vld [vmem:[#allocation2 + $0x78] sm:$0xff]
    %v263 = vld [vmem:[#allocation3] sm:$0x1]
    %v265 = vlaneseq
    %v266 = vshrl.u32 %v265, 7
    %v267 = vsub.s32 0, %v266
    %v268 = vrot.slane %v263, %v267
    %v270 = vmul.f32 %v247, %v268
    %v271 = vmul.f32 %v248, %v268
    %v272 = vmul.f32 %v249, %v268
    %v273 = vmul.f32 %v250, %v268
    %v274 = vmul.f32 %v251, %v268
    %v275 = vmul.f32 %v252, %v268
    %v276 = vmul.f32 %v253, %v268
    %v277 = vmul.f32 %v254, %v268
    %v278 = vmul.f32 %v255, %v268
    %v279 = vmul.f32 %v256, %v268
    %v280 = vmul.f32 %v257, %v268
    %v281 = vmul.f32 %v258, %v268
    %v282 = vmul.f32 %v259, %v268
    %v283 = vmul.f32 %v260, %v268
    %v284 = vmul.f32 %v261, %v268
    %v285 = vmul.f32 %v262, %v268
    %v286 = vld [vmem:[#allocation4] sm:$0x1]
    %v288 = vlaneseq
    %v289 = vshrl.u32 %v288, 7
    %v290 = vsub.s32 0, %v289
    %v291 = vrot.slane %v286, %v290
    %v293 = vadd.f32 %v270, %v291
    %v294 = vadd.f32 %v271, %v291
    %v295 = vadd.f32 %v272, %v291
    %v296 = vadd.f32 %v273, %v291
    %v297 = vadd.f32 %v274, %v291
    %v298 = vadd.f32 %v275, %v291
    %v299 = vadd.f32 %v276, %v291
    %v300 = vadd.f32 %v277, %v291
    %v301 = vadd.f32 %v278, %v291
    %v302 = vadd.f32 %v279, %v291
    %v303 = vadd.f32 %v280, %v291
    %v304 = vadd.f32 %v281, %v291
    %v305 = vadd.f32 %v282, %v291
    %v306 = vadd.f32 %v283, %v291
    %v307 = vadd.f32 %v284, %v291
    %v308 = vadd.f32 %v285, %v291
    %309 = vst.msk [vmem:[%s4] sm:$0xff] %vm227, %v293
    %310 = vst.msk [vmem:[%s4 + $0x8] sm:$0xff] %vm227, %v294
    %311 = vst.msk [vmem:[%s4 + $0x10] sm:$0xff] %vm227, %v295
    %312 = vst.msk [vmem:[%s4 + $0x18] sm:$0xff] %vm227, %v296
    %313 = vst.msk [vmem:[%s4 + $0x20] sm:$0xff] %vm227, %v297
    %314 = vst.msk [vmem:[%s4 + $0x28] sm:$0xff] %vm227, %v298
    %315 = vst.msk [vmem:[%s4 + $0x30] sm:$0xff] %vm227, %v299
    %316 = vst.msk [vmem:[%s4 + $0x38] sm:$0xff] %vm227, %v300
    %317 = vst.msk [vmem:[%s4 + $0x40] sm:$0xff] %vm227, %v301
    %318 = vst.msk [vmem:[%s4 + $0x48] sm:$0xff] %vm227, %v302
    %319 = vst.msk [vmem:[%s4 + $0x50] sm:$0xff] %vm227, %v303
    %320 = vst.msk [vmem:[%s4 + $0x58] sm:$0xff] %vm227, %v304
    %321 = vst.msk [vmem:[%s4 + $0x60] sm:$0xff] %vm227, %v305
    %322 = vst.msk [vmem:[%s4 + $0x68] sm:$0xff] %vm227, %v306
    %323 = vst.msk [vmem:[%s4 + $0x70] sm:$0xff] %vm227, %v307
    %324 = vst.msk [vmem:[%s4 + $0x78] sm:$0xff] %vm227, %v308
  $region25: #{deeplab_bottleneck_forward.30} parent=0 // pred_fallthru
    _
  // Predicated region
  $region26: #{deeplab_bottleneck_forward.30} parent=0 // pred_check
    _
  $region27: #{deeplab_bottleneck_forward.30} parent=0 // pred_check_branch
    %326 = sbr.rel (0) target = $region29
  $region28: #{deeplab_bottleneck_forward.30} parent=0 // pred_region
    _
  $region29: #{deeplab_bottleneck_forward.30} parent=0 // pred_fallthru
    _
  // Predicated region
  $region30: #{deeplab_bottleneck_forward.30} parent=0 // pred_check
    _
  $region31: #{deeplab_bottleneck_forward.30} parent=0 // pred_check_branch
    %328 = sbr.rel (0) target = $region33
  $region32: #{deeplab_bottleneck_forward.30} parent=0 // pred_region
    _
  $region33: #{deeplab_bottleneck_forward.30} parent=0 // pred_fallthru
    _

// kernel: deeplab_bottleneck_forward.28
$region0: #{deeplab_bottleneck_forward.28}
  #allocation0 [shape = 'u32[]', space=smem, size = 0x4, offset = 0x4, fixed_abs, tag = 'smem constant byte address 0x4 - core index']
  #allocation1 [shape = 'u32[144,128]{1,0:T(1,128)}', space=vmem, size = 0x12000, scoped, tag = 'internal scratch']
  %s0 = inlined_call_operand.vmem [shape: f32[128,288], index: 0, kind: input, shape index: {}]
  %s1 = inlined_call_operand.vmem [shape: f32[128,36], index: 1, kind: input, shape index: {}]
  %s2 = inlined_call_operand.vmem [shape: f32[128,72], index: 2, kind: input, shape index: {}]
  %s3 = inlined_call_operand.vmem [shape: f32[288,32], index: 3, kind: input, shape index: {}]
  %s4 = inlined_call_operand.vmem [shape: f32[36,32], index: 4, kind: input, shape index: {}]
  %s5 = inlined_call_operand.vmem [shape: f32[72,32], index: 5, kind: input, shape index: {}]
  %s6 = inlined_call_operand.vmem [shape: f32[1,32], index: 6, kind: input, shape index: {}]
  %s7 = inlined_call_operand.vmem [shape: f32[1,32], index: 7, kind: input, shape index: {}]
  %s8 = inlined_call_operand.vmem [shape: f32[128,32], index: 8, kind: output, shape index: {}]
  %s9 = sld [smem:[#allocation0]]
  $region42: #{deeplab_bottleneck_forward.28} parent=0
    _
  %s11 = ssub.s32 1, %s9
  %s12 = scalar_select 0, %s11, %s9
  // Predicated region
  $region2: #{deeplab_bottleneck_forward.28} parent=0 // pred_check
    _
  $region3: #{deeplab_bottleneck_forward.28} parent=0 // pred_check_branch
    %14 = sbr.rel (0) target = $region5
  $region4: #{deeplab_bottleneck_forward.28} parent=0 // pred_region
    _
  $region5: #{deeplab_bottleneck_forward.28} parent=0 // pred_fallthru
    _
  // Predicated region
  $region6: #{deeplab_bottleneck_forward.28} parent=0 // pred_check
    _
  $region7: #{deeplab_bottleneck_forward.28} parent=0 // pred_check_branch
    %16 = sbr.rel (0) target = $region9
  $region8: #{deeplab_bottleneck_forward.28} parent=0 // pred_region
    _
  $region9: #{deeplab_bottleneck_forward.28} parent=0 // pred_fallthru
    _
  // Predicated region
  $region10: #{deeplab_bottleneck_forward.28} parent=0 // pred_check
    _
  $region11: #{deeplab_bottleneck_forward.28} parent=0 // pred_check_branch
    %18 = sbr.rel (0) target = $region13
  $region12: #{deeplab_bottleneck_forward.28} parent=0 // pred_region
    _
  $region13: #{deeplab_bottleneck_forward.28} parent=0 // pred_fallthru
    _
  // Predicated region
  $region14: #{deeplab_bottleneck_forward.28} parent=0 // pred_check
    _
  $region15: #{deeplab_bottleneck_forward.28} parent=0 // pred_check_branch
    %20 = sbr.rel (0) target = $region17
  $region16: #{deeplab_bottleneck_forward.28} parent=0 // pred_region
    _
  $region17: #{deeplab_bottleneck_forward.28} parent=0 // pred_fallthru
    _
  // Predicated region
  $region18: #{deeplab_bottleneck_forward.28} parent=0 // pred_check
    _
  $region19: #{deeplab_bottleneck_forward.28} parent=0 // pred_check_branch
    %22 = sbr.rel (0) target = $region21
  $region20: #{deeplab_bottleneck_forward.28} parent=0 // pred_region
    _
  $region21: #{deeplab_bottleneck_forward.28} parent=0 // pred_fallthru
    _
  // Predicated region
  $region22: #{deeplab_bottleneck_forward.28} parent=0 // pred_check
    _
  $region23: #{deeplab_bottleneck_forward.28} parent=0 // pred_check_branch
    %24 = sbr.rel (0) target = $region25
  $region24: #{deeplab_bottleneck_forward.28} parent=0 // pred_region
    _
  $region25: #{deeplab_bottleneck_forward.28} parent=0 // pred_fallthru
    _
  // Predicated region
  $region26: #{deeplab_bottleneck_forward.28} parent=0 // pred_check
    _
  $region27: #{deeplab_bottleneck_forward.28} parent=0 // pred_check_branch
    %26 = sbr.rel (0) target = $region29
  $region28: #{deeplab_bottleneck_forward.28} parent=0 // pred_region
    _
  $region29: #{deeplab_bottleneck_forward.28} parent=0 // pred_fallthru
    _
  // Predicated region
  $region30: #{deeplab_bottleneck_forward.28} parent=0 // pred_check
    _
  $region31: #{deeplab_bottleneck_forward.28} parent=0 // pred_check_branch
    %28 = sbr.rel (0) target = $region33
  $region32: #{deeplab_bottleneck_forward.28} parent=0 // pred_region
    _
  $region33: #{deeplab_bottleneck_forward.28} parent=0 // pred_fallthru
    _
  %v30 = vld [vmem:[%s0] sm:$0xff]
  %v31 = vld [vmem:[%s0 + $0x8] sm:$0xff]
  %v32 = vld [vmem:[%s0 + $0x10] sm:$0xff]
  %v33 = vld [vmem:[%s0 + $0x18] sm:$0xff]
  %v34 = vld [vmem:[%s0 + $0x20] sm:$0xff]
  %v35 = vld [vmem:[%s0 + $0x28] sm:$0xff]
  %v36 = vld [vmem:[%s0 + $0x30] sm:$0xff]
  %v37 = vld [vmem:[%s0 + $0x38] sm:$0xff]
  %v38 = vld [vmem:[%s0 + $0x40] sm:$0xff]
  %v39 = vld [vmem:[%s0 + $0x48] sm:$0xff]
  %v40 = vld [vmem:[%s0 + $0x50] sm:$0xff]
  %v41 = vld [vmem:[%s0 + $0x58] sm:$0xff]
  %v42 = vld [vmem:[%s0 + $0x60] sm:$0xff]
  %v43 = vld [vmem:[%s0 + $0x68] sm:$0xff]
  %v44 = vld [vmem:[%s0 + $0x70] sm:$0xff]
  %v45 = vld [vmem:[%s0 + $0x78] sm:$0xff]
  %v46 = vld [vmem:[%s0 + $0x80] sm:$0xff]
  %v47 = vld [vmem:[%s0 + $0x88] sm:$0xff]
  %v48 = vld [vmem:[%s0 + $0x90] sm:$0xff]
  %v49 = vld [vmem:[%s0 + $0x98] sm:$0xff]
  %v50 = vld [vmem:[%s0 + $0xa0] sm:$0xff]
  %v51 = vld [vmem:[%s0 + $0xa8] sm:$0xff]
  %v52 = vld [vmem:[%s0 + $0xb0] sm:$0xff]
  %v53 = vld [vmem:[%s0 + $0xb8] sm:$0xff]
  %v54 = vld [vmem:[%s0 + $0xc0] sm:$0xff]
  %v55 = vld [vmem:[%s0 + $0xc8] sm:$0xff]
  %v56 = vld [vmem:[%s0 + $0xd0] sm:$0xff]
  %v57 = vld [vmem:[%s0 + $0xd8] sm:$0xff]
  %v58 = vld [vmem:[%s0 + $0xe0] sm:$0xff]
  %v59 = vld [vmem:[%s0 + $0xe8] sm:$0xff]
  %v60 = vld [vmem:[%s0 + $0xf0] sm:$0xff]
  %v61 = vld [vmem:[%s0 + $0xf8] sm:$0xff]
  %v62 = vld [vmem:[%s0 + $0x100] sm:$0xff]
  %v63 = vld [vmem:[%s0 + $0x108] sm:$0xff]
  %v64 = vld [vmem:[%s0 + $0x110] sm:$0xff]
  %v65 = vld [vmem:[%s0 + $0x118] sm:$0xff]
  %v66 = vld [vmem:[%s0 + $0x120] sm:$0xff]
  %v67 = vld [vmem:[%s0 + $0x128] sm:$0xff]
  %v68 = vld [vmem:[%s0 + $0x130] sm:$0xff]
  %v69 = vld [vmem:[%s0 + $0x138] sm:$0xff]
  %v70 = vld [vmem:[%s0 + $0x140] sm:$0xff]
  %v71 = vld [vmem:[%s0 + $0x148] sm:$0xff]
  %v72 = vld [vmem:[%s0 + $0x150] sm:$0xff]
  %v73 = vld [vmem:[%s0 + $0x158] sm:$0xff]
  %v74 = vld [vmem:[%s0 + $0x160] sm:$0xff]
  %v75 = vld [vmem:[%s0 + $0x168] sm:$0xff]
  %v76 = vld [vmem:[%s0 + $0x170] sm:$0xff]
  %v77 = vld [vmem:[%s0 + $0x178] sm:$0xff]
  %v78 = vpack.c.bf16 %v33, %v30
  %v79 = vpack.c.bf16 %v34, %v31
  %v80 = vpack.c.bf16 %v35, %v32
  %v81 = vpack.c.bf16 %v39, %v36
  %v82 = vpack.c.bf16 %v40, %v37
  %v83 = vpack.c.bf16 %v41, %v38
  %v84 = vpack.c.bf16 %v45, %v42
  %v85 = vpack.c.bf16 %v46, %v43
  %v86 = vpack.c.bf16 %v47, %v44
  %v87 = vpack.c.bf16 %v51, %v48
  %v88 = vpack.c.bf16 %v52, %v49
  %v89 = vpack.c.bf16 %v53, %v50
  %v90 = vpack.c.bf16 %v57, %v54
  %v91 = vpack.c.bf16 %v58, %v55
  %v92 = vpack.c.bf16 %v59, %v56
  %v93 = vpack.c.bf16 %v63, %v60
  %v94 = vpack.c.bf16 %v64, %v61
  %v95 = vpack.c.bf16 %v65, %v62
  %v96 = vpack.c.bf16 %v69, %v66
  %v97 = vpack.c.bf16 %v70, %v67
  %v98 = vpack.c.bf16 %v71, %v68
  %v99 = vpack.c.bf16 %v75, %v72
  %v100 = vpack.c.bf16 %v76, %v73
  %v101 = vpack.c.bf16 %v77, %v74
  %v102 = vld [vmem:[%s3] sm:$0xff]
  %v103 = vld [vmem:[%s3 + $0x8] sm:$0xff]
  %v104 = vld [vmem:[%s3 + $0x10] sm:$0xff]
  %v105 = vld [vmem:[%s3 + $0x18] sm:$0xff]
  %v106 = vld [vmem:[%s3 + $0x20] sm:$0xff]
  %v107 = vld [vmem:[%s3 + $0x28] sm:$0xff]
  %v108 = vld [vmem:[%s3 + $0x30] sm:$0xff]
  %v109 = vld [vmem:[%s3 + $0x38] sm:$0xff]
  %v110 = vld [vmem:[%s3 + $0x40] sm:$0xff]
  %v111 = vld [vmem:[%s3 + $0x48] sm:$0xff]
  %v112 = vld [vmem:[%s3 + $0x50] sm:$0xff]
  %v113 = vld [vmem:[%s3 + $0x58] sm:$0xff]
  %v114 = vld [vmem:[%s3 + $0x60] sm:$0xff]
  %v115 = vld [vmem:[%s3 + $0x68] sm:$0xff]
  %v116 = vld [vmem:[%s3 + $0x70] sm:$0xff]
  %v117 = vld [vmem:[%s3 + $0x78] sm:$0xff]
  %v118 = vld [vmem:[%s3 + $0x80] sm:$0xff]
  %v119 = vld [vmem:[%s3 + $0x88] sm:$0xff]
  %v120 = vld [vmem:[%s3 + $0x90] sm:$0xff]
  %v121 = vld [vmem:[%s3 + $0x98] sm:$0xff]
  %v122 = vld [vmem:[%s3 + $0xa0] sm:$0xff]
  %v123 = vld [vmem:[%s3 + $0xa8] sm:$0xff]
  %v124 = vld [vmem:[%s3 + $0xb0] sm:$0xff]
  %v125 = vld [vmem:[%s3 + $0xb8] sm:$0xff]
  %v126 = vld [vmem:[%s3 + $0xc0] sm:$0xff]
  %v127 = vld [vmem:[%s3 + $0xc8] sm:$0xff]
  %v128 = vld [vmem:[%s3 + $0xd0] sm:$0xff]
  %v129 = vld [vmem:[%s3 + $0xd8] sm:$0xff]
  %v130 = vld [vmem:[%s3 + $0xe0] sm:$0xff]
  %v131 = vld [vmem:[%s3 + $0xe8] sm:$0xff]
  %v132 = vld [vmem:[%s3 + $0xf0] sm:$0xff]
  %v133 = vld [vmem:[%s3 + $0xf8] sm:$0xff]
  %v134 = vld [vmem:[%s3 + $0x100] sm:$0xff]
  %v135 = vld [vmem:[%s3 + $0x108] sm:$0xff]
  %v136 = vld [vmem:[%s3 + $0x110] sm:$0xff]
  %v137 = vld [vmem:[%s3 + $0x118] sm:$0xff]
  %v138 = vpack.c.bf16 %v103, %v102
  %v139 = vpack.c.bf16 %v105, %v104
  %v140 = vpack.c.bf16 %v107, %v106
  %v141 = vpack.c.bf16 %v109, %v108
  %v142 = vpack.c.bf16 %v111, %v110
  %v143 = vpack.c.bf16 %v113, %v112
  %v144 = vpack.c.bf16 %v115, %v114
  %v145 = vpack.c.bf16 %v117, %v116
  %v146 = vpack.c.bf16 %v119, %v118
  %v147 = vpack.c.bf16 %v121, %v120
  %v148 = vpack.c.bf16 %v123, %v122
  %v149 = vpack.c.bf16 %v125, %v124
  %v150 = vpack.c.bf16 %v127, %v126
  %v151 = vpack.c.bf16 %v129, %v128
  %v152 = vpack.c.bf16 %v131, %v130
  %v153 = vpack.c.bf16 %v133, %v132
  %v154 = vpack.c.bf16 %v135, %v134
  %v155 = vpack.c.bf16 %v137, %v136
  %v156 = vld [vmem:[%s1] sm:$0xff]
  %v157 = vld [vmem:[%s1 + $0x8] sm:$0xff]
  %v158 = vld [vmem:[%s1 + $0x10] sm:$0xff]
  %v159 = vld [vmem:[%s1 + $0x18] sm:$0xff]
  %v160 = vld [vmem:[%s1 + $0x20] sm:$0xff]
  %v161 = vld [vmem:[%s1 + $0x28] sm:$0xff]
  %v162 = vld [vmem:[%s1 + $0x30] sm:$0xff]
  %v163 = vld [vmem:[%s1 + $0x38] sm:$0xff]
  %v164 = vld [vmem:[%s1 + $0x40] sm:$0xff]
  %v165 = vld [vmem:[%s1 + $0x48] sm:$0xff]
  %v166 = vld [vmem:[%s1 + $0x50] sm:$0xff]
  %v167 = vld [vmem:[%s1 + $0x58] sm:$0xff]
  %v168 = vld [vmem:[%s1 + $0x60] sm:$0xff]
  %v169 = vld [vmem:[%s1 + $0x68] sm:$0xff]
  %v170 = vld [vmem:[%s1 + $0x70] sm:$0xff]
  %v171 = vld [vmem:[%s1 + $0x78] sm:$0xff]
  %v172 = vpack.c.bf16 %v157, %v156
  %v173 = vpack.c.bf16 %v159, %v158
  %v174 = vpack.c.bf16 %v161, %v160
  %v175 = vpack.c.bf16 %v163, %v162
  %v176 = vpack.c.bf16 %v165, %v164
  %v177 = vpack.c.bf16 %v167, %v166
  %v178 = vpack.c.bf16 %v169, %v168
  %v179 = vpack.c.bf16 %v171, %v170
  %v180 = vld [vmem:[%s4] sm:$0xff]
  %v181 = vld [vmem:[%s4 + $0x8] sm:$0xff]
  %v182 = vld [vmem:[%s4 + $0x10] sm:$0xff]
  %v183 = vld [vmem:[%s4 + $0x18] sm:$0xff]
  %v184 = vld [vmem:[%s4 + $0x20] sm:$0xf]
  %v185 = vpack.c.bf16 %v181, %v180
  %v186 = vpack.c.bf16 %v183, %v182
  %v187 = vpack.c.bf16 %v184, %v184
  %vm188 = vcmask 293888
  %v190 = vsel %vm188, %v172, 0
  %v193 = vsel %vm188, %v173, 0
  %v196 = vsel %vm188, %v174, 0
  %v199 = vsel %vm188, %v175, 0
  %v202 = vsel %vm188, %v176, 0
  %v205 = vsel %vm188, %v177, 0
  %v208 = vsel %vm188, %v178, 0
  %v211 = vsel %vm188, %v179, 0
  %vm213 = vcmask 1041408
  %v215 = vsel %vm213, %v187, 0
  %217 = vmatprep.subr.bf16.mxu0 0
  %218 = vmatpush1.bf16.msra.mxu0 0
  %219 = vmatprep.subr.bf16.mxu0 0
  %220 = vmatpush1.bf16.msra.mxu0 0
  %221 = vmatprep.subr.bf16.mxu0 0
  %222 = vmatpush1.bf16.msra.mxu0 0
  %223 = vmatprep.subr.bf16.mxu0 0
  %224 = vmatpush1.bf16.msra.mxu0 0
  %225 = vmatprep.subr.bf16.mxu0 0
  %226 = vmatpush1.bf16.msra.mxu0 0
  %227 = vmatprep.subr.bf16.mxu0 0
  %228 = vmatpush1.bf16.msra.mxu0 %v215
  %229 = vmatprep.subr.bf16.mxu0 0
  %230 = vmatpush1.bf16.msra.mxu0 %v186
  %231 = vmatprep.subr.bf16.mxu0 0
  %232 = vmatpush1.bf16.msra.mxu0 %v185
  %233 = vmatprep.subr.bf16.mxu0 0
  %234 = vmatpush2.bf16.msra.mxu0 0
  %235 = vmatprep.subr.bf16.mxu0 0
  %236 = vmatpush2.bf16.msra.mxu0 0
  %237 = vmatprep.subr.bf16.mxu0 0
  %238 = vmatpush2.bf16.msra.mxu0 0
  %239 = vmatprep.subr.bf16.mxu0 0
  %240 = vmatpush2.bf16.msra.mxu0 0
  %241 = vmatprep.subr.bf16.mxu0 0
  %242 = vmatpush2.bf16.msra.mxu0 0
  %243 = vmatprep.subr.bf16.mxu0 0
  %244 = vmatpush2.bf16.msra.mxu0 0
  %245 = vmatprep.subr.bf16.mxu0 0
  %246 = vmatpush2.bf16.msra.mxu0 0
  %247 = vmatprep.subr.bf16.mxu0 0
  %248 = vmatpush2.bf16.msra.mxu0 0
  %249 = vmatprep.mubr.bf16.mxu0 0
  %250 = vmatmul.mubr.bf16.gmra.mxu0 %v190
  %v251 = vpop.f32.mrf.mxu0
  %v252 = vadd.f32 0.0, %v251
  %v253 = vpop.f32.mrf.mxu0
  %v254 = vpop.f32.mrf.mxu0
  %v255 = vadd.f32 0.0, %v254
  %v256 = vpop.f32.mrf.mxu0
  %257 = vmatprep.mubr.bf16.mxu0 0
  %258 = vmatmul.mubr.bf16.gmra.mxu0 %v193
  %v259 = vpop.f32.mrf.mxu0
  %v260 = vadd.f32 0.0, %v259
  %v261 = vpop.f32.mrf.mxu0
  %v262 = vpop.f32.mrf.mxu0
  %v263 = vadd.f32 0.0, %v262
  %v264 = vpop.f32.mrf.mxu0
  %265 = vmatprep.mubr.bf16.mxu0 0
  %266 = vmatmul.mubr.bf16.gmra.mxu0 %v196
  %v267 = vpop.f32.mrf.mxu0
  %v268 = vadd.f32 0.0, %v267
  %v269 = vpop.f32.mrf.mxu0
  %v270 = vpop.f32.mrf.mxu0
  %v271 = vadd.f32 0.0, %v270
  %v272 = vpop.f32.mrf.mxu0
  %273 = vmatprep.mubr.bf16.mxu0 0
  %274 = vmatmul.mubr.bf16.gmra.mxu0 %v199
  %v275 = vpop.f32.mrf.mxu0
  %v276 = vadd.f32 0.0, %v275
  %v277 = vpop.f32.mrf.mxu0
  %v278 = vpop.f32.mrf.mxu0
  %v279 = vadd.f32 0.0, %v278
  %v280 = vpop.f32.mrf.mxu0
  %281 = vmatprep.mubr.bf16.mxu0 0
  %282 = vmatmul.mubr.bf16.gmra.mxu0 %v202
  %v283 = vpop.f32.mrf.mxu0
  %v284 = vadd.f32 0.0, %v283
  %v285 = vpop.f32.mrf.mxu0
  %v286 = vpop.f32.mrf.mxu0
  %v287 = vadd.f32 0.0, %v286
  %v288 = vpop.f32.mrf.mxu0
  %289 = vmatprep.mubr.bf16.mxu0 0
  %290 = vmatmul.mubr.bf16.gmra.mxu0 %v205
  %v291 = vpop.f32.mrf.mxu0
  %v292 = vadd.f32 0.0, %v291
  %v293 = vpop.f32.mrf.mxu0
  %v294 = vpop.f32.mrf.mxu0
  %v295 = vadd.f32 0.0, %v294
  %v296 = vpop.f32.mrf.mxu0
  %297 = vmatprep.mubr.bf16.mxu0 0
  %298 = vmatmul.mubr.bf16.gmra.mxu0 %v208
  %v299 = vpop.f32.mrf.mxu0
  %v300 = vadd.f32 0.0, %v299
  %v301 = vpop.f32.mrf.mxu0
  %v302 = vpop.f32.mrf.mxu0
  %v303 = vadd.f32 0.0, %v302
  %v304 = vpop.f32.mrf.mxu0
  %305 = vmatprep.mubr.bf16.mxu0 0
  %306 = vmatmul.mubr.bf16.gmra.mxu0 %v211
  %v307 = vpop.f32.mrf.mxu0
  %v308 = vadd.f32 0.0, %v307
  %v309 = vpop.f32.mrf.mxu0
  %v310 = vpop.f32.mrf.mxu0
  %v311 = vadd.f32 0.0, %v310
  %v312 = vpop.f32.mrf.mxu0
  %313 = vdwg.mxu0
  %vm314 = vcmask 261120
  %v316 = vsel %vm314, %v80, 0
  %v319 = vsel %vm314, %v83, 0
  %v322 = vsel %vm314, %v86, 0
  %v325 = vsel %vm314, %v89, 0
  %v328 = vsel %vm314, %v92, 0
  %v331 = vsel %vm314, %v95, 0
  %v334 = vsel %vm314, %v98, 0
  %v337 = vsel %vm314, %v101, 0
  %339 = vmatprep.subr.bf16.mxu0 0
  %340 = vmatpush1.bf16.msra.mxu0 %v145
  %341 = vmatprep.subr.bf16.mxu0 0
  %342 = vmatpush1.bf16.msra.mxu0 %v144
  %343 = vmatprep.subr.bf16.mxu0 0
  %344 = vmatpush1.bf16.msra.mxu0 %v143
  %345 = vmatprep.subr.bf16.mxu0 0
  %346 = vmatpush1.bf16.msra.mxu0 %v142
  %347 = vmatprep.subr.bf16.mxu0 0
  %348 = vmatpush1.bf16.msra.mxu0 %v141
  %349 = vmatprep.subr.bf16.mxu0 0
  %350 = vmatpush1.bf16.msra.mxu0 %v140
  %351 = vmatprep.subr.bf16.mxu0 0
  %352 = vmatpush1.bf16.msra.mxu0 %v139
  %353 = vmatprep.subr.bf16.mxu0 0
  %354 = vmatpush1.bf16.msra.mxu0 %v138
  %355 = vmatprep.subr.bf16.mxu0 0
  %356 = vmatpush2.bf16.msra.mxu0 %v153
  %357 = vmatprep.subr.bf16.mxu0 0
  %358 = vmatpush2.bf16.msra.mxu0 %v152
  %359 = vmatprep.subr.bf16.mxu0 0
  %360 = vmatpush2.bf16.msra.mxu0 %v151
  %361 = vmatprep.subr.bf16.mxu0 0
  %362 = vmatpush2.bf16.msra.mxu0 %v150
  %363 = vmatprep.subr.bf16.mxu0 0
  %364 = vmatpush2.bf16.msra.mxu0 %v149
  %365 = vmatprep.subr.bf16.mxu0 0
  %366 = vmatpush2.bf16.msra.mxu0 %v148
  %367 = vmatprep.subr.bf16.mxu0 0
  %368 = vmatpush2.bf16.msra.mxu0 %v147
  %369 = vmatprep.subr.bf16.mxu0 0
  %370 = vmatpush2.bf16.msra.mxu0 %v146
  %371 = vmatprep.mubr.bf16.mxu0 %v79
  %372 = vmatmul.mubr.bf16.gmra.mxu0 %v78
  %v373 = vpop.f32.mrf.mxu0
  %v374 = vadd.f32 %v252, %v373
  %v375 = vpop.f32.mrf.mxu0
  %v376 = vpop.f32.mrf.mxu0
  %v377 = vadd.f32 %v255, %v376
  %v378 = vpop.f32.mrf.mxu0
  %379 = vmatprep.mubr.bf16.mxu0 %v82
  %380 = vmatmul.mubr.bf16.gmra.mxu0 %v81
  %v381 = vpop.f32.mrf.mxu0
  %v382 = vadd.f32 %v260, %v381
  %v383 = vpop.f32.mrf.mxu0
  %v384 = vpop.f32.mrf.mxu0
  %v385 = vadd.f32 %v263, %v384
  %v386 = vpop.f32.mrf.mxu0
  %387 = vmatprep.mubr.bf16.mxu0 %v85
  %388 = vmatmul.mubr.bf16.gmra.mxu0 %v84
  %v389 = vpop.f32.mrf.mxu0
  %v390 = vadd.f32 %v268, %v389
  %v391 = vpop.f32.mrf.mxu0
  %v392 = vpop.f32.mrf.mxu0
  %v393 = vadd.f32 %v271, %v392
  %v394 = vpop.f32.mrf.mxu0
  %395 = vmatprep.mubr.bf16.mxu0 %v88
  %396 = vmatmul.mubr.bf16.gmra.mxu0 %v87
  %v397 = vpop.f32.mrf.mxu0
  %v398 = vadd.f32 %v276, %v397
  %v399 = vpop.f32.mrf.mxu0
  %v400 = vpop.f32.mrf.mxu0
  %v401 = vadd.f32 %v279, %v400
  %v402 = vpop.f32.mrf.mxu0
  %403 = vmatprep.mubr.bf16.mxu0 %v91
  %404 = vmatmul.mubr.bf16.gmra.mxu0 %v90
  %v405 = vpop.f32.mrf.mxu0
  %v406 = vadd.f32 %v284, %v405
  %v407 = vpop.f32.mrf.mxu0
  %v408 = vpop.f32.mrf.mxu0
  %v409 = vadd.f32 %v287, %v408
  %v410 = vpop.f32.mrf.mxu0
  %411 = vmatprep.mubr.bf16.mxu0 %v94
  %412 = vmatmul.mubr.bf16.gmra.mxu0 %v93
  %v413 = vpop.f32.mrf.mxu0
  %v414 = vadd.f32 %v292, %v413
  %v415 = vpop.f32.mrf.mxu0
  %v416 = vpop.f32.mrf.mxu0
  %v417 = vadd.f32 %v295, %v416
  %v418 = vpop.f32.mrf.mxu0
  %419 = vmatprep.mubr.bf16.mxu0 %v97
  %420 = vmatmul.mubr.bf16.gmra.mxu0 %v96
  %v421 = vpop.f32.mrf.mxu0
  %v422 = vadd.f32 %v300, %v421
  %v423 = vpop.f32.mrf.mxu0
  %v424 = vpop.f32.mrf.mxu0
  %v425 = vadd.f32 %v303, %v424
  %v426 = vpop.f32.mrf.mxu0
  %427 = vmatprep.mubr.bf16.mxu0 %v100
  %428 = vmatmul.mubr.bf16.gmra.mxu0 %v99
  %v429 = vpop.f32.mrf.mxu0
  %v430 = vadd.f32 %v308, %v429
  %v431 = vpop.f32.mrf.mxu0
  %v432 = vpop.f32.mrf.mxu0
  %v433 = vadd.f32 %v311, %v432
  %v434 = vpop.f32.mrf.mxu0
  %435 = vdwg.mxu0
  %436 = vmatprep.subr.bf16.mxu0 0
  %437 = vmatpush1.bf16.msra.mxu0 0
  %438 = vmatprep.subr.bf16.mxu0 0
  %439 = vmatpush1.bf16.msra.mxu0 0
  %440 = vmatprep.subr.bf16.mxu0 0
  %441 = vmatpush1.bf16.msra.mxu0 0
  %442 = vmatprep.subr.bf16.mxu0 0
  %443 = vmatpush1.bf16.msra.mxu0 0
  %444 = vmatprep.subr.bf16.mxu0 0
  %445 = vmatpush1.bf16.msra.mxu0 0
  %446 = vmatprep.subr.bf16.mxu0 0
  %447 = vmatpush1.bf16.msra.mxu0 0
  %448 = vmatprep.subr.bf16.mxu0 0
  %449 = vmatpush1.bf16.msra.mxu0 %v155
  %450 = vmatprep.subr.bf16.mxu0 0
  %451 = vmatpush1.bf16.msra.mxu0 %v154
  %452 = vmatprep.subr.bf16.mxu0 0
  %453 = vmatpush2.bf16.msra.mxu0 0
  %454 = vmatprep.subr.bf16.mxu0 0
  %455 = vmatpush2.bf16.msra.mxu0 0
  %456 = vmatprep.subr.bf16.mxu0 0
  %457 = vmatpush2.bf16.msra.mxu0 0
  %458 = vmatprep.subr.bf16.mxu0 0
  %459 = vmatpush2.bf16.msra.mxu0 0
  %460 = vmatprep.subr.bf16.mxu0 0
  %461 = vmatpush2.bf16.msra.mxu0 0
  %462 = vmatprep.subr.bf16.mxu0 0
  %463 = vmatpush2.bf16.msra.mxu0 0
  %464 = vmatprep.subr.bf16.mxu0 0
  %465 = vmatpush2.bf16.msra.mxu0 0
  %466 = vmatprep.subr.bf16.mxu0 0
  %467 = vmatpush2.bf16.msra.mxu0 0
  %468 = vmatprep.mubr.bf16.mxu0 0
  %469 = vmatmul.mubr.bf16.gmra.mxu0 %v316
  %v470 = vpop.f32.mrf.mxu0
  %v471 = vadd.f32 %v374, %v470
  %v472 = vpop.f32.mrf.mxu0
  %v473 = vpop.f32.mrf.mxu0
  %v474 = vadd.f32 %v377, %v473
  %v475 = vpop.f32.mrf.mxu0
  %476 = vmatprep.mubr.bf16.mxu0 0
  %477 = vmatmul.mubr.bf16.gmra.mxu0 %v319
  %v478 = vpop.f32.mrf.mxu0
  %v479 = vadd.f32 %v382, %v478
  %v480 = vpop.f32.mrf.mxu0
  %v481 = vpop.f32.mrf.mxu0
  %v482 = vadd.f32 %v385, %v481
  %v483 = vpop.f32.mrf.mxu0
  %484 = vmatprep.mubr.bf16.mxu0 0
  %485 = vmatmul.mubr.bf16.gmra.mxu0 %v322
  %v486 = vpop.f32.mrf.mxu0
  %v487 = vadd.f32 %v390, %v486
  %v488 = vpop.f32.mrf.mxu0
  %v489 = vpop.f32.mrf.mxu0
  %v490 = vadd.f32 %v393, %v489
  %v491 = vpop.f32.mrf.mxu0
  %492 = vmatprep.mubr.bf16.mxu0 0
  %493 = vmatmul.mubr.bf16.gmra.mxu0 %v325
  %v494 = vpop.f32.mrf.mxu0
  %v495 = vadd.f32 %v398, %v494
  %v496 = vpop.f32.mrf.mxu0
  %v497 = vpop.f32.mrf.mxu0
  %v498 = vadd.f32 %v401, %v497
  %v499 = vpop.f32.mrf.mxu0
  %500 = vmatprep.mubr.bf16.mxu0 0
  %501 = vmatmul.mubr.bf16.gmra.mxu0 %v328
  %v502 = vpop.f32.mrf.mxu0
  %v503 = vadd.f32 %v406, %v502
  %v504 = vpop.f32.mrf.mxu0
  %v505 = vpop.f32.mrf.mxu0
  %v506 = vadd.f32 %v409, %v505
  %v507 = vpop.f32.mrf.mxu0
  %508 = vmatprep.mubr.bf16.mxu0 0
  %509 = vmatmul.mubr.bf16.gmra.mxu0 %v331
  %v510 = vpop.f32.mrf.mxu0
  %v511 = vadd.f32 %v414, %v510
  %v512 = vpop.f32.mrf.mxu0
  %v513 = vpop.f32.mrf.mxu0
  %v514 = vadd.f32 %v417, %v513
  %v515 = vpop.f32.mrf.mxu0
  %516 = vmatprep.mubr.bf16.mxu0 0
  %517 = vmatmul.mubr.bf16.gmra.mxu0 %v334
  %v518 = vpop.f32.mrf.mxu0
  %v519 = vadd.f32 %v422, %v518
  %v520 = vpop.f32.mrf.mxu0
  %v521 = vpop.f32.mrf.mxu0
  %v522 = vadd.f32 %v425, %v521
  %v523 = vpop.f32.mrf.mxu0
  %524 = vmatprep.mubr.bf16.mxu0 0
  %525 = vmatmul.mubr.bf16.gmra.mxu0 %v337
  %v526 = vpop.f32.mrf.mxu0
  %v527 = vadd.f32 %v430, %v526
  %v528 = vpop.f32.mrf.mxu0
  %v529 = vpop.f32.mrf.mxu0
  %v530 = vadd.f32 %v433, %v529
  %v531 = vpop.f32.mrf.mxu0
  %532 = vdwg.mxu0
  %v533 = vld [vmem:[%s2] sm:$0xff]
  %v534 = vld [vmem:[%s2 + $0x8] sm:$0xff]
  %v535 = vld [vmem:[%s2 + $0x10] sm:$0xff]
  %v536 = vld [vmem:[%s2 + $0x18] sm:$0xff]
  %v537 = vld [vmem:[%s2 + $0x20] sm:$0xff]
  %v538 = vld [vmem:[%s2 + $0x28] sm:$0xff]
  %v539 = vld [vmem:[%s2 + $0x30] sm:$0xff]
  %v540 = vld [vmem:[%s2 + $0x38] sm:$0xff]
  %v541 = vld [vmem:[%s2 + $0x40] sm:$0xff]
  %v542 = vld [vmem:[%s2 + $0x48] sm:$0xff]
  %v543 = vld [vmem:[%s2 + $0x50] sm:$0xff]
  %v544 = vld [vmem:[%s2 + $0x58] sm:$0xff]
  %v545 = vld [vmem:[%s2 + $0x60] sm:$0xff]
  %v546 = vld [vmem:[%s2 + $0x68] sm:$0xff]
  %v547 = vld [vmem:[%s2 + $0x70] sm:$0xff]
  %v548 = vld [vmem:[%s2 + $0x78] sm:$0xff]
  %v549 = vpack.c.bf16 %v534, %v533
  %v550 = vpack.c.bf16 %v536, %v535
  %v551 = vpack.c.bf16 %v538, %v537
  %v552 = vpack.c.bf16 %v540, %v539
  %v553 = vpack.c.bf16 %v542, %v541
  %v554 = vpack.c.bf16 %v544, %v543
  %v555 = vpack.c.bf16 %v546, %v545
  %v556 = vpack.c.bf16 %v548, %v547
  %v557 = vld [vmem:[%s5] sm:$0xff]
  %v558 = vld [vmem:[%s5 + $0x8] sm:$0xff]
  %v559 = vld [vmem:[%s5 + $0x10] sm:$0xff]
  %v560 = vld [vmem:[%s5 + $0x18] sm:$0xff]
  %v561 = vld [vmem:[%s5 + $0x20] sm:$0xff]
  %v562 = vld [vmem:[%s5 + $0x28] sm:$0xff]
  %v563 = vld [vmem:[%s5 + $0x30] sm:$0xff]
  %v564 = vld [vmem:[%s5 + $0x38] sm:$0xff]
  %v565 = vld [vmem:[%s5 + $0x40] sm:$0xff]
  %v566 = vpack.c.bf16 %v558, %v557
  %v567 = vpack.c.bf16 %v560, %v559
  %v568 = vpack.c.bf16 %v562, %v561
  %v569 = vpack.c.bf16 %v564, %v563
  %v570 = vpack.c.bf16 %v565, %v565
  %vm571 = vcmask 588800
  %v573 = vsel %vm571, %v549, 0
  %v576 = vsel %vm571, %v550, 0
  %v579 = vsel %vm571, %v551, 0
  %v582 = vsel %vm571, %v552, 0
  %v585 = vsel %vm571, %v553, 0
  %v588 = vsel %vm571, %v554, 0
  %v591 = vsel %vm571, %v555, 0
  %v594 = vsel %vm571, %v556, 0
  %vm596 = vcmask 1043456
  %v598 = vsel %vm596, %v570, 0
  %600 = vmatprep.subr.bf16.mxu0 0
  %601 = vmatpush1.bf16.msra.mxu0 0
  %602 = vmatprep.subr.bf16.mxu0 0
  %603 = vmatpush1.bf16.msra.mxu0 0
  %604 = vmatprep.subr.bf16.mxu0 0
  %605 = vmatpush1.bf16.msra.mxu0 0
  %606 = vmatprep.subr.bf16.mxu0 0
  %607 = vmatpush1.bf16.msra.mxu0 %v598
  %608 = vmatprep.subr.bf16.mxu0 0
  %609 = vmatpush1.bf16.msra.mxu0 %v569
  %610 = vmatprep.subr.bf16.mxu0 0
  %611 = vmatpush1.bf16.msra.mxu0 %v568
  %612 = vmatprep.subr.bf16.mxu0 0
  %613 = vmatpush1.bf16.msra.mxu0 %v567
  %614 = vmatprep.subr.bf16.mxu0 0
  %615 = vmatpush1.bf16.msra.mxu0 %v566
  %616 = vmatprep.subr.bf16.mxu0 0
  %617 = vmatpush2.bf16.msra.mxu0 0
  %618 = vmatprep.subr.bf16.mxu0 0
  %619 = vmatpush2.bf16.msra.mxu0 0
  %620 = vmatprep.subr.bf16.mxu0 0
  %621 = vmatpush2.bf16.msra.mxu0 0
  %622 = vmatprep.subr.bf16.mxu0 0
  %623 = vmatpush2.bf16.msra.mxu0 0
  %624 = vmatprep.subr.bf16.mxu0 0
  %625 = vmatpush2.bf16.msra.mxu0 0
  %626 = vmatprep.subr.bf16.mxu0 0
  %627 = vmatpush2.bf16.msra.mxu0 0
  %628 = vmatprep.subr.bf16.mxu0 0
  %629 = vmatpush2.bf16.msra.mxu0 0
  %630 = vmatprep.subr.bf16.mxu0 0
  %631 = vmatpush2.bf16.msra.mxu0 0
  %632 = vmatprep.mubr.bf16.mxu0 0
  %633 = vmatmul.mubr.bf16.gmra.mxu0 %v573
  %v634 = vpop.f32.mrf.mxu0
  %v635 = vadd.f32 0.0, %v634
  %v636 = vpop.f32.mrf.mxu0
  %v637 = vpop.f32.mrf.mxu0
  %v638 = vadd.f32 0.0, %v637
  %v639 = vpop.f32.mrf.mxu0
  %640 = vmatprep.mubr.bf16.mxu0 0
  %641 = vmatmul.mubr.bf16.gmra.mxu0 %v576
  %v642 = vpop.f32.mrf.mxu0
  %v643 = vadd.f32 0.0, %v642
  %v644 = vpop.f32.mrf.mxu0
  %v645 = vpop.f32.mrf.mxu0
  %v646 = vadd.f32 0.0, %v645
  %v647 = vpop.f32.mrf.mxu0
  %648 = vmatprep.mubr.bf16.mxu0 0
  %649 = vmatmul.mubr.bf16.gmra.mxu0 %v579
  %v650 = vpop.f32.mrf.mxu0
  %v651 = vadd.f32 0.0, %v650
  %v652 = vpop.f32.mrf.mxu0
  %v653 = vpop.f32.mrf.mxu0
  %v654 = vadd.f32 0.0, %v653
  %v655 = vpop.f32.mrf.mxu0
  %656 = vmatprep.mubr.bf16.mxu0 0
  %657 = vmatmul.mubr.bf16.gmra.mxu0 %v582
  %v658 = vpop.f32.mrf.mxu0
  %v659 = vadd.f32 0.0, %v658
  %v660 = vpop.f32.mrf.mxu0
  %v661 = vpop.f32.mrf.mxu0
  %v662 = vadd.f32 0.0, %v661
  %v663 = vpop.f32.mrf.mxu0
  %664 = vmatprep.mubr.bf16.mxu0 0
  %665 = vmatmul.mubr.bf16.gmra.mxu0 %v585
  %v666 = vpop.f32.mrf.mxu0
  %v667 = vadd.f32 0.0, %v666
  %v668 = vpop.f32.mrf.mxu0
  %v669 = vpop.f32.mrf.mxu0
  %v670 = vadd.f32 0.0, %v669
  %v671 = vpop.f32.mrf.mxu0
  %672 = vmatprep.mubr.bf16.mxu0 0
  %673 = vmatmul.mubr.bf16.gmra.mxu0 %v588
  %v674 = vpop.f32.mrf.mxu0
  %v675 = vadd.f32 0.0, %v674
  %v676 = vpop.f32.mrf.mxu0
  %v677 = vpop.f32.mrf.mxu0
  %v678 = vadd.f32 0.0, %v677
  %v679 = vpop.f32.mrf.mxu0
  %680 = vmatprep.mubr.bf16.mxu0 0
  %681 = vmatmul.mubr.bf16.gmra.mxu0 %v591
  %v682 = vpop.f32.mrf.mxu0
  %v683 = vadd.f32 0.0, %v682
  %v684 = vpop.f32.mrf.mxu0
  %v685 = vpop.f32.mrf.mxu0
  %v686 = vadd.f32 0.0, %v685
  %v687 = vpop.f32.mrf.mxu0
  %688 = vmatprep.mubr.bf16.mxu0 0
  %689 = vmatmul.mubr.bf16.gmra.mxu0 %v594
  %v690 = vpop.f32.mrf.mxu0
  %v691 = vadd.f32 0.0, %v690
  %v692 = vpop.f32.mrf.mxu0
  %v693 = vpop.f32.mrf.mxu0
  %v694 = vadd.f32 0.0, %v693
  %v695 = vpop.f32.mrf.mxu0
  %696 = vdwg.mxu0
  %v697 = vadd.f32 %v471, %v635
  %v698 = vadd.f32 %v474, %v638
  %v699 = vadd.f32 %v479, %v643
  %v700 = vadd.f32 %v482, %v646
  %v701 = vadd.f32 %v487, %v651
  %v702 = vadd.f32 %v490, %v654
  %v703 = vadd.f32 %v495, %v659
  %v704 = vadd.f32 %v498, %v662
  %v705 = vadd.f32 %v503, %v667
  %v706 = vadd.f32 %v506, %v670
  %v707 = vadd.f32 %v511, %v675
  %v708 = vadd.f32 %v514, %v678
  %v709 = vadd.f32 %v519, %v683
  %v710 = vadd.f32 %v522, %v686
  %v711 = vadd.f32 %v527, %v691
  %v712 = vadd.f32 %v530, %v694
  %v713 = vld [vmem:[%s6] sm:$0x1]
  %v715 = vlaneseq
  %v716 = vshrl.u32 %v715, 7
  %v717 = vsub.s32 0, %v716
  %v718 = vrot.slane %v713, %v717
  %v720 = vmul.f32 %v697, %v718
  %v721 = vmul.f32 %v698, %v718
  %v722 = vmul.f32 %v699, %v718
  %v723 = vmul.f32 %v700, %v718
  %v724 = vmul.f32 %v701, %v718
  %v725 = vmul.f32 %v702, %v718
  %v726 = vmul.f32 %v703, %v718
  %v727 = vmul.f32 %v704, %v718
  %v728 = vmul.f32 %v705, %v718
  %v729 = vmul.f32 %v706, %v718
  %v730 = vmul.f32 %v707, %v718
  %v731 = vmul.f32 %v708, %v718
  %v732 = vmul.f32 %v709, %v718
  %v733 = vmul.f32 %v710, %v718
  %v734 = vmul.f32 %v711, %v718
  %v735 = vmul.f32 %v712, %v718
  %v736 = vld [vmem:[%s7] sm:$0x1]
  %v738 = vlaneseq
  %v739 = vshrl.u32 %v738, 7
  %v740 = vsub.s32 0, %v739
  %v741 = vrot.slane %v736, %v740
  %v743 = vadd.f32 %v720, %v741
  %v744 = vadd.f32 %v721, %v741
  %v745 = vadd.f32 %v722, %v741
  %v746 = vadd.f32 %v723, %v741
  %v747 = vadd.f32 %v724, %v741
  %v748 = vadd.f32 %v725, %v741
  %v749 = vadd.f32 %v726, %v741
  %v750 = vadd.f32 %v727, %v741
  %v751 = vadd.f32 %v728, %v741
  %v752 = vadd.f32 %v729, %v741
  %v753 = vadd.f32 %v730, %v741
  %v754 = vadd.f32 %v731, %v741
  %v755 = vadd.f32 %v732, %v741
  %v756 = vadd.f32 %v733, %v741
  %v757 = vadd.f32 %v734, %v741
  %v758 = vadd.f32 %v735, %v741
  %v759 = vmax.f32 %v743, 0.0
  %v760 = vmax.f32 %v744, 0.0
  %v761 = vmax.f32 %v745, 0.0
  %v762 = vmax.f32 %v746, 0.0
  %v763 = vmax.f32 %v747, 0.0
  %v764 = vmax.f32 %v748, 0.0
  %v765 = vmax.f32 %v749, 0.0
  %v766 = vmax.f32 %v750, 0.0
  %v767 = vmax.f32 %v751, 0.0
  %v768 = vmax.f32 %v752, 0.0
  %v769 = vmax.f32 %v753, 0.0
  %v770 = vmax.f32 %v754, 0.0
  %v771 = vmax.f32 %v755, 0.0
  %v772 = vmax.f32 %v756, 0.0
  %v773 = vmax.f32 %v757, 0.0
  %v774 = vmax.f32 %v758, 0.0
  %775 = vst.msk [vmem:[%s8] sm:$0xff] %vm314, %v759
  %776 = vst.msk [vmem:[%s8 + $0x8] sm:$0xff] %vm314, %v760
  %777 = vst.msk [vmem:[%s8 + $0x10] sm:$0xff] %vm314, %v761
  %778 = vst.msk [vmem:[%s8 + $0x18] sm:$0xff] %vm314, %v762
  %779 = vst.msk [vmem:[%s8 + $0x20] sm:$0xff] %vm314, %v763
  %780 = vst.msk [vmem:[%s8 + $0x28] sm:$0xff] %vm314, %v764
  %781 = vst.msk [vmem:[%s8 + $0x30] sm:$0xff] %vm314, %v765
  %782 = vst.msk [vmem:[%s8 + $0x38] sm:$0xff] %vm314, %v766
  %783 = vst.msk [vmem:[%s8 + $0x40] sm:$0xff] %vm314, %v767
  %784 = vst.msk [vmem:[%s8 + $0x48] sm:$0xff] %vm314, %v768
  %785 = vst.msk [vmem:[%s8 + $0x50] sm:$0xff] %vm314, %v769
  %786 = vst.msk [vmem:[%s8 + $0x58] sm:$0xff] %vm314, %v770
  %787 = vst.msk [vmem:[%s8 + $0x60] sm:$0xff] %vm314, %v771
  %788 = vst.msk [vmem:[%s8 + $0x68] sm:$0xff] %vm314, %v772
  %789 = vst.msk [vmem:[%s8 + $0x70] sm:$0xff] %vm314, %v773
  %790 = vst.msk [vmem:[%s8 + $0x78] sm:$0xff] %vm314, %v774
  // Predicated region
  $region34: #{deeplab_bottleneck_forward.28} parent=0 // pred_check
    _
  $region35: #{deeplab_bottleneck_forward.28} parent=0 // pred_check_branch
    %792 = sbr.rel (0) target = $region37
  $region36: #{deeplab_bottleneck_forward.28} parent=0 // pred_region
    _
  $region37: #{deeplab_bottleneck_forward.28} parent=0 // pred_fallthru
    _
  // Predicated region
  $region38: #{deeplab_bottleneck_forward.28} parent=0 // pred_check
    _
  $region39: #{deeplab_bottleneck_forward.28} parent=0 // pred_check_branch
    %794 = sbr.rel (0) target = $region41
  $region40: #{deeplab_bottleneck_forward.28} parent=0 // pred_region
    _
  $region41: #{deeplab_bottleneck_forward.28} parent=0 // pred_fallthru
    _

// kernel: deeplab_bottleneck_forward.31
$region0: #{deeplab_bottleneck_forward.31}
  #allocation0 [shape = 'u32[]', space=smem, size = 0x4, offset = 0x4, fixed_abs, tag = 'smem constant byte address 0x4 - core index']
  #allocation1 [shape = 'u32[144,128]{1,0:T(1,128)}', space=vmem, size = 0x12000, scoped, tag = 'internal scratch']
  %s0 = inlined_call_operand.vmem [shape: f32[2,8,8], index: 0, kind: input, shape index: {}]
  %s1 = inlined_call_operand.vmem [shape: f32[32,8], index: 1, kind: input, shape index: {}]
  %s2 = inlined_call_operand.vmem [shape: f32[8,32], index: 2, kind: input, shape index: {}]
  %s3 = inlined_call_operand.hbm [shape: f32[2,32,32], index: 3, kind: output, shape index: {0}]
  %s4 = inlined_call_operand.hbm [shape: f32[2,32,32], index: 4, kind: output, shape index: {1}]
  %s5 = inlined_call_operand.hbm [shape: f32[2,32,32], index: 5, kind: output, shape index: {2}]
  %6 = xla_tuple %s3, %s4, %s5
  %s7 = sld [smem:[#allocation0]]
  $region38: #{deeplab_bottleneck_forward.31} parent=0
    _
  %s9 = ssub.s32 1, %s7
  %s10 = scalar_select 0, %s9, %s7
  $region1: #{deeplab_bottleneck_forward.31} parent=0
    #allocation2 [shape = 'u8[32768]{0}', space=vmem, size = 0x8000, scoped, tag = 'output window, operand 0, single buffered']
    #allocation3 [shape = 's32[1]{0}', space=sflag, size = 0x4, scoped, tag = 'scoped memory for deeplab_bottleneck_forward.31']
    #allocation4 [shape = 'u8[32768]{0}', space=vmem, size = 0x8000, scoped, tag = 'output window, operand 1, single buffered']
    #allocation5 [shape = 's32[1]{0}', space=sflag, size = 0x4, scoped, tag = 'scoped memory for deeplab_bottleneck_forward.31']
    #allocation6 [shape = 'u8[32768]{0}', space=vmem, size = 0x8000, scoped, tag = 'output window, operand 2, single buffered']
    %11 = vsyncpa [#allocation3], 0
    %12 = vsyncpa [#allocation5], 0
    // Predicated region
    $region2: #{deeplab_bottleneck_forward.31} parent=1 // pred_check
      _
    $region3: #{deeplab_bottleneck_forward.31} parent=1 // pred_check_branch
      %14 = sbr.rel (0) target = $region5
    $region4: #{deeplab_bottleneck_forward.31} parent=1 // pred_region
      _
    $region5: #{deeplab_bottleneck_forward.31} parent=1 // pred_fallthru
      _
    // Predicated region
    $region6: #{deeplab_bottleneck_forward.31} parent=1 // pred_check
      _
    $region7: #{deeplab_bottleneck_forward.31} parent=1 // pred_check_branch
      %16 = sbr.rel (0) target = $region9
    $region8: #{deeplab_bottleneck_forward.31} parent=1 // pred_region
      _
    $region9: #{deeplab_bottleneck_forward.31} parent=1 // pred_fallthru
      _
    // Predicated region
    $region10: #{deeplab_bottleneck_forward.31} parent=1 // pred_check
      _
    $region11: #{deeplab_bottleneck_forward.31} parent=1 // pred_check_branch
      %18 = sbr.rel (0) target = $region13
    $region12: #{deeplab_bottleneck_forward.31} parent=1 // pred_region
      _
    $region13: #{deeplab_bottleneck_forward.31} parent=1 // pred_fallthru
      _
    %v19 = vld [vmem:[%s1] sm:$0xff]
    %v20 = vld [vmem:[%s1 + $0x8] sm:$0xff]
    %v21 = vld [vmem:[%s1 + $0x10] sm:$0xff]
    %v22 = vld [vmem:[%s1 + $0x18] sm:$0xff]
    %v23 = vld [vmem:[%s2] sm:$0xff]
    %v24 = vld [vmem:[%s0] sm:$0xff]
    %vm25 = vcmask 64512
    %v27 = vsel %vm25, %v19, 0
    %v30 = vsel %vm25, %v20, 0
    %v33 = vsel %vm25, %v21, 0
    %v36 = vsel %vm25, %v22, 0
    %38 = vmatprep.subr.mxu0 0.0
    %39 = vmatpush1.msra.mxu0 0.0
    %40 = vmatprep.subr.mxu0 0.0
    %41 = vmatpush1.msra.mxu0 0.0
    %42 = vmatprep.subr.mxu0 0.0
    %43 = vmatpush1.msra.mxu0 0.0
    %44 = vmatprep.subr.mxu0 0.0
    %45 = vmatpush1.msra.mxu0 0.0
    %46 = vmatprep.subr.mxu0 0.0
    %47 = vmatpush1.msra.mxu0 0.0
    %48 = vmatprep.subr.mxu0 0.0
    %49 = vmatpush1.msra.mxu0 0.0
    %50 = vmatprep.subr.mxu0 0.0
    %51 = vmatpush1.msra.mxu0 0.0
    %52 = vmatprep.subr.mxu0 0.0
    %53 = vmatpush1.msra.mxu0 0.0
    %54 = vmatprep.subr.mxu0 0.0
    %55 = vmatpush1.msra.mxu0 0.0
    %56 = vmatprep.subr.mxu0 0.0
    %57 = vmatpush1.msra.mxu0 0.0
    %58 = vmatprep.subr.mxu0 0.0
    %59 = vmatpush1.msra.mxu0 0.0
    %60 = vmatprep.subr.mxu0 0.0
    %61 = vmatpush1.msra.mxu0 0.0
    %62 = vmatprep.subr.mxu0 0.0
    %63 = vmatpush1.msra.mxu0 0.0
    %64 = vmatprep.subr.mxu0 0.0
    %65 = vmatpush1.msra.mxu0 0.0
    %66 = vmatprep.subr.mxu0 0.0
    %67 = vmatpush1.msra.mxu0 0.0
    %68 = vmatprep.subr.mxu0 0.0
    %69 = vmatpush1.msra.mxu0 %v24
    %70 = vmatprep.subr.mxu0 0.0
    %71 = vmatpush2.msra.mxu0 0.0
    %72 = vmatprep.subr.mxu0 0.0
    %73 = vmatpush2.msra.mxu0 0.0
    %74 = vmatprep.subr.mxu0 0.0
    %75 = vmatpush2.msra.mxu0 0.0
    %76 = vmatprep.subr.mxu0 0.0
    %77 = vmatpush2.msra.mxu0 0.0
    %78 = vmatprep.subr.mxu0 0.0
    %79 = vmatpush2.msra.mxu0 0.0
    %80 = vmatprep.subr.mxu0 0.0
    %81 = vmatpush2.msra.mxu0 0.0
    %82 = vmatprep.subr.mxu0 0.0
    %83 = vmatpush2.msra.mxu0 0.0
    %84 = vmatprep.subr.mxu0 0.0
    %85 = vmatpush2.msra.mxu0 0.0
    %86 = vmatprep.subr.mxu0 0.0
    %87 = vmatpush2.msra.mxu0 0.0
    %88 = vmatprep.subr.mxu0 0.0
    %89 = vmatpush2.msra.mxu0 0.0
    %90 = vmatprep.subr.mxu0 0.0
    %91 = vmatpush2.msra.mxu0 0.0
    %92 = vmatprep.subr.mxu0 0.0
    %93 = vmatpush2.msra.mxu0 0.0
    %94 = vmatprep.subr.mxu0 0.0
    %95 = vmatpush2.msra.mxu0 0.0
    %96 = vmatprep.subr.mxu0 0.0
    %97 = vmatpush2.msra.mxu0 0.0
    %98 = vmatprep.subr.mxu0 0.0
    %99 = vmatpush2.msra.mxu0 0.0
    %100 = vmatprep.subr.mxu0 0.0
    %101 = vmatpush2.msra.mxu0 0.0
    %102 = vmatprep.mubr.f32.mxu0 0.0
    %103 = vmatmul.mubr.f32.gmra.mxu0 %v27
    %v104 = vpop.f32.mrf.mxu0
    %v105 = vadd.f32 0.0, %v104
    %v106 = vpop.f32.mrf.mxu0
    %107 = vmatprep.mubr.f32.mxu0 0.0
    %108 = vmatmul.mubr.f32.gmra.mxu0 %v30
    %v109 = vpop.f32.mrf.mxu0
    %v110 = vadd.f32 0.0, %v109
    %v111 = vpop.f32.mrf.mxu0
    %112 = vmatprep.mubr.f32.mxu0 0.0
    %113 = vmatmul.mubr.f32.gmra.mxu0 %v33
    %v114 = vpop.f32.mrf.mxu0
    %v115 = vadd.f32 0.0, %v114
    %v116 = vpop.f32.mrf.mxu0
    %117 = vmatprep.mubr.f32.mxu0 0.0
    %118 = vmatmul.mubr.f32.gmra.mxu0 %v36
    %v119 = vpop.f32.mrf.mxu0
    %v120 = vadd.f32 0.0, %v119
    %v121 = vpop.f32.mrf.mxu0
    %122 = vdwg.mxu0
    %v124 = vsel %vm25, %v105, 0
    %v127 = vsel %vm25, %v110, 0
    %v130 = vsel %vm25, %v115, 0
    %v133 = vsel %vm25, %v120, 0
    %135 = vmatprep.subr.mxu0 0.0
    %136 = vmatpush1.msra.mxu0 0.0
    %137 = vmatprep.subr.mxu0 0.0
    %138 = vmatpush1.msra.mxu0 0.0
    %139 = vmatprep.subr.mxu0 0.0
    %140 = vmatpush1.msra.mxu0 0.0
    %141 = vmatprep.subr.mxu0 0.0
    %142 = vmatpush1.msra.mxu0 0.0
    %143 = vmatprep.subr.mxu0 0.0
    %144 = vmatpush1.msra.mxu0 0.0
    %145 = vmatprep.subr.mxu0 0.0
    %146 = vmatpush1.msra.mxu0 0.0
    %147 = vmatprep.subr.mxu0 0.0
    %148 = vmatpush1.msra.mxu0 0.0
    %149 = vmatprep.subr.mxu0 0.0
    %150 = vmatpush1.msra.mxu0 0.0
    %151 = vmatprep.subr.mxu0 0.0
    %152 = vmatpush1.msra.mxu0 0.0
    %153 = vmatprep.subr.mxu0 0.0
    %154 = vmatpush1.msra.mxu0 0.0
    %155 = vmatprep.subr.mxu0 0.0
    %156 = vmatpush1.msra.mxu0 0.0
    %157 = vmatprep.subr.mxu0 0.0
    %158 = vmatpush1.msra.mxu0 0.0
    %159 = vmatprep.subr.mxu0 0.0
    %160 = vmatpush1.msra.mxu0 0.0
    %161 = vmatprep.subr.mxu0 0.0
    %162 = vmatpush1.msra.mxu0 0.0
    %163 = vmatprep.subr.mxu0 0.0
    %164 = vmatpush1.msra.mxu0 0.0
    %165 = vmatprep.subr.mxu0 0.0
    %166 = vmatpush1.msra.mxu0 %v23
    %167 = vmatprep.subr.mxu0 0.0
    %168 = vmatpush2.msra.mxu0 0.0
    %169 = vmatprep.subr.mxu0 0.0
    %170 = vmatpush2.msra.mxu0 0.0
    %171 = vmatprep.subr.mxu0 0.0
    %172 = vmatpush2.msra.mxu0 0.0
    %173 = vmatprep.subr.mxu0 0.0
    %174 = vmatpush2.msra.mxu0 0.0
    %175 = vmatprep.subr.mxu0 0.0
    %176 = vmatpush2.msra.mxu0 0.0
    %177 = vmatprep.subr.mxu0 0.0
    %178 = vmatpush2.msra.mxu0 0.0
    %179 = vmatprep.subr.mxu0 0.0
    %180 = vmatpush2.msra.mxu0 0.0
    %181 = vmatprep.subr.mxu0 0.0
    %182 = vmatpush2.msra.mxu0 0.0
    %183 = vmatprep.subr.mxu0 0.0
    %184 = vmatpush2.msra.mxu0 0.0
    %185 = vmatprep.subr.mxu0 0.0
    %186 = vmatpush2.msra.mxu0 0.0
    %187 = vmatprep.subr.mxu0 0.0
    %188 = vmatpush2.msra.mxu0 0.0
    %189 = vmatprep.subr.mxu0 0.0
    %190 = vmatpush2.msra.mxu0 0.0
    %191 = vmatprep.subr.mxu0 0.0
    %192 = vmatpush2.msra.mxu0 0.0
    %193 = vmatprep.subr.mxu0 0.0
    %194 = vmatpush2.msra.mxu0 0.0
    %195 = vmatprep.subr.mxu0 0.0
    %196 = vmatpush2.msra.mxu0 0.0
    %197 = vmatprep.subr.mxu0 0.0
    %198 = vmatpush2.msra.mxu0 0.0
    %199 = vmatprep.mubr.f32.mxu0 0.0
    %200 = vmatmul.mubr.f32.gmra.mxu0 %v124
    %v201 = vpop.f32.mrf.mxu0
    %v202 = vadd.f32 0.0, %v201
    %v203 = vpop.f32.mrf.mxu0
    %204 = vmatprep.mubr.f32.mxu0 0.0
    %205 = vmatmul.mubr.f32.gmra.mxu0 %v127
    %v206 = vpop.f32.mrf.mxu0
    %v207 = vadd.f32 0.0, %v206
    %v208 = vpop.f32.mrf.mxu0
    %209 = vmatprep.mubr.f32.mxu0 0.0
    %210 = vmatmul.mubr.f32.gmra.mxu0 %v130
    %v211 = vpop.f32.mrf.mxu0
    %v212 = vadd.f32 0.0, %v211
    %v213 = vpop.f32.mrf.mxu0
    %214 = vmatprep.mubr.f32.mxu0 0.0
    %215 = vmatmul.mubr.f32.gmra.mxu0 %v133
    %v216 = vpop.f32.mrf.mxu0
    %v217 = vadd.f32 0.0, %v216
    %v218 = vpop.f32.mrf.mxu0
    %219 = vdwg.mxu0
    %vm220 = vcmask 261120
    %221 = vst.msk [vmem:[#allocation2] sm:$0xff] %vm220, %v202
    %222 = vst.msk [vmem:[#allocation2 + $0x8] sm:$0xff] %vm220, %v207
    %223 = vst.msk [vmem:[#allocation2 + $0x10] sm:$0xff] %vm220, %v212
    %224 = vst.msk [vmem:[#allocation2 + $0x18] sm:$0xff] %vm220, %v217
    %v225 = vtanh.pop %v202
    %v226 = vtanh.pop %v207
    %v227 = vtanh.pop %v212
    %v228 = vtanh.pop %v217
    %229 = vst.msk [vmem:[#allocation4] sm:$0xff] %vm220, %v225
    %230 = vst.msk [vmem:[#allocation4 + $0x8] sm:$0xff] %vm220, %v226
    %231 = vst.msk [vmem:[#allocation4 + $0x10] sm:$0xff] %vm220, %v227
    %232 = vst.msk [vmem:[#allocation4 + $0x18] sm:$0xff] %vm220, %v228
    %v233 = vmul.f32 %v202, 0.5
    %v234 = vmul.f32 %v207, 0.5
    %v235 = vmul.f32 %v212, 0.5
    %v236 = vmul.f32 %v217, 0.5
    %v237 = vtanh.pop %v233
    %v238 = vtanh.pop %v234
    %v239 = vtanh.pop %v235
    %v240 = vtanh.pop %v236
    %v241 = vadd.f32 %v237, 1.0
    %v242 = vadd.f32 %v238, 1.0
    %v243 = vadd.f32 %v239, 1.0
    %v244 = vadd.f32 %v240, 1.0
    %v245 = vmul.f32 %v241, 0.5
    %v246 = vmul.f32 %v242, 0.5
    %v247 = vmul.f32 %v243, 0.5
    %v248 = vmul.f32 %v244, 0.5
    %249 = vst.msk [vmem:[#allocation6] sm:$0xff] %vm220, %v245
    %250 = vst.msk [vmem:[#allocation6 + $0x8] sm:$0xff] %vm220, %v246
    %251 = vst.msk [vmem:[#allocation6 + $0x10] sm:$0xff] %vm220, %v247
    %252 = vst.msk [vmem:[#allocation6 + $0x18] sm:$0xff] %vm220, %v248
    %s253 = scalar_lea.vmem %s0, 8
    %v254 = vld [vmem:[%s253] sm:$0xff]
    %255 = vmatprep.subr.mxu0 0.0
    %256 = vmatpush1.msra.mxu0 0.0
    %257 = vmatprep.subr.mxu0 0.0
    %258 = vmatpush1.msra.mxu0 0.0
    %259 = vmatprep.subr.mxu0 0.0
    %260 = vmatpush1.msra.mxu0 0.0
    %261 = vmatprep.subr.mxu0 0.0
    %262 = vmatpush1.msra.mxu0 0.0
    %263 = vmatprep.subr.mxu0 0.0
    %264 = vmatpush1.msra.mxu0 0.0
    %265 = vmatprep.subr.mxu0 0.0
    %266 = vmatpush1.msra.mxu0 0.0
    %267 = vmatprep.subr.mxu0 0.0
    %268 = vmatpush1.msra.mxu0 0.0
    %269 = vmatprep.subr.mxu0 0.0
    %270 = vmatpush1.msra.mxu0 0.0
    %271 = vmatprep.subr.mxu0 0.0
    %272 = vmatpush1.msra.mxu0 0.0
    %273 = vmatprep.subr.mxu0 0.0
    %274 = vmatpush1.msra.mxu0 0.0
    %275 = vmatprep.subr.mxu0 0.0
    %276 = vmatpush1.msra.mxu0 0.0
    %277 = vmatprep.subr.mxu0 0.0
    %278 = vmatpush1.msra.mxu0 0.0
    %279 = vmatprep.subr.mxu0 0.0
    %280 = vmatpush1.msra.mxu0 0.0
    %281 = vmatprep.subr.mxu0 0.0
    %282 = vmatpush1.msra.mxu0 0.0
    %283 = vmatprep.subr.mxu0 0.0
    %284 = vmatpush1.msra.mxu0 0.0
    %285 = vmatprep.subr.mxu0 0.0
    %286 = vmatpush1.msra.mxu0 %v254
    %287 = vmatprep.subr.mxu0 0.0
    %288 = vmatpush2.msra.mxu0 0.0
    %289 = vmatprep.subr.mxu0 0.0
    %290 = vmatpush2.msra.mxu0 0.0
    %291 = vmatprep.subr.mxu0 0.0
    %292 = vmatpush2.msra.mxu0 0.0
    %293 = vmatprep.subr.mxu0 0.0
    %294 = vmatpush2.msra.mxu0 0.0
    %295 = vmatprep.subr.mxu0 0.0
    %296 = vmatpush2.msra.mxu0 0.0
    %297 = vmatprep.subr.mxu0 0.0
    %298 = vmatpush2.msra.mxu0 0.0
    %299 = vmatprep.subr.mxu0 0.0
    %300 = vmatpush2.msra.mxu0 0.0
    %301 = vmatprep.subr.mxu0 0.0
    %302 = vmatpush2.msra.mxu0 0.0
    %303 = vmatprep.subr.mxu0 0.0
    %304 = vmatpush2.msra.mxu0 0.0
    %305 = vmatprep.subr.mxu0 0.0
    %306 = vmatpush2.msra.mxu0 0.0
    %307 = vmatprep.subr.mxu0 0.0
    %308 = vmatpush2.msra.mxu0 0.0
    %309 = vmatprep.subr.mxu0 0.0
    %310 = vmatpush2.msra.mxu0 0.0
    %311 = vmatprep.subr.mxu0 0.0
    %312 = vmatpush2.msra.mxu0 0.0
    %313 = vmatprep.subr.mxu0 0.0
    %314 = vmatpush2.msra.mxu0 0.0
    %315 = vmatprep.subr.mxu0 0.0
    %316 = vmatpush2.msra.mxu0 0.0
    %317 = vmatprep.subr.mxu0 0.0
    %318 = vmatpush2.msra.mxu0 0.0
    %319 = vmatprep.mubr.f32.mxu0 0.0
    %320 = vmatmul.mubr.f32.gmra.mxu0 %v27
    %v321 = vpop.f32.mrf.mxu0
    %v322 = vadd.f32 0.0, %v321
    %v323 = vpop.f32.mrf.mxu0
    %324 = vmatprep.mubr.f32.mxu0 0.0
    %325 = vmatmul.mubr.f32.gmra.mxu0 %v30
    %v326 = vpop.f32.mrf.mxu0
    %v327 = vadd.f32 0.0, %v326
    %v328 = vpop.f32.mrf.mxu0
    %329 = vmatprep.mubr.f32.mxu0 0.0
    %330 = vmatmul.mubr.f32.gmra.mxu0 %v33
    %v331 = vpop.f32.mrf.mxu0
    %v332 = vadd.f32 0.0, %v331
    %v333 = vpop.f32.mrf.mxu0
    %334 = vmatprep.mubr.f32.mxu0 0.0
    %335 = vmatmul.mubr.f32.gmra.mxu0 %v36
    %v336 = vpop.f32.mrf.mxu0
    %v337 = vadd.f32 0.0, %v336
    %v338 = vpop.f32.mrf.mxu0
    %339 = vdwg.mxu0
    %v341 = vsel %vm25, %v322, 0
    %v344 = vsel %vm25, %v327, 0
    %v347 = vsel %vm25, %v332, 0
    %v350 = vsel %vm25, %v337, 0
    %352 = vmatprep.subr.mxu0 0.0
    %353 = vmatpush1.msra.mxu0 0.0
    %354 = vmatprep.subr.mxu0 0.0
    %355 = vmatpush1.msra.mxu0 0.0
    %356 = vmatprep.subr.mxu0 0.0
    %357 = vmatpush1.msra.mxu0 0.0
    %358 = vmatprep.subr.mxu0 0.0
    %359 = vmatpush1.msra.mxu0 0.0
    %360 = vmatprep.subr.mxu0 0.0
    %361 = vmatpush1.msra.mxu0 0.0
    %362 = vmatprep.subr.mxu0 0.0
    %363 = vmatpush1.msra.mxu0 0.0
    %364 = vmatprep.subr.mxu0 0.0
    %365 = vmatpush1.msra.mxu0 0.0
    %366 = vmatprep.subr.mxu0 0.0
    %367 = vmatpush1.msra.mxu0 0.0
    %368 = vmatprep.subr.mxu0 0.0
    %369 = vmatpush1.msra.mxu0 0.0
    %370 = vmatprep.subr.mxu0 0.0
    %371 = vmatpush1.msra.mxu0 0.0
    %372 = vmatprep.subr.mxu0 0.0
    %373 = vmatpush1.msra.mxu0 0.0
    %374 = vmatprep.subr.mxu0 0.0
    %375 = vmatpush1.msra.mxu0 0.0
    %376 = vmatprep.subr.mxu0 0.0
    %377 = vmatpush1.msra.mxu0 0.0
    %378 = vmatprep.subr.mxu0 0.0
    %379 = vmatpush1.msra.mxu0 0.0
    %380 = vmatprep.subr.mxu0 0.0
    %381 = vmatpush1.msra.mxu0 0.0
    %382 = vmatprep.subr.mxu0 0.0
    %383 = vmatpush1.msra.mxu0 %v23
    %384 = vmatprep.subr.mxu0 0.0
    %385 = vmatpush2.msra.mxu0 0.0
    %386 = vmatprep.subr.mxu0 0.0
    %387 = vmatpush2.msra.mxu0 0.0
    %388 = vmatprep.subr.mxu0 0.0
    %389 = vmatpush2.msra.mxu0 0.0
    %390 = vmatprep.subr.mxu0 0.0
    %391 = vmatpush2.msra.mxu0 0.0
    %392 = vmatprep.subr.mxu0 0.0
    %393 = vmatpush2.msra.mxu0 0.0
    %394 = vmatprep.subr.mxu0 0.0
    %395 = vmatpush2.msra.mxu0 0.0
    %396 = vmatprep.subr.mxu0 0.0
    %397 = vmatpush2.msra.mxu0 0.0
    %398 = vmatprep.subr.mxu0 0.0
    %399 = vmatpush2.msra.mxu0 0.0
    %400 = vmatprep.subr.mxu0 0.0
    %401 = vmatpush2.msra.mxu0 0.0
    %402 = vmatprep.subr.mxu0 0.0
    %403 = vmatpush2.msra.mxu0 0.0
    %404 = vmatprep.subr.mxu0 0.0
    %405 = vmatpush2.msra.mxu0 0.0
    %406 = vmatprep.subr.mxu0 0.0
    %407 = vmatpush2.msra.mxu0 0.0
    %408 = vmatprep.subr.mxu0 0.0
    %409 = vmatpush2.msra.mxu0 0.0
    %410 = vmatprep.subr.mxu0 0.0
    %411 = vmatpush2.msra.mxu0 0.0
    %412 = vmatprep.subr.mxu0 0.0
    %413 = vmatpush2.msra.mxu0 0.0
    %414 = vmatprep.subr.mxu0 0.0
    %415 = vmatpush2.msra.mxu0 0.0
    %416 = vmatprep.mubr.f32.mxu0 0.0
    %417 = vmatmul.mubr.f32.gmra.mxu0 %v341
    %v418 = vpop.f32.mrf.mxu0
    %v419 = vadd.f32 0.0, %v418
    %v420 = vpop.f32.mrf.mxu0
    %421 = vmatprep.mubr.f32.mxu0 0.0
    %422 = vmatmul.mubr.f32.gmra.mxu0 %v344
    %v423 = vpop.f32.mrf.mxu0
    %v424 = vadd.f32 0.0, %v423
    %v425 = vpop.f32.mrf.mxu0
    %426 = vmatprep.mubr.f32.mxu0 0.0
    %427 = vmatmul.mubr.f32.gmra.mxu0 %v347
    %v428 = vpop.f32.mrf.mxu0
    %v429 = vadd.f32 0.0, %v428
    %v430 = vpop.f32.mrf.mxu0
    %431 = vmatprep.mubr.f32.mxu0 0.0
    %432 = vmatmul.mubr.f32.gmra.mxu0 %v350
    %v433 = vpop.f32.mrf.mxu0
    %v434 = vadd.f32 0.0, %v433
    %v435 = vpop.f32.mrf.mxu0
    %436 = vdwg.mxu0
    %s437 = scalar_lea.vmem [#allocation2], 32
    %438 = vst.msk [vmem:[%s437] sm:$0xff] %vm220, %v419
    %439 = vst.msk [vmem:[%s437 + $0x8] sm:$0xff] %vm220, %v424
    %440 = vst.msk [vmem:[%s437 + $0x10] sm:$0xff] %vm220, %v429
    %441 = vst.msk [vmem:[%s437 + $0x18] sm:$0xff] %vm220, %v434
    %v442 = vtanh.pop %v419
    %v443 = vtanh.pop %v424
    %v444 = vtanh.pop %v429
    %v445 = vtanh.pop %v434
    %s446 = scalar_lea.vmem [#allocation4], 32
    %447 = vst.msk [vmem:[%s446] sm:$0xff] %vm220, %v442
    %448 = vst.msk [vmem:[%s446 + $0x8] sm:$0xff] %vm220, %v443
    %449 = vst.msk [vmem:[%s446 + $0x10] sm:$0xff] %vm220, %v444
    %450 = vst.msk [vmem:[%s446 + $0x18] sm:$0xff] %vm220, %v445
    %v451 = vmul.f32 %v419, 0.5
    %v452 = vmul.f32 %v424, 0.5
    %v453 = vmul.f32 %v429, 0.5
    %v454 = vmul.f32 %v434, 0.5
    %v455 = vtanh.pop %v451
    %v456 = vtanh.pop %v452
    %v457 = vtanh.pop %v453
    %v458 = vtanh.pop %v454
    %v459 = vadd.f32 %v455, 1.0
    %v460 = vadd.f32 %v456, 1.0
    %v461 = vadd.f32 %v457, 1.0
    %v462 = vadd.f32 %v458, 1.0
    %v463 = vmul.f32 %v459, 0.5
    %v464 = vmul.f32 %v460, 0.5
    %v465 = vmul.f32 %v461, 0.5
    %v466 = vmul.f32 %v462, 0.5
    %s467 = scalar_lea.vmem [#allocation6], 32
    %468 = vst.msk [vmem:[%s467] sm:$0xff] %vm220, %v463
    %469 = vst.msk [vmem:[%s467 + $0x8] sm:$0xff] %vm220, %v464
    %470 = vst.msk [vmem:[%s467 + $0x10] sm:$0xff] %vm220, %v465
    %471 = vst.msk [vmem:[%s467 + $0x18] sm:$0xff] %vm220, %v466
    // Predicated region
    $region14: #{deeplab_bottleneck_forward.31} parent=1 // pred_check
      _
    $region15: #{deeplab_bottleneck_forward.31} parent=1 // pred_check_branch
      %473 = sbr.rel (0) target = $region17
    $region16: #{deeplab_bottleneck_forward.31} parent=1 // pred_region
      %s475 = ssub.s32 1024, 1024
      %476 = vsyncadd [#allocation3], %s475
      %s477 = sshll.u32 [#allocation2], 4
      %s478 = int_to_ptr.vmem [resolvable:$true] %s477
      %483 = dma.vmem_to_hbm [thread:$0]  %s478, 1024, %s3, [#allocation3], 128, 128, 8
    $region17: #{deeplab_bottleneck_forward.31} parent=1 // pred_fallthru
      _
    // Predicated region
    $region18: #{deeplab_bottleneck_forward.31} parent=1 // pred_check
      _
    $region19: #{deeplab_bottleneck_forward.31} parent=1 // pred_check_branch
      %485 = sbr.rel (0) target = $region21
    $region20: #{deeplab_bottleneck_forward.31} parent=1 // pred_region
      %s487 = ssub.s32 1024, 1024
      %488 = vsyncadd [#allocation5], %s487
      %s489 = sshll.u32 [#allocation4], 4
      %s490 = int_to_ptr.vmem [resolvable:$true] %s489
      %495 = dma.vmem_to_hbm [thread:$0]  %s490, 1024, %s4, [#allocation5], 128, 128, 8
    $region21: #{deeplab_bottleneck_forward.31} parent=1 // pred_fallthru
      _
    // Predicated region
    $region22: #{deeplab_bottleneck_forward.31} parent=1 // pred_check
      _
    $region23: #{deeplab_bottleneck_forward.31} parent=1 // pred_check_branch
      %497 = sbr.rel (0) target = $region25
    $region24: #{deeplab_bottleneck_forward.31} parent=1 // pred_region
      %s499 = ssub.s32 1024, 1024
      %500 = vsyncadd [#allocation5], %s499
      %s501 = sshll.u32 [#allocation6], 4
      %s502 = int_to_ptr.vmem [resolvable:$true] %s501
      %507 = dma.vmem_to_hbm [thread:$0]  %s502, 1024, %s5, [#allocation5], 128, 128, 8
    $region25: #{deeplab_bottleneck_forward.31} parent=1 // pred_fallthru
      _
    // Predicated region
    $region26: #{deeplab_bottleneck_forward.31} parent=1 // pred_check
      _
    $region27: #{deeplab_bottleneck_forward.31} parent=1 // pred_check_branch
      %509 = sbr.rel (0) target = $region29
    $region28: #{deeplab_bottleneck_forward.31} parent=1 // pred_region
      %510 = dma.done [#allocation3], 1024
    $region29: #{deeplab_bottleneck_forward.31} parent=1 // pred_fallthru
      _
    // Predicated region
    $region30: #{deeplab_bottleneck_forward.31} parent=1 // pred_check
      _
    $region31: #{deeplab_bottleneck_forward.31} parent=1 // pred_check_branch
      %512 = sbr.rel (0) target = $region33
    $region32: #{deeplab_bottleneck_forward.31} parent=1 // pred_region
      %513 = dma.done [#allocation5], 1024
    $region33: #{deeplab_bottleneck_forward.31} parent=1 // pred_fallthru
      _
    // Predicated region
    $region34: #{deeplab_bottleneck_forward.31} parent=1 // pred_check
      _
    $region35: #{deeplab_bottleneck_forward.31} parent=1 // pred_check_branch
      %515 = sbr.rel (0) target = $region37
    $region36: #{deeplab_bottleneck_forward.31} parent=1 // pred_region
      %516 = dma.done [#allocation5], 1024
    $region37: #{deeplab_bottleneck_forward.31} parent=1 // pred_fallthru
      _
    %517 = vsyncpa [#allocation3], 1
    %518 = vsyncpa [#allocation5], 1

</llo_original>
